<compile_context>
chip_gen: v7x
topology: tpu7x:2x2x1
jax: 0.10.0
libtpu: 0.0.40
codegen_flags: <defaults>
</compile_context>

<pallas_src>
import functools

import jax
import jax.numpy as jnp
from jax.experimental import pallas as pl
from jax.experimental.pallas import tpu as pltpu


# ----------------------------------------------------------------------------
# Fused kernel: LSTM1 -> LSTM2 -> FC, single grid point.
# Gate order inside the kernel (wrapper-permuted): i, f, o, g.
# ----------------------------------------------------------------------------
def _fjord_kernel(xp1_ref, whh1_ref, wih2_ref, whh2_ref, b2_ref,
                  wfc_ref, bfc_ref, h01_ref, c01_ref, h02_ref, c02_ref,
                  out_ref, h1n_ref, c1n_ref, h2n_ref, c2n_ref,
                  y2_scr, *, batch, seq_len, hidden_dim):
    B, T, H = batch, seq_len, hidden_dim

    # TODO(synk): could hold W_hh1 / W_ih2 / W_hh2 resident in the MXU via
    # pltpu.matmul_push_rhs / matmul_acc_lhs / matmul_pop to avoid re-streaming
    # the RHS every timestep; kept as jnp.dot for portability.
    whh1 = whh1_ref[...]                              # (H, 4H)
    wih2 = wih2_ref[...]                              # (H, 4H)
    whh2 = whh2_ref[...]                              # (H, 4H)
    # Broadcast the layer-2 bias ONCE (JAX does not CSE broadcast_in_dim).
    b2 = jnp.broadcast_to(b2_ref[...], (B, 4 * H))

    h1 = h01_ref[...]
    c1 = c01_ref[...]
    h2 = h02_ref[...]
    c2 = c02_ref[...]

    def lstm_cell(gates, c_prev):
        # Gate layout [i, f, o, g]: one contiguous sigmoid slab + one tanh.
        sig = jax.nn.sigmoid(gates[:, 0:3 * H])
        i_g = sig[:, 0:H]
        f_g = sig[:, H:2 * H]
        o_g = sig[:, 2 * H:3 * H]
        g_g = jnp.tanh(gates[:, 3 * H:4 * H])
        c_new = f_g * c_prev + i_g * g_g
        h_new = o_g * jnp.tanh(c_new)
        return h_new, c_new

    # Static fully-unrolled time loop (T=8); recurrent state lives in vregs.
    # TODO(synk): switch to lax.fori_loop(..., unroll=2..4) with state in VMEM
    # scratch if T ever grows beyond ~16-32 (vreg live-range pressure).
    for t in range(T):
        # Layer-2 recurrent partial first: depends only on last step's h2, so
        # the MXU can issue it while layer-1's activations are in flight.
        g2_rec = jnp.dot(h2, whh2, preferred_element_type=jnp.float32) + b2

        # Layer 1: only the recurrent matmul remains on the serial path.
        g1 = xp1_ref[t] + jnp.dot(h1, whh1, preferred_element_type=jnp.float32)
        h1, c1 = lstm_cell(g1, c1)

        # Layer 2.
        g2 = jnp.dot(h1, wih2, preferred_element_type=jnp.float32) + g2_rec
        h2, c2 = lstm_cell(g2, c2)

        y2_scr[t] = h2                                # time-major, full tiles

    # Final hidden states (single invocation -> plain writes).
    h1n_ref[...] = h1
    c1n_ref[...] = c1
    h2n_ref[...] = h2
    c2n_ref[...] = c2

    # Batched FC over the whole sequence; lane-dense 128-wide output.
    y2 = y2_scr[...].reshape(T * B, H)
    out_ref[...] = (jnp.dot(y2, wfc_ref[...],
                            preferred_element_type=jnp.float32)
                    + bfc_ref[...])


def fjord_fused(xp1, whh1, wih2, whh2, b2, wfc_p, bfc_p,
                h01, c01, h02, c02, *, batch, seq_len, hidden_dim, v_pad):
    B, T, H = batch, seq_len, hidden_dim

    def _full(shape):
        return pl.BlockSpec(shape, lambda i: (0,) * len(shape))

    kernel = functools.partial(_fjord_kernel, batch=B, seq_len=T,
                               hidden_dim=H)
    # TODO(synk): on v7x, split the batch over a leading "parallel" grid axis
    # (one half per TensorCore); kept grid=(1,) so v5e/v6e stay latency-optimal.
    return pl.pallas_call(
        kernel,
        out_shape=(jax.ShapeDtypeStruct((T * B, v_pad), jnp.float32),
                   jax.ShapeDtypeStruct((B, H), jnp.float32),
                   jax.ShapeDtypeStruct((B, H), jnp.float32),
                   jax.ShapeDtypeStruct((B, H), jnp.float32),
                   jax.ShapeDtypeStruct((B, H), jnp.float32)),
        grid=(1,),
        in_specs=[
            _full((T, B, 4 * H)),       # xp1: layer-1 projection (+bias), i,f,o,g
            _full((H, 4 * H)),          # W_hh1^T (permuted)
            _full((H, 4 * H)),          # W_ih2^T (permuted)
            _full((H, 4 * H)),          # W_hh2^T (permuted)
            _full((1, 4 * H)),          # b_ih2 + b_hh2 (permuted)
            _full((H, v_pad)),          # fc weight, lane-padded
            _full((1, v_pad)),          # fc bias, lane-padded
            _full((B, H)), _full((B, H)),   # h0/c0 layer 1
            _full((B, H)), _full((B, H)),   # h0/c0 layer 2
        ],
        out_specs=(_full((T * B, v_pad)),
                   _full((B, H)), _full((B, H)),
                   _full((B, H)), _full((B, H))),
        scratch_shapes=[pltpu.VMEM((T, B, H), jnp.float32)],
        compiler_params=pltpu.CompilerParams(
            dimension_semantics=("arbitrary",)),
    )(xp1, whh1, wih2, whh2, b2, wfc_p, bfc_p, h01, c01, h02, c02)


# ----------------------------------------------------------------------------
# Parameters (deterministic init, PyTorch-like shapes).
# ----------------------------------------------------------------------------
def init_params(key, vocab_size=90, embedding_dim=8, hidden_dim=128):
    ks = jax.random.split(key, 12)
    k = 1.0 / jnp.sqrt(hidden_dim)

    def uni(kk, shape):
        return jax.random.uniform(kk, shape, jnp.float32, -k, k)

    return {
        "embedding": jax.random.normal(ks[0], (vocab_size, embedding_dim),
                                       jnp.float32),
        "lstm1": {
            "w_ih": uni(ks[1], (4 * hidden_dim, embedding_dim)),
            "w_hh": uni(ks[2], (4 * hidden_dim, hidden_dim)),
            "b_ih": uni(ks[3], (4 * hidden_dim,)),
            "b_hh": uni(ks[4], (4 * hidden_dim,)),
        },
        "lstm2": {
            "w_ih": uni(ks[5], (4 * hidden_dim, hidden_dim)),
            "w_hh": uni(ks[6], (4 * hidden_dim, hidden_dim)),
            "b_ih": uni(ks[7], (4 * hidden_dim,)),
            "b_hh": uni(ks[8], (4 * hidden_dim,)),
        },
        "fc": {
            "w": uni(ks[9], (vocab_size, hidden_dim)),
            "b": uni(ks[10], (vocab_size,)),
        },
    }


# ----------------------------------------------------------------------------
# Full forward (matches ShakespeareFjord.forward).
# ----------------------------------------------------------------------------
def shakespeare_forward(params, tokens, hidden=None):
    vocab_size, _ = params["embedding"].shape
    H = params["lstm1"]["w_hh"].shape[1]
    B, T = tokens.shape
    v_pad = ((vocab_size + 127) // 128) * 128

    # Gate-column permutation: PyTorch (i, f, g, o) -> kernel (i, f, o, g).
    perm = jnp.concatenate([jnp.arange(0, H), jnp.arange(H, 2 * H),
                            jnp.arange(3 * H, 4 * H), jnp.arange(2 * H, 3 * H)])

    def prep_w(w):                            # (4H, in) -> (in, 4H), permuted
        return jnp.transpose(w[perm])

    def prep_b(p):
        return (p["b_ih"] + p["b_hh"])[perm].reshape(1, 4 * H)

    p1, p2, pf = params["lstm1"], params["lstm2"], params["fc"]

    # Fold the non-recurrent layer-1 projection into the embedding table.
    emb_proj = params["embedding"] @ prep_w(p1["w_ih"]) + prep_b(p1)  # (V, 4H)

    # The module's forward explicitly clamps tokens to [0, vocab-1].
    tok = jnp.clip(tokens.astype(jnp.int32), 0, vocab_size - 1)
    # TODO(synk): embedding gather left to XLA (tiny table, no Pallas win).
    xp1 = emb_proj[tok]                       # (B, T, 4H)
    xp1 = jnp.transpose(xp1, (1, 0, 2))       # time-major (T, B, 4H)

    if hidden is None:
        z = jnp.zeros((B, H), jnp.float32)
        h01, c01, h02, c02 = z, z, z, z
    else:
        h01, c01 = (a.reshape(B, H) for a in hidden[0])
        h02, c02 = (a.reshape(B, H) for a in hidden[1])

    whh1_t = prep_w(p1["w_hh"])                                      # (H, 4H)
    wih2_t = prep_w(p2["w_ih"])                                      # (H, 4H)
    whh2_t = prep_w(p2["w_hh"])                                      # (H, 4H)
    b2 = prep_b(p2)                                                  # (1, 4H)
    wfc_p = jnp.pad(jnp.transpose(pf["w"]),
                    ((0, 0), (0, v_pad - vocab_size)))               # (H, 128)
    bfc_p = jnp.pad(pf["b"].reshape(1, vocab_size),
                    ((0, 0), (0, v_pad - vocab_size)))               # (1, 128)

    out_p, h1n, c1n, h2n, c2n = fjord_fused(
        xp1, whh1_t, wih2_t, whh2_t, b2, wfc_p, bfc_p,
        h01, c01, h02, c02,
        batch=B, seq_len=T, hidden_dim=H, v_pad=v_pad)

    # Un-permute time-major rows (t*B + b) back to PyTorch's (b*T + t).
    out = (out_p.reshape(T, B, v_pad)[:, :, :vocab_size]
           .transpose(1, 0, 2).reshape(B * T, vocab_size))
    hidden_1 = (h1n.reshape(1, B, H), c1n.reshape(1, B, H))
    hidden_2 = (h2n.reshape(1, B, H), c2n.reshape(1, B, H))
    return out, [hidden_1, hidden_2]


# ----------------------------------------------------------------------------
# Pure-JAX reference (PyTorch gate order), for correctness check.
# ----------------------------------------------------------------------------
def _ref_lstm(x_tbf, w_ih, w_hh, b_ih, b_hh, h0, c0):
    H = h0.shape[-1]

    def step(carry, x_t):
        h, c = carry
        gates = x_t @ w_ih.T + h @ w_hh.T + b_ih + b_hh
        i = jax.nn.sigmoid(gates[:, 0:H])
        f = jax.nn.sigmoid(gates[:, H:2 * H])
        g = jnp.tanh(gates[:, 2 * H:3 * H])
        o = jax.nn.sigmoid(gates[:, 3 * H:4 * H])
        c = f * c + i * g
        h = o * jnp.tanh(c)
        return (h, c), h

    (hN, cN), ys = jax.lax.scan(step, (h0, c0), x_tbf)
    return ys, hN, cN


def _ref_forward(params, tokens, hidden=None):
    vocab_size, _ = params["embedding"].shape
    H = params["lstm1"]["w_hh"].shape[1]
    B, T = tokens.shape
    tok = jnp.clip(tokens.astype(jnp.int32), 0, vocab_size - 1)
    x = jnp.transpose(params["embedding"][tok], (1, 0, 2))   # (T, B, E)
    if hidden is None:
        z = jnp.zeros((B, H), jnp.float32)
        hidden = [(z, z), (z, z)]
    else:
        hidden = [(h.reshape(B, H), c.reshape(B, H)) for (h, c) in hidden]
    p1, p2 = params["lstm1"], params["lstm2"]
    y1, h1, c1 = _ref_lstm(x, p1["w_ih"], p1["w_hh"], p1["b_ih"], p1["b_hh"],
                           hidden[0][0], hidden[0][1])
    y2, h2, c2 = _ref_lstm(y1, p2["w_ih"], p2["w_hh"], p2["b_ih"], p2["b_hh"],
                           hidden[1][0], hidden[1][1])
    y2_bt = jnp.transpose(y2, (1, 0, 2)).reshape(B * T, H)
    out = y2_bt @ params["fc"]["w"].T + params["fc"]["b"]
    return out, [(h1.reshape(1, B, H), c1.reshape(1, B, H)),
                 (h2.reshape(1, B, H), c2.reshape(1, B, H))]


if __name__ == "__main__":
    key = jax.random.PRNGKey(0)
    k_param, k_tok = jax.random.split(key)

    vocab_size, embedding_dim, hidden_dim = 90, 8, 128
    B, T = 32, 8   # larger batch per perf review; B multiple of 8 sublanes

    params = init_params(k_param, vocab_size, embedding_dim, hidden_dim)
    tokens = jax.random.randint(k_tok, (B, T), 0, vocab_size, dtype=jnp.int32)

    # First call: fresh hidden state.
    out, hidden = shakespeare_forward(params, tokens, hidden=None)
    out = jax.block_until_ready(out)
    jax.block_until_ready(hidden)

    assert out.shape == (B * T, vocab_size)
    assert hidden[0][0].shape == (1, B, hidden_dim)

    ref_out, ref_hidden = _ref_forward(params, tokens, hidden=None)
    ref_out = jax.block_until_ready(ref_out)
    assert jnp.allclose(out, ref_out, atol=2e-4, rtol=1e-4), "out mismatch"
    for (hk, ck), (hr, cr) in zip(hidden, ref_hidden):
        assert jnp.allclose(hk, hr, atol=2e-4, rtol=1e-4), "h_N mismatch"
        assert jnp.allclose(ck, cr, atol=2e-4, rtol=1e-4), "c_N mismatch"

    # Second call: feed the returned hidden state back in (stateful path).
    out2, hidden2 = shakespeare_forward(params, tokens, hidden=hidden)
    out2 = jax.block_until_ready(out2)
    ref_out2, _ = _ref_forward(params, tokens, hidden=ref_hidden)
    assert jnp.allclose(out2, jax.block_until_ready(ref_out2),
                        atol=2e-4, rtol=1e-4), "stateful out mismatch"

    print("KERNEL_OK")
</pallas_src>

<mosaic_0001>
module attributes {stable_mosaic.version = 11 : i64} {
  func.func @_fjord_kernel(%arg0: i32, %arg1: memref<8x32x512xf32, #tpu.memory_space<vmem>>, %arg2: memref<128x512xf32, #tpu.memory_space<vmem>>, %arg3: memref<128x512xf32, #tpu.memory_space<vmem>>, %arg4: memref<128x512xf32, #tpu.memory_space<vmem>>, %arg5: memref<1x512xf32, #tpu.memory_space<vmem>>, %arg6: memref<128x128xf32, #tpu.memory_space<vmem>>, %arg7: memref<1x128xf32, #tpu.memory_space<vmem>>, %arg8: memref<32x128xf32, #tpu.memory_space<vmem>>, %arg9: memref<32x128xf32, #tpu.memory_space<vmem>>, %arg10: memref<32x128xf32, #tpu.memory_space<vmem>>, %arg11: memref<32x128xf32, #tpu.memory_space<vmem>>, %arg12: memref<256x128xf32, #tpu.memory_space<vmem>>, %arg13: memref<32x128xf32, #tpu.memory_space<vmem>>, %arg14: memref<32x128xf32, #tpu.memory_space<vmem>>, %arg15: memref<32x128xf32, #tpu.memory_space<vmem>>, %arg16: memref<32x128xf32, #tpu.memory_space<vmem>>, %arg17: memref<8x32x128xf32, #tpu.memory_space<vmem>>) attributes {dimension_semantics = [#tpu.dimension_semantics<arbitrary>], iteration_bounds = array<i64: 1>, scalar_prefetch = 0 : i64, scratch_operands = 1 : i64, tpu.core_type = #tpu.core_type<tc>, window_params = [{pipeline_mode = #tpu.pipeline_mode<synchronous>, transform_indices = @transform_0, window_bounds = array<i64: 8, 32, 512>}, {pipeline_mode = #tpu.pipeline_mode<synchronous>, transform_indices = @transform_1, window_bounds = array<i64: 128, 512>}, {pipeline_mode = #tpu.pipeline_mode<synchronous>, transform_indices = @transform_2, window_bounds = array<i64: 128, 512>}, {pipeline_mode = #tpu.pipeline_mode<synchronous>, transform_indices = @transform_3, window_bounds = array<i64: 128, 512>}, {pipeline_mode = #tpu.pipeline_mode<synchronous>, transform_indices = @transform_4, window_bounds = array<i64: 1, 512>}, {pipeline_mode = #tpu.pipeline_mode<synchronous>, transform_indices = @transform_5, window_bounds = array<i64: 128, 128>}, {pipeline_mode = #tpu.pipeline_mode<synchronous>, transform_indices = @transform_6, window_bounds = array<i64: 1, 128>}, {pipeline_mode = #tpu.pipeline_mode<synchronous>, transform_indices = @transform_7, window_bounds = array<i64: 32, 128>}, {pipeline_mode = #tpu.pipeline_mode<synchronous>, transform_indices = @transform_8, window_bounds = array<i64: 32, 128>}, {pipeline_mode = #tpu.pipeline_mode<synchronous>, transform_indices = @transform_9, window_bounds = array<i64: 32, 128>}, {pipeline_mode = #tpu.pipeline_mode<synchronous>, transform_indices = @transform_10, window_bounds = array<i64: 32, 128>}, {pipeline_mode = #tpu.pipeline_mode<synchronous>, transform_indices = @transform_11, window_bounds = array<i64: 256, 128>}, {pipeline_mode = #tpu.pipeline_mode<synchronous>, transform_indices = @transform_12, window_bounds = array<i64: 32, 128>}, {pipeline_mode = #tpu.pipeline_mode<synchronous>, transform_indices = @transform_13, window_bounds = array<i64: 32, 128>}, {pipeline_mode = #tpu.pipeline_mode<synchronous>, transform_indices = @transform_14, window_bounds = array<i64: 32, 128>}, {pipeline_mode = #tpu.pipeline_mode<synchronous>, transform_indices = @transform_15, window_bounds = array<i64: 32, 128>}]} {
    %c0 = arith.constant 0 : index
    %c0_0 = arith.constant 0 : index
    %0 = vector.load %arg2[%c0, %c0_0] : memref<128x512xf32, #tpu.memory_space<vmem>>, vector<128x512xf32>
    %c0_1 = arith.constant 0 : index
    %c0_2 = arith.constant 0 : index
    %1 = vector.load %arg3[%c0_1, %c0_2] : memref<128x512xf32, #tpu.memory_space<vmem>>, vector<128x512xf32>
    %c0_3 = arith.constant 0 : index
    %c0_4 = arith.constant 0 : index
    %2 = vector.load %arg4[%c0_3, %c0_4] : memref<128x512xf32, #tpu.memory_space<vmem>>, vector<128x512xf32>
    %c0_5 = arith.constant 0 : index
    %c0_6 = arith.constant 0 : index
    %3 = vector.load %arg5[%c0_5, %c0_6] : memref<1x512xf32, #tpu.memory_space<vmem>>, vector<1x512xf32>
    %4 = vector.shape_cast %3 : vector<1x512xf32> to vector<1x512xf32>
    %5 = vector.broadcast %4 : vector<1x512xf32> to vector<32x512xf32>
    %c0_7 = arith.constant 0 : index
    %c0_8 = arith.constant 0 : index
    %6 = vector.load %arg8[%c0_7, %c0_8] : memref<32x128xf32, #tpu.memory_space<vmem>>, vector<32x128xf32>
    %c0_9 = arith.constant 0 : index
    %c0_10 = arith.constant 0 : index
    %7 = vector.load %arg9[%c0_9, %c0_10] : memref<32x128xf32, #tpu.memory_space<vmem>>, vector<32x128xf32>
    %c0_11 = arith.constant 0 : index
    %c0_12 = arith.constant 0 : index
    %8 = vector.load %arg10[%c0_11, %c0_12] : memref<32x128xf32, #tpu.memory_space<vmem>>, vector<32x128xf32>
    %c0_13 = arith.constant 0 : index
    %c0_14 = arith.constant 0 : index
    %9 = vector.load %arg11[%c0_13, %c0_14] : memref<32x128xf32, #tpu.memory_space<vmem>>, vector<32x128xf32>
    %cst = arith.constant dense<0.000000e+00> : vector<32x512xf32>
    %10 = tpu.matmul %8, %2, %cst {dimension_numbers = #tpu.dot_dimension_numbers<[1], [0], [0], [1], [0, 0, 1, 1], [], []>} : vector<32x128xf32>, vector<128x512xf32>, vector<32x512xf32> -> vector<32x512xf32>
    %11 = arith.addf %10, %5 : vector<32x512xf32>
    %c0_15 = arith.constant 0 : index
    %c0_16 = arith.constant 0 : index
    %c0_17 = arith.constant 0 : index
    %12 = vector.load %arg1[%c0_15, %c0_16, %c0_17] : memref<8x32x512xf32, #tpu.memory_space<vmem>>, vector<1x32x512xf32>
    %13 = vector.shape_cast %12 : vector<1x32x512xf32> to vector<32x512xf32>
    %cst_18 = arith.constant dense<0.000000e+00> : vector<32x512xf32>
    %14 = tpu.matmul %6, %0, %cst_18 {dimension_numbers = #tpu.dot_dimension_numbers<[1], [0], [0], [1], [0, 0, 1, 1], [], []>} : vector<32x128xf32>, vector<128x512xf32>, vector<32x512xf32> -> vector<32x512xf32>
    %15 = arith.addf %13, %14 : vector<32x512xf32>
    %16 = vector.extract_strided_slice %15 {offsets = [0, 0], sizes = [32, 384], strides = [1, 1]} : vector<32x512xf32> to vector<32x384xf32>
    %17 = arith.negf %16 : vector<32x384xf32>
    %18 = math.exp %17 : vector<32x384xf32>
    %cst_19 = arith.constant 1.000000e+00 : f32
    %19 = vector.broadcast %cst_19 : f32 to vector<32x384xf32>
    %20 = arith.addf %19, %18 : vector<32x384xf32>
    %21 = arith.divf %19, %20 : vector<32x384xf32>
    %22 = vector.extract_strided_slice %21 {offsets = [0, 0], sizes = [32, 128], strides = [1, 1]} : vector<32x384xf32> to vector<32x128xf32>
    %23 = vector.extract_strided_slice %21 {offsets = [0, 128], sizes = [32, 128], strides = [1, 1]} : vector<32x384xf32> to vector<32x128xf32>
    %24 = vector.extract_strided_slice %21 {offsets = [0, 256], sizes = [32, 128], strides = [1, 1]} : vector<32x384xf32> to vector<32x128xf32>
    %25 = vector.extract_strided_slice %15 {offsets = [0, 384], sizes = [32, 128], strides = [1, 1]} : vector<32x512xf32> to vector<32x128xf32>
    %26 = math.tanh %25 : vector<32x128xf32>
    %27 = arith.mulf %23, %7 : vector<32x128xf32>
    %28 = arith.mulf %22, %26 : vector<32x128xf32>
    %29 = arith.addf %27, %28 : vector<32x128xf32>
    %30 = math.tanh %29 : vector<32x128xf32>
    %31 = arith.mulf %24, %30 : vector<32x128xf32>
    %cst_20 = arith.constant dense<0.000000e+00> : vector<32x512xf32>
    %32 = tpu.matmul %31, %1, %cst_20 {dimension_numbers = #tpu.dot_dimension_numbers<[1], [0], [0], [1], [0, 0, 1, 1], [], []>} : vector<32x128xf32>, vector<128x512xf32>, vector<32x512xf32> -> vector<32x512xf32>
    %33 = arith.addf %32, %11 : vector<32x512xf32>
    %34 = vector.extract_strided_slice %33 {offsets = [0, 0], sizes = [32, 384], strides = [1, 1]} : vector<32x512xf32> to vector<32x384xf32>
    %35 = arith.negf %34 : vector<32x384xf32>
    %36 = math.exp %35 : vector<32x384xf32>
    %cst_21 = arith.constant 1.000000e+00 : f32
    %37 = vector.broadcast %cst_21 : f32 to vector<32x384xf32>
    %38 = arith.addf %37, %36 : vector<32x384xf32>
    %39 = arith.divf %37, %38 : vector<32x384xf32>
    %40 = vector.extract_strided_slice %39 {offsets = [0, 0], sizes = [32, 128], strides = [1, 1]} : vector<32x384xf32> to vector<32x128xf32>
    %41 = vector.extract_strided_slice %39 {offsets = [0, 128], sizes = [32, 128], strides = [1, 1]} : vector<32x384xf32> to vector<32x128xf32>
    %42 = vector.extract_strided_slice %39 {offsets = [0, 256], sizes = [32, 128], strides = [1, 1]} : vector<32x384xf32> to vector<32x128xf32>
    %43 = vector.extract_strided_slice %33 {offsets = [0, 384], sizes = [32, 128], strides = [1, 1]} : vector<32x512xf32> to vector<32x128xf32>
    %44 = math.tanh %43 : vector<32x128xf32>
    %45 = arith.mulf %41, %9 : vector<32x128xf32>
    %46 = arith.mulf %40, %44 : vector<32x128xf32>
    %47 = arith.addf %45, %46 : vector<32x128xf32>
    %48 = math.tanh %47 : vector<32x128xf32>
    %49 = arith.mulf %42, %48 : vector<32x128xf32>
    %c0_22 = arith.constant 0 : index
    %c0_23 = arith.constant 0 : index
    %c0_24 = arith.constant 0 : index
    %50 = vector.load %arg17[%c0_22, %c0_23, %c0_24] : memref<8x32x128xf32, #tpu.memory_space<vmem>>, vector<1x32x128xf32>
    %51 = vector.shape_cast %50 : vector<1x32x128xf32> to vector<32x128xf32>
    %52 = vector.shape_cast %49 : vector<32x128xf32> to vector<1x32x128xf32>
    tpu.vector_store %arg17[%c0_22, %c0_23, %c0_24], %52 {strides = array<i32>} : memref<8x32x128xf32, #tpu.memory_space<vmem>>, vector<1x32x128xf32>,
    %cst_25 = arith.constant dense<0.000000e+00> : vector<32x512xf32>
    %53 = tpu.matmul %49, %2, %cst_25 {dimension_numbers = #tpu.dot_dimension_numbers<[1], [0], [0], [1], [0, 0, 1, 1], [], []>} : vector<32x128xf32>, vector<128x512xf32>, vector<32x512xf32> -> vector<32x512xf32>
    %54 = arith.addf %53, %5 : vector<32x512xf32>
    %c1 = arith.constant 1 : index
    %c0_26 = arith.constant 0 : index
    %c0_27 = arith.constant 0 : index
    %55 = vector.load %arg1[%c1, %c0_26, %c0_27] : memref<8x32x512xf32, #tpu.memory_space<vmem>>, vector<1x32x512xf32>
    %56 = vector.shape_cast %55 : vector<1x32x512xf32> to vector<32x512xf32>
    %cst_28 = arith.constant dense<0.000000e+00> : vector<32x512xf32>
    %57 = tpu.matmul %31, %0, %cst_28 {dimension_numbers = #tpu.dot_dimension_numbers<[1], [0], [0], [1], [0, 0, 1, 1], [], []>} : vector<32x128xf32>, vector<128x512xf32>, vector<32x512xf32> -> vector<32x512xf32>
    %58 = arith.addf %56, %57 : vector<32x512xf32>
    %59 = vector.extract_strided_slice %58 {offsets = [0, 0], sizes = [32, 384], strides = [1, 1]} : vector<32x512xf32> to vector<32x384xf32>
    %60 = arith.negf %59 : vector<32x384xf32>
    %61 = math.exp %60 : vector<32x384xf32>
    %cst_29 = arith.constant 1.000000e+00 : f32
    %62 = vector.broadcast %cst_29 : f32 to vector<32x384xf32>
    %63 = arith.addf %62, %61 : vector<32x384xf32>
    %64 = arith.divf %62, %63 : vector<32x384xf32>
    %65 = vector.extract_strided_slice %64 {offsets = [0, 0], sizes = [32, 128], strides = [1, 1]} : vector<32x384xf32> to vector<32x128xf32>
    %66 = vector.extract_strided_slice %64 {offsets = [0, 128], sizes = [32, 128], strides = [1, 1]} : vector<32x384xf32> to vector<32x128xf32>
    %67 = vector.extract_strided_slice %64 {offsets = [0, 256], sizes = [32, 128], strides = [1, 1]} : vector<32x384xf32> to vector<32x128xf32>
    %68 = vector.extract_strided_slice %58 {offsets = [0, 384], sizes = [32, 128], strides = [1, 1]} : vector<32x512xf32> to vector<32x128xf32>
    %69 = math.tanh %68 : vector<32x128xf32>
    %70 = arith.mulf %66, %29 : vector<32x128xf32>
    %71 = arith.mulf %65, %69 : vector<32x128xf32>
    %72 = arith.addf %70, %71 : vector<32x128xf32>
    %73 = math.tanh %72 : vector<32x128xf32>
    %74 = arith.mulf %67, %73 : vector<32x128xf32>
    %cst_30 = arith.constant dense<0.000000e+00> : vector<32x512xf32>
    %75 = tpu.matmul %74, %1, %cst_30 {dimension_numbers = #tpu.dot_dimension_numbers<[1], [0], [0], [1], [0, 0, 1, 1], [], []>} : vector<32x128xf32>, vector<128x512xf32>, vector<32x512xf32> -> vector<32x512xf32>
    %76 = arith.addf %75, %54 : vector<32x512xf32>
    %77 = vector.extract_strided_slice %76 {offsets = [0, 0], sizes = [32, 384], strides = [1, 1]} : vector<32x512xf32> to vector<32x384xf32>
    %78 = arith.negf %77 : vector<32x384xf32>
    %79 = math.exp %78 : vector<32x384xf32>
    %cst_31 = arith.constant 1.000000e+00 : f32
    %80 = vector.broadcast %cst_31 : f32 to vector<32x384xf32>
    %81 = arith.addf %80, %79 : vector<32x384xf32>
    %82 = arith.divf %80, %81 : vector<32x384xf32>
    %83 = vector.extract_strided_slice %82 {offsets = [0, 0], sizes = [32, 128], strides = [1, 1]} : vector<32x384xf32> to vector<32x128xf32>
    %84 = vector.extract_strided_slice %82 {offsets = [0, 128], sizes = [32, 128], strides = [1, 1]} : vector<32x384xf32> to vector<32x128xf32>
    %85 = vector.extract_strided_slice %82 {offsets = [0, 256], sizes = [32, 128], strides = [1, 1]} : vector<32x384xf32> to vector<32x128xf32>
    %86 = vector.extract_strided_slice %76 {offsets = [0, 384], sizes = [32, 128], strides = [1, 1]} : vector<32x512xf32> to vector<32x128xf32>
    %87 = math.tanh %86 : vector<32x128xf32>
    %88 = arith.mulf %84, %47 : vector<32x128xf32>
    %89 = arith.mulf %83, %87 : vector<32x128xf32>
    %90 = arith.addf %88, %89 : vector<32x128xf32>
    %91 = math.tanh %90 : vector<32x128xf32>
    %92 = arith.mulf %85, %91 : vector<32x128xf32>
    %c1_32 = arith.constant 1 : index
    %c0_33 = arith.constant 0 : index
    %c0_34 = arith.constant 0 : index
    %93 = vector.load %arg17[%c1_32, %c0_33, %c0_34] : memref<8x32x128xf32, #tpu.memory_space<vmem>>, vector<1x32x128xf32>
    %94 = vector.shape_cast %93 : vector<1x32x128xf32> to vector<32x128xf32>
    %95 = vector.shape_cast %92 : vector<32x128xf32> to vector<1x32x128xf32>
    tpu.vector_store %arg17[%c1_32, %c0_33, %c0_34], %95 {strides = array<i32>} : memref<8x32x128xf32, #tpu.memory_space<vmem>>, vector<1x32x128xf32>,
    %cst_35 = arith.constant dense<0.000000e+00> : vector<32x512xf32>
    %96 = tpu.matmul %92, %2, %cst_35 {dimension_numbers = #tpu.dot_dimension_numbers<[1], [0], [0], [1], [0, 0, 1, 1], [], []>} : vector<32x128xf32>, vector<128x512xf32>, vector<32x512xf32> -> vector<32x512xf32>
    %97 = arith.addf %96, %5 : vector<32x512xf32>
    %c2 = arith.constant 2 : index
    %c0_36 = arith.constant 0 : index
    %c0_37 = arith.constant 0 : index
    %98 = vector.load %arg1[%c2, %c0_36, %c0_37] : memref<8x32x512xf32, #tpu.memory_space<vmem>>, vector<1x32x512xf32>
    %99 = vector.shape_cast %98 : vector<1x32x512xf32> to vector<32x512xf32>
    %cst_38 = arith.constant dense<0.000000e+00> : vector<32x512xf32>
    %100 = tpu.matmul %74, %0, %cst_38 {dimension_numbers = #tpu.dot_dimension_numbers<[1], [0], [0], [1], [0, 0, 1, 1], [], []>} : vector<32x128xf32>, vector<128x512xf32>, vector<32x512xf32> -> vector<32x512xf32>
    %101 = arith.addf %99, %100 : vector<32x512xf32>
    %102 = vector.extract_strided_slice %101 {offsets = [0, 0], sizes = [32, 384], strides = [1, 1]} : vector<32x512xf32> to vector<32x384xf32>
    %103 = arith.negf %102 : vector<32x384xf32>
    %104 = math.exp %103 : vector<32x384xf32>
    %cst_39 = arith.constant 1.000000e+00 : f32
    %105 = vector.broadcast %cst_39 : f32 to vector<32x384xf32>
    %106 = arith.addf %105, %104 : vector<32x384xf32>
    %107 = arith.divf %105, %106 : vector<32x384xf32>
    %108 = vector.extract_strided_slice %107 {offsets = [0, 0], sizes = [32, 128], strides = [1, 1]} : vector<32x384xf32> to vector<32x128xf32>
    %109 = vector.extract_strided_slice %107 {offsets = [0, 128], sizes = [32, 128], strides = [1, 1]} : vector<32x384xf32> to vector<32x128xf32>
    %110 = vector.extract_strided_slice %107 {offsets = [0, 256], sizes = [32, 128], strides = [1, 1]} : vector<32x384xf32> to vector<32x128xf32>
    %111 = vector.extract_strided_slice %101 {offsets = [0, 384], sizes = [32, 128], strides = [1, 1]} : vector<32x512xf32> to vector<32x128xf32>
    %112 = math.tanh %111 : vector<32x128xf32>
    %113 = arith.mulf %109, %72 : vector<32x128xf32>
    %114 = arith.mulf %108, %112 : vector<32x128xf32>
    %115 = arith.addf %113, %114 : vector<32x128xf32>
    %116 = math.tanh %115 : vector<32x128xf32>
    %117 = arith.mulf %110, %116 : vector<32x128xf32>
    %cst_40 = arith.constant dense<0.000000e+00> : vector<32x512xf32>
    %118 = tpu.matmul %117, %1, %cst_40 {dimension_numbers = #tpu.dot_dimension_numbers<[1], [0], [0], [1], [0, 0, 1, 1], [], []>} : vector<32x128xf32>, vector<128x512xf32>, vector<32x512xf32> -> vector<32x512xf32>
    %119 = arith.addf %118, %97 : vector<32x512xf32>
    %120 = vector.extract_strided_slice %119 {offsets = [0, 0], sizes = [32, 384], strides = [1, 1]} : vector<32x512xf32> to vector<32x384xf32>
    %121 = arith.negf %120 : vector<32x384xf32>
    %122 = math.exp %121 : vector<32x384xf32>
    %cst_41 = arith.constant 1.000000e+00 : f32
    %123 = vector.broadcast %cst_41 : f32 to vector<32x384xf32>
    %124 = arith.addf %123, %122 : vector<32x384xf32>
    %125 = arith.divf %123, %124 : vector<32x384xf32>
    %126 = vector.extract_strided_slice %125 {offsets = [0, 0], sizes = [32, 128], strides = [1, 1]} : vector<32x384xf32> to vector<32x128xf32>
    %127 = vector.extract_strided_slice %125 {offsets = [0, 128], sizes = [32, 128], strides = [1, 1]} : vector<32x384xf32> to vector<32x128xf32>
    %128 = vector.extract_strided_slice %125 {offsets = [0, 256], sizes = [32, 128], strides = [1, 1]} : vector<32x384xf32> to vector<32x128xf32>
    %129 = vector.extract_strided_slice %119 {offsets = [0, 384], sizes = [32, 128], strides = [1, 1]} : vector<32x512xf32> to vector<32x128xf32>
    %130 = math.tanh %129 : vector<32x128xf32>
    %131 = arith.mulf %127, %90 : vector<32x128xf32>
    %132 = arith.mulf %126, %130 : vector<32x128xf32>
    %133 = arith.addf %131, %132 : vector<32x128xf32>
    %134 = math.tanh %133 : vector<32x128xf32>
    %135 = arith.mulf %128, %134 : vector<32x128xf32>
    %c2_42 = arith.constant 2 : index
    %c0_43 = arith.constant 0 : index
    %c0_44 = arith.constant 0 : index
    %136 = vector.load %arg17[%c2_42, %c0_43, %c0_44] : memref<8x32x128xf32, #tpu.memory_space<vmem>>, vector<1x32x128xf32>
    %137 = vector.shape_cast %136 : vector<1x32x128xf32> to vector<32x128xf32>
    %138 = vector.shape_cast %135 : vector<32x128xf32> to vector<1x32x128xf32>
    tpu.vector_store %arg17[%c2_42, %c0_43, %c0_44], %138 {strides = array<i32>} : memref<8x32x128xf32, #tpu.memory_space<vmem>>, vector<1x32x128xf32>,
    %cst_45 = arith.constant dense<0.000000e+00> : vector<32x512xf32>
    %139 = tpu.matmul %135, %2, %cst_45 {dimension_numbers = #tpu.dot_dimension_numbers<[1], [0], [0], [1], [0, 0, 1, 1], [], []>} : vector<32x128xf32>, vector<128x512xf32>, vector<32x512xf32> -> vector<32x512xf32>
    %140 = arith.addf %139, %5 : vector<32x512xf32>
    %c3 = arith.constant 3 : index
    %c0_46 = arith.constant 0 : index
    %c0_47 = arith.constant 0 : index
    %141 = vector.load %arg1[%c3, %c0_46, %c0_47] : memref<8x32x512xf32, #tpu.memory_space<vmem>>, vector<1x32x512xf32>
    %142 = vector.shape_cast %141 : vector<1x32x512xf32> to vector<32x512xf32>
    %cst_48 = arith.constant dense<0.000000e+00> : vector<32x512xf32>
    %143 = tpu.matmul %117, %0, %cst_48 {dimension_numbers = #tpu.dot_dimension_numbers<[1], [0], [0], [1], [0, 0, 1, 1], [], []>} : vector<32x128xf32>, vector<128x512xf32>, vector<32x512xf32> -> vector<32x512xf32>
    %144 = arith.addf %142, %143 : vector<32x512xf32>
    %145 = vector.extract_strided_slice %144 {offsets = [0, 0], sizes = [32, 384], strides = [1, 1]} : vector<32x512xf32> to vector<32x384xf32>
    %146 = arith.negf %145 : vector<32x384xf32>
    %147 = math.exp %146 : vector<32x384xf32>
    %cst_49 = arith.constant 1.000000e+00 : f32
    %148 = vector.broadcast %cst_49 : f32 to vector<32x384xf32>
    %149 = arith.addf %148, %147 : vector<32x384xf32>
    %150 = arith.divf %148, %149 : vector<32x384xf32>
    %151 = vector.extract_strided_slice %150 {offsets = [0, 0], sizes = [32, 128], strides = [1, 1]} : vector<32x384xf32> to vector<32x128xf32>
    %152 = vector.extract_strided_slice %150 {offsets = [0, 128], sizes = [32, 128], strides = [1, 1]} : vector<32x384xf32> to vector<32x128xf32>
    %153 = vector.extract_strided_slice %150 {offsets = [0, 256], sizes = [32, 128], strides = [1, 1]} : vector<32x384xf32> to vector<32x128xf32>
    %154 = vector.extract_strided_slice %144 {offsets = [0, 384], sizes = [32, 128], strides = [1, 1]} : vector<32x512xf32> to vector<32x128xf32>
    %155 = math.tanh %154 : vector<32x128xf32>
    %156 = arith.mulf %152, %115 : vector<32x128xf32>
    %157 = arith.mulf %151, %155 : vector<32x128xf32>
    %158 = arith.addf %156, %157 : vector<32x128xf32>
    %159 = math.tanh %158 : vector<32x128xf32>
    %160 = arith.mulf %153, %159 : vector<32x128xf32>
    %cst_50 = arith.constant dense<0.000000e+00> : vector<32x512xf32>
    %161 = tpu.matmul %160, %1, %cst_50 {dimension_numbers = #tpu.dot_dimension_numbers<[1], [0], [0], [1], [0, 0, 1, 1], [], []>} : vector<32x128xf32>, vector<128x512xf32>, vector<32x512xf32> -> vector<32x512xf32>
    %162 = arith.addf %161, %140 : vector<32x512xf32>
    %163 = vector.extract_strided_slice %162 {offsets = [0, 0], sizes = [32, 384], strides = [1, 1]} : vector<32x512xf32> to vector<32x384xf32>
    %164 = arith.negf %163 : vector<32x384xf32>
    %165 = math.exp %164 : vector<32x384xf32>
    %cst_51 = arith.constant 1.000000e+00 : f32
    %166 = vector.broadcast %cst_51 : f32 to vector<32x384xf32>
    %167 = arith.addf %166, %165 : vector<32x384xf32>
    %168 = arith.divf %166, %167 : vector<32x384xf32>
    %169 = vector.extract_strided_slice %168 {offsets = [0, 0], sizes = [32, 128], strides = [1, 1]} : vector<32x384xf32> to vector<32x128xf32>
    %170 = vector.extract_strided_slice %168 {offsets = [0, 128], sizes = [32, 128], strides = [1, 1]} : vector<32x384xf32> to vector<32x128xf32>
    %171 = vector.extract_strided_slice %168 {offsets = [0, 256], sizes = [32, 128], strides = [1, 1]} : vector<32x384xf32> to vector<32x128xf32>
    %172 = vector.extract_strided_slice %162 {offsets = [0, 384], sizes = [32, 128], strides = [1, 1]} : vector<32x512xf32> to vector<32x128xf32>
    %173 = math.tanh %172 : vector<32x128xf32>
    %174 = arith.mulf %170, %133 : vector<32x128xf32>
    %175 = arith.mulf %169, %173 : vector<32x128xf32>
    %176 = arith.addf %174, %175 : vector<32x128xf32>
    %177 = math.tanh %176 : vector<32x128xf32>
    %178 = arith.mulf %171, %177 : vector<32x128xf32>
    %c3_52 = arith.constant 3 : index
    %c0_53 = arith.constant 0 : index
    %c0_54 = arith.constant 0 : index
    %179 = vector.load %arg17[%c3_52, %c0_53, %c0_54] : memref<8x32x128xf32, #tpu.memory_space<vmem>>, vector<1x32x128xf32>
    %180 = vector.shape_cast %179 : vector<1x32x128xf32> to vector<32x128xf32>
    %181 = vector.shape_cast %178 : vector<32x128xf32> to vector<1x32x128xf32>
    tpu.vector_store %arg17[%c3_52, %c0_53, %c0_54], %181 {strides = array<i32>} : memref<8x32x128xf32, #tpu.memory_space<vmem>>, vector<1x32x128xf32>,
    %cst_55 = arith.constant dense<0.000000e+00> : vector<32x512xf32>
    %182 = tpu.matmul %178, %2, %cst_55 {dimension_numbers = #tpu.dot_dimension_numbers<[1], [0], [0], [1], [0, 0, 1, 1], [], []>} : vector<32x128xf32>, vector<128x512xf32>, vector<32x512xf32> -> vector<32x512xf32>
    %183 = arith.addf %182, %5 : vector<32x512xf32>
    %c4 = arith.constant 4 : index
    %c0_56 = arith.constant 0 : index
    %c0_57 = arith.constant 0 : index
    %184 = vector.load %arg1[%c4, %c0_56, %c0_57] : memref<8x32x512xf32, #tpu.memory_space<vmem>>, vector<1x32x512xf32>
    %185 = vector.shape_cast %184 : vector<1x32x512xf32> to vector<32x512xf32>
    %cst_58 = arith.constant dense<0.000000e+00> : vector<32x512xf32>
    %186 = tpu.matmul %160, %0, %cst_58 {dimension_numbers = #tpu.dot_dimension_numbers<[1], [0], [0], [1], [0, 0, 1, 1], [], []>} : vector<32x128xf32>, vector<128x512xf32>, vector<32x512xf32> -> vector<32x512xf32>
    %187 = arith.addf %185, %186 : vector<32x512xf32>
    %188 = vector.extract_strided_slice %187 {offsets = [0, 0], sizes = [32, 384], strides = [1, 1]} : vector<32x512xf32> to vector<32x384xf32>
    %189 = arith.negf %188 : vector<32x384xf32>
    %190 = math.exp %189 : vector<32x384xf32>
    %cst_59 = arith.constant 1.000000e+00 : f32
    %191 = vector.broadcast %cst_59 : f32 to vector<32x384xf32>
    %192 = arith.addf %191, %190 : vector<32x384xf32>
    %193 = arith.divf %191, %192 : vector<32x384xf32>
    %194 = vector.extract_strided_slice %193 {offsets = [0, 0], sizes = [32, 128], strides = [1, 1]} : vector<32x384xf32> to vector<32x128xf32>
    %195 = vector.extract_strided_slice %193 {offsets = [0, 128], sizes = [32, 128], strides = [1, 1]} : vector<32x384xf32> to vector<32x128xf32>
    %196 = vector.extract_strided_slice %193 {offsets = [0, 256], sizes = [32, 128], strides = [1, 1]} : vector<32x384xf32> to vector<32x128xf32>
    %197 = vector.extract_strided_slice %187 {offsets = [0, 384], sizes = [32, 128], strides = [1, 1]} : vector<32x512xf32> to vector<32x128xf32>
    %198 = math.tanh %197 : vector<32x128xf32>
    %199 = arith.mulf %195, %158 : vector<32x128xf32>
    %200 = arith.mulf %194, %198 : vector<32x128xf32>
    %201 = arith.addf %199, %200 : vector<32x128xf32>
    %202 = math.tanh %201 : vector<32x128xf32>
    %203 = arith.mulf %196, %202 : vector<32x128xf32>
    %cst_60 = arith.constant dense<0.000000e+00> : vector<32x512xf32>
    %204 = tpu.matmul %203, %1, %cst_60 {dimension_numbers = #tpu.dot_dimension_numbers<[1], [0], [0], [1], [0, 0, 1, 1], [], []>} : vector<32x128xf32>, vector<128x512xf32>, vector<32x512xf32> -> vector<32x512xf32>
    %205 = arith.addf %204, %183 : vector<32x512xf32>
    %206 = vector.extract_strided_slice %205 {offsets = [0, 0], sizes = [32, 384], strides = [1, 1]} : vector<32x512xf32> to vector<32x384xf32>
    %207 = arith.negf %206 : vector<32x384xf32>
    %208 = math.exp %207 : vector<32x384xf32>
    %cst_61 = arith.constant 1.000000e+00 : f32
    %209 = vector.broadcast %cst_61 : f32 to vector<32x384xf32>
    %210 = arith.addf %209, %208 : vector<32x384xf32>
    %211 = arith.divf %209, %210 : vector<32x384xf32>
    %212 = vector.extract_strided_slice %211 {offsets = [0, 0], sizes = [32, 128], strides = [1, 1]} : vector<32x384xf32> to vector<32x128xf32>
    %213 = vector.extract_strided_slice %211 {offsets = [0, 128], sizes = [32, 128], strides = [1, 1]} : vector<32x384xf32> to vector<32x128xf32>
    %214 = vector.extract_strided_slice %211 {offsets = [0, 256], sizes = [32, 128], strides = [1, 1]} : vector<32x384xf32> to vector<32x128xf32>
    %215 = vector.extract_strided_slice %205 {offsets = [0, 384], sizes = [32, 128], strides = [1, 1]} : vector<32x512xf32> to vector<32x128xf32>
    %216 = math.tanh %215 : vector<32x128xf32>
    %217 = arith.mulf %213, %176 : vector<32x128xf32>
    %218 = arith.mulf %212, %216 : vector<32x128xf32>
    %219 = arith.addf %217, %218 : vector<32x128xf32>
    %220 = math.tanh %219 : vector<32x128xf32>
    %221 = arith.mulf %214, %220 : vector<32x128xf32>
    %c4_62 = arith.constant 4 : index
    %c0_63 = arith.constant 0 : index
    %c0_64 = arith.constant 0 : index
    %222 = vector.load %arg17[%c4_62, %c0_63, %c0_64] : memref<8x32x128xf32, #tpu.memory_space<vmem>>, vector<1x32x128xf32>
    %223 = vector.shape_cast %222 : vector<1x32x128xf32> to vector<32x128xf32>
    %224 = vector.shape_cast %221 : vector<32x128xf32> to vector<1x32x128xf32>
    tpu.vector_store %arg17[%c4_62, %c0_63, %c0_64], %224 {strides = array<i32>} : memref<8x32x128xf32, #tpu.memory_space<vmem>>, vector<1x32x128xf32>,
    %cst_65 = arith.constant dense<0.000000e+00> : vector<32x512xf32>
    %225 = tpu.matmul %221, %2, %cst_65 {dimension_numbers = #tpu.dot_dimension_numbers<[1], [0], [0], [1], [0, 0, 1, 1], [], []>} : vector<32x128xf32>, vector<128x512xf32>, vector<32x512xf32> -> vector<32x512xf32>
    %226 = arith.addf %225, %5 : vector<32x512xf32>
    %c5 = arith.constant 5 : index
    %c0_66 = arith.constant 0 : index
    %c0_67 = arith.constant 0 : index
    %227 = vector.load %arg1[%c5, %c0_66, %c0_67] : memref<8x32x512xf32, #tpu.memory_space<vmem>>, vector<1x32x512xf32>
    %228 = vector.shape_cast %227 : vector<1x32x512xf32> to vector<32x512xf32>
    %cst_68 = arith.constant dense<0.000000e+00> : vector<32x512xf32>
    %229 = tpu.matmul %203, %0, %cst_68 {dimension_numbers = #tpu.dot_dimension_numbers<[1], [0], [0], [1], [0, 0, 1, 1], [], []>} : vector<32x128xf32>, vector<128x512xf32>, vector<32x512xf32> -> vector<32x512xf32>
    %230 = arith.addf %228, %229 : vector<32x512xf32>
    %231 = vector.extract_strided_slice %230 {offsets = [0, 0], sizes = [32, 384], strides = [1, 1]} : vector<32x512xf32> to vector<32x384xf32>
    %232 = arith.negf %231 : vector<32x384xf32>
    %233 = math.exp %232 : vector<32x384xf32>
    %cst_69 = arith.constant 1.000000e+00 : f32
    %234 = vector.broadcast %cst_69 : f32 to vector<32x384xf32>
    %235 = arith.addf %234, %233 : vector<32x384xf32>
    %236 = arith.divf %234, %235 : vector<32x384xf32>
    %237 = vector.extract_strided_slice %236 {offsets = [0, 0], sizes = [32, 128], strides = [1, 1]} : vector<32x384xf32> to vector<32x128xf32>
    %238 = vector.extract_strided_slice %236 {offsets = [0, 128], sizes = [32, 128], strides = [1, 1]} : vector<32x384xf32> to vector<32x128xf32>
    %239 = vector.extract_strided_slice %236 {offsets = [0, 256], sizes = [32, 128], strides = [1, 1]} : vector<32x384xf32> to vector<32x128xf32>
    %240 = vector.extract_strided_slice %230 {offsets = [0, 384], sizes = [32, 128], strides = [1, 1]} : vector<32x512xf32> to vector<32x128xf32>
    %241 = math.tanh %240 : vector<32x128xf32>
    %242 = arith.mulf %238, %201 : vector<32x128xf32>
    %243 = arith.mulf %237, %241 : vector<32x128xf32>
    %244 = arith.addf %242, %243 : vector<32x128xf32>
    %245 = math.tanh %244 : vector<32x128xf32>
    %246 = arith.mulf %239, %245 : vector<32x128xf32>
    %cst_70 = arith.constant dense<0.000000e+00> : vector<32x512xf32>
    %247 = tpu.matmul %246, %1, %cst_70 {dimension_numbers = #tpu.dot_dimension_numbers<[1], [0], [0], [1], [0, 0, 1, 1], [], []>} : vector<32x128xf32>, vector<128x512xf32>, vector<32x512xf32> -> vector<32x512xf32>
    %248 = arith.addf %247, %226 : vector<32x512xf32>
    %249 = vector.extract_strided_slice %248 {offsets = [0, 0], sizes = [32, 384], strides = [1, 1]} : vector<32x512xf32> to vector<32x384xf32>
    %250 = arith.negf %249 : vector<32x384xf32>
    %251 = math.exp %250 : vector<32x384xf32>
    %cst_71 = arith.constant 1.000000e+00 : f32
    %252 = vector.broadcast %cst_71 : f32 to vector<32x384xf32>
    %253 = arith.addf %252, %251 : vector<32x384xf32>
    %254 = arith.divf %252, %253 : vector<32x384xf32>
    %255 = vector.extract_strided_slice %254 {offsets = [0, 0], sizes = [32, 128], strides = [1, 1]} : vector<32x384xf32> to vector<32x128xf32>
    %256 = vector.extract_strided_slice %254 {offsets = [0, 128], sizes = [32, 128], strides = [1, 1]} : vector<32x384xf32> to vector<32x128xf32>
    %257 = vector.extract_strided_slice %254 {offsets = [0, 256], sizes = [32, 128], strides = [1, 1]} : vector<32x384xf32> to vector<32x128xf32>
    %258 = vector.extract_strided_slice %248 {offsets = [0, 384], sizes = [32, 128], strides = [1, 1]} : vector<32x512xf32> to vector<32x128xf32>
    %259 = math.tanh %258 : vector<32x128xf32>
    %260 = arith.mulf %256, %219 : vector<32x128xf32>
    %261 = arith.mulf %255, %259 : vector<32x128xf32>
    %262 = arith.addf %260, %261 : vector<32x128xf32>
    %263 = math.tanh %262 : vector<32x128xf32>
    %264 = arith.mulf %257, %263 : vector<32x128xf32>
    %c5_72 = arith.constant 5 : index
    %c0_73 = arith.constant 0 : index
    %c0_74 = arith.constant 0 : index
    %265 = vector.load %arg17[%c5_72, %c0_73, %c0_74] : memref<8x32x128xf32, #tpu.memory_space<vmem>>, vector<1x32x128xf32>
    %266 = vector.shape_cast %265 : vector<1x32x128xf32> to vector<32x128xf32>
    %267 = vector.shape_cast %264 : vector<32x128xf32> to vector<1x32x128xf32>
    tpu.vector_store %arg17[%c5_72, %c0_73, %c0_74], %267 {strides = array<i32>} : memref<8x32x128xf32, #tpu.memory_space<vmem>>, vector<1x32x128xf32>,
    %cst_75 = arith.constant dense<0.000000e+00> : vector<32x512xf32>
    %268 = tpu.matmul %264, %2, %cst_75 {dimension_numbers = #tpu.dot_dimension_numbers<[1], [0], [0], [1], [0, 0, 1, 1], [], []>} : vector<32x128xf32>, vector<128x512xf32>, vector<32x512xf32> -> vector<32x512xf32>
    %269 = arith.addf %268, %5 : vector<32x512xf32>
    %c6 = arith.constant 6 : index
    %c0_76 = arith.constant 0 : index
    %c0_77 = arith.constant 0 : index
    %270 = vector.load %arg1[%c6, %c0_76, %c0_77] : memref<8x32x512xf32, #tpu.memory_space<vmem>>, vector<1x32x512xf32>
    %271 = vector.shape_cast %270 : vector<1x32x512xf32> to vector<32x512xf32>
    %cst_78 = arith.constant dense<0.000000e+00> : vector<32x512xf32>
    %272 = tpu.matmul %246, %0, %cst_78 {dimension_numbers = #tpu.dot_dimension_numbers<[1], [0], [0], [1], [0, 0, 1, 1], [], []>} : vector<32x128xf32>, vector<128x512xf32>, vector<32x512xf32> -> vector<32x512xf32>
    %273 = arith.addf %271, %272 : vector<32x512xf32>
    %274 = vector.extract_strided_slice %273 {offsets = [0, 0], sizes = [32, 384], strides = [1, 1]} : vector<32x512xf32> to vector<32x384xf32>
    %275 = arith.negf %274 : vector<32x384xf32>
    %276 = math.exp %275 : vector<32x384xf32>
    %cst_79 = arith.constant 1.000000e+00 : f32
    %277 = vector.broadcast %cst_79 : f32 to vector<32x384xf32>
    %278 = arith.addf %277, %276 : vector<32x384xf32>
    %279 = arith.divf %277, %278 : vector<32x384xf32>
    %280 = vector.extract_strided_slice %279 {offsets = [0, 0], sizes = [32, 128], strides = [1, 1]} : vector<32x384xf32> to vector<32x128xf32>
    %281 = vector.extract_strided_slice %279 {offsets = [0, 128], sizes = [32, 128], strides = [1, 1]} : vector<32x384xf32> to vector<32x128xf32>
    %282 = vector.extract_strided_slice %279 {offsets = [0, 256], sizes = [32, 128], strides = [1, 1]} : vector<32x384xf32> to vector<32x128xf32>
    %283 = vector.extract_strided_slice %273 {offsets = [0, 384], sizes = [32, 128], strides = [1, 1]} : vector<32x512xf32> to vector<32x128xf32>
    %284 = math.tanh %283 : vector<32x128xf32>
    %285 = arith.mulf %281, %244 : vector<32x128xf32>
    %286 = arith.mulf %280, %284 : vector<32x128xf32>
    %287 = arith.addf %285, %286 : vector<32x128xf32>
    %288 = math.tanh %287 : vector<32x128xf32>
    %289 = arith.mulf %282, %288 : vector<32x128xf32>
    %cst_80 = arith.constant dense<0.000000e+00> : vector<32x512xf32>
    %290 = tpu.matmul %289, %1, %cst_80 {dimension_numbers = #tpu.dot_dimension_numbers<[1], [0], [0], [1], [0, 0, 1, 1], [], []>} : vector<32x128xf32>, vector<128x512xf32>, vector<32x512xf32> -> vector<32x512xf32>
    %291 = arith.addf %290, %269 : vector<32x512xf32>
    %292 = vector.extract_strided_slice %291 {offsets = [0, 0], sizes = [32, 384], strides = [1, 1]} : vector<32x512xf32> to vector<32x384xf32>
    %293 = arith.negf %292 : vector<32x384xf32>
    %294 = math.exp %293 : vector<32x384xf32>
    %cst_81 = arith.constant 1.000000e+00 : f32
    %295 = vector.broadcast %cst_81 : f32 to vector<32x384xf32>
    %296 = arith.addf %295, %294 : vector<32x384xf32>
    %297 = arith.divf %295, %296 : vector<32x384xf32>
    %298 = vector.extract_strided_slice %297 {offsets = [0, 0], sizes = [32, 128], strides = [1, 1]} : vector<32x384xf32> to vector<32x128xf32>
    %299 = vector.extract_strided_slice %297 {offsets = [0, 128], sizes = [32, 128], strides = [1, 1]} : vector<32x384xf32> to vector<32x128xf32>
    %300 = vector.extract_strided_slice %297 {offsets = [0, 256], sizes = [32, 128], strides = [1, 1]} : vector<32x384xf32> to vector<32x128xf32>
    %301 = vector.extract_strided_slice %291 {offsets = [0, 384], sizes = [32, 128], strides = [1, 1]} : vector<32x512xf32> to vector<32x128xf32>
    %302 = math.tanh %301 : vector<32x128xf32>
    %303 = arith.mulf %299, %262 : vector<32x128xf32>
    %304 = arith.mulf %298, %302 : vector<32x128xf32>
    %305 = arith.addf %303, %304 : vector<32x128xf32>
    %306 = math.tanh %305 : vector<32x128xf32>
    %307 = arith.mulf %300, %306 : vector<32x128xf32>
    %c6_82 = arith.constant 6 : index
    %c0_83 = arith.constant 0 : index
    %c0_84 = arith.constant 0 : index
    %308 = vector.load %arg17[%c6_82, %c0_83, %c0_84] : memref<8x32x128xf32, #tpu.memory_space<vmem>>, vector<1x32x128xf32>
    %309 = vector.shape_cast %308 : vector<1x32x128xf32> to vector<32x128xf32>
    %310 = vector.shape_cast %307 : vector<32x128xf32> to vector<1x32x128xf32>
    tpu.vector_store %arg17[%c6_82, %c0_83, %c0_84], %310 {strides = array<i32>} : memref<8x32x128xf32, #tpu.memory_space<vmem>>, vector<1x32x128xf32>,
    %cst_85 = arith.constant dense<0.000000e+00> : vector<32x512xf32>
    %311 = tpu.matmul %307, %2, %cst_85 {dimension_numbers = #tpu.dot_dimension_numbers<[1], [0], [0], [1], [0, 0, 1, 1], [], []>} : vector<32x128xf32>, vector<128x512xf32>, vector<32x512xf32> -> vector<32x512xf32>
    %312 = arith.addf %311, %5 : vector<32x512xf32>
    %c7 = arith.constant 7 : index
    %c0_86 = arith.constant 0 : index
    %c0_87 = arith.constant 0 : index
    %313 = vector.load %arg1[%c7, %c0_86, %c0_87] : memref<8x32x512xf32, #tpu.memory_space<vmem>>, vector<1x32x512xf32>
    %314 = vector.shape_cast %313 : vector<1x32x512xf32> to vector<32x512xf32>
    %cst_88 = arith.constant dense<0.000000e+00> : vector<32x512xf32>
    %315 = tpu.matmul %289, %0, %cst_88 {dimension_numbers = #tpu.dot_dimension_numbers<[1], [0], [0], [1], [0, 0, 1, 1], [], []>} : vector<32x128xf32>, vector<128x512xf32>, vector<32x512xf32> -> vector<32x512xf32>
    %316 = arith.addf %314, %315 : vector<32x512xf32>
    %317 = vector.extract_strided_slice %316 {offsets = [0, 0], sizes = [32, 384], strides = [1, 1]} : vector<32x512xf32> to vector<32x384xf32>
    %318 = arith.negf %317 : vector<32x384xf32>
    %319 = math.exp %318 : vector<32x384xf32>
    %cst_89 = arith.constant 1.000000e+00 : f32
    %320 = vector.broadcast %cst_89 : f32 to vector<32x384xf32>
    %321 = arith.addf %320, %319 : vector<32x384xf32>
    %322 = arith.divf %320, %321 : vector<32x384xf32>
    %323 = vector.extract_strided_slice %322 {offsets = [0, 0], sizes = [32, 128], strides = [1, 1]} : vector<32x384xf32> to vector<32x128xf32>
    %324 = vector.extract_strided_slice %322 {offsets = [0, 128], sizes = [32, 128], strides = [1, 1]} : vector<32x384xf32> to vector<32x128xf32>
    %325 = vector.extract_strided_slice %322 {offsets = [0, 256], sizes = [32, 128], strides = [1, 1]} : vector<32x384xf32> to vector<32x128xf32>
    %326 = vector.extract_strided_slice %316 {offsets = [0, 384], sizes = [32, 128], strides = [1, 1]} : vector<32x512xf32> to vector<32x128xf32>
    %327 = math.tanh %326 : vector<32x128xf32>
    %328 = arith.mulf %324, %287 : vector<32x128xf32>
    %329 = arith.mulf %323, %327 : vector<32x128xf32>
    %330 = arith.addf %328, %329 : vector<32x128xf32>
    %331 = math.tanh %330 : vector<32x128xf32>
    %332 = arith.mulf %325, %331 : vector<32x128xf32>
    %cst_90 = arith.constant dense<0.000000e+00> : vector<32x512xf32>
    %333 = tpu.matmul %332, %1, %cst_90 {dimension_numbers = #tpu.dot_dimension_numbers<[1], [0], [0], [1], [0, 0, 1, 1], [], []>} : vector<32x128xf32>, vector<128x512xf32>, vector<32x512xf32> -> vector<32x512xf32>
    %334 = arith.addf %333, %312 : vector<32x512xf32>
    %335 = vector.extract_strided_slice %334 {offsets = [0, 0], sizes = [32, 384], strides = [1, 1]} : vector<32x512xf32> to vector<32x384xf32>
    %336 = arith.negf %335 : vector<32x384xf32>
    %337 = math.exp %336 : vector<32x384xf32>
    %cst_91 = arith.constant 1.000000e+00 : f32
    %338 = vector.broadcast %cst_91 : f32 to vector<32x384xf32>
    %339 = arith.addf %338, %337 : vector<32x384xf32>
    %340 = arith.divf %338, %339 : vector<32x384xf32>
    %341 = vector.extract_strided_slice %340 {offsets = [0, 0], sizes = [32, 128], strides = [1, 1]} : vector<32x384xf32> to vector<32x128xf32>
    %342 = vector.extract_strided_slice %340 {offsets = [0, 128], sizes = [32, 128], strides = [1, 1]} : vector<32x384xf32> to vector<32x128xf32>
    %343 = vector.extract_strided_slice %340 {offsets = [0, 256], sizes = [32, 128], strides = [1, 1]} : vector<32x384xf32> to vector<32x128xf32>
    %344 = vector.extract_strided_slice %334 {offsets = [0, 384], sizes = [32, 128], strides = [1, 1]} : vector<32x512xf32> to vector<32x128xf32>
    %345 = math.tanh %344 : vector<32x128xf32>
    %346 = arith.mulf %342, %305 : vector<32x128xf32>
    %347 = arith.mulf %341, %345 : vector<32x128xf32>
    %348 = arith.addf %346, %347 : vector<32x128xf32>
    %349 = math.tanh %348 : vector<32x128xf32>
    %350 = arith.mulf %343, %349 : vector<32x128xf32>
    %c7_92 = arith.constant 7 : index
    %c0_93 = arith.constant 0 : index
    %c0_94 = arith.constant 0 : index
    %351 = vector.load %arg17[%c7_92, %c0_93, %c0_94] : memref<8x32x128xf32, #tpu.memory_space<vmem>>, vector<1x32x128xf32>
    %352 = vector.shape_cast %351 : vector<1x32x128xf32> to vector<32x128xf32>
    %353 = vector.shape_cast %350 : vector<32x128xf32> to vector<1x32x128xf32>
    tpu.vector_store %arg17[%c7_92, %c0_93, %c0_94], %353 {strides = array<i32>} : memref<8x32x128xf32, #tpu.memory_space<vmem>>, vector<1x32x128xf32>,
    %c0_95 = arith.constant 0 : index
    %c0_96 = arith.constant 0 : index
    %354 = vector.load %arg13[%c0_95, %c0_96] : memref<32x128xf32, #tpu.memory_space<vmem>>, vector<32x128xf32>
    tpu.vector_store %arg13[%c0_95, %c0_96], %332 {strides = array<i32>} : memref<32x128xf32, #tpu.memory_space<vmem>>, vector<32x128xf32>,
    %c0_97 = arith.constant 0 : index
    %c0_98 = arith.constant 0 : index
    %355 = vector.load %arg14[%c0_97, %c0_98] : memref<32x128xf32, #tpu.memory_space<vmem>>, vector<32x128xf32>
    tpu.vector_store %arg14[%c0_97, %c0_98], %330 {strides = array<i32>} : memref<32x128xf32, #tpu.memory_space<vmem>>, vector<32x128xf32>,
    %c0_99 = arith.constant 0 : index
    %c0_100 = arith.constant 0 : index
    %356 = vector.load %arg15[%c0_99, %c0_100] : memref<32x128xf32, #tpu.memory_space<vmem>>, vector<32x128xf32>
    tpu.vector_store %arg15[%c0_99, %c0_100], %350 {strides = array<i32>} : memref<32x128xf32, #tpu.memory_space<vmem>>, vector<32x128xf32>,
    %c0_101 = arith.constant 0 : index
    %c0_102 = arith.constant 0 : index
    %357 = vector.load %arg16[%c0_101, %c0_102] : memref<32x128xf32, #tpu.memory_space<vmem>>, vector<32x128xf32>
    tpu.vector_store %arg16[%c0_101, %c0_102], %348 {strides = array<i32>} : memref<32x128xf32, #tpu.memory_space<vmem>>, vector<32x128xf32>,
    %c0_103 = arith.constant 0 : index
    %c0_104 = arith.constant 0 : index
    %c0_105 = arith.constant 0 : index
    %358 = vector.load %arg17[%c0_103, %c0_104, %c0_105] : memref<8x32x128xf32, #tpu.memory_space<vmem>>, vector<8x32x128xf32>
    %359 = vector.shape_cast %358 : vector<8x32x128xf32> to vector<256x128xf32>
    %c0_106 = arith.constant 0 : index
    %c0_107 = arith.constant 0 : index
    %360 = vector.load %arg6[%c0_106, %c0_107] : memref<128x128xf32, #tpu.memory_space<vmem>>, vector<128x128xf32>
    %cst_108 = arith.constant dense<0.000000e+00> : vector<256x128xf32>
    %361 = tpu.matmul %359, %360, %cst_108 {dimension_numbers = #tpu.dot_dimension_numbers<[1], [0], [0], [1], [0, 0, 1, 1], [], []>} : vector<256x128xf32>, vector<128x128xf32>, vector<256x128xf32> -> vector<256x128xf32>
    %c0_109 = arith.constant 0 : index
    %c0_110 = arith.constant 0 : index
    %362 = vector.load %arg7[%c0_109, %c0_110] : memref<1x128xf32, #tpu.memory_space<vmem>>, vector<1x128xf32>
    %363 = vector.broadcast %362 : vector<1x128xf32> to vector<256x128xf32>
    %364 = arith.addf %361, %363 : vector<256x128xf32>
    %c0_111 = arith.constant 0 : index
    %c0_112 = arith.constant 0 : index
    %365 = vector.load %arg12[%c0_111, %c0_112] : memref<256x128xf32, #tpu.memory_space<vmem>>, vector<256x128xf32>
    tpu.vector_store %arg12[%c0_111, %c0_112], %364 {strides = array<i32>} : memref<256x128xf32, #tpu.memory_space<vmem>>, vector<256x128xf32>,
    return
  }
  func.func @transform_0(%arg0: i32) -> (i32, i32, i32) {
    %c0_i32 = arith.constant 0 : i32
    %c0_i32_0 = arith.constant 0 : i32
    %c0_i32_1 = arith.constant 0 : i32
    %c0_i32_2 = arith.constant 0 : i32
    return %c0_i32, %c0_i32_0, %c0_i32_1 : i32, i32, i32
  }
  func.func @transform_1(%arg0: i32) -> (i32, i32) {
    %c0_i32 = arith.constant 0 : i32
    %c0_i32_0 = arith.constant 0 : i32
    %c0_i32_1 = arith.constant 0 : i32
    return %c0_i32, %c0_i32_0 : i32, i32
  }
  func.func @transform_2(%arg0: i32) -> (i32, i32) {
    %c0_i32 = arith.constant 0 : i32
    %c0_i32_0 = arith.constant 0 : i32
    %c0_i32_1 = arith.constant 0 : i32
    return %c0_i32, %c0_i32_0 : i32, i32
  }
  func.func @transform_3(%arg0: i32) -> (i32, i32) {
    %c0_i32 = arith.constant 0 : i32
    %c0_i32_0 = arith.constant 0 : i32
    %c0_i32_1 = arith.constant 0 : i32
    return %c0_i32, %c0_i32_0 : i32, i32
  }
  func.func @transform_4(%arg0: i32) -> (i32, i32) {
    %c0_i32 = arith.constant 0 : i32
    %c0_i32_0 = arith.constant 0 : i32
    %c0_i32_1 = arith.constant 0 : i32
    return %c0_i32, %c0_i32_0 : i32, i32
  }
  func.func @transform_5(%arg0: i32) -> (i32, i32) {
    %c0_i32 = arith.constant 0 : i32
    %c0_i32_0 = arith.constant 0 : i32
    %c0_i32_1 = arith.constant 0 : i32
    return %c0_i32, %c0_i32_0 : i32, i32
  }
  func.func @transform_6(%arg0: i32) -> (i32, i32) {
    %c0_i32 = arith.constant 0 : i32
    %c0_i32_0 = arith.constant 0 : i32
    %c0_i32_1 = arith.constant 0 : i32
    return %c0_i32, %c0_i32_0 : i32, i32
  }
  func.func @transform_7(%arg0: i32) -> (i32, i32) {
    %c0_i32 = arith.constant 0 : i32
    %c0_i32_0 = arith.constant 0 : i32
    %c0_i32_1 = arith.constant 0 : i32
    return %c0_i32, %c0_i32_0 : i32, i32
  }
  func.func @transform_8(%arg0: i32) -> (i32, i32) {
    %c0_i32 = arith.constant 0 : i32
    %c0_i32_0 = arith.constant 0 : i32
    %c0_i32_1 = arith.constant 0 : i32
    return %c0_i32, %c0_i32_0 : i32, i32
  }
  func.func @transform_9(%arg0: i32) -> (i32, i32) {
    %c0_i32 = arith.constant 0 : i32
    %c0_i32_0 = arith.constant 0 : i32
    %c0_i32_1 = arith.constant 0 : i32
    return %c0_i32, %c0_i32_0 : i32, i32
  }
  func.func @transform_10(%arg0: i32) -> (i32, i32) {
    %c0_i32 = arith.constant 0 : i32
    %c0_i32_0 = arith.constant 0 : i32
    %c0_i32_1 = arith.constant 0 : i32
    return %c0_i32, %c0_i32_0 : i32, i32
  }
  func.func @transform_11(%arg0: i32) -> (i32, i32) {
    %c0_i32 = arith.constant 0 : i32
    %c0_i32_0 = arith.constant 0 : i32
    %c0_i32_1 = arith.constant 0 : i32
    return %c0_i32, %c0_i32_0 : i32, i32
  }
  func.func @transform_12(%arg0: i32) -> (i32, i32) {
    %c0_i32 = arith.constant 0 : i32
    %c0_i32_0 = arith.constant 0 : i32
    %c0_i32_1 = arith.constant 0 : i32
    return %c0_i32, %c0_i32_0 : i32, i32
  }
  func.func @transform_13(%arg0: i32) -> (i32, i32) {
    %c0_i32 = arith.constant 0 : i32
    %c0_i32_0 = arith.constant 0 : i32
    %c0_i32_1 = arith.constant 0 : i32
    return %c0_i32, %c0_i32_0 : i32, i32
  }
  func.func @transform_14(%arg0: i32) -> (i32, i32) {
    %c0_i32 = arith.constant 0 : i32
    %c0_i32_0 = arith.constant 0 : i32
    %c0_i32_1 = arith.constant 0 : i32
    return %c0_i32, %c0_i32_0 : i32, i32
  }
  func.func @transform_15(%arg0: i32) -> (i32, i32) {
    %c0_i32 = arith.constant 0 : i32
    %c0_i32_0 = arith.constant 0 : i32
    %c0_i32_1 = arith.constant 0 : i32
    return %c0_i32, %c0_i32_0 : i32, i32
  }
}

</mosaic_0001>

<llo_original>
// kernel: tpu_custom_call.1
$region0: #{tpu_custom_call.1}
  #allocation0 [shape = 'u32[]', space=smem, size = 0x4, offset = 0x4, fixed_abs, tag = 'smem constant byte address 0x4 - core index']
  #allocation1 [shape = 'u32[144,128]{1,0:T(1,128)}', space=vmem, size = 0x12000, scoped, tag = 'internal scratch']
  #allocation2 [shape = 'f32[8,32,128]{2,1,0:T(8,128)}', space=vmem, size = 0x20000, scoped, tag = 'scratch operand']
  %s0 = inlined_call_operand.hbm [shape: f32[8,32,512], index: 0, kind: input, shape index: {}]
  %s1 = inlined_call_operand.hbm [shape: f32[128,512], index: 1, kind: input, shape index: {}]
  %s2 = inlined_call_operand.hbm [shape: f32[128,512], index: 2, kind: input, shape index: {}]
  %s3 = inlined_call_operand.hbm [shape: f32[128,512], index: 3, kind: input, shape index: {}]
  %s4 = inlined_call_operand.hbm [shape: f32[1,512], index: 4, kind: input, shape index: {}]
  %s5 = inlined_call_operand.hbm [shape: f32[128,128], index: 5, kind: input, shape index: {}]
  %s6 = inlined_call_operand.vmem [shape: f32[1,128], index: 6, kind: input, shape index: {}]
  %s7 = inlined_call_operand.hbm [shape: f32[32,128], index: 7, kind: input, shape index: {}]
  %s8 = inlined_call_operand.hbm [shape: f32[32,128], index: 8, kind: input, shape index: {}]
  %s9 = inlined_call_operand.vmem [shape: f32[32,128], index: 9, kind: input, shape index: {}]
  %s10 = inlined_call_operand.hbm [shape: f32[32,128], index: 10, kind: input, shape index: {}]
  %s11 = inlined_call_operand.hbm [shape: f32[256,128], index: 11, kind: output, shape index: {0}]
  %s12 = inlined_call_operand.hbm [shape: f32[32,128], index: 12, kind: output, shape index: {1}]
  %s13 = inlined_call_operand.hbm [shape: f32[32,128], index: 13, kind: output, shape index: {2}]
  %s14 = inlined_call_operand.hbm [shape: f32[32,128], index: 14, kind: output, shape index: {3}]
  %s15 = inlined_call_operand.hbm [shape: f32[32,128], index: 15, kind: output, shape index: {4}]
  %16 = xla_tuple %s11, %s12, %s13, %s14, %s15
  %s17 = sld [smem:[#allocation0]]
  $region122: #{tpu_custom_call.1} parent=0
    _
  %s19 = ssub.s32 1, %s17
  %s20 = scalar_select 0, %s19, %s17
  $region1: #{tpu_custom_call.1} parent=0
    #allocation3 [shape = 'u8[524288]{0}', space=vmem, size = 0x80000, scoped, tag = 'input window, operand 0, single buffered']
    #allocation4 [shape = 's32[1]{0}', space=sflag, size = 0x4, scoped, tag = 'scoped memory for tpu_custom_call.1']
    #allocation5 [shape = 's32[1]{0}', space=sflag, size = 0x4, scoped, tag = 'scoped memory for tpu_custom_call.1']
    #allocation6 [shape = 'u8[262144]{0}', space=vmem, size = 0x40000, scoped, tag = 'input window, operand 1, single buffered']
    #allocation7 [shape = 's32[1]{0}', space=sflag, size = 0x4, scoped, tag = 'scoped memory for tpu_custom_call.1']
    #allocation8 [shape = 'u8[262144]{0}', space=vmem, size = 0x40000, scoped, tag = 'input window, operand 2, single buffered']
    #allocation9 [shape = 'u8[262144]{0}', space=vmem, size = 0x40000, scoped, tag = 'input window, operand 3, single buffered']
    #allocation10 [shape = 's32[1]{0}', space=sflag, size = 0x4, scoped, tag = 'scoped memory for tpu_custom_call.1']
    #allocation11 [shape = 'u8[2048]{0}', space=vmem, size = 0x800, scoped, tag = 'input window, operand 4, single buffered']
    #allocation12 [shape = 'u8[65536]{0}', space=vmem, size = 0x10000, scoped, tag = 'input window, operand 5, single buffered']
    #allocation13 [shape = 's32[1]{0}', space=sflag, size = 0x4, scoped, tag = 'scoped memory for tpu_custom_call.1']
    #allocation14 [shape = 'u8[16384]{0}', space=vmem, size = 0x4000, scoped, tag = 'input window, operand 7, single buffered']
    #allocation15 [shape = 'u8[16384]{0}', space=vmem, size = 0x4000, scoped, tag = 'input window, operand 8, single buffered']
    #allocation16 [shape = 's32[1]{0}', space=sflag, size = 0x4, scoped, tag = 'scoped memory for tpu_custom_call.1']
    #allocation17 [shape = 'u8[16384]{0}', space=vmem, size = 0x4000, scoped, tag = 'input window, operand 10, single buffered']
    #allocation18 [shape = 'u8[131072]{0}', space=vmem, size = 0x20000, scoped, tag = 'output window, operand 0, single buffered']
    #allocation19 [shape = 'u8[16384]{0}', space=vmem, size = 0x4000, scoped, tag = 'output window, operand 1, single buffered']
    #allocation20 [shape = 's32[1]{0}', space=sflag, size = 0x4, scoped, tag = 'scoped memory for tpu_custom_call.1']
    #allocation21 [shape = 'u8[16384]{0}', space=vmem, size = 0x4000, scoped, tag = 'output window, operand 2, single buffered']
    #allocation22 [shape = 'u8[16384]{0}', space=vmem, size = 0x4000, scoped, tag = 'output window, operand 3, single buffered']
    #allocation23 [shape = 's32[1]{0}', space=sflag, size = 0x4, scoped, tag = 'scoped memory for tpu_custom_call.1']
    #allocation24 [shape = 'u8[16384]{0}', space=vmem, size = 0x4000, scoped, tag = 'output window, operand 4, single buffered']
    %21 = vsyncpa [#allocation4], 0
    %22 = vsyncpa [#allocation7], 0
    %23 = vsyncpa [#allocation10], 0
    %24 = vsyncpa [#allocation13], 0
    %25 = vsyncpa [#allocation16], 0
    %26 = vsyncpa [#allocation5], 0
    %27 = vsyncpa [#allocation20], 0
    %28 = vsyncpa [#allocation23], 0
    // Predicated region
    $region2: #{tpu_custom_call.1} parent=1 // pred_check
      _
    $region3: #{tpu_custom_call.1} parent=1 // pred_check_branch
      %30 = sbr.rel (0) target = $region5
    $region4: #{tpu_custom_call.1} parent=1 // pred_region
      %s32 = ssub.s32 16384, 16384
      %33 = vsyncadd [#allocation4], %s32
      %s34 = sshll.u32 [#allocation3], 4
      %s35 = int_to_ptr.vmem [resolvable:$true] %s34
      %40 = dma.hbm_to_vmem [thread:$0]  %s0, 16384, %s35, [#allocation4], 512, 512, 32
    $region5: #{tpu_custom_call.1} parent=1 // pred_fallthru
      _
    // Predicated region
    $region6: #{tpu_custom_call.1} parent=1 // pred_check
      _
    $region7: #{tpu_custom_call.1} parent=1 // pred_check_branch
      %42 = sbr.rel (0) target = $region9
    $region8: #{tpu_custom_call.1} parent=1 // pred_region
      %s44 = ssub.s32 8192, 8192
      %45 = vsyncadd [#allocation7], %s44
      %s46 = sshll.u32 [#allocation6], 4
      %s47 = int_to_ptr.vmem [resolvable:$true] %s46
      %52 = dma.hbm_to_vmem [thread:$0]  %s1, 8192, %s47, [#allocation7], 512, 512, 32
    $region9: #{tpu_custom_call.1} parent=1 // pred_fallthru
      _
    // Predicated region
    $region10: #{tpu_custom_call.1} parent=1 // pred_check
      _
    $region11: #{tpu_custom_call.1} parent=1 // pred_check_branch
      %54 = sbr.rel (0) target = $region13
    $region12: #{tpu_custom_call.1} parent=1 // pred_region
      %s56 = ssub.s32 8192, 8192
      %57 = vsyncadd [#allocation7], %s56
      %s58 = sshll.u32 [#allocation8], 4
      %s59 = int_to_ptr.vmem [resolvable:$true] %s58
      %64 = dma.hbm_to_vmem [thread:$0]  %s2, 8192, %s59, [#allocation7], 512, 512, 32
    $region13: #{tpu_custom_call.1} parent=1 // pred_fallthru
      _
    // Predicated region
    $region14: #{tpu_custom_call.1} parent=1 // pred_check
      _
    $region15: #{tpu_custom_call.1} parent=1 // pred_check_branch
      %66 = sbr.rel (0) target = $region17
    $region16: #{tpu_custom_call.1} parent=1 // pred_region
      %s68 = ssub.s32 8192, 8192
      %69 = vsyncadd [#allocation10], %s68
      %s70 = sshll.u32 [#allocation9], 4
      %s71 = int_to_ptr.vmem [resolvable:$true] %s70
      %76 = dma.hbm_to_vmem [thread:$0]  %s3, 8192, %s71, [#allocation10], 512, 512, 32
    $region17: #{tpu_custom_call.1} parent=1 // pred_fallthru
      _
    // Predicated region
    $region18: #{tpu_custom_call.1} parent=1 // pred_check
      _
    $region19: #{tpu_custom_call.1} parent=1 // pred_check_branch
      %78 = sbr.rel (0) target = $region21
    $region20: #{tpu_custom_call.1} parent=1 // pred_region
      %s80 = ssub.s32 64, 64
      %81 = vsyncadd [#allocation10], %s80
      %s83 = sshll.u32 [#allocation11], 4
      %s84 = int_to_ptr.vmem [resolvable:$true] %s83
      %86 = dma.hbm_to_vmem [thread:$0]  %s4, 64, %s84, [#allocation10]
    $region21: #{tpu_custom_call.1} parent=1 // pred_fallthru
      _
    // Predicated region
    $region22: #{tpu_custom_call.1} parent=1 // pred_check
      _
    $region23: #{tpu_custom_call.1} parent=1 // pred_check_branch
      %88 = sbr.rel (0) target = $region25
    $region24: #{tpu_custom_call.1} parent=1 // pred_region
      %s90 = ssub.s32 2048, 2048
      %91 = vsyncadd [#allocation13], %s90
      %s92 = sshll.u32 [#allocation12], 4
      %s93 = int_to_ptr.vmem [resolvable:$true] %s92
      %98 = dma.hbm_to_vmem [thread:$0]  %s5, 2048, %s93, [#allocation13], 128, 128, 8
    $region25: #{tpu_custom_call.1} parent=1 // pred_fallthru
      _
    // Predicated region
    $region26: #{tpu_custom_call.1} parent=1 // pred_check
      _
    $region27: #{tpu_custom_call.1} parent=1 // pred_check_branch
      %100 = sbr.rel (0) target = $region29
    $region28: #{tpu_custom_call.1} parent=1 // pred_region
      _
    $region29: #{tpu_custom_call.1} parent=1 // pred_fallthru
      _
    // Predicated region
    $region30: #{tpu_custom_call.1} parent=1 // pred_check
      _
    $region31: #{tpu_custom_call.1} parent=1 // pred_check_branch
      %102 = sbr.rel (0) target = $region33
    $region32: #{tpu_custom_call.1} parent=1 // pred_region
      %s104 = ssub.s32 512, 512
      %105 = vsyncadd [#allocation13], %s104
      %s106 = sshll.u32 [#allocation14], 4
      %s107 = int_to_ptr.vmem [resolvable:$true] %s106
      %112 = dma.hbm_to_vmem [thread:$0]  %s7, 512, %s107, [#allocation13], 128, 128, 8
    $region33: #{tpu_custom_call.1} parent=1 // pred_fallthru
      _
    // Predicated region
    $region34: #{tpu_custom_call.1} parent=1 // pred_check
      _
    $region35: #{tpu_custom_call.1} parent=1 // pred_check_branch
      %114 = sbr.rel (0) target = $region37
    $region36: #{tpu_custom_call.1} parent=1 // pred_region
      %s116 = ssub.s32 512, 512
      %117 = vsyncadd [#allocation16], %s116
      %s118 = sshll.u32 [#allocation15], 4
      %s119 = int_to_ptr.vmem [resolvable:$true] %s118
      %124 = dma.hbm_to_vmem [thread:$0]  %s8, 512, %s119, [#allocation16], 128, 128, 8
    $region37: #{tpu_custom_call.1} parent=1 // pred_fallthru
      _
    // Predicated region
    $region38: #{tpu_custom_call.1} parent=1 // pred_check
      _
    $region39: #{tpu_custom_call.1} parent=1 // pred_check_branch
      %126 = sbr.rel (0) target = $region41
    $region40: #{tpu_custom_call.1} parent=1 // pred_region
      _
    $region41: #{tpu_custom_call.1} parent=1 // pred_fallthru
      _
    // Predicated region
    $region42: #{tpu_custom_call.1} parent=1 // pred_check
      _
    $region43: #{tpu_custom_call.1} parent=1 // pred_check_branch
      %128 = sbr.rel (0) target = $region45
    $region44: #{tpu_custom_call.1} parent=1 // pred_region
      %s130 = ssub.s32 512, 512
      %131 = vsyncadd [#allocation16], %s130
      %s132 = sshll.u32 [#allocation17], 4
      %s133 = int_to_ptr.vmem [resolvable:$true] %s132
      %138 = dma.hbm_to_vmem [thread:$0]  %s10, 512, %s133, [#allocation16], 128, 128, 8
    $region45: #{tpu_custom_call.1} parent=1 // pred_fallthru
      _
    // Predicated region
    $region46: #{tpu_custom_call.1} parent=1 // pred_check
      _
    $region47: #{tpu_custom_call.1} parent=1 // pred_check_branch
      %140 = sbr.rel (0) target = $region49
    $region48: #{tpu_custom_call.1} parent=1 // pred_region
      %141 = dma.done [#allocation4], 16384
    $region49: #{tpu_custom_call.1} parent=1 // pred_fallthru
      _
    // Predicated region
    $region50: #{tpu_custom_call.1} parent=1 // pred_check
      _
    $region51: #{tpu_custom_call.1} parent=1 // pred_check_branch
      %143 = sbr.rel (0) target = $region53
    $region52: #{tpu_custom_call.1} parent=1 // pred_region
      %144 = dma.done [#allocation7], 8192
    $region53: #{tpu_custom_call.1} parent=1 // pred_fallthru
      _
    // Predicated region
    $region54: #{tpu_custom_call.1} parent=1 // pred_check
      _
    $region55: #{tpu_custom_call.1} parent=1 // pred_check_branch
      %146 = sbr.rel (0) target = $region57
    $region56: #{tpu_custom_call.1} parent=1 // pred_region
      %147 = dma.done [#allocation7], 8192
    $region57: #{tpu_custom_call.1} parent=1 // pred_fallthru
      _
    // Predicated region
    $region58: #{tpu_custom_call.1} parent=1 // pred_check
      _
    $region59: #{tpu_custom_call.1} parent=1 // pred_check_branch
      %149 = sbr.rel (0) target = $region61
    $region60: #{tpu_custom_call.1} parent=1 // pred_region
      %150 = dma.done [#allocation10], 8192
    $region61: #{tpu_custom_call.1} parent=1 // pred_fallthru
      _
    // Predicated region
    $region62: #{tpu_custom_call.1} parent=1 // pred_check
      _
    $region63: #{tpu_custom_call.1} parent=1 // pred_check_branch
      %152 = sbr.rel (0) target = $region65
    $region64: #{tpu_custom_call.1} parent=1 // pred_region
      %153 = dma.done [#allocation10], 64
    $region65: #{tpu_custom_call.1} parent=1 // pred_fallthru
      _
    // Predicated region
    $region66: #{tpu_custom_call.1} parent=1 // pred_check
      _
    $region67: #{tpu_custom_call.1} parent=1 // pred_check_branch
      %155 = sbr.rel (0) target = $region69
    $region68: #{tpu_custom_call.1} parent=1 // pred_region
      %156 = dma.done [#allocation13], 2048
    $region69: #{tpu_custom_call.1} parent=1 // pred_fallthru
      _
    // Predicated region
    $region70: #{tpu_custom_call.1} parent=1 // pred_check
      _
    $region71: #{tpu_custom_call.1} parent=1 // pred_check_branch
      %158 = sbr.rel (0) target = $region73
    $region72: #{tpu_custom_call.1} parent=1 // pred_region
      %159 = dma.done [#allocation13], 512
    $region73: #{tpu_custom_call.1} parent=1 // pred_fallthru
      _
    // Predicated region
    $region74: #{tpu_custom_call.1} parent=1 // pred_check
      _
    $region75: #{tpu_custom_call.1} parent=1 // pred_check_branch
      %161 = sbr.rel (0) target = $region77
    $region76: #{tpu_custom_call.1} parent=1 // pred_region
      %162 = dma.done [#allocation16], 512
    $region77: #{tpu_custom_call.1} parent=1 // pred_fallthru
      _
    // Predicated region
    $region78: #{tpu_custom_call.1} parent=1 // pred_check
      _
    $region79: #{tpu_custom_call.1} parent=1 // pred_check_branch
      %164 = sbr.rel (0) target = $region81
    $region80: #{tpu_custom_call.1} parent=1 // pred_region
      %165 = dma.done [#allocation16], 512
    $region81: #{tpu_custom_call.1} parent=1 // pred_fallthru
      _
    %v166 = vld [vmem:[#allocation6] sm:$0xff]
    %v167 = vld [vmem:[#allocation6 + $0x8] sm:$0xff]
    %v168 = vld [vmem:[#allocation6 + $0x10] sm:$0xff]
    %v169 = vld [vmem:[#allocation6 + $0x18] sm:$0xff]
    %v170 = vld [vmem:[#allocation6 + $0x20] sm:$0xff]
    %v171 = vld [vmem:[#allocation6 + $0x28] sm:$0xff]
    %v172 = vld [vmem:[#allocation6 + $0x30] sm:$0xff]
    %v173 = vld [vmem:[#allocation6 + $0x38] sm:$0xff]
    %v174 = vld [vmem:[#allocation6 + $0x40] sm:$0xff]
    %v175 = vld [vmem:[#allocation6 + $0x48] sm:$0xff]
    %v176 = vld [vmem:[#allocation6 + $0x50] sm:$0xff]
    %v177 = vld [vmem:[#allocation6 + $0x58] sm:$0xff]
    %v178 = vld [vmem:[#allocation6 + $0x60] sm:$0xff]
    %v179 = vld [vmem:[#allocation6 + $0x68] sm:$0xff]
    %v180 = vld [vmem:[#allocation6 + $0x70] sm:$0xff]
    %v181 = vld [vmem:[#allocation6 + $0x78] sm:$0xff]
    %v182 = vld [vmem:[#allocation6 + $0x80] sm:$0xff]
    %v183 = vld [vmem:[#allocation6 + $0x88] sm:$0xff]
    %v184 = vld [vmem:[#allocation6 + $0x90] sm:$0xff]
    %v185 = vld [vmem:[#allocation6 + $0x98] sm:$0xff]
    %v186 = vld [vmem:[#allocation6 + $0xa0] sm:$0xff]
    %v187 = vld [vmem:[#allocation6 + $0xa8] sm:$0xff]
    %v188 = vld [vmem:[#allocation6 + $0xb0] sm:$0xff]
    %v189 = vld [vmem:[#allocation6 + $0xb8] sm:$0xff]
    %v190 = vld [vmem:[#allocation6 + $0xc0] sm:$0xff]
    %v191 = vld [vmem:[#allocation6 + $0xc8] sm:$0xff]
    %v192 = vld [vmem:[#allocation6 + $0xd0] sm:$0xff]
    %v193 = vld [vmem:[#allocation6 + $0xd8] sm:$0xff]
    %v194 = vld [vmem:[#allocation6 + $0xe0] sm:$0xff]
    %v195 = vld [vmem:[#allocation6 + $0xe8] sm:$0xff]
    %v196 = vld [vmem:[#allocation6 + $0xf0] sm:$0xff]
    %v197 = vld [vmem:[#allocation6 + $0xf8] sm:$0xff]
    %v198 = vld [vmem:[#allocation6 + $0x100] sm:$0xff]
    %v199 = vld [vmem:[#allocation6 + $0x108] sm:$0xff]
    %v200 = vld [vmem:[#allocation6 + $0x110] sm:$0xff]
    %v201 = vld [vmem:[#allocation6 + $0x118] sm:$0xff]
    %v202 = vld [vmem:[#allocation6 + $0x120] sm:$0xff]
    %v203 = vld [vmem:[#allocation6 + $0x128] sm:$0xff]
    %v204 = vld [vmem:[#allocation6 + $0x130] sm:$0xff]
    %v205 = vld [vmem:[#allocation6 + $0x138] sm:$0xff]
    %v206 = vld [vmem:[#allocation6 + $0x140] sm:$0xff]
    %v207 = vld [vmem:[#allocation6 + $0x148] sm:$0xff]
    %v208 = vld [vmem:[#allocation6 + $0x150] sm:$0xff]
    %v209 = vld [vmem:[#allocation6 + $0x158] sm:$0xff]
    %v210 = vld [vmem:[#allocation6 + $0x160] sm:$0xff]
    %v211 = vld [vmem:[#allocation6 + $0x168] sm:$0xff]
    %v212 = vld [vmem:[#allocation6 + $0x170] sm:$0xff]
    %v213 = vld [vmem:[#allocation6 + $0x178] sm:$0xff]
    %v214 = vld [vmem:[#allocation6 + $0x180] sm:$0xff]
    %v215 = vld [vmem:[#allocation6 + $0x188] sm:$0xff]
    %v216 = vld [vmem:[#allocation6 + $0x190] sm:$0xff]
    %v217 = vld [vmem:[#allocation6 + $0x198] sm:$0xff]
    %v218 = vld [vmem:[#allocation6 + $0x1a0] sm:$0xff]
    %v219 = vld [vmem:[#allocation6 + $0x1a8] sm:$0xff]
    %v220 = vld [vmem:[#allocation6 + $0x1b0] sm:$0xff]
    %v221 = vld [vmem:[#allocation6 + $0x1b8] sm:$0xff]
    %v222 = vld [vmem:[#allocation6 + $0x1c0] sm:$0xff]
    %v223 = vld [vmem:[#allocation6 + $0x1c8] sm:$0xff]
    %v224 = vld [vmem:[#allocation6 + $0x1d0] sm:$0xff]
    %v225 = vld [vmem:[#allocation6 + $0x1d8] sm:$0xff]
    %v226 = vld [vmem:[#allocation6 + $0x1e0] sm:$0xff]
    %v227 = vld [vmem:[#allocation6 + $0x1e8] sm:$0xff]
    %v228 = vld [vmem:[#allocation6 + $0x1f0] sm:$0xff]
    %v229 = vld [vmem:[#allocation6 + $0x1f8] sm:$0xff]
    %v230 = vld [vmem:[#allocation8] sm:$0xff]
    %v231 = vld [vmem:[#allocation8 + $0x8] sm:$0xff]
    %v232 = vld [vmem:[#allocation8 + $0x10] sm:$0xff]
    %v233 = vld [vmem:[#allocation8 + $0x18] sm:$0xff]
    %v234 = vld [vmem:[#allocation8 + $0x20] sm:$0xff]
    %v235 = vld [vmem:[#allocation8 + $0x28] sm:$0xff]
    %v236 = vld [vmem:[#allocation8 + $0x30] sm:$0xff]
    %v237 = vld [vmem:[#allocation8 + $0x38] sm:$0xff]
    %v238 = vld [vmem:[#allocation8 + $0x40] sm:$0xff]
    %v239 = vld [vmem:[#allocation8 + $0x48] sm:$0xff]
    %v240 = vld [vmem:[#allocation8 + $0x50] sm:$0xff]
    %v241 = vld [vmem:[#allocation8 + $0x58] sm:$0xff]
    %v242 = vld [vmem:[#allocation8 + $0x60] sm:$0xff]
    %v243 = vld [vmem:[#allocation8 + $0x68] sm:$0xff]
    %v244 = vld [vmem:[#allocation8 + $0x70] sm:$0xff]
    %v245 = vld [vmem:[#allocation8 + $0x78] sm:$0xff]
    %v246 = vld [vmem:[#allocation8 + $0x80] sm:$0xff]
    %v247 = vld [vmem:[#allocation8 + $0x88] sm:$0xff]
    %v248 = vld [vmem:[#allocation8 + $0x90] sm:$0xff]
    %v249 = vld [vmem:[#allocation8 + $0x98] sm:$0xff]
    %v250 = vld [vmem:[#allocation8 + $0xa0] sm:$0xff]
    %v251 = vld [vmem:[#allocation8 + $0xa8] sm:$0xff]
    %v252 = vld [vmem:[#allocation8 + $0xb0] sm:$0xff]
    %v253 = vld [vmem:[#allocation8 + $0xb8] sm:$0xff]
    %v254 = vld [vmem:[#allocation8 + $0xc0] sm:$0xff]
    %v255 = vld [vmem:[#allocation8 + $0xc8] sm:$0xff]
    %v256 = vld [vmem:[#allocation8 + $0xd0] sm:$0xff]
    %v257 = vld [vmem:[#allocation8 + $0xd8] sm:$0xff]
    %v258 = vld [vmem:[#allocation8 + $0xe0] sm:$0xff]
    %v259 = vld [vmem:[#allocation8 + $0xe8] sm:$0xff]
    %v260 = vld [vmem:[#allocation8 + $0xf0] sm:$0xff]
    %v261 = vld [vmem:[#allocation8 + $0xf8] sm:$0xff]
    %v262 = vld [vmem:[#allocation8 + $0x100] sm:$0xff]
    %v263 = vld [vmem:[#allocation8 + $0x108] sm:$0xff]
    %v264 = vld [vmem:[#allocation8 + $0x110] sm:$0xff]
    %v265 = vld [vmem:[#allocation8 + $0x118] sm:$0xff]
    %v266 = vld [vmem:[#allocation8 + $0x120] sm:$0xff]
    %v267 = vld [vmem:[#allocation8 + $0x128] sm:$0xff]
    %v268 = vld [vmem:[#allocation8 + $0x130] sm:$0xff]
    %v269 = vld [vmem:[#allocation8 + $0x138] sm:$0xff]
    %v270 = vld [vmem:[#allocation8 + $0x140] sm:$0xff]
    %v271 = vld [vmem:[#allocation8 + $0x148] sm:$0xff]
    %v272 = vld [vmem:[#allocation8 + $0x150] sm:$0xff]
    %v273 = vld [vmem:[#allocation8 + $0x158] sm:$0xff]
    %v274 = vld [vmem:[#allocation8 + $0x160] sm:$0xff]
    %v275 = vld [vmem:[#allocation8 + $0x168] sm:$0xff]
    %v276 = vld [vmem:[#allocation8 + $0x170] sm:$0xff]
    %v277 = vld [vmem:[#allocation8 + $0x178] sm:$0xff]
    %v278 = vld [vmem:[#allocation8 + $0x180] sm:$0xff]
    %v279 = vld [vmem:[#allocation8 + $0x188] sm:$0xff]
    %v280 = vld [vmem:[#allocation8 + $0x190] sm:$0xff]
    %v281 = vld [vmem:[#allocation8 + $0x198] sm:$0xff]
    %v282 = vld [vmem:[#allocation8 + $0x1a0] sm:$0xff]
    %v283 = vld [vmem:[#allocation8 + $0x1a8] sm:$0xff]
    %v284 = vld [vmem:[#allocation8 + $0x1b0] sm:$0xff]
    %v285 = vld [vmem:[#allocation8 + $0x1b8] sm:$0xff]
    %v286 = vld [vmem:[#allocation8 + $0x1c0] sm:$0xff]
    %v287 = vld [vmem:[#allocation8 + $0x1c8] sm:$0xff]
    %v288 = vld [vmem:[#allocation8 + $0x1d0] sm:$0xff]
    %v289 = vld [vmem:[#allocation8 + $0x1d8] sm:$0xff]
    %v290 = vld [vmem:[#allocation8 + $0x1e0] sm:$0xff]
    %v291 = vld [vmem:[#allocation8 + $0x1e8] sm:$0xff]
    %v292 = vld [vmem:[#allocation8 + $0x1f0] sm:$0xff]
    %v293 = vld [vmem:[#allocation8 + $0x1f8] sm:$0xff]
    %v294 = vld [vmem:[#allocation9] sm:$0xff]
    %v295 = vld [vmem:[#allocation9 + $0x8] sm:$0xff]
    %v296 = vld [vmem:[#allocation9 + $0x10] sm:$0xff]
    %v297 = vld [vmem:[#allocation9 + $0x18] sm:$0xff]
    %v298 = vld [vmem:[#allocation9 + $0x20] sm:$0xff]
    %v299 = vld [vmem:[#allocation9 + $0x28] sm:$0xff]
    %v300 = vld [vmem:[#allocation9 + $0x30] sm:$0xff]
    %v301 = vld [vmem:[#allocation9 + $0x38] sm:$0xff]
    %v302 = vld [vmem:[#allocation9 + $0x40] sm:$0xff]
    %v303 = vld [vmem:[#allocation9 + $0x48] sm:$0xff]
    %v304 = vld [vmem:[#allocation9 + $0x50] sm:$0xff]
    %v305 = vld [vmem:[#allocation9 + $0x58] sm:$0xff]
    %v306 = vld [vmem:[#allocation9 + $0x60] sm:$0xff]
    %v307 = vld [vmem:[#allocation9 + $0x68] sm:$0xff]
    %v308 = vld [vmem:[#allocation9 + $0x70] sm:$0xff]
    %v309 = vld [vmem:[#allocation9 + $0x78] sm:$0xff]
    %v310 = vld [vmem:[#allocation9 + $0x80] sm:$0xff]
    %v311 = vld [vmem:[#allocation9 + $0x88] sm:$0xff]
    %v312 = vld [vmem:[#allocation9 + $0x90] sm:$0xff]
    %v313 = vld [vmem:[#allocation9 + $0x98] sm:$0xff]
    %v314 = vld [vmem:[#allocation9 + $0xa0] sm:$0xff]
    %v315 = vld [vmem:[#allocation9 + $0xa8] sm:$0xff]
    %v316 = vld [vmem:[#allocation9 + $0xb0] sm:$0xff]
    %v317 = vld [vmem:[#allocation9 + $0xb8] sm:$0xff]
    %v318 = vld [vmem:[#allocation9 + $0xc0] sm:$0xff]
    %v319 = vld [vmem:[#allocation9 + $0xc8] sm:$0xff]
    %v320 = vld [vmem:[#allocation9 + $0xd0] sm:$0xff]
    %v321 = vld [vmem:[#allocation9 + $0xd8] sm:$0xff]
    %v322 = vld [vmem:[#allocation9 + $0xe0] sm:$0xff]
    %v323 = vld [vmem:[#allocation9 + $0xe8] sm:$0xff]
    %v324 = vld [vmem:[#allocation9 + $0xf0] sm:$0xff]
    %v325 = vld [vmem:[#allocation9 + $0xf8] sm:$0xff]
    %v326 = vld [vmem:[#allocation9 + $0x100] sm:$0xff]
    %v327 = vld [vmem:[#allocation9 + $0x108] sm:$0xff]
    %v328 = vld [vmem:[#allocation9 + $0x110] sm:$0xff]
    %v329 = vld [vmem:[#allocation9 + $0x118] sm:$0xff]
    %v330 = vld [vmem:[#allocation9 + $0x120] sm:$0xff]
    %v331 = vld [vmem:[#allocation9 + $0x128] sm:$0xff]
    %v332 = vld [vmem:[#allocation9 + $0x130] sm:$0xff]
    %v333 = vld [vmem:[#allocation9 + $0x138] sm:$0xff]
    %v334 = vld [vmem:[#allocation9 + $0x140] sm:$0xff]
    %v335 = vld [vmem:[#allocation9 + $0x148] sm:$0xff]
    %v336 = vld [vmem:[#allocation9 + $0x150] sm:$0xff]
    %v337 = vld [vmem:[#allocation9 + $0x158] sm:$0xff]
    %v338 = vld [vmem:[#allocation9 + $0x160] sm:$0xff]
    %v339 = vld [vmem:[#allocation9 + $0x168] sm:$0xff]
    %v340 = vld [vmem:[#allocation9 + $0x170] sm:$0xff]
    %v341 = vld [vmem:[#allocation9 + $0x178] sm:$0xff]
    %v342 = vld [vmem:[#allocation9 + $0x180] sm:$0xff]
    %v343 = vld [vmem:[#allocation9 + $0x188] sm:$0xff]
    %v344 = vld [vmem:[#allocation9 + $0x190] sm:$0xff]
    %v345 = vld [vmem:[#allocation9 + $0x198] sm:$0xff]
    %v346 = vld [vmem:[#allocation9 + $0x1a0] sm:$0xff]
    %v347 = vld [vmem:[#allocation9 + $0x1a8] sm:$0xff]
    %v348 = vld [vmem:[#allocation9 + $0x1b0] sm:$0xff]
    %v349 = vld [vmem:[#allocation9 + $0x1b8] sm:$0xff]
    %v350 = vld [vmem:[#allocation9 + $0x1c0] sm:$0xff]
    %v351 = vld [vmem:[#allocation9 + $0x1c8] sm:$0xff]
    %v352 = vld [vmem:[#allocation9 + $0x1d0] sm:$0xff]
    %v353 = vld [vmem:[#allocation9 + $0x1d8] sm:$0xff]
    %v354 = vld [vmem:[#allocation9 + $0x1e0] sm:$0xff]
    %v355 = vld [vmem:[#allocation9 + $0x1e8] sm:$0xff]
    %v356 = vld [vmem:[#allocation9 + $0x1f0] sm:$0xff]
    %v357 = vld [vmem:[#allocation9 + $0x1f8] sm:$0xff]
    %v358 = vld [vmem:[#allocation11] sm:$0xf]
    %v360 = vlaneseq
    %v361 = vshrl.u32 %v360, 7
    %v362 = vsub.s32 0, %v361
    %v363 = vrot.slane %v358, %v362
    %v364 = vlaneseq
    %v365 = vshrl.u32 %v364, 7
    %v366 = vsub.s32 1, %v365
    %v367 = vrot.slane %v358, %v366
    %v368 = vlaneseq
    %v369 = vshrl.u32 %v368, 7
    %v370 = vsub.s32 2, %v369
    %v371 = vrot.slane %v358, %v370
    %v372 = vlaneseq
    %v373 = vshrl.u32 %v372, 7
    %v374 = vsub.s32 3, %v373
    %v375 = vrot.slane %v358, %v374
    %v380 = vld [vmem:[#allocation14] sm:$0xff]
    %v381 = vld [vmem:[#allocation14 + $0x8] sm:$0xff]
    %v382 = vld [vmem:[#allocation14 + $0x10] sm:$0xff]
    %v383 = vld [vmem:[#allocation14 + $0x18] sm:$0xff]
    %v384 = vld [vmem:[#allocation15] sm:$0xff]
    %v385 = vld [vmem:[#allocation15 + $0x8] sm:$0xff]
    %v386 = vld [vmem:[#allocation15 + $0x10] sm:$0xff]
    %v387 = vld [vmem:[#allocation15 + $0x18] sm:$0xff]
    %v388 = vld [vmem:[%s9] sm:$0xff]
    %v389 = vld [vmem:[%s9 + $0x8] sm:$0xff]
    %v390 = vld [vmem:[%s9 + $0x10] sm:$0xff]
    %v391 = vld [vmem:[%s9 + $0x18] sm:$0xff]
    %v392 = vld [vmem:[#allocation17] sm:$0xff]
    %v393 = vld [vmem:[#allocation17 + $0x8] sm:$0xff]
    %v394 = vld [vmem:[#allocation17 + $0x10] sm:$0xff]
    %v395 = vld [vmem:[#allocation17 + $0x18] sm:$0xff]
    %396 = vmatprep.subr.mxu0 %v295
    %397 = vmatpush1.msra.mxu0 %v294
    %398 = vmatprep.subr.mxu0 %v299
    %399 = vmatpush1.msra.mxu0 %v298
    %400 = vmatprep.subr.mxu0 %v303
    %401 = vmatpush1.msra.mxu0 %v302
    %402 = vmatprep.subr.mxu0 %v307
    %403 = vmatpush1.msra.mxu0 %v306
    %404 = vmatprep.subr.mxu0 %v311
    %405 = vmatpush1.msra.mxu0 %v310
    %406 = vmatprep.subr.mxu0 %v315
    %407 = vmatpush1.msra.mxu0 %v314
    %408 = vmatprep.subr.mxu0 %v319
    %409 = vmatpush1.msra.mxu0 %v318
    %410 = vmatprep.subr.mxu0 %v323
    %411 = vmatpush1.msra.mxu0 %v322
    %412 = vmatprep.subr.mxu0 %v327
    %413 = vmatpush1.msra.mxu0 %v326
    %414 = vmatprep.subr.mxu0 %v331
    %415 = vmatpush1.msra.mxu0 %v330
    %416 = vmatprep.subr.mxu0 %v335
    %417 = vmatpush1.msra.mxu0 %v334
    %418 = vmatprep.subr.mxu0 %v339
    %419 = vmatpush1.msra.mxu0 %v338
    %420 = vmatprep.subr.mxu0 %v343
    %421 = vmatpush1.msra.mxu0 %v342
    %422 = vmatprep.subr.mxu0 %v347
    %423 = vmatpush1.msra.mxu0 %v346
    %424 = vmatprep.subr.mxu0 %v351
    %425 = vmatpush1.msra.mxu0 %v350
    %426 = vmatprep.subr.mxu0 %v355
    %427 = vmatpush1.msra.mxu0 %v354
    %428 = vmatprep.subr.mxu0 0.0
    %429 = vmatpush1.msra.mxu0 0.0
    %430 = vmatprep.subr.mxu0 0.0
    %431 = vmatpush1.msra.mxu0 0.0
    %432 = vmatprep.subr.mxu0 0.0
    %433 = vmatpush1.msra.mxu0 0.0
    %434 = vmatprep.subr.mxu0 0.0
    %435 = vmatpush1.msra.mxu0 0.0
    %436 = vmatprep.subr.mxu0 0.0
    %437 = vmatpush1.msra.mxu0 0.0
    %438 = vmatprep.subr.mxu0 0.0
    %439 = vmatpush1.msra.mxu0 0.0
    %440 = vmatprep.subr.mxu0 0.0
    %441 = vmatpush1.msra.mxu0 0.0
    %442 = vmatprep.subr.mxu0 0.0
    %443 = vmatpush1.msra.mxu0 0.0
    %444 = vmatprep.subr.mxu0 0.0
    %445 = vmatpush1.msra.mxu0 0.0
    %446 = vmatprep.subr.mxu0 0.0
    %447 = vmatpush1.msra.mxu0 0.0
    %448 = vmatprep.subr.mxu0 0.0
    %449 = vmatpush1.msra.mxu0 0.0
    %450 = vmatprep.subr.mxu0 0.0
    %451 = vmatpush1.msra.mxu0 0.0
    %452 = vmatprep.subr.mxu0 0.0
    %453 = vmatpush1.msra.mxu0 0.0
    %454 = vmatprep.subr.mxu0 0.0
    %455 = vmatpush1.msra.mxu0 0.0
    %456 = vmatprep.subr.mxu0 0.0
    %457 = vmatpush1.msra.mxu0 0.0
    %458 = vmatprep.subr.mxu0 0.0
    %459 = vmatpush1.msra.mxu0 0.0
    %460 = vmatprep.mubr.f32.mxu0 0.0
    %461 = vmatmul.mubr.f32.gmra.mrb[0].mxu0 %v388
    %v462 = vpop.f32.mrb[0].mxu0
    %v463 = vadd.f32 %v363, %v462
    %v464 = vpop.f32.mrb[0].mxu0
    %v465 = vadd.f32 %v367, %v464
    %466 = vmatprep.mubr.f32.mxu0 0.0
    %467 = vmatmul.mubr.f32.gmra.mrb[0].mxu0 %v389
    %v468 = vpop.f32.mrb[0].mxu0
    %v469 = vadd.f32 %v363, %v468
    %v470 = vpop.f32.mrb[0].mxu0
    %v471 = vadd.f32 %v367, %v470
    %472 = vmatprep.mubr.f32.mxu0 0.0
    %473 = vmatmul.mubr.f32.gmra.mrb[0].mxu0 %v390
    %v474 = vpop.f32.mrb[0].mxu0
    %v475 = vadd.f32 %v363, %v474
    %v476 = vpop.f32.mrb[0].mxu0
    %v477 = vadd.f32 %v367, %v476
    %478 = vmatprep.mubr.f32.mxu0 0.0
    %479 = vmatmul.mubr.f32.gmra.mrb[0].mxu0 %v391
    %v480 = vpop.f32.mrb[0].mxu0
    %v481 = vadd.f32 %v363, %v480
    %v482 = vpop.f32.mrb[0].mxu0
    %v483 = vadd.f32 %v367, %v482
    %484 = vdwg.mxu0
    %485 = vmatprep.subr.mxu0 %v297
    %486 = vmatpush1.msra.mxu0 %v296
    %487 = vmatprep.subr.mxu0 %v301
    %488 = vmatpush1.msra.mxu0 %v300
    %489 = vmatprep.subr.mxu0 %v305
    %490 = vmatpush1.msra.mxu0 %v304
    %491 = vmatprep.subr.mxu0 %v309
    %492 = vmatpush1.msra.mxu0 %v308
    %493 = vmatprep.subr.mxu0 %v313
    %494 = vmatpush1.msra.mxu0 %v312
    %495 = vmatprep.subr.mxu0 %v317
    %496 = vmatpush1.msra.mxu0 %v316
    %497 = vmatprep.subr.mxu0 %v321
    %498 = vmatpush1.msra.mxu0 %v320
    %499 = vmatprep.subr.mxu0 %v325
    %500 = vmatpush1.msra.mxu0 %v324
    %501 = vmatprep.subr.mxu0 %v329
    %502 = vmatpush1.msra.mxu0 %v328
    %503 = vmatprep.subr.mxu0 %v333
    %504 = vmatpush1.msra.mxu0 %v332
    %505 = vmatprep.subr.mxu0 %v337
    %506 = vmatpush1.msra.mxu0 %v336
    %507 = vmatprep.subr.mxu0 %v341
    %508 = vmatpush1.msra.mxu0 %v340
    %509 = vmatprep.subr.mxu0 %v345
    %510 = vmatpush1.msra.mxu0 %v344
    %511 = vmatprep.subr.mxu0 %v349
    %512 = vmatpush1.msra.mxu0 %v348
    %513 = vmatprep.subr.mxu0 %v353
    %514 = vmatpush1.msra.mxu0 %v352
    %515 = vmatprep.subr.mxu0 %v357
    %516 = vmatpush1.msra.mxu0 %v356
    %517 = vmatprep.subr.mxu0 0.0
    %518 = vmatpush1.msra.mxu0 0.0
    %519 = vmatprep.subr.mxu0 0.0
    %520 = vmatpush1.msra.mxu0 0.0
    %521 = vmatprep.subr.mxu0 0.0
    %522 = vmatpush1.msra.mxu0 0.0
    %523 = vmatprep.subr.mxu0 0.0
    %524 = vmatpush1.msra.mxu0 0.0
    %525 = vmatprep.subr.mxu0 0.0
    %526 = vmatpush1.msra.mxu0 0.0
    %527 = vmatprep.subr.mxu0 0.0
    %528 = vmatpush1.msra.mxu0 0.0
    %529 = vmatprep.subr.mxu0 0.0
    %530 = vmatpush1.msra.mxu0 0.0
    %531 = vmatprep.subr.mxu0 0.0
    %532 = vmatpush1.msra.mxu0 0.0
    %533 = vmatprep.subr.mxu0 0.0
    %534 = vmatpush1.msra.mxu0 0.0
    %535 = vmatprep.subr.mxu0 0.0
    %536 = vmatpush1.msra.mxu0 0.0
    %537 = vmatprep.subr.mxu0 0.0
    %538 = vmatpush1.msra.mxu0 0.0
    %539 = vmatprep.subr.mxu0 0.0
    %540 = vmatpush1.msra.mxu0 0.0
    %541 = vmatprep.subr.mxu0 0.0
    %542 = vmatpush1.msra.mxu0 0.0
    %543 = vmatprep.subr.mxu0 0.0
    %544 = vmatpush1.msra.mxu0 0.0
    %545 = vmatprep.subr.mxu0 0.0
    %546 = vmatpush1.msra.mxu0 0.0
    %547 = vmatprep.subr.mxu0 0.0
    %548 = vmatpush1.msra.mxu0 0.0
    %549 = vmatprep.mubr.f32.mxu0 0.0
    %550 = vmatmul.mubr.f32.gmra.mrb[0].mxu0 %v388
    %v551 = vpop.f32.mrb[0].mxu0
    %v552 = vadd.f32 %v371, %v551
    %v553 = vpop.f32.mrb[0].mxu0
    %v554 = vadd.f32 %v375, %v553
    %555 = vmatprep.mubr.f32.mxu0 0.0
    %556 = vmatmul.mubr.f32.gmra.mrb[0].mxu0 %v389
    %v557 = vpop.f32.mrb[0].mxu0
    %v558 = vadd.f32 %v371, %v557
    %v559 = vpop.f32.mrb[0].mxu0
    %v560 = vadd.f32 %v375, %v559
    %561 = vmatprep.mubr.f32.mxu0 0.0
    %562 = vmatmul.mubr.f32.gmra.mrb[0].mxu0 %v390
    %v563 = vpop.f32.mrb[0].mxu0
    %v564 = vadd.f32 %v371, %v563
    %v565 = vpop.f32.mrb[0].mxu0
    %v566 = vadd.f32 %v375, %v565
    %567 = vmatprep.mubr.f32.mxu0 0.0
    %568 = vmatmul.mubr.f32.gmra.mrb[0].mxu0 %v391
    %v569 = vpop.f32.mrb[0].mxu0
    %v570 = vadd.f32 %v371, %v569
    %v571 = vpop.f32.mrb[0].mxu0
    %v572 = vadd.f32 %v375, %v571
    %573 = vdwg.mxu0
    %v574 = vld [vmem:[#allocation3] sm:$0xff]
    %v575 = vld [vmem:[#allocation3 + $0x8] sm:$0xff]
    %v576 = vld [vmem:[#allocation3 + $0x10] sm:$0xff]
    %v577 = vld [vmem:[#allocation3 + $0x18] sm:$0xff]
    %v578 = vld [vmem:[#allocation3 + $0x20] sm:$0xff]
    %v579 = vld [vmem:[#allocation3 + $0x28] sm:$0xff]
    %v580 = vld [vmem:[#allocation3 + $0x30] sm:$0xff]
    %v581 = vld [vmem:[#allocation3 + $0x38] sm:$0xff]
    %v582 = vld [vmem:[#allocation3 + $0x40] sm:$0xff]
    %v583 = vld [vmem:[#allocation3 + $0x48] sm:$0xff]
    %v584 = vld [vmem:[#allocation3 + $0x50] sm:$0xff]
    %v585 = vld [vmem:[#allocation3 + $0x58] sm:$0xff]
    %v586 = vld [vmem:[#allocation3 + $0x60] sm:$0xff]
    %v587 = vld [vmem:[#allocation3 + $0x68] sm:$0xff]
    %v588 = vld [vmem:[#allocation3 + $0x70] sm:$0xff]
    %v589 = vld [vmem:[#allocation3 + $0x78] sm:$0xff]
    %590 = vmatprep.subr.mxu0 %v167
    %591 = vmatpush1.msra.mxu0 %v166
    %592 = vmatprep.subr.mxu0 %v171
    %593 = vmatpush1.msra.mxu0 %v170
    %594 = vmatprep.subr.mxu0 %v175
    %595 = vmatpush1.msra.mxu0 %v174
    %596 = vmatprep.subr.mxu0 %v179
    %597 = vmatpush1.msra.mxu0 %v178
    %598 = vmatprep.subr.mxu0 %v183
    %599 = vmatpush1.msra.mxu0 %v182
    %600 = vmatprep.subr.mxu0 %v187
    %601 = vmatpush1.msra.mxu0 %v186
    %602 = vmatprep.subr.mxu0 %v191
    %603 = vmatpush1.msra.mxu0 %v190
    %604 = vmatprep.subr.mxu0 %v195
    %605 = vmatpush1.msra.mxu0 %v194
    %606 = vmatprep.subr.mxu0 %v199
    %607 = vmatpush1.msra.mxu0 %v198
    %608 = vmatprep.subr.mxu0 %v203
    %609 = vmatpush1.msra.mxu0 %v202
    %610 = vmatprep.subr.mxu0 %v207
    %611 = vmatpush1.msra.mxu0 %v206
    %612 = vmatprep.subr.mxu0 %v211
    %613 = vmatpush1.msra.mxu0 %v210
    %614 = vmatprep.subr.mxu0 %v215
    %615 = vmatpush1.msra.mxu0 %v214
    %616 = vmatprep.subr.mxu0 %v219
    %617 = vmatpush1.msra.mxu0 %v218
    %618 = vmatprep.subr.mxu0 %v223
    %619 = vmatpush1.msra.mxu0 %v222
    %620 = vmatprep.subr.mxu0 %v227
    %621 = vmatpush1.msra.mxu0 %v226
    %622 = vmatprep.subr.mxu0 0.0
    %623 = vmatpush1.msra.mxu0 0.0
    %624 = vmatprep.subr.mxu0 0.0
    %625 = vmatpush1.msra.mxu0 0.0
    %626 = vmatprep.subr.mxu0 0.0
    %627 = vmatpush1.msra.mxu0 0.0
    %628 = vmatprep.subr.mxu0 0.0
    %629 = vmatpush1.msra.mxu0 0.0
    %630 = vmatprep.subr.mxu0 0.0
    %631 = vmatpush1.msra.mxu0 0.0
    %632 = vmatprep.subr.mxu0 0.0
    %633 = vmatpush1.msra.mxu0 0.0
    %634 = vmatprep.subr.mxu0 0.0
    %635 = vmatpush1.msra.mxu0 0.0
    %636 = vmatprep.subr.mxu0 0.0
    %637 = vmatpush1.msra.mxu0 0.0
    %638 = vmatprep.subr.mxu0 0.0
    %639 = vmatpush1.msra.mxu0 0.0
    %640 = vmatprep.subr.mxu0 0.0
    %641 = vmatpush1.msra.mxu0 0.0
    %642 = vmatprep.subr.mxu0 0.0
    %643 = vmatpush1.msra.mxu0 0.0
    %644 = vmatprep.subr.mxu0 0.0
    %645 = vmatpush1.msra.mxu0 0.0
    %646 = vmatprep.subr.mxu0 0.0
    %647 = vmatpush1.msra.mxu0 0.0
    %648 = vmatprep.subr.mxu0 0.0
    %649 = vmatpush1.msra.mxu0 0.0
    %650 = vmatprep.subr.mxu0 0.0
    %651 = vmatpush1.msra.mxu0 0.0
    %652 = vmatprep.subr.mxu0 0.0
    %653 = vmatpush1.msra.mxu0 0.0
    %654 = vmatprep.mubr.f32.mxu0 0.0
    %655 = vmatmul.mubr.f32.gmra.mrb[0].mxu0 %v380
    %v656 = vpop.f32.mrb[0].mxu0
    %v657 = vadd.f32 0.0, %v656
    %v658 = vpop.f32.mrb[0].mxu0
    %v659 = vadd.f32 0.0, %v658
    %660 = vmatprep.mubr.f32.mxu0 0.0
    %661 = vmatmul.mubr.f32.gmra.mrb[0].mxu0 %v381
    %v662 = vpop.f32.mrb[0].mxu0
    %v663 = vadd.f32 0.0, %v662
    %v664 = vpop.f32.mrb[0].mxu0
    %v665 = vadd.f32 0.0, %v664
    %666 = vmatprep.mubr.f32.mxu0 0.0
    %667 = vmatmul.mubr.f32.gmra.mrb[0].mxu0 %v382
    %v668 = vpop.f32.mrb[0].mxu0
    %v669 = vadd.f32 0.0, %v668
    %v670 = vpop.f32.mrb[0].mxu0
    %v671 = vadd.f32 0.0, %v670
    %672 = vmatprep.mubr.f32.mxu0 0.0
    %673 = vmatmul.mubr.f32.gmra.mrb[0].mxu0 %v383
    %v674 = vpop.f32.mrb[0].mxu0
    %v675 = vadd.f32 0.0, %v674
    %v676 = vpop.f32.mrb[0].mxu0
    %v677 = vadd.f32 0.0, %v676
    %678 = vdwg.mxu0
    %679 = vmatprep.subr.mxu0 %v169
    %680 = vmatpush1.msra.mxu0 %v168
    %681 = vmatprep.subr.mxu0 %v173
    %682 = vmatpush1.msra.mxu0 %v172
    %683 = vmatprep.subr.mxu0 %v177
    %684 = vmatpush1.msra.mxu0 %v176
    %685 = vmatprep.subr.mxu0 %v181
    %686 = vmatpush1.msra.mxu0 %v180
    %687 = vmatprep.subr.mxu0 %v185
    %688 = vmatpush1.msra.mxu0 %v184
    %689 = vmatprep.subr.mxu0 %v189
    %690 = vmatpush1.msra.mxu0 %v188
    %691 = vmatprep.subr.mxu0 %v193
    %692 = vmatpush1.msra.mxu0 %v192
    %693 = vmatprep.subr.mxu0 %v197
    %694 = vmatpush1.msra.mxu0 %v196
    %695 = vmatprep.subr.mxu0 %v201
    %696 = vmatpush1.msra.mxu0 %v200
    %697 = vmatprep.subr.mxu0 %v205
    %698 = vmatpush1.msra.mxu0 %v204
    %699 = vmatprep.subr.mxu0 %v209
    %700 = vmatpush1.msra.mxu0 %v208
    %701 = vmatprep.subr.mxu0 %v213
    %702 = vmatpush1.msra.mxu0 %v212
    %703 = vmatprep.subr.mxu0 %v217
    %704 = vmatpush1.msra.mxu0 %v216
    %705 = vmatprep.subr.mxu0 %v221
    %706 = vmatpush1.msra.mxu0 %v220
    %707 = vmatprep.subr.mxu0 %v225
    %708 = vmatpush1.msra.mxu0 %v224
    %709 = vmatprep.subr.mxu0 %v229
    %710 = vmatpush1.msra.mxu0 %v228
    %711 = vmatprep.subr.mxu0 0.0
    %712 = vmatpush1.msra.mxu0 0.0
    %713 = vmatprep.subr.mxu0 0.0
    %714 = vmatpush1.msra.mxu0 0.0
    %715 = vmatprep.subr.mxu0 0.0
    %716 = vmatpush1.msra.mxu0 0.0
    %717 = vmatprep.subr.mxu0 0.0
    %718 = vmatpush1.msra.mxu0 0.0
    %719 = vmatprep.subr.mxu0 0.0
    %720 = vmatpush1.msra.mxu0 0.0
    %721 = vmatprep.subr.mxu0 0.0
    %722 = vmatpush1.msra.mxu0 0.0
    %723 = vmatprep.subr.mxu0 0.0
    %724 = vmatpush1.msra.mxu0 0.0
    %725 = vmatprep.subr.mxu0 0.0
    %726 = vmatpush1.msra.mxu0 0.0
    %727 = vmatprep.subr.mxu0 0.0
    %728 = vmatpush1.msra.mxu0 0.0
    %729 = vmatprep.subr.mxu0 0.0
    %730 = vmatpush1.msra.mxu0 0.0
    %731 = vmatprep.subr.mxu0 0.0
    %732 = vmatpush1.msra.mxu0 0.0
    %733 = vmatprep.subr.mxu0 0.0
    %734 = vmatpush1.msra.mxu0 0.0
    %735 = vmatprep.subr.mxu0 0.0
    %736 = vmatpush1.msra.mxu0 0.0
    %737 = vmatprep.subr.mxu0 0.0
    %738 = vmatpush1.msra.mxu0 0.0
    %739 = vmatprep.subr.mxu0 0.0
    %740 = vmatpush1.msra.mxu0 0.0
    %741 = vmatprep.subr.mxu0 0.0
    %742 = vmatpush1.msra.mxu0 0.0
    %743 = vmatprep.mubr.f32.mxu0 0.0
    %744 = vmatmul.mubr.f32.gmra.mrb[0].mxu0 %v380
    %v745 = vpop.f32.mrb[0].mxu0
    %v746 = vadd.f32 0.0, %v745
    %v747 = vpop.f32.mrb[0].mxu0
    %v748 = vadd.f32 0.0, %v747
    %749 = vmatprep.mubr.f32.mxu0 0.0
    %750 = vmatmul.mubr.f32.gmra.mrb[0].mxu0 %v381
    %v751 = vpop.f32.mrb[0].mxu0
    %v752 = vadd.f32 0.0, %v751
    %v753 = vpop.f32.mrb[0].mxu0
    %v754 = vadd.f32 0.0, %v753
    %755 = vmatprep.mubr.f32.mxu0 0.0
    %756 = vmatmul.mubr.f32.gmra.mrb[0].mxu0 %v382
    %v757 = vpop.f32.mrb[0].mxu0
    %v758 = vadd.f32 0.0, %v757
    %v759 = vpop.f32.mrb[0].mxu0
    %v760 = vadd.f32 0.0, %v759
    %761 = vmatprep.mubr.f32.mxu0 0.0
    %762 = vmatmul.mubr.f32.gmra.mrb[0].mxu0 %v383
    %v763 = vpop.f32.mrb[0].mxu0
    %v764 = vadd.f32 0.0, %v763
    %v765 = vpop.f32.mrb[0].mxu0
    %v766 = vadd.f32 0.0, %v765
    %767 = vdwg.mxu0
    %v768 = vadd.f32 %v574, %v657
    %v769 = vadd.f32 %v575, %v659
    %v770 = vadd.f32 %v576, %v746
    %v771 = vadd.f32 %v577, %v748
    %v772 = vadd.f32 %v578, %v663
    %v773 = vadd.f32 %v579, %v665
    %v774 = vadd.f32 %v580, %v752
    %v775 = vadd.f32 %v581, %v754
    %v776 = vadd.f32 %v582, %v669
    %v777 = vadd.f32 %v583, %v671
    %v778 = vadd.f32 %v584, %v758
    %v779 = vadd.f32 %v585, %v760
    %v780 = vadd.f32 %v586, %v675
    %v781 = vadd.f32 %v587, %v677
    %v782 = vadd.f32 %v588, %v764
    %v783 = vadd.f32 %v589, %v766
    %v784 = vxor.u32 %v768, 2147483648
    %v785 = vxor.u32 %v769, 2147483648
    %v786 = vxor.u32 %v770, 2147483648
    %v787 = vxor.u32 %v772, 2147483648
    %v788 = vxor.u32 %v773, 2147483648
    %v789 = vxor.u32 %v774, 2147483648
    %v790 = vxor.u32 %v776, 2147483648
    %v791 = vxor.u32 %v777, 2147483648
    %v792 = vxor.u32 %v778, 2147483648
    %v793 = vxor.u32 %v780, 2147483648
    %v794 = vxor.u32 %v781, 2147483648
    %v795 = vxor.u32 %v782, 2147483648
    %v796 = vmul.f32 %v784, 1.442695
    %v797 = vpow.pop %v796
    %v798 = vmul.f32 %v785, 1.442695
    %v799 = vpow.pop %v798
    %v800 = vmul.f32 %v786, 1.442695
    %v801 = vpow.pop %v800
    %v802 = vmul.f32 %v787, 1.442695
    %v803 = vpow.pop %v802
    %v804 = vmul.f32 %v788, 1.442695
    %v805 = vpow.pop %v804
    %v806 = vmul.f32 %v789, 1.442695
    %v807 = vpow.pop %v806
    %v808 = vmul.f32 %v790, 1.442695
    %v809 = vpow.pop %v808
    %v810 = vmul.f32 %v791, 1.442695
    %v811 = vpow.pop %v810
    %v812 = vmul.f32 %v792, 1.442695
    %v813 = vpow.pop %v812
    %v814 = vmul.f32 %v793, 1.442695
    %v815 = vpow.pop %v814
    %v816 = vmul.f32 %v794, 1.442695
    %v817 = vpow.pop %v816
    %v818 = vmul.f32 %v795, 1.442695
    %v819 = vpow.pop %v818
    %v820 = vadd.f32 %v797, 1.0
    %v821 = vadd.f32 %v799, 1.0
    %v822 = vadd.f32 %v801, 1.0
    %v823 = vadd.f32 %v803, 1.0
    %v824 = vadd.f32 %v805, 1.0
    %v825 = vadd.f32 %v807, 1.0
    %v826 = vadd.f32 %v809, 1.0
    %v827 = vadd.f32 %v811, 1.0
    %v828 = vadd.f32 %v813, 1.0
    %v829 = vadd.f32 %v815, 1.0
    %v830 = vadd.f32 %v817, 1.0
    %v831 = vadd.f32 %v819, 1.0
    %v832 = vrcp.pop %v820
    %v833 = vmul.f32 1.0, %v832
    %v834 = vrcp.pop %v821
    %v835 = vmul.f32 1.0, %v834
    %v836 = vrcp.pop %v822
    %v837 = vmul.f32 1.0, %v836
    %v838 = vrcp.pop %v823
    %v839 = vmul.f32 1.0, %v838
    %v840 = vrcp.pop %v824
    %v841 = vmul.f32 1.0, %v840
    %v842 = vrcp.pop %v825
    %v843 = vmul.f32 1.0, %v842
    %v844 = vrcp.pop %v826
    %v845 = vmul.f32 1.0, %v844
    %v846 = vrcp.pop %v827
    %v847 = vmul.f32 1.0, %v846
    %v848 = vrcp.pop %v828
    %v849 = vmul.f32 1.0, %v848
    %v850 = vrcp.pop %v829
    %v851 = vmul.f32 1.0, %v850
    %v852 = vrcp.pop %v830
    %v853 = vmul.f32 1.0, %v852
    %v854 = vrcp.pop %v831
    %v855 = vmul.f32 1.0, %v854
    %v856 = vtanh.pop %v771
    %v857 = vtanh.pop %v775
    %v858 = vtanh.pop %v779
    %v859 = vtanh.pop %v783
    %v860 = vmul.f32 %v835, %v384
    %v861 = vmul.f32 %v841, %v385
    %v862 = vmul.f32 %v847, %v386
    %v863 = vmul.f32 %v853, %v387
    %v864 = vmul.f32 %v833, %v856
    %v865 = vmul.f32 %v839, %v857
    %v866 = vmul.f32 %v845, %v858
    %v867 = vmul.f32 %v851, %v859
    %v868 = vadd.f32 %v860, %v864
    %v869 = vadd.f32 %v861, %v865
    %v870 = vadd.f32 %v862, %v866
    %v871 = vadd.f32 %v863, %v867
    %v872 = vtanh.pop %v868
    %v873 = vtanh.pop %v869
    %v874 = vtanh.pop %v870
    %v875 = vtanh.pop %v871
    %v876 = vmul.f32 %v837, %v872
    %v877 = vmul.f32 %v843, %v873
    %v878 = vmul.f32 %v849, %v874
    %v879 = vmul.f32 %v855, %v875
    %880 = vmatprep.subr.mxu0 %v231
    %881 = vmatpush1.msra.mxu0 %v230
    %882 = vmatprep.subr.mxu0 %v235
    %883 = vmatpush1.msra.mxu0 %v234
    %884 = vmatprep.subr.mxu0 %v239
    %885 = vmatpush1.msra.mxu0 %v238
    %886 = vmatprep.subr.mxu0 %v243
    %887 = vmatpush1.msra.mxu0 %v242
    %888 = vmatprep.subr.mxu0 %v247
    %889 = vmatpush1.msra.mxu0 %v246
    %890 = vmatprep.subr.mxu0 %v251
    %891 = vmatpush1.msra.mxu0 %v250
    %892 = vmatprep.subr.mxu0 %v255
    %893 = vmatpush1.msra.mxu0 %v254
    %894 = vmatprep.subr.mxu0 %v259
    %895 = vmatpush1.msra.mxu0 %v258
    %896 = vmatprep.subr.mxu0 %v263
    %897 = vmatpush1.msra.mxu0 %v262
    %898 = vmatprep.subr.mxu0 %v267
    %899 = vmatpush1.msra.mxu0 %v266
    %900 = vmatprep.subr.mxu0 %v271
    %901 = vmatpush1.msra.mxu0 %v270
    %902 = vmatprep.subr.mxu0 %v275
    %903 = vmatpush1.msra.mxu0 %v274
    %904 = vmatprep.subr.mxu0 %v279
    %905 = vmatpush1.msra.mxu0 %v278
    %906 = vmatprep.subr.mxu0 %v283
    %907 = vmatpush1.msra.mxu0 %v282
    %908 = vmatprep.subr.mxu0 %v287
    %909 = vmatpush1.msra.mxu0 %v286
    %910 = vmatprep.subr.mxu0 %v291
    %911 = vmatpush1.msra.mxu0 %v290
    %912 = vmatprep.subr.mxu0 0.0
    %913 = vmatpush1.msra.mxu0 0.0
    %914 = vmatprep.subr.mxu0 0.0
    %915 = vmatpush1.msra.mxu0 0.0
    %916 = vmatprep.subr.mxu0 0.0
    %917 = vmatpush1.msra.mxu0 0.0
    %918 = vmatprep.subr.mxu0 0.0
    %919 = vmatpush1.msra.mxu0 0.0
    %920 = vmatprep.subr.mxu0 0.0
    %921 = vmatpush1.msra.mxu0 0.0
    %922 = vmatprep.subr.mxu0 0.0
    %923 = vmatpush1.msra.mxu0 0.0
    %924 = vmatprep.subr.mxu0 0.0
    %925 = vmatpush1.msra.mxu0 0.0
    %926 = vmatprep.subr.mxu0 0.0
    %927 = vmatpush1.msra.mxu0 0.0
    %928 = vmatprep.subr.mxu0 0.0
    %929 = vmatpush1.msra.mxu0 0.0
    %930 = vmatprep.subr.mxu0 0.0
    %931 = vmatpush1.msra.mxu0 0.0
    %932 = vmatprep.subr.mxu0 0.0
    %933 = vmatpush1.msra.mxu0 0.0
    %934 = vmatprep.subr.mxu0 0.0
    %935 = vmatpush1.msra.mxu0 0.0
    %936 = vmatprep.subr.mxu0 0.0
    %937 = vmatpush1.msra.mxu0 0.0
    %938 = vmatprep.subr.mxu0 0.0
    %939 = vmatpush1.msra.mxu0 0.0
    %940 = vmatprep.subr.mxu0 0.0
    %941 = vmatpush1.msra.mxu0 0.0
    %942 = vmatprep.subr.mxu0 0.0
    %943 = vmatpush1.msra.mxu0 0.0
    %944 = vmatprep.mubr.f32.mxu0 0.0
    %945 = vmatmul.mubr.f32.gmra.mrb[0].mxu0 %v876
    %v946 = vpop.f32.mrb[0].mxu0
    %v947 = vadd.f32 %v463, %v946
    %v948 = vpop.f32.mrb[0].mxu0
    %v949 = vadd.f32 %v465, %v948
    %950 = vmatprep.mubr.f32.mxu0 0.0
    %951 = vmatmul.mubr.f32.gmra.mrb[0].mxu0 %v877
    %v952 = vpop.f32.mrb[0].mxu0
    %v953 = vadd.f32 %v469, %v952
    %v954 = vpop.f32.mrb[0].mxu0
    %v955 = vadd.f32 %v471, %v954
    %956 = vmatprep.mubr.f32.mxu0 0.0
    %957 = vmatmul.mubr.f32.gmra.mrb[0].mxu0 %v878
    %v958 = vpop.f32.mrb[0].mxu0
    %v959 = vadd.f32 %v475, %v958
    %v960 = vpop.f32.mrb[0].mxu0
    %v961 = vadd.f32 %v477, %v960
    %962 = vmatprep.mubr.f32.mxu0 0.0
    %963 = vmatmul.mubr.f32.gmra.mrb[0].mxu0 %v879
    %v964 = vpop.f32.mrb[0].mxu0
    %v965 = vadd.f32 %v481, %v964
    %v966 = vpop.f32.mrb[0].mxu0
    %v967 = vadd.f32 %v483, %v966
    %968 = vdwg.mxu0
    %969 = vmatprep.subr.mxu0 %v233
    %970 = vmatpush1.msra.mxu0 %v232
    %971 = vmatprep.subr.mxu0 %v237
    %972 = vmatpush1.msra.mxu0 %v236
    %973 = vmatprep.subr.mxu0 %v241
    %974 = vmatpush1.msra.mxu0 %v240
    %975 = vmatprep.subr.mxu0 %v245
    %976 = vmatpush1.msra.mxu0 %v244
    %977 = vmatprep.subr.mxu0 %v249
    %978 = vmatpush1.msra.mxu0 %v248
    %979 = vmatprep.subr.mxu0 %v253
    %980 = vmatpush1.msra.mxu0 %v252
    %981 = vmatprep.subr.mxu0 %v257
    %982 = vmatpush1.msra.mxu0 %v256
    %983 = vmatprep.subr.mxu0 %v261
    %984 = vmatpush1.msra.mxu0 %v260
    %985 = vmatprep.subr.mxu0 %v265
    %986 = vmatpush1.msra.mxu0 %v264
    %987 = vmatprep.subr.mxu0 %v269
    %988 = vmatpush1.msra.mxu0 %v268
    %989 = vmatprep.subr.mxu0 %v273
    %990 = vmatpush1.msra.mxu0 %v272
    %991 = vmatprep.subr.mxu0 %v277
    %992 = vmatpush1.msra.mxu0 %v276
    %993 = vmatprep.subr.mxu0 %v281
    %994 = vmatpush1.msra.mxu0 %v280
    %995 = vmatprep.subr.mxu0 %v285
    %996 = vmatpush1.msra.mxu0 %v284
    %997 = vmatprep.subr.mxu0 %v289
    %998 = vmatpush1.msra.mxu0 %v288
    %999 = vmatprep.subr.mxu0 %v293
    %1000 = vmatpush1.msra.mxu0 %v292
    %1001 = vmatprep.subr.mxu0 0.0
    %1002 = vmatpush1.msra.mxu0 0.0
    %1003 = vmatprep.subr.mxu0 0.0
    %1004 = vmatpush1.msra.mxu0 0.0
    %1005 = vmatprep.subr.mxu0 0.0
    %1006 = vmatpush1.msra.mxu0 0.0
    %1007 = vmatprep.subr.mxu0 0.0
    %1008 = vmatpush1.msra.mxu0 0.0
    %1009 = vmatprep.subr.mxu0 0.0
    %1010 = vmatpush1.msra.mxu0 0.0
    %1011 = vmatprep.subr.mxu0 0.0
    %1012 = vmatpush1.msra.mxu0 0.0
    %1013 = vmatprep.subr.mxu0 0.0
    %1014 = vmatpush1.msra.mxu0 0.0
    %1015 = vmatprep.subr.mxu0 0.0
    %1016 = vmatpush1.msra.mxu0 0.0
    %1017 = vmatprep.subr.mxu0 0.0
    %1018 = vmatpush1.msra.mxu0 0.0
    %1019 = vmatprep.subr.mxu0 0.0
    %1020 = vmatpush1.msra.mxu0 0.0
    %1021 = vmatprep.subr.mxu0 0.0
    %1022 = vmatpush1.msra.mxu0 0.0
    %1023 = vmatprep.subr.mxu0 0.0
    %1024 = vmatpush1.msra.mxu0 0.0
    %1025 = vmatprep.subr.mxu0 0.0
    %1026 = vmatpush1.msra.mxu0 0.0
    %1027 = vmatprep.subr.mxu0 0.0
    %1028 = vmatpush1.msra.mxu0 0.0
    %1029 = vmatprep.subr.mxu0 0.0
    %1030 = vmatpush1.msra.mxu0 0.0
    %1031 = vmatprep.subr.mxu0 0.0
    %1032 = vmatpush1.msra.mxu0 0.0
    %1033 = vmatprep.mubr.f32.mxu0 0.0
    %1034 = vmatmul.mubr.f32.gmra.mrb[0].mxu0 %v876
    %v1035 = vpop.f32.mrb[0].mxu0
    %v1036 = vadd.f32 %v552, %v1035
    %v1037 = vpop.f32.mrb[0].mxu0
    %v1038 = vadd.f32 %v554, %v1037
    %1039 = vmatprep.mubr.f32.mxu0 0.0
    %1040 = vmatmul.mubr.f32.gmra.mrb[0].mxu0 %v877
    %v1041 = vpop.f32.mrb[0].mxu0
    %v1042 = vadd.f32 %v558, %v1041
    %v1043 = vpop.f32.mrb[0].mxu0
    %v1044 = vadd.f32 %v560, %v1043
    %1045 = vmatprep.mubr.f32.mxu0 0.0
    %1046 = vmatmul.mubr.f32.gmra.mrb[0].mxu0 %v878
    %v1047 = vpop.f32.mrb[0].mxu0
    %v1048 = vadd.f32 %v564, %v1047
    %v1049 = vpop.f32.mrb[0].mxu0
    %v1050 = vadd.f32 %v566, %v1049
    %1051 = vmatprep.mubr.f32.mxu0 0.0
    %1052 = vmatmul.mubr.f32.gmra.mrb[0].mxu0 %v879
    %v1053 = vpop.f32.mrb[0].mxu0
    %v1054 = vadd.f32 %v570, %v1053
    %v1055 = vpop.f32.mrb[0].mxu0
    %v1056 = vadd.f32 %v572, %v1055
    %1057 = vdwg.mxu0
    %v1058 = vxor.u32 %v947, 2147483648
    %v1059 = vxor.u32 %v949, 2147483648
    %v1060 = vxor.u32 %v1036, 2147483648
    %v1061 = vxor.u32 %v953, 2147483648
    %v1062 = vxor.u32 %v955, 2147483648
    %v1063 = vxor.u32 %v1042, 2147483648
    %v1064 = vxor.u32 %v959, 2147483648
    %v1065 = vxor.u32 %v961, 2147483648
    %v1066 = vxor.u32 %v1048, 2147483648
    %v1067 = vxor.u32 %v965, 2147483648
    %v1068 = vxor.u32 %v967, 2147483648
    %v1069 = vxor.u32 %v1054, 2147483648
    %v1070 = vmul.f32 %v1058, 1.442695
    %v1071 = vpow.pop %v1070
    %v1072 = vmul.f32 %v1059, 1.442695
    %v1073 = vpow.pop %v1072
    %v1074 = vmul.f32 %v1060, 1.442695
    %v1075 = vpow.pop %v1074
    %v1076 = vmul.f32 %v1061, 1.442695
    %v1077 = vpow.pop %v1076
    %v1078 = vmul.f32 %v1062, 1.442695
    %v1079 = vpow.pop %v1078
    %v1080 = vmul.f32 %v1063, 1.442695
    %v1081 = vpow.pop %v1080
    %v1082 = vmul.f32 %v1064, 1.442695
    %v1083 = vpow.pop %v1082
    %v1084 = vmul.f32 %v1065, 1.442695
    %v1085 = vpow.pop %v1084
    %v1086 = vmul.f32 %v1066, 1.442695
    %v1087 = vpow.pop %v1086
    %v1088 = vmul.f32 %v1067, 1.442695
    %v1089 = vpow.pop %v1088
    %v1090 = vmul.f32 %v1068, 1.442695
    %v1091 = vpow.pop %v1090
    %v1092 = vmul.f32 %v1069, 1.442695
    %v1093 = vpow.pop %v1092
    %v1094 = vadd.f32 %v1071, 1.0
    %v1095 = vadd.f32 %v1073, 1.0
    %v1096 = vadd.f32 %v1075, 1.0
    %v1097 = vadd.f32 %v1077, 1.0
    %v1098 = vadd.f32 %v1079, 1.0
    %v1099 = vadd.f32 %v1081, 1.0
    %v1100 = vadd.f32 %v1083, 1.0
    %v1101 = vadd.f32 %v1085, 1.0
    %v1102 = vadd.f32 %v1087, 1.0
    %v1103 = vadd.f32 %v1089, 1.0
    %v1104 = vadd.f32 %v1091, 1.0
    %v1105 = vadd.f32 %v1093, 1.0
    %v1106 = vrcp.pop %v1094
    %v1107 = vmul.f32 1.0, %v1106
    %v1108 = vrcp.pop %v1095
    %v1109 = vmul.f32 1.0, %v1108
    %v1110 = vrcp.pop %v1096
    %v1111 = vmul.f32 1.0, %v1110
    %v1112 = vrcp.pop %v1097
    %v1113 = vmul.f32 1.0, %v1112
    %v1114 = vrcp.pop %v1098
    %v1115 = vmul.f32 1.0, %v1114
    %v1116 = vrcp.pop %v1099
    %v1117 = vmul.f32 1.0, %v1116
    %v1118 = vrcp.pop %v1100
    %v1119 = vmul.f32 1.0, %v1118
    %v1120 = vrcp.pop %v1101
    %v1121 = vmul.f32 1.0, %v1120
    %v1122 = vrcp.pop %v1102
    %v1123 = vmul.f32 1.0, %v1122
    %v1124 = vrcp.pop %v1103
    %v1125 = vmul.f32 1.0, %v1124
    %v1126 = vrcp.pop %v1104
    %v1127 = vmul.f32 1.0, %v1126
    %v1128 = vrcp.pop %v1105
    %v1129 = vmul.f32 1.0, %v1128
    %v1130 = vtanh.pop %v1038
    %v1131 = vtanh.pop %v1044
    %v1132 = vtanh.pop %v1050
    %v1133 = vtanh.pop %v1056
    %v1134 = vmul.f32 %v1109, %v392
    %v1135 = vmul.f32 %v1115, %v393
    %v1136 = vmul.f32 %v1121, %v394
    %v1137 = vmul.f32 %v1127, %v395
    %v1138 = vmul.f32 %v1107, %v1130
    %v1139 = vmul.f32 %v1113, %v1131
    %v1140 = vmul.f32 %v1119, %v1132
    %v1141 = vmul.f32 %v1125, %v1133
    %v1142 = vadd.f32 %v1134, %v1138
    %v1143 = vadd.f32 %v1135, %v1139
    %v1144 = vadd.f32 %v1136, %v1140
    %v1145 = vadd.f32 %v1137, %v1141
    %v1146 = vtanh.pop %v1142
    %v1147 = vtanh.pop %v1143
    %v1148 = vtanh.pop %v1144
    %v1149 = vtanh.pop %v1145
    %v1150 = vmul.f32 %v1111, %v1146
    %v1151 = vmul.f32 %v1117, %v1147
    %v1152 = vmul.f32 %v1123, %v1148
    %v1153 = vmul.f32 %v1129, %v1149
    %1154 = vst [vmem:[#allocation2] sm:$0xff] %v1150
    %1155 = vst [vmem:[#allocation2 + $0x8] sm:$0xff] %v1151
    %1156 = vst [vmem:[#allocation2 + $0x10] sm:$0xff] %v1152
    %1157 = vst [vmem:[#allocation2 + $0x18] sm:$0xff] %v1153
    %1158 = vmatprep.subr.mxu0 %v295
    %1159 = vmatpush1.msra.mxu0 %v294
    %1160 = vmatprep.subr.mxu0 %v299
    %1161 = vmatpush1.msra.mxu0 %v298
    %1162 = vmatprep.subr.mxu0 %v303
    %1163 = vmatpush1.msra.mxu0 %v302
    %1164 = vmatprep.subr.mxu0 %v307
    %1165 = vmatpush1.msra.mxu0 %v306
    %1166 = vmatprep.subr.mxu0 %v311
    %1167 = vmatpush1.msra.mxu0 %v310
    %1168 = vmatprep.subr.mxu0 %v315
    %1169 = vmatpush1.msra.mxu0 %v314
    %1170 = vmatprep.subr.mxu0 %v319
    %1171 = vmatpush1.msra.mxu0 %v318
    %1172 = vmatprep.subr.mxu0 %v323
    %1173 = vmatpush1.msra.mxu0 %v322
    %1174 = vmatprep.subr.mxu0 %v327
    %1175 = vmatpush1.msra.mxu0 %v326
    %1176 = vmatprep.subr.mxu0 %v331
    %1177 = vmatpush1.msra.mxu0 %v330
    %1178 = vmatprep.subr.mxu0 %v335
    %1179 = vmatpush1.msra.mxu0 %v334
    %1180 = vmatprep.subr.mxu0 %v339
    %1181 = vmatpush1.msra.mxu0 %v338
    %1182 = vmatprep.subr.mxu0 %v343
    %1183 = vmatpush1.msra.mxu0 %v342
    %1184 = vmatprep.subr.mxu0 %v347
    %1185 = vmatpush1.msra.mxu0 %v346
    %1186 = vmatprep.subr.mxu0 %v351
    %1187 = vmatpush1.msra.mxu0 %v350
    %1188 = vmatprep.subr.mxu0 %v355
    %1189 = vmatpush1.msra.mxu0 %v354
    %1190 = vmatprep.subr.mxu0 0.0
    %1191 = vmatpush1.msra.mxu0 0.0
    %1192 = vmatprep.subr.mxu0 0.0
    %1193 = vmatpush1.msra.mxu0 0.0
    %1194 = vmatprep.subr.mxu0 0.0
    %1195 = vmatpush1.msra.mxu0 0.0
    %1196 = vmatprep.subr.mxu0 0.0
    %1197 = vmatpush1.msra.mxu0 0.0
    %1198 = vmatprep.subr.mxu0 0.0
    %1199 = vmatpush1.msra.mxu0 0.0
    %1200 = vmatprep.subr.mxu0 0.0
    %1201 = vmatpush1.msra.mxu0 0.0
    %1202 = vmatprep.subr.mxu0 0.0
    %1203 = vmatpush1.msra.mxu0 0.0
    %1204 = vmatprep.subr.mxu0 0.0
    %1205 = vmatpush1.msra.mxu0 0.0
    %1206 = vmatprep.subr.mxu0 0.0
    %1207 = vmatpush1.msra.mxu0 0.0
    %1208 = vmatprep.subr.mxu0 0.0
    %1209 = vmatpush1.msra.mxu0 0.0
    %1210 = vmatprep.subr.mxu0 0.0
    %1211 = vmatpush1.msra.mxu0 0.0
    %1212 = vmatprep.subr.mxu0 0.0
    %1213 = vmatpush1.msra.mxu0 0.0
    %1214 = vmatprep.subr.mxu0 0.0
    %1215 = vmatpush1.msra.mxu0 0.0
    %1216 = vmatprep.subr.mxu0 0.0
    %1217 = vmatpush1.msra.mxu0 0.0
    %1218 = vmatprep.subr.mxu0 0.0
    %1219 = vmatpush1.msra.mxu0 0.0
    %1220 = vmatprep.subr.mxu0 0.0
    %1221 = vmatpush1.msra.mxu0 0.0
    %1222 = vmatprep.mubr.f32.mxu0 0.0
    %1223 = vmatmul.mubr.f32.gmra.mrb[0].mxu0 %v1150
    %v1224 = vpop.f32.mrb[0].mxu0
    %v1225 = vadd.f32 %v363, %v1224
    %v1226 = vpop.f32.mrb[0].mxu0
    %v1227 = vadd.f32 %v367, %v1226
    %1228 = vmatprep.mubr.f32.mxu0 0.0
    %1229 = vmatmul.mubr.f32.gmra.mrb[0].mxu0 %v1151
    %v1230 = vpop.f32.mrb[0].mxu0
    %v1231 = vadd.f32 %v363, %v1230
    %v1232 = vpop.f32.mrb[0].mxu0
    %v1233 = vadd.f32 %v367, %v1232
    %1234 = vmatprep.mubr.f32.mxu0 0.0
    %1235 = vmatmul.mubr.f32.gmra.mrb[0].mxu0 %v1152
    %v1236 = vpop.f32.mrb[0].mxu0
    %v1237 = vadd.f32 %v363, %v1236
    %v1238 = vpop.f32.mrb[0].mxu0
    %v1239 = vadd.f32 %v367, %v1238
    %1240 = vmatprep.mubr.f32.mxu0 0.0
    %1241 = vmatmul.mubr.f32.gmra.mrb[0].mxu0 %v1153
    %v1242 = vpop.f32.mrb[0].mxu0
    %v1243 = vadd.f32 %v363, %v1242
    %v1244 = vpop.f32.mrb[0].mxu0
    %v1245 = vadd.f32 %v367, %v1244
    %1246 = vdwg.mxu0
    %1247 = vmatprep.subr.mxu0 %v297
    %1248 = vmatpush1.msra.mxu0 %v296
    %1249 = vmatprep.subr.mxu0 %v301
    %1250 = vmatpush1.msra.mxu0 %v300
    %1251 = vmatprep.subr.mxu0 %v305
    %1252 = vmatpush1.msra.mxu0 %v304
    %1253 = vmatprep.subr.mxu0 %v309
    %1254 = vmatpush1.msra.mxu0 %v308
    %1255 = vmatprep.subr.mxu0 %v313
    %1256 = vmatpush1.msra.mxu0 %v312
    %1257 = vmatprep.subr.mxu0 %v317
    %1258 = vmatpush1.msra.mxu0 %v316
    %1259 = vmatprep.subr.mxu0 %v321
    %1260 = vmatpush1.msra.mxu0 %v320
    %1261 = vmatprep.subr.mxu0 %v325
    %1262 = vmatpush1.msra.mxu0 %v324
    %1263 = vmatprep.subr.mxu0 %v329
    %1264 = vmatpush1.msra.mxu0 %v328
    %1265 = vmatprep.subr.mxu0 %v333
    %1266 = vmatpush1.msra.mxu0 %v332
    %1267 = vmatprep.subr.mxu0 %v337
    %1268 = vmatpush1.msra.mxu0 %v336
    %1269 = vmatprep.subr.mxu0 %v341
    %1270 = vmatpush1.msra.mxu0 %v340
    %1271 = vmatprep.subr.mxu0 %v345
    %1272 = vmatpush1.msra.mxu0 %v344
    %1273 = vmatprep.subr.mxu0 %v349
    %1274 = vmatpush1.msra.mxu0 %v348
    %1275 = vmatprep.subr.mxu0 %v353
    %1276 = vmatpush1.msra.mxu0 %v352
    %1277 = vmatprep.subr.mxu0 %v357
    %1278 = vmatpush1.msra.mxu0 %v356
    %1279 = vmatprep.subr.mxu0 0.0
    %1280 = vmatpush1.msra.mxu0 0.0
    %1281 = vmatprep.subr.mxu0 0.0
    %1282 = vmatpush1.msra.mxu0 0.0
    %1283 = vmatprep.subr.mxu0 0.0
    %1284 = vmatpush1.msra.mxu0 0.0
    %1285 = vmatprep.subr.mxu0 0.0
    %1286 = vmatpush1.msra.mxu0 0.0
    %1287 = vmatprep.subr.mxu0 0.0
    %1288 = vmatpush1.msra.mxu0 0.0
    %1289 = vmatprep.subr.mxu0 0.0
    %1290 = vmatpush1.msra.mxu0 0.0
    %1291 = vmatprep.subr.mxu0 0.0
    %1292 = vmatpush1.msra.mxu0 0.0
    %1293 = vmatprep.subr.mxu0 0.0
    %1294 = vmatpush1.msra.mxu0 0.0
    %1295 = vmatprep.subr.mxu0 0.0
    %1296 = vmatpush1.msra.mxu0 0.0
    %1297 = vmatprep.subr.mxu0 0.0
    %1298 = vmatpush1.msra.mxu0 0.0
    %1299 = vmatprep.subr.mxu0 0.0
    %1300 = vmatpush1.msra.mxu0 0.0
    %1301 = vmatprep.subr.mxu0 0.0
    %1302 = vmatpush1.msra.mxu0 0.0
    %1303 = vmatprep.subr.mxu0 0.0
    %1304 = vmatpush1.msra.mxu0 0.0
    %1305 = vmatprep.subr.mxu0 0.0
    %1306 = vmatpush1.msra.mxu0 0.0
    %1307 = vmatprep.subr.mxu0 0.0
    %1308 = vmatpush1.msra.mxu0 0.0
    %1309 = vmatprep.subr.mxu0 0.0
    %1310 = vmatpush1.msra.mxu0 0.0
    %1311 = vmatprep.mubr.f32.mxu0 0.0
    %1312 = vmatmul.mubr.f32.gmra.mrb[0].mxu0 %v1150
    %v1313 = vpop.f32.mrb[0].mxu0
    %v1314 = vadd.f32 %v371, %v1313
    %v1315 = vpop.f32.mrb[0].mxu0
    %v1316 = vadd.f32 %v375, %v1315
    %1317 = vmatprep.mubr.f32.mxu0 0.0
    %1318 = vmatmul.mubr.f32.gmra.mrb[0].mxu0 %v1151
    %v1319 = vpop.f32.mrb[0].mxu0
    %v1320 = vadd.f32 %v371, %v1319
    %v1321 = vpop.f32.mrb[0].mxu0
    %v1322 = vadd.f32 %v375, %v1321
    %1323 = vmatprep.mubr.f32.mxu0 0.0
    %1324 = vmatmul.mubr.f32.gmra.mrb[0].mxu0 %v1152
    %v1325 = vpop.f32.mrb[0].mxu0
    %v1326 = vadd.f32 %v371, %v1325
    %v1327 = vpop.f32.mrb[0].mxu0
    %v1328 = vadd.f32 %v375, %v1327
    %1329 = vmatprep.mubr.f32.mxu0 0.0
    %1330 = vmatmul.mubr.f32.gmra.mrb[0].mxu0 %v1153
    %v1331 = vpop.f32.mrb[0].mxu0
    %v1332 = vadd.f32 %v371, %v1331
    %v1333 = vpop.f32.mrb[0].mxu0
    %v1334 = vadd.f32 %v375, %v1333
    %1335 = vdwg.mxu0
    %s1336 = scalar_lea.vmem [#allocation3], 128
    %v1337 = vld [vmem:[%s1336] sm:$0xff]
    %v1338 = vld [vmem:[%s1336 + $0x8] sm:$0xff]
    %v1339 = vld [vmem:[%s1336 + $0x10] sm:$0xff]
    %v1340 = vld [vmem:[%s1336 + $0x18] sm:$0xff]
    %v1341 = vld [vmem:[%s1336 + $0x20] sm:$0xff]
    %v1342 = vld [vmem:[%s1336 + $0x28] sm:$0xff]
    %v1343 = vld [vmem:[%s1336 + $0x30] sm:$0xff]
    %v1344 = vld [vmem:[%s1336 + $0x38] sm:$0xff]
    %v1345 = vld [vmem:[%s1336 + $0x40] sm:$0xff]
    %v1346 = vld [vmem:[%s1336 + $0x48] sm:$0xff]
    %v1347 = vld [vmem:[%s1336 + $0x50] sm:$0xff]
    %v1348 = vld [vmem:[%s1336 + $0x58] sm:$0xff]
    %v1349 = vld [vmem:[%s1336 + $0x60] sm:$0xff]
    %v1350 = vld [vmem:[%s1336 + $0x68] sm:$0xff]
    %v1351 = vld [vmem:[%s1336 + $0x70] sm:$0xff]
    %v1352 = vld [vmem:[%s1336 + $0x78] sm:$0xff]
    %1353 = vmatprep.subr.mxu0 %v167
    %1354 = vmatpush1.msra.mxu0 %v166
    %1355 = vmatprep.subr.mxu0 %v171
    %1356 = vmatpush1.msra.mxu0 %v170
    %1357 = vmatprep.subr.mxu0 %v175
    %1358 = vmatpush1.msra.mxu0 %v174
    %1359 = vmatprep.subr.mxu0 %v179
    %1360 = vmatpush1.msra.mxu0 %v178
    %1361 = vmatprep.subr.mxu0 %v183
    %1362 = vmatpush1.msra.mxu0 %v182
    %1363 = vmatprep.subr.mxu0 %v187
    %1364 = vmatpush1.msra.mxu0 %v186
    %1365 = vmatprep.subr.mxu0 %v191
    %1366 = vmatpush1.msra.mxu0 %v190
    %1367 = vmatprep.subr.mxu0 %v195
    %1368 = vmatpush1.msra.mxu0 %v194
    %1369 = vmatprep.subr.mxu0 %v199
    %1370 = vmatpush1.msra.mxu0 %v198
    %1371 = vmatprep.subr.mxu0 %v203
    %1372 = vmatpush1.msra.mxu0 %v202
    %1373 = vmatprep.subr.mxu0 %v207
    %1374 = vmatpush1.msra.mxu0 %v206
    %1375 = vmatprep.subr.mxu0 %v211
    %1376 = vmatpush1.msra.mxu0 %v210
    %1377 = vmatprep.subr.mxu0 %v215
    %1378 = vmatpush1.msra.mxu0 %v214
    %1379 = vmatprep.subr.mxu0 %v219
    %1380 = vmatpush1.msra.mxu0 %v218
    %1381 = vmatprep.subr.mxu0 %v223
    %1382 = vmatpush1.msra.mxu0 %v222
    %1383 = vmatprep.subr.mxu0 %v227
    %1384 = vmatpush1.msra.mxu0 %v226
    %1385 = vmatprep.subr.mxu0 0.0
    %1386 = vmatpush1.msra.mxu0 0.0
    %1387 = vmatprep.subr.mxu0 0.0
    %1388 = vmatpush1.msra.mxu0 0.0
    %1389 = vmatprep.subr.mxu0 0.0
    %1390 = vmatpush1.msra.mxu0 0.0
    %1391 = vmatprep.subr.mxu0 0.0
    %1392 = vmatpush1.msra.mxu0 0.0
    %1393 = vmatprep.subr.mxu0 0.0
    %1394 = vmatpush1.msra.mxu0 0.0
    %1395 = vmatprep.subr.mxu0 0.0
    %1396 = vmatpush1.msra.mxu0 0.0
    %1397 = vmatprep.subr.mxu0 0.0
    %1398 = vmatpush1.msra.mxu0 0.0
    %1399 = vmatprep.subr.mxu0 0.0
    %1400 = vmatpush1.msra.mxu0 0.0
    %1401 = vmatprep.subr.mxu0 0.0
    %1402 = vmatpush1.msra.mxu0 0.0
    %1403 = vmatprep.subr.mxu0 0.0
    %1404 = vmatpush1.msra.mxu0 0.0
    %1405 = vmatprep.subr.mxu0 0.0
    %1406 = vmatpush1.msra.mxu0 0.0
    %1407 = vmatprep.subr.mxu0 0.0
    %1408 = vmatpush1.msra.mxu0 0.0
    %1409 = vmatprep.subr.mxu0 0.0
    %1410 = vmatpush1.msra.mxu0 0.0
    %1411 = vmatprep.subr.mxu0 0.0
    %1412 = vmatpush1.msra.mxu0 0.0
    %1413 = vmatprep.subr.mxu0 0.0
    %1414 = vmatpush1.msra.mxu0 0.0
    %1415 = vmatprep.subr.mxu0 0.0
    %1416 = vmatpush1.msra.mxu0 0.0
    %1417 = vmatprep.mubr.f32.mxu0 0.0
    %1418 = vmatmul.mubr.f32.gmra.mrb[0].mxu0 %v876
    %v1419 = vpop.f32.mrb[0].mxu0
    %v1420 = vadd.f32 0.0, %v1419
    %v1421 = vpop.f32.mrb[0].mxu0
    %v1422 = vadd.f32 0.0, %v1421
    %1423 = vmatprep.mubr.f32.mxu0 0.0
    %1424 = vmatmul.mubr.f32.gmra.mrb[0].mxu0 %v877
    %v1425 = vpop.f32.mrb[0].mxu0
    %v1426 = vadd.f32 0.0, %v1425
    %v1427 = vpop.f32.mrb[0].mxu0
    %v1428 = vadd.f32 0.0, %v1427
    %1429 = vmatprep.mubr.f32.mxu0 0.0
    %1430 = vmatmul.mubr.f32.gmra.mrb[0].mxu0 %v878
    %v1431 = vpop.f32.mrb[0].mxu0
    %v1432 = vadd.f32 0.0, %v1431
    %v1433 = vpop.f32.mrb[0].mxu0
    %v1434 = vadd.f32 0.0, %v1433
    %1435 = vmatprep.mubr.f32.mxu0 0.0
    %1436 = vmatmul.mubr.f32.gmra.mrb[0].mxu0 %v879
    %v1437 = vpop.f32.mrb[0].mxu0
    %v1438 = vadd.f32 0.0, %v1437
    %v1439 = vpop.f32.mrb[0].mxu0
    %v1440 = vadd.f32 0.0, %v1439
    %1441 = vdwg.mxu0
    %1442 = vmatprep.subr.mxu0 %v169
    %1443 = vmatpush1.msra.mxu0 %v168
    %1444 = vmatprep.subr.mxu0 %v173
    %1445 = vmatpush1.msra.mxu0 %v172
    %1446 = vmatprep.subr.mxu0 %v177
    %1447 = vmatpush1.msra.mxu0 %v176
    %1448 = vmatprep.subr.mxu0 %v181
    %1449 = vmatpush1.msra.mxu0 %v180
    %1450 = vmatprep.subr.mxu0 %v185
    %1451 = vmatpush1.msra.mxu0 %v184
    %1452 = vmatprep.subr.mxu0 %v189
    %1453 = vmatpush1.msra.mxu0 %v188
    %1454 = vmatprep.subr.mxu0 %v193
    %1455 = vmatpush1.msra.mxu0 %v192
    %1456 = vmatprep.subr.mxu0 %v197
    %1457 = vmatpush1.msra.mxu0 %v196
    %1458 = vmatprep.subr.mxu0 %v201
    %1459 = vmatpush1.msra.mxu0 %v200
    %1460 = vmatprep.subr.mxu0 %v205
    %1461 = vmatpush1.msra.mxu0 %v204
    %1462 = vmatprep.subr.mxu0 %v209
    %1463 = vmatpush1.msra.mxu0 %v208
    %1464 = vmatprep.subr.mxu0 %v213
    %1465 = vmatpush1.msra.mxu0 %v212
    %1466 = vmatprep.subr.mxu0 %v217
    %1467 = vmatpush1.msra.mxu0 %v216
    %1468 = vmatprep.subr.mxu0 %v221
    %1469 = vmatpush1.msra.mxu0 %v220
    %1470 = vmatprep.subr.mxu0 %v225
    %1471 = vmatpush1.msra.mxu0 %v224
    %1472 = vmatprep.subr.mxu0 %v229
    %1473 = vmatpush1.msra.mxu0 %v228
    %1474 = vmatprep.subr.mxu0 0.0
    %1475 = vmatpush1.msra.mxu0 0.0
    %1476 = vmatprep.subr.mxu0 0.0
    %1477 = vmatpush1.msra.mxu0 0.0
    %1478 = vmatprep.subr.mxu0 0.0
    %1479 = vmatpush1.msra.mxu0 0.0
    %1480 = vmatprep.subr.mxu0 0.0
    %1481 = vmatpush1.msra.mxu0 0.0
    %1482 = vmatprep.subr.mxu0 0.0
    %1483 = vmatpush1.msra.mxu0 0.0
    %1484 = vmatprep.subr.mxu0 0.0
    %1485 = vmatpush1.msra.mxu0 0.0
    %1486 = vmatprep.subr.mxu0 0.0
    %1487 = vmatpush1.msra.mxu0 0.0
    %1488 = vmatprep.subr.mxu0 0.0
    %1489 = vmatpush1.msra.mxu0 0.0
    %1490 = vmatprep.subr.mxu0 0.0
    %1491 = vmatpush1.msra.mxu0 0.0
    %1492 = vmatprep.subr.mxu0 0.0
    %1493 = vmatpush1.msra.mxu0 0.0
    %1494 = vmatprep.subr.mxu0 0.0
    %1495 = vmatpush1.msra.mxu0 0.0
    %1496 = vmatprep.subr.mxu0 0.0
    %1497 = vmatpush1.msra.mxu0 0.0
    %1498 = vmatprep.subr.mxu0 0.0
    %1499 = vmatpush1.msra.mxu0 0.0
    %1500 = vmatprep.subr.mxu0 0.0
    %1501 = vmatpush1.msra.mxu0 0.0
    %1502 = vmatprep.subr.mxu0 0.0
    %1503 = vmatpush1.msra.mxu0 0.0
    %1504 = vmatprep.subr.mxu0 0.0
    %1505 = vmatpush1.msra.mxu0 0.0
    %1506 = vmatprep.mubr.f32.mxu0 0.0
    %1507 = vmatmul.mubr.f32.gmra.mrb[0].mxu0 %v876
    %v1508 = vpop.f32.mrb[0].mxu0
    %v1509 = vadd.f32 0.0, %v1508
    %v1510 = vpop.f32.mrb[0].mxu0
    %v1511 = vadd.f32 0.0, %v1510
    %1512 = vmatprep.mubr.f32.mxu0 0.0
    %1513 = vmatmul.mubr.f32.gmra.mrb[0].mxu0 %v877
    %v1514 = vpop.f32.mrb[0].mxu0
    %v1515 = vadd.f32 0.0, %v1514
    %v1516 = vpop.f32.mrb[0].mxu0
    %v1517 = vadd.f32 0.0, %v1516
    %1518 = vmatprep.mubr.f32.mxu0 0.0
    %1519 = vmatmul.mubr.f32.gmra.mrb[0].mxu0 %v878
    %v1520 = vpop.f32.mrb[0].mxu0
    %v1521 = vadd.f32 0.0, %v1520
    %v1522 = vpop.f32.mrb[0].mxu0
    %v1523 = vadd.f32 0.0, %v1522
    %1524 = vmatprep.mubr.f32.mxu0 0.0
    %1525 = vmatmul.mubr.f32.gmra.mrb[0].mxu0 %v879
    %v1526 = vpop.f32.mrb[0].mxu0
    %v1527 = vadd.f32 0.0, %v1526
    %v1528 = vpop.f32.mrb[0].mxu0
    %v1529 = vadd.f32 0.0, %v1528
    %1530 = vdwg.mxu0
    %v1531 = vadd.f32 %v1337, %v1420
    %v1532 = vadd.f32 %v1338, %v1422
    %v1533 = vadd.f32 %v1339, %v1509
    %v1534 = vadd.f32 %v1340, %v1511
    %v1535 = vadd.f32 %v1341, %v1426
    %v1536 = vadd.f32 %v1342, %v1428
    %v1537 = vadd.f32 %v1343, %v1515
    %v1538 = vadd.f32 %v1344, %v1517
    %v1539 = vadd.f32 %v1345, %v1432
    %v1540 = vadd.f32 %v1346, %v1434
    %v1541 = vadd.f32 %v1347, %v1521
    %v1542 = vadd.f32 %v1348, %v1523
    %v1543 = vadd.f32 %v1349, %v1438
    %v1544 = vadd.f32 %v1350, %v1440
    %v1545 = vadd.f32 %v1351, %v1527
    %v1546 = vadd.f32 %v1352, %v1529
    %v1547 = vxor.u32 %v1531, 2147483648
    %v1548 = vxor.u32 %v1532, 2147483648
    %v1549 = vxor.u32 %v1533, 2147483648
    %v1550 = vxor.u32 %v1535, 2147483648
    %v1551 = vxor.u32 %v1536, 2147483648
    %v1552 = vxor.u32 %v1537, 2147483648
    %v1553 = vxor.u32 %v1539, 2147483648
    %v1554 = vxor.u32 %v1540, 2147483648
    %v1555 = vxor.u32 %v1541, 2147483648
    %v1556 = vxor.u32 %v1543, 2147483648
    %v1557 = vxor.u32 %v1544, 2147483648
    %v1558 = vxor.u32 %v1545, 2147483648
    %v1559 = vmul.f32 %v1547, 1.442695
    %v1560 = vpow.pop %v1559
    %v1561 = vmul.f32 %v1548, 1.442695
    %v1562 = vpow.pop %v1561
    %v1563 = vmul.f32 %v1549, 1.442695
    %v1564 = vpow.pop %v1563
    %v1565 = vmul.f32 %v1550, 1.442695
    %v1566 = vpow.pop %v1565
    %v1567 = vmul.f32 %v1551, 1.442695
    %v1568 = vpow.pop %v1567
    %v1569 = vmul.f32 %v1552, 1.442695
    %v1570 = vpow.pop %v1569
    %v1571 = vmul.f32 %v1553, 1.442695
    %v1572 = vpow.pop %v1571
    %v1573 = vmul.f32 %v1554, 1.442695
    %v1574 = vpow.pop %v1573
    %v1575 = vmul.f32 %v1555, 1.442695
    %v1576 = vpow.pop %v1575
    %v1577 = vmul.f32 %v1556, 1.442695
    %v1578 = vpow.pop %v1577
    %v1579 = vmul.f32 %v1557, 1.442695
    %v1580 = vpow.pop %v1579
    %v1581 = vmul.f32 %v1558, 1.442695
    %v1582 = vpow.pop %v1581
    %v1583 = vadd.f32 %v1560, 1.0
    %v1584 = vadd.f32 %v1562, 1.0
    %v1585 = vadd.f32 %v1564, 1.0
    %v1586 = vadd.f32 %v1566, 1.0
    %v1587 = vadd.f32 %v1568, 1.0
    %v1588 = vadd.f32 %v1570, 1.0
    %v1589 = vadd.f32 %v1572, 1.0
    %v1590 = vadd.f32 %v1574, 1.0
    %v1591 = vadd.f32 %v1576, 1.0
    %v1592 = vadd.f32 %v1578, 1.0
    %v1593 = vadd.f32 %v1580, 1.0
    %v1594 = vadd.f32 %v1582, 1.0
    %v1595 = vrcp.pop %v1583
    %v1596 = vmul.f32 1.0, %v1595
    %v1597 = vrcp.pop %v1584
    %v1598 = vmul.f32 1.0, %v1597
    %v1599 = vrcp.pop %v1585
    %v1600 = vmul.f32 1.0, %v1599
    %v1601 = vrcp.pop %v1586
    %v1602 = vmul.f32 1.0, %v1601
    %v1603 = vrcp.pop %v1587
    %v1604 = vmul.f32 1.0, %v1603
    %v1605 = vrcp.pop %v1588
    %v1606 = vmul.f32 1.0, %v1605
    %v1607 = vrcp.pop %v1589
    %v1608 = vmul.f32 1.0, %v1607
    %v1609 = vrcp.pop %v1590
    %v1610 = vmul.f32 1.0, %v1609
    %v1611 = vrcp.pop %v1591
    %v1612 = vmul.f32 1.0, %v1611
    %v1613 = vrcp.pop %v1592
    %v1614 = vmul.f32 1.0, %v1613
    %v1615 = vrcp.pop %v1593
    %v1616 = vmul.f32 1.0, %v1615
    %v1617 = vrcp.pop %v1594
    %v1618 = vmul.f32 1.0, %v1617
    %v1619 = vtanh.pop %v1534
    %v1620 = vtanh.pop %v1538
    %v1621 = vtanh.pop %v1542
    %v1622 = vtanh.pop %v1546
    %v1623 = vmul.f32 %v1598, %v868
    %v1624 = vmul.f32 %v1604, %v869
    %v1625 = vmul.f32 %v1610, %v870
    %v1626 = vmul.f32 %v1616, %v871
    %v1627 = vmul.f32 %v1596, %v1619
    %v1628 = vmul.f32 %v1602, %v1620
    %v1629 = vmul.f32 %v1608, %v1621
    %v1630 = vmul.f32 %v1614, %v1622
    %v1631 = vadd.f32 %v1623, %v1627
    %v1632 = vadd.f32 %v1624, %v1628
    %v1633 = vadd.f32 %v1625, %v1629
    %v1634 = vadd.f32 %v1626, %v1630
    %v1635 = vtanh.pop %v1631
    %v1636 = vtanh.pop %v1632
    %v1637 = vtanh.pop %v1633
    %v1638 = vtanh.pop %v1634
    %v1639 = vmul.f32 %v1600, %v1635
    %v1640 = vmul.f32 %v1606, %v1636
    %v1641 = vmul.f32 %v1612, %v1637
    %v1642 = vmul.f32 %v1618, %v1638
    %1643 = vmatprep.subr.mxu0 %v231
    %1644 = vmatpush1.msra.mxu0 %v230
    %1645 = vmatprep.subr.mxu0 %v235
    %1646 = vmatpush1.msra.mxu0 %v234
    %1647 = vmatprep.subr.mxu0 %v239
    %1648 = vmatpush1.msra.mxu0 %v238
    %1649 = vmatprep.subr.mxu0 %v243
    %1650 = vmatpush1.msra.mxu0 %v242
    %1651 = vmatprep.subr.mxu0 %v247
    %1652 = vmatpush1.msra.mxu0 %v246
    %1653 = vmatprep.subr.mxu0 %v251
    %1654 = vmatpush1.msra.mxu0 %v250
    %1655 = vmatprep.subr.mxu0 %v255
    %1656 = vmatpush1.msra.mxu0 %v254
    %1657 = vmatprep.subr.mxu0 %v259
    %1658 = vmatpush1.msra.mxu0 %v258
    %1659 = vmatprep.subr.mxu0 %v263
    %1660 = vmatpush1.msra.mxu0 %v262
    %1661 = vmatprep.subr.mxu0 %v267
    %1662 = vmatpush1.msra.mxu0 %v266
    %1663 = vmatprep.subr.mxu0 %v271
    %1664 = vmatpush1.msra.mxu0 %v270
    %1665 = vmatprep.subr.mxu0 %v275
    %1666 = vmatpush1.msra.mxu0 %v274
    %1667 = vmatprep.subr.mxu0 %v279
    %1668 = vmatpush1.msra.mxu0 %v278
    %1669 = vmatprep.subr.mxu0 %v283
    %1670 = vmatpush1.msra.mxu0 %v282
    %1671 = vmatprep.subr.mxu0 %v287
    %1672 = vmatpush1.msra.mxu0 %v286
    %1673 = vmatprep.subr.mxu0 %v291
    %1674 = vmatpush1.msra.mxu0 %v290
    %1675 = vmatprep.subr.mxu0 0.0
    %1676 = vmatpush1.msra.mxu0 0.0
    %1677 = vmatprep.subr.mxu0 0.0
    %1678 = vmatpush1.msra.mxu0 0.0
    %1679 = vmatprep.subr.mxu0 0.0
    %1680 = vmatpush1.msra.mxu0 0.0
    %1681 = vmatprep.subr.mxu0 0.0
    %1682 = vmatpush1.msra.mxu0 0.0
    %1683 = vmatprep.subr.mxu0 0.0
    %1684 = vmatpush1.msra.mxu0 0.0
    %1685 = vmatprep.subr.mxu0 0.0
    %1686 = vmatpush1.msra.mxu0 0.0
    %1687 = vmatprep.subr.mxu0 0.0
    %1688 = vmatpush1.msra.mxu0 0.0
    %1689 = vmatprep.subr.mxu0 0.0
    %1690 = vmatpush1.msra.mxu0 0.0
    %1691 = vmatprep.subr.mxu0 0.0
    %1692 = vmatpush1.msra.mxu0 0.0
    %1693 = vmatprep.subr.mxu0 0.0
    %1694 = vmatpush1.msra.mxu0 0.0
    %1695 = vmatprep.subr.mxu0 0.0
    %1696 = vmatpush1.msra.mxu0 0.0
    %1697 = vmatprep.subr.mxu0 0.0
    %1698 = vmatpush1.msra.mxu0 0.0
    %1699 = vmatprep.subr.mxu0 0.0
    %1700 = vmatpush1.msra.mxu0 0.0
    %1701 = vmatprep.subr.mxu0 0.0
    %1702 = vmatpush1.msra.mxu0 0.0
    %1703 = vmatprep.subr.mxu0 0.0
    %1704 = vmatpush1.msra.mxu0 0.0
    %1705 = vmatprep.subr.mxu0 0.0
    %1706 = vmatpush1.msra.mxu0 0.0
    %1707 = vmatprep.mubr.f32.mxu0 0.0
    %1708 = vmatmul.mubr.f32.gmra.mrb[0].mxu0 %v1639
    %v1709 = vpop.f32.mrb[0].mxu0
    %v1710 = vadd.f32 %v1225, %v1709
    %v1711 = vpop.f32.mrb[0].mxu0
    %v1712 = vadd.f32 %v1227, %v1711
    %1713 = vmatprep.mubr.f32.mxu0 0.0
    %1714 = vmatmul.mubr.f32.gmra.mrb[0].mxu0 %v1640
    %v1715 = vpop.f32.mrb[0].mxu0
    %v1716 = vadd.f32 %v1231, %v1715
    %v1717 = vpop.f32.mrb[0].mxu0
    %v1718 = vadd.f32 %v1233, %v1717
    %1719 = vmatprep.mubr.f32.mxu0 0.0
    %1720 = vmatmul.mubr.f32.gmra.mrb[0].mxu0 %v1641
    %v1721 = vpop.f32.mrb[0].mxu0
    %v1722 = vadd.f32 %v1237, %v1721
    %v1723 = vpop.f32.mrb[0].mxu0
    %v1724 = vadd.f32 %v1239, %v1723
    %1725 = vmatprep.mubr.f32.mxu0 0.0
    %1726 = vmatmul.mubr.f32.gmra.mrb[0].mxu0 %v1642
    %v1727 = vpop.f32.mrb[0].mxu0
    %v1728 = vadd.f32 %v1243, %v1727
    %v1729 = vpop.f32.mrb[0].mxu0
    %v1730 = vadd.f32 %v1245, %v1729
    %1731 = vdwg.mxu0
    %1732 = vmatprep.subr.mxu0 %v233
    %1733 = vmatpush1.msra.mxu0 %v232
    %1734 = vmatprep.subr.mxu0 %v237
    %1735 = vmatpush1.msra.mxu0 %v236
    %1736 = vmatprep.subr.mxu0 %v241
    %1737 = vmatpush1.msra.mxu0 %v240
    %1738 = vmatprep.subr.mxu0 %v245
    %1739 = vmatpush1.msra.mxu0 %v244
    %1740 = vmatprep.subr.mxu0 %v249
    %1741 = vmatpush1.msra.mxu0 %v248
    %1742 = vmatprep.subr.mxu0 %v253
    %1743 = vmatpush1.msra.mxu0 %v252
    %1744 = vmatprep.subr.mxu0 %v257
    %1745 = vmatpush1.msra.mxu0 %v256
    %1746 = vmatprep.subr.mxu0 %v261
    %1747 = vmatpush1.msra.mxu0 %v260
    %1748 = vmatprep.subr.mxu0 %v265
    %1749 = vmatpush1.msra.mxu0 %v264
    %1750 = vmatprep.subr.mxu0 %v269
    %1751 = vmatpush1.msra.mxu0 %v268
    %1752 = vmatprep.subr.mxu0 %v273
    %1753 = vmatpush1.msra.mxu0 %v272
    %1754 = vmatprep.subr.mxu0 %v277
    %1755 = vmatpush1.msra.mxu0 %v276
    %1756 = vmatprep.subr.mxu0 %v281
    %1757 = vmatpush1.msra.mxu0 %v280
    %1758 = vmatprep.subr.mxu0 %v285
    %1759 = vmatpush1.msra.mxu0 %v284
    %1760 = vmatprep.subr.mxu0 %v289
    %1761 = vmatpush1.msra.mxu0 %v288
    %1762 = vmatprep.subr.mxu0 %v293
    %1763 = vmatpush1.msra.mxu0 %v292
    %1764 = vmatprep.subr.mxu0 0.0
    %1765 = vmatpush1.msra.mxu0 0.0
    %1766 = vmatprep.subr.mxu0 0.0
    %1767 = vmatpush1.msra.mxu0 0.0
    %1768 = vmatprep.subr.mxu0 0.0
    %1769 = vmatpush1.msra.mxu0 0.0
    %1770 = vmatprep.subr.mxu0 0.0
    %1771 = vmatpush1.msra.mxu0 0.0
    %1772 = vmatprep.subr.mxu0 0.0
    %1773 = vmatpush1.msra.mxu0 0.0
    %1774 = vmatprep.subr.mxu0 0.0
    %1775 = vmatpush1.msra.mxu0 0.0
    %1776 = vmatprep.subr.mxu0 0.0
    %1777 = vmatpush1.msra.mxu0 0.0
    %1778 = vmatprep.subr.mxu0 0.0
    %1779 = vmatpush1.msra.mxu0 0.0
    %1780 = vmatprep.subr.mxu0 0.0
    %1781 = vmatpush1.msra.mxu0 0.0
    %1782 = vmatprep.subr.mxu0 0.0
    %1783 = vmatpush1.msra.mxu0 0.0
    %1784 = vmatprep.subr.mxu0 0.0
    %1785 = vmatpush1.msra.mxu0 0.0
    %1786 = vmatprep.subr.mxu0 0.0
    %1787 = vmatpush1.msra.mxu0 0.0
    %1788 = vmatprep.subr.mxu0 0.0
    %1789 = vmatpush1.msra.mxu0 0.0
    %1790 = vmatprep.subr.mxu0 0.0
    %1791 = vmatpush1.msra.mxu0 0.0
    %1792 = vmatprep.subr.mxu0 0.0
    %1793 = vmatpush1.msra.mxu0 0.0
    %1794 = vmatprep.subr.mxu0 0.0
    %1795 = vmatpush1.msra.mxu0 0.0
    %1796 = vmatprep.mubr.f32.mxu0 0.0
    %1797 = vmatmul.mubr.f32.gmra.mrb[0].mxu0 %v1639
    %v1798 = vpop.f32.mrb[0].mxu0
    %v1799 = vadd.f32 %v1314, %v1798
    %v1800 = vpop.f32.mrb[0].mxu0
    %v1801 = vadd.f32 %v1316, %v1800
    %1802 = vmatprep.mubr.f32.mxu0 0.0
    %1803 = vmatmul.mubr.f32.gmra.mrb[0].mxu0 %v1640
    %v1804 = vpop.f32.mrb[0].mxu0
    %v1805 = vadd.f32 %v1320, %v1804
    %v1806 = vpop.f32.mrb[0].mxu0
    %v1807 = vadd.f32 %v1322, %v1806
    %1808 = vmatprep.mubr.f32.mxu0 0.0
    %1809 = vmatmul.mubr.f32.gmra.mrb[0].mxu0 %v1641
    %v1810 = vpop.f32.mrb[0].mxu0
    %v1811 = vadd.f32 %v1326, %v1810
    %v1812 = vpop.f32.mrb[0].mxu0
    %v1813 = vadd.f32 %v1328, %v1812
    %1814 = vmatprep.mubr.f32.mxu0 0.0
    %1815 = vmatmul.mubr.f32.gmra.mrb[0].mxu0 %v1642
    %v1816 = vpop.f32.mrb[0].mxu0
    %v1817 = vadd.f32 %v1332, %v1816
    %v1818 = vpop.f32.mrb[0].mxu0
    %v1819 = vadd.f32 %v1334, %v1818
    %1820 = vdwg.mxu0
    %v1821 = vxor.u32 %v1710, 2147483648
    %v1822 = vxor.u32 %v1712, 2147483648
    %v1823 = vxor.u32 %v1799, 2147483648
    %v1824 = vxor.u32 %v1716, 2147483648
    %v1825 = vxor.u32 %v1718, 2147483648
    %v1826 = vxor.u32 %v1805, 2147483648
    %v1827 = vxor.u32 %v1722, 2147483648
    %v1828 = vxor.u32 %v1724, 2147483648
    %v1829 = vxor.u32 %v1811, 2147483648
    %v1830 = vxor.u32 %v1728, 2147483648
    %v1831 = vxor.u32 %v1730, 2147483648
    %v1832 = vxor.u32 %v1817, 2147483648
    %v1833 = vmul.f32 %v1821, 1.442695
    %v1834 = vpow.pop %v1833
    %v1835 = vmul.f32 %v1822, 1.442695
    %v1836 = vpow.pop %v1835
    %v1837 = vmul.f32 %v1823, 1.442695
    %v1838 = vpow.pop %v1837
    %v1839 = vmul.f32 %v1824, 1.442695
    %v1840 = vpow.pop %v1839
    %v1841 = vmul.f32 %v1825, 1.442695
    %v1842 = vpow.pop %v1841
    %v1843 = vmul.f32 %v1826, 1.442695
    %v1844 = vpow.pop %v1843
    %v1845 = vmul.f32 %v1827, 1.442695
    %v1846 = vpow.pop %v1845
    %v1847 = vmul.f32 %v1828, 1.442695
    %v1848 = vpow.pop %v1847
    %v1849 = vmul.f32 %v1829, 1.442695
    %v1850 = vpow.pop %v1849
    %v1851 = vmul.f32 %v1830, 1.442695
    %v1852 = vpow.pop %v1851
    %v1853 = vmul.f32 %v1831, 1.442695
    %v1854 = vpow.pop %v1853
    %v1855 = vmul.f32 %v1832, 1.442695
    %v1856 = vpow.pop %v1855
    %v1857 = vadd.f32 %v1834, 1.0
    %v1858 = vadd.f32 %v1836, 1.0
    %v1859 = vadd.f32 %v1838, 1.0
    %v1860 = vadd.f32 %v1840, 1.0
    %v1861 = vadd.f32 %v1842, 1.0
    %v1862 = vadd.f32 %v1844, 1.0
    %v1863 = vadd.f32 %v1846, 1.0
    %v1864 = vadd.f32 %v1848, 1.0
    %v1865 = vadd.f32 %v1850, 1.0
    %v1866 = vadd.f32 %v1852, 1.0
    %v1867 = vadd.f32 %v1854, 1.0
    %v1868 = vadd.f32 %v1856, 1.0
    %v1869 = vrcp.pop %v1857
    %v1870 = vmul.f32 1.0, %v1869
    %v1871 = vrcp.pop %v1858
    %v1872 = vmul.f32 1.0, %v1871
    %v1873 = vrcp.pop %v1859
    %v1874 = vmul.f32 1.0, %v1873
    %v1875 = vrcp.pop %v1860
    %v1876 = vmul.f32 1.0, %v1875
    %v1877 = vrcp.pop %v1861
    %v1878 = vmul.f32 1.0, %v1877
    %v1879 = vrcp.pop %v1862
    %v1880 = vmul.f32 1.0, %v1879
    %v1881 = vrcp.pop %v1863
    %v1882 = vmul.f32 1.0, %v1881
    %v1883 = vrcp.pop %v1864
    %v1884 = vmul.f32 1.0, %v1883
    %v1885 = vrcp.pop %v1865
    %v1886 = vmul.f32 1.0, %v1885
    %v1887 = vrcp.pop %v1866
    %v1888 = vmul.f32 1.0, %v1887
    %v1889 = vrcp.pop %v1867
    %v1890 = vmul.f32 1.0, %v1889
    %v1891 = vrcp.pop %v1868
    %v1892 = vmul.f32 1.0, %v1891
    %v1893 = vtanh.pop %v1801
    %v1894 = vtanh.pop %v1807
    %v1895 = vtanh.pop %v1813
    %v1896 = vtanh.pop %v1819
    %v1897 = vmul.f32 %v1872, %v1142
    %v1898 = vmul.f32 %v1878, %v1143
    %v1899 = vmul.f32 %v1884, %v1144
    %v1900 = vmul.f32 %v1890, %v1145
    %v1901 = vmul.f32 %v1870, %v1893
    %v1902 = vmul.f32 %v1876, %v1894
    %v1903 = vmul.f32 %v1882, %v1895
    %v1904 = vmul.f32 %v1888, %v1896
    %v1905 = vadd.f32 %v1897, %v1901
    %v1906 = vadd.f32 %v1898, %v1902
    %v1907 = vadd.f32 %v1899, %v1903
    %v1908 = vadd.f32 %v1900, %v1904
    %v1909 = vtanh.pop %v1905
    %v1910 = vtanh.pop %v1906
    %v1911 = vtanh.pop %v1907
    %v1912 = vtanh.pop %v1908
    %v1913 = vmul.f32 %v1874, %v1909
    %v1914 = vmul.f32 %v1880, %v1910
    %v1915 = vmul.f32 %v1886, %v1911
    %v1916 = vmul.f32 %v1892, %v1912
    %s1917 = scalar_lea.vmem [#allocation2], 32
    %1918 = vst [vmem:[%s1917] sm:$0xff] %v1913
    %1919 = vst [vmem:[%s1917 + $0x8] sm:$0xff] %v1914
    %1920 = vst [vmem:[%s1917 + $0x10] sm:$0xff] %v1915
    %1921 = vst [vmem:[%s1917 + $0x18] sm:$0xff] %v1916
    %1922 = vmatprep.subr.mxu0 %v295
    %1923 = vmatpush1.msra.mxu0 %v294
    %1924 = vmatprep.subr.mxu0 %v299
    %1925 = vmatpush1.msra.mxu0 %v298
    %1926 = vmatprep.subr.mxu0 %v303
    %1927 = vmatpush1.msra.mxu0 %v302
    %1928 = vmatprep.subr.mxu0 %v307
    %1929 = vmatpush1.msra.mxu0 %v306
    %1930 = vmatprep.subr.mxu0 %v311
    %1931 = vmatpush1.msra.mxu0 %v310
    %1932 = vmatprep.subr.mxu0 %v315
    %1933 = vmatpush1.msra.mxu0 %v314
    %1934 = vmatprep.subr.mxu0 %v319
    %1935 = vmatpush1.msra.mxu0 %v318
    %1936 = vmatprep.subr.mxu0 %v323
    %1937 = vmatpush1.msra.mxu0 %v322
    %1938 = vmatprep.subr.mxu0 %v327
    %1939 = vmatpush1.msra.mxu0 %v326
    %1940 = vmatprep.subr.mxu0 %v331
    %1941 = vmatpush1.msra.mxu0 %v330
    %1942 = vmatprep.subr.mxu0 %v335
    %1943 = vmatpush1.msra.mxu0 %v334
    %1944 = vmatprep.subr.mxu0 %v339
    %1945 = vmatpush1.msra.mxu0 %v338
    %1946 = vmatprep.subr.mxu0 %v343
    %1947 = vmatpush1.msra.mxu0 %v342
    %1948 = vmatprep.subr.mxu0 %v347
    %1949 = vmatpush1.msra.mxu0 %v346
    %1950 = vmatprep.subr.mxu0 %v351
    %1951 = vmatpush1.msra.mxu0 %v350
    %1952 = vmatprep.subr.mxu0 %v355
    %1953 = vmatpush1.msra.mxu0 %v354
    %1954 = vmatprep.subr.mxu0 0.0
    %1955 = vmatpush1.msra.mxu0 0.0
    %1956 = vmatprep.subr.mxu0 0.0
    %1957 = vmatpush1.msra.mxu0 0.0
    %1958 = vmatprep.subr.mxu0 0.0
    %1959 = vmatpush1.msra.mxu0 0.0
    %1960 = vmatprep.subr.mxu0 0.0
    %1961 = vmatpush1.msra.mxu0 0.0
    %1962 = vmatprep.subr.mxu0 0.0
    %1963 = vmatpush1.msra.mxu0 0.0
    %1964 = vmatprep.subr.mxu0 0.0
    %1965 = vmatpush1.msra.mxu0 0.0
    %1966 = vmatprep.subr.mxu0 0.0
    %1967 = vmatpush1.msra.mxu0 0.0
    %1968 = vmatprep.subr.mxu0 0.0
    %1969 = vmatpush1.msra.mxu0 0.0
    %1970 = vmatprep.subr.mxu0 0.0
    %1971 = vmatpush1.msra.mxu0 0.0
    %1972 = vmatprep.subr.mxu0 0.0
    %1973 = vmatpush1.msra.mxu0 0.0
    %1974 = vmatprep.subr.mxu0 0.0
    %1975 = vmatpush1.msra.mxu0 0.0
    %1976 = vmatprep.subr.mxu0 0.0
    %1977 = vmatpush1.msra.mxu0 0.0
    %1978 = vmatprep.subr.mxu0 0.0
    %1979 = vmatpush1.msra.mxu0 0.0
    %1980 = vmatprep.subr.mxu0 0.0
    %1981 = vmatpush1.msra.mxu0 0.0
    %1982 = vmatprep.subr.mxu0 0.0
    %1983 = vmatpush1.msra.mxu0 0.0
    %1984 = vmatprep.subr.mxu0 0.0
    %1985 = vmatpush1.msra.mxu0 0.0
    %1986 = vmatprep.mubr.f32.mxu0 0.0
    %1987 = vmatmul.mubr.f32.gmra.mrb[0].mxu0 %v1913
    %v1988 = vpop.f32.mrb[0].mxu0
    %v1989 = vadd.f32 %v363, %v1988
    %v1990 = vpop.f32.mrb[0].mxu0
    %v1991 = vadd.f32 %v367, %v1990
    %1992 = vmatprep.mubr.f32.mxu0 0.0
    %1993 = vmatmul.mubr.f32.gmra.mrb[0].mxu0 %v1914
    %v1994 = vpop.f32.mrb[0].mxu0
    %v1995 = vadd.f32 %v363, %v1994
    %v1996 = vpop.f32.mrb[0].mxu0
    %v1997 = vadd.f32 %v367, %v1996
    %1998 = vmatprep.mubr.f32.mxu0 0.0
    %1999 = vmatmul.mubr.f32.gmra.mrb[0].mxu0 %v1915
    %v2000 = vpop.f32.mrb[0].mxu0
    %v2001 = vadd.f32 %v363, %v2000
    %v2002 = vpop.f32.mrb[0].mxu0
    %v2003 = vadd.f32 %v367, %v2002
    %2004 = vmatprep.mubr.f32.mxu0 0.0
    %2005 = vmatmul.mubr.f32.gmra.mrb[0].mxu0 %v1916
    %v2006 = vpop.f32.mrb[0].mxu0
    %v2007 = vadd.f32 %v363, %v2006
    %v2008 = vpop.f32.mrb[0].mxu0
    %v2009 = vadd.f32 %v367, %v2008
    %2010 = vdwg.mxu0
    %2011 = vmatprep.subr.mxu0 %v297
    %2012 = vmatpush1.msra.mxu0 %v296
    %2013 = vmatprep.subr.mxu0 %v301
    %2014 = vmatpush1.msra.mxu0 %v300
    %2015 = vmatprep.subr.mxu0 %v305
    %2016 = vmatpush1.msra.mxu0 %v304
    %2017 = vmatprep.subr.mxu0 %v309
    %2018 = vmatpush1.msra.mxu0 %v308
    %2019 = vmatprep.subr.mxu0 %v313
    %2020 = vmatpush1.msra.mxu0 %v312
    %2021 = vmatprep.subr.mxu0 %v317
    %2022 = vmatpush1.msra.mxu0 %v316
    %2023 = vmatprep.subr.mxu0 %v321
    %2024 = vmatpush1.msra.mxu0 %v320
    %2025 = vmatprep.subr.mxu0 %v325
    %2026 = vmatpush1.msra.mxu0 %v324
    %2027 = vmatprep.subr.mxu0 %v329
    %2028 = vmatpush1.msra.mxu0 %v328
    %2029 = vmatprep.subr.mxu0 %v333
    %2030 = vmatpush1.msra.mxu0 %v332
    %2031 = vmatprep.subr.mxu0 %v337
    %2032 = vmatpush1.msra.mxu0 %v336
    %2033 = vmatprep.subr.mxu0 %v341
    %2034 = vmatpush1.msra.mxu0 %v340
    %2035 = vmatprep.subr.mxu0 %v345
    %2036 = vmatpush1.msra.mxu0 %v344
    %2037 = vmatprep.subr.mxu0 %v349
    %2038 = vmatpush1.msra.mxu0 %v348
    %2039 = vmatprep.subr.mxu0 %v353
    %2040 = vmatpush1.msra.mxu0 %v352
    %2041 = vmatprep.subr.mxu0 %v357
    %2042 = vmatpush1.msra.mxu0 %v356
    %2043 = vmatprep.subr.mxu0 0.0
    %2044 = vmatpush1.msra.mxu0 0.0
    %2045 = vmatprep.subr.mxu0 0.0
    %2046 = vmatpush1.msra.mxu0 0.0
    %2047 = vmatprep.subr.mxu0 0.0
    %2048 = vmatpush1.msra.mxu0 0.0
    %2049 = vmatprep.subr.mxu0 0.0
    %2050 = vmatpush1.msra.mxu0 0.0
    %2051 = vmatprep.subr.mxu0 0.0
    %2052 = vmatpush1.msra.mxu0 0.0
    %2053 = vmatprep.subr.mxu0 0.0
    %2054 = vmatpush1.msra.mxu0 0.0
    %2055 = vmatprep.subr.mxu0 0.0
    %2056 = vmatpush1.msra.mxu0 0.0
    %2057 = vmatprep.subr.mxu0 0.0
    %2058 = vmatpush1.msra.mxu0 0.0
    %2059 = vmatprep.subr.mxu0 0.0
    %2060 = vmatpush1.msra.mxu0 0.0
    %2061 = vmatprep.subr.mxu0 0.0
    %2062 = vmatpush1.msra.mxu0 0.0
    %2063 = vmatprep.subr.mxu0 0.0
    %2064 = vmatpush1.msra.mxu0 0.0
    %2065 = vmatprep.subr.mxu0 0.0
    %2066 = vmatpush1.msra.mxu0 0.0
    %2067 = vmatprep.subr.mxu0 0.0
    %2068 = vmatpush1.msra.mxu0 0.0
    %2069 = vmatprep.subr.mxu0 0.0
    %2070 = vmatpush1.msra.mxu0 0.0
    %2071 = vmatprep.subr.mxu0 0.0
    %2072 = vmatpush1.msra.mxu0 0.0
    %2073 = vmatprep.subr.mxu0 0.0
    %2074 = vmatpush1.msra.mxu0 0.0
    %2075 = vmatprep.mubr.f32.mxu0 0.0
    %2076 = vmatmul.mubr.f32.gmra.mrb[0].mxu0 %v1913
    %v2077 = vpop.f32.mrb[0].mxu0
    %v2078 = vadd.f32 %v371, %v2077
    %v2079 = vpop.f32.mrb[0].mxu0
    %v2080 = vadd.f32 %v375, %v2079
    %2081 = vmatprep.mubr.f32.mxu0 0.0
    %2082 = vmatmul.mubr.f32.gmra.mrb[0].mxu0 %v1914
    %v2083 = vpop.f32.mrb[0].mxu0
    %v2084 = vadd.f32 %v371, %v2083
    %v2085 = vpop.f32.mrb[0].mxu0
    %v2086 = vadd.f32 %v375, %v2085
    %2087 = vmatprep.mubr.f32.mxu0 0.0
    %2088 = vmatmul.mubr.f32.gmra.mrb[0].mxu0 %v1915
    %v2089 = vpop.f32.mrb[0].mxu0
    %v2090 = vadd.f32 %v371, %v2089
    %v2091 = vpop.f32.mrb[0].mxu0
    %v2092 = vadd.f32 %v375, %v2091
    %2093 = vmatprep.mubr.f32.mxu0 0.0
    %2094 = vmatmul.mubr.f32.gmra.mrb[0].mxu0 %v1916
    %v2095 = vpop.f32.mrb[0].mxu0
    %v2096 = vadd.f32 %v371, %v2095
    %v2097 = vpop.f32.mrb[0].mxu0
    %v2098 = vadd.f32 %v375, %v2097
    %2099 = vdwg.mxu0
    %s2100 = scalar_lea.vmem [#allocation3], 256
    %v2101 = vld [vmem:[%s2100] sm:$0xff]
    %v2102 = vld [vmem:[%s2100 + $0x8] sm:$0xff]
    %v2103 = vld [vmem:[%s2100 + $0x10] sm:$0xff]
    %v2104 = vld [vmem:[%s2100 + $0x18] sm:$0xff]
    %v2105 = vld [vmem:[%s2100 + $0x20] sm:$0xff]
    %v2106 = vld [vmem:[%s2100 + $0x28] sm:$0xff]
    %v2107 = vld [vmem:[%s2100 + $0x30] sm:$0xff]
    %v2108 = vld [vmem:[%s2100 + $0x38] sm:$0xff]
    %v2109 = vld [vmem:[%s2100 + $0x40] sm:$0xff]
    %v2110 = vld [vmem:[%s2100 + $0x48] sm:$0xff]
    %v2111 = vld [vmem:[%s2100 + $0x50] sm:$0xff]
    %v2112 = vld [vmem:[%s2100 + $0x58] sm:$0xff]
    %v2113 = vld [vmem:[%s2100 + $0x60] sm:$0xff]
    %v2114 = vld [vmem:[%s2100 + $0x68] sm:$0xff]
    %v2115 = vld [vmem:[%s2100 + $0x70] sm:$0xff]
    %v2116 = vld [vmem:[%s2100 + $0x78] sm:$0xff]
    %2117 = vmatprep.subr.mxu0 %v167
    %2118 = vmatpush1.msra.mxu0 %v166
    %2119 = vmatprep.subr.mxu0 %v171
    %2120 = vmatpush1.msra.mxu0 %v170
    %2121 = vmatprep.subr.mxu0 %v175
    %2122 = vmatpush1.msra.mxu0 %v174
    %2123 = vmatprep.subr.mxu0 %v179
    %2124 = vmatpush1.msra.mxu0 %v178
    %2125 = vmatprep.subr.mxu0 %v183
    %2126 = vmatpush1.msra.mxu0 %v182
    %2127 = vmatprep.subr.mxu0 %v187
    %2128 = vmatpush1.msra.mxu0 %v186
    %2129 = vmatprep.subr.mxu0 %v191
    %2130 = vmatpush1.msra.mxu0 %v190
    %2131 = vmatprep.subr.mxu0 %v195
    %2132 = vmatpush1.msra.mxu0 %v194
    %2133 = vmatprep.subr.mxu0 %v199
    %2134 = vmatpush1.msra.mxu0 %v198
    %2135 = vmatprep.subr.mxu0 %v203
    %2136 = vmatpush1.msra.mxu0 %v202
    %2137 = vmatprep.subr.mxu0 %v207
    %2138 = vmatpush1.msra.mxu0 %v206
    %2139 = vmatprep.subr.mxu0 %v211
    %2140 = vmatpush1.msra.mxu0 %v210
    %2141 = vmatprep.subr.mxu0 %v215
    %2142 = vmatpush1.msra.mxu0 %v214
    %2143 = vmatprep.subr.mxu0 %v219
    %2144 = vmatpush1.msra.mxu0 %v218
    %2145 = vmatprep.subr.mxu0 %v223
    %2146 = vmatpush1.msra.mxu0 %v222
    %2147 = vmatprep.subr.mxu0 %v227
    %2148 = vmatpush1.msra.mxu0 %v226
    %2149 = vmatprep.subr.mxu0 0.0
    %2150 = vmatpush1.msra.mxu0 0.0
    %2151 = vmatprep.subr.mxu0 0.0
    %2152 = vmatpush1.msra.mxu0 0.0
    %2153 = vmatprep.subr.mxu0 0.0
    %2154 = vmatpush1.msra.mxu0 0.0
    %2155 = vmatprep.subr.mxu0 0.0
    %2156 = vmatpush1.msra.mxu0 0.0
    %2157 = vmatprep.subr.mxu0 0.0
    %2158 = vmatpush1.msra.mxu0 0.0
    %2159 = vmatprep.subr.mxu0 0.0
    %2160 = vmatpush1.msra.mxu0 0.0
    %2161 = vmatprep.subr.mxu0 0.0
    %2162 = vmatpush1.msra.mxu0 0.0
    %2163 = vmatprep.subr.mxu0 0.0
    %2164 = vmatpush1.msra.mxu0 0.0
    %2165 = vmatprep.subr.mxu0 0.0
    %2166 = vmatpush1.msra.mxu0 0.0
    %2167 = vmatprep.subr.mxu0 0.0
    %2168 = vmatpush1.msra.mxu0 0.0
    %2169 = vmatprep.subr.mxu0 0.0
    %2170 = vmatpush1.msra.mxu0 0.0
    %2171 = vmatprep.subr.mxu0 0.0
    %2172 = vmatpush1.msra.mxu0 0.0
    %2173 = vmatprep.subr.mxu0 0.0
    %2174 = vmatpush1.msra.mxu0 0.0
    %2175 = vmatprep.subr.mxu0 0.0
    %2176 = vmatpush1.msra.mxu0 0.0
    %2177 = vmatprep.subr.mxu0 0.0
    %2178 = vmatpush1.msra.mxu0 0.0
    %2179 = vmatprep.subr.mxu0 0.0
    %2180 = vmatpush1.msra.mxu0 0.0
    %2181 = vmatprep.mubr.f32.mxu0 0.0
    %2182 = vmatmul.mubr.f32.gmra.mrb[0].mxu0 %v1639
    %v2183 = vpop.f32.mrb[0].mxu0
    %v2184 = vadd.f32 0.0, %v2183
    %v2185 = vpop.f32.mrb[0].mxu0
    %v2186 = vadd.f32 0.0, %v2185
    %2187 = vmatprep.mubr.f32.mxu0 0.0
    %2188 = vmatmul.mubr.f32.gmra.mrb[0].mxu0 %v1640
    %v2189 = vpop.f32.mrb[0].mxu0
    %v2190 = vadd.f32 0.0, %v2189
    %v2191 = vpop.f32.mrb[0].mxu0
    %v2192 = vadd.f32 0.0, %v2191
    %2193 = vmatprep.mubr.f32.mxu0 0.0
    %2194 = vmatmul.mubr.f32.gmra.mrb[0].mxu0 %v1641
    %v2195 = vpop.f32.mrb[0].mxu0
    %v2196 = vadd.f32 0.0, %v2195
    %v2197 = vpop.f32.mrb[0].mxu0
    %v2198 = vadd.f32 0.0, %v2197
    %2199 = vmatprep.mubr.f32.mxu0 0.0
    %2200 = vmatmul.mubr.f32.gmra.mrb[0].mxu0 %v1642
    %v2201 = vpop.f32.mrb[0].mxu0
    %v2202 = vadd.f32 0.0, %v2201
    %v2203 = vpop.f32.mrb[0].mxu0
    %v2204 = vadd.f32 0.0, %v2203
    %2205 = vdwg.mxu0
    %2206 = vmatprep.subr.mxu0 %v169
    %2207 = vmatpush1.msra.mxu0 %v168
    %2208 = vmatprep.subr.mxu0 %v173
    %2209 = vmatpush1.msra.mxu0 %v172
    %2210 = vmatprep.subr.mxu0 %v177
    %2211 = vmatpush1.msra.mxu0 %v176
    %2212 = vmatprep.subr.mxu0 %v181
    %2213 = vmatpush1.msra.mxu0 %v180
    %2214 = vmatprep.subr.mxu0 %v185
    %2215 = vmatpush1.msra.mxu0 %v184
    %2216 = vmatprep.subr.mxu0 %v189
    %2217 = vmatpush1.msra.mxu0 %v188
    %2218 = vmatprep.subr.mxu0 %v193
    %2219 = vmatpush1.msra.mxu0 %v192
    %2220 = vmatprep.subr.mxu0 %v197
    %2221 = vmatpush1.msra.mxu0 %v196
    %2222 = vmatprep.subr.mxu0 %v201
    %2223 = vmatpush1.msra.mxu0 %v200
    %2224 = vmatprep.subr.mxu0 %v205
    %2225 = vmatpush1.msra.mxu0 %v204
    %2226 = vmatprep.subr.mxu0 %v209
    %2227 = vmatpush1.msra.mxu0 %v208
    %2228 = vmatprep.subr.mxu0 %v213
    %2229 = vmatpush1.msra.mxu0 %v212
    %2230 = vmatprep.subr.mxu0 %v217
    %2231 = vmatpush1.msra.mxu0 %v216
    %2232 = vmatprep.subr.mxu0 %v221
    %2233 = vmatpush1.msra.mxu0 %v220
    %2234 = vmatprep.subr.mxu0 %v225
    %2235 = vmatpush1.msra.mxu0 %v224
    %2236 = vmatprep.subr.mxu0 %v229
    %2237 = vmatpush1.msra.mxu0 %v228
    %2238 = vmatprep.subr.mxu0 0.0
    %2239 = vmatpush1.msra.mxu0 0.0
    %2240 = vmatprep.subr.mxu0 0.0
    %2241 = vmatpush1.msra.mxu0 0.0
    %2242 = vmatprep.subr.mxu0 0.0
    %2243 = vmatpush1.msra.mxu0 0.0
    %2244 = vmatprep.subr.mxu0 0.0
    %2245 = vmatpush1.msra.mxu0 0.0
    %2246 = vmatprep.subr.mxu0 0.0
    %2247 = vmatpush1.msra.mxu0 0.0
    %2248 = vmatprep.subr.mxu0 0.0
    %2249 = vmatpush1.msra.mxu0 0.0
    %2250 = vmatprep.subr.mxu0 0.0
    %2251 = vmatpush1.msra.mxu0 0.0
    %2252 = vmatprep.subr.mxu0 0.0
    %2253 = vmatpush1.msra.mxu0 0.0
    %2254 = vmatprep.subr.mxu0 0.0
    %2255 = vmatpush1.msra.mxu0 0.0
    %2256 = vmatprep.subr.mxu0 0.0
    %2257 = vmatpush1.msra.mxu0 0.0
    %2258 = vmatprep.subr.mxu0 0.0
    %2259 = vmatpush1.msra.mxu0 0.0
    %2260 = vmatprep.subr.mxu0 0.0
    %2261 = vmatpush1.msra.mxu0 0.0
    %2262 = vmatprep.subr.mxu0 0.0
    %2263 = vmatpush1.msra.mxu0 0.0
    %2264 = vmatprep.subr.mxu0 0.0
    %2265 = vmatpush1.msra.mxu0 0.0
    %2266 = vmatprep.subr.mxu0 0.0
    %2267 = vmatpush1.msra.mxu0 0.0
    %2268 = vmatprep.subr.mxu0 0.0
    %2269 = vmatpush1.msra.mxu0 0.0
    %2270 = vmatprep.mubr.f32.mxu0 0.0
    %2271 = vmatmul.mubr.f32.gmra.mrb[0].mxu0 %v1639
    %v2272 = vpop.f32.mrb[0].mxu0
    %v2273 = vadd.f32 0.0, %v2272
    %v2274 = vpop.f32.mrb[0].mxu0
    %v2275 = vadd.f32 0.0, %v2274
    %2276 = vmatprep.mubr.f32.mxu0 0.0
    %2277 = vmatmul.mubr.f32.gmra.mrb[0].mxu0 %v1640
    %v2278 = vpop.f32.mrb[0].mxu0
    %v2279 = vadd.f32 0.0, %v2278
    %v2280 = vpop.f32.mrb[0].mxu0
    %v2281 = vadd.f32 0.0, %v2280
    %2282 = vmatprep.mubr.f32.mxu0 0.0
    %2283 = vmatmul.mubr.f32.gmra.mrb[0].mxu0 %v1641
    %v2284 = vpop.f32.mrb[0].mxu0
    %v2285 = vadd.f32 0.0, %v2284
    %v2286 = vpop.f32.mrb[0].mxu0
    %v2287 = vadd.f32 0.0, %v2286
    %2288 = vmatprep.mubr.f32.mxu0 0.0
    %2289 = vmatmul.mubr.f32.gmra.mrb[0].mxu0 %v1642
    %v2290 = vpop.f32.mrb[0].mxu0
    %v2291 = vadd.f32 0.0, %v2290
    %v2292 = vpop.f32.mrb[0].mxu0
    %v2293 = vadd.f32 0.0, %v2292
    %2294 = vdwg.mxu0
    %v2295 = vadd.f32 %v2101, %v2184
    %v2296 = vadd.f32 %v2102, %v2186
    %v2297 = vadd.f32 %v2103, %v2273
    %v2298 = vadd.f32 %v2104, %v2275
    %v2299 = vadd.f32 %v2105, %v2190
    %v2300 = vadd.f32 %v2106, %v2192
    %v2301 = vadd.f32 %v2107, %v2279
    %v2302 = vadd.f32 %v2108, %v2281
    %v2303 = vadd.f32 %v2109, %v2196
    %v2304 = vadd.f32 %v2110, %v2198
    %v2305 = vadd.f32 %v2111, %v2285
    %v2306 = vadd.f32 %v2112, %v2287
    %v2307 = vadd.f32 %v2113, %v2202
    %v2308 = vadd.f32 %v2114, %v2204
    %v2309 = vadd.f32 %v2115, %v2291
    %v2310 = vadd.f32 %v2116, %v2293
    %v2311 = vxor.u32 %v2295, 2147483648
    %v2312 = vxor.u32 %v2296, 2147483648
    %v2313 = vxor.u32 %v2297, 2147483648
    %v2314 = vxor.u32 %v2299, 2147483648
    %v2315 = vxor.u32 %v2300, 2147483648
    %v2316 = vxor.u32 %v2301, 2147483648
    %v2317 = vxor.u32 %v2303, 2147483648
    %v2318 = vxor.u32 %v2304, 2147483648
    %v2319 = vxor.u32 %v2305, 2147483648
    %v2320 = vxor.u32 %v2307, 2147483648
    %v2321 = vxor.u32 %v2308, 2147483648
    %v2322 = vxor.u32 %v2309, 2147483648
    %v2323 = vmul.f32 %v2311, 1.442695
    %v2324 = vpow.pop %v2323
    %v2325 = vmul.f32 %v2312, 1.442695
    %v2326 = vpow.pop %v2325
    %v2327 = vmul.f32 %v2313, 1.442695
    %v2328 = vpow.pop %v2327
    %v2329 = vmul.f32 %v2314, 1.442695
    %v2330 = vpow.pop %v2329
    %v2331 = vmul.f32 %v2315, 1.442695
    %v2332 = vpow.pop %v2331
    %v2333 = vmul.f32 %v2316, 1.442695
    %v2334 = vpow.pop %v2333
    %v2335 = vmul.f32 %v2317, 1.442695
    %v2336 = vpow.pop %v2335
    %v2337 = vmul.f32 %v2318, 1.442695
    %v2338 = vpow.pop %v2337
    %v2339 = vmul.f32 %v2319, 1.442695
    %v2340 = vpow.pop %v2339
    %v2341 = vmul.f32 %v2320, 1.442695
    %v2342 = vpow.pop %v2341
    %v2343 = vmul.f32 %v2321, 1.442695
    %v2344 = vpow.pop %v2343
    %v2345 = vmul.f32 %v2322, 1.442695
    %v2346 = vpow.pop %v2345
    %v2347 = vadd.f32 %v2324, 1.0
    %v2348 = vadd.f32 %v2326, 1.0
    %v2349 = vadd.f32 %v2328, 1.0
    %v2350 = vadd.f32 %v2330, 1.0
    %v2351 = vadd.f32 %v2332, 1.0
    %v2352 = vadd.f32 %v2334, 1.0
    %v2353 = vadd.f32 %v2336, 1.0
    %v2354 = vadd.f32 %v2338, 1.0
    %v2355 = vadd.f32 %v2340, 1.0
    %v2356 = vadd.f32 %v2342, 1.0
    %v2357 = vadd.f32 %v2344, 1.0
    %v2358 = vadd.f32 %v2346, 1.0
    %v2359 = vrcp.pop %v2347
    %v2360 = vmul.f32 1.0, %v2359
    %v2361 = vrcp.pop %v2348
    %v2362 = vmul.f32 1.0, %v2361
    %v2363 = vrcp.pop %v2349
    %v2364 = vmul.f32 1.0, %v2363
    %v2365 = vrcp.pop %v2350
    %v2366 = vmul.f32 1.0, %v2365
    %v2367 = vrcp.pop %v2351
    %v2368 = vmul.f32 1.0, %v2367
    %v2369 = vrcp.pop %v2352
    %v2370 = vmul.f32 1.0, %v2369
    %v2371 = vrcp.pop %v2353
    %v2372 = vmul.f32 1.0, %v2371
    %v2373 = vrcp.pop %v2354
    %v2374 = vmul.f32 1.0, %v2373
    %v2375 = vrcp.pop %v2355
    %v2376 = vmul.f32 1.0, %v2375
    %v2377 = vrcp.pop %v2356
    %v2378 = vmul.f32 1.0, %v2377
    %v2379 = vrcp.pop %v2357
    %v2380 = vmul.f32 1.0, %v2379
    %v2381 = vrcp.pop %v2358
    %v2382 = vmul.f32 1.0, %v2381
    %v2383 = vtanh.pop %v2298
    %v2384 = vtanh.pop %v2302
    %v2385 = vtanh.pop %v2306
    %v2386 = vtanh.pop %v2310
    %v2387 = vmul.f32 %v2362, %v1631
    %v2388 = vmul.f32 %v2368, %v1632
    %v2389 = vmul.f32 %v2374, %v1633
    %v2390 = vmul.f32 %v2380, %v1634
    %v2391 = vmul.f32 %v2360, %v2383
    %v2392 = vmul.f32 %v2366, %v2384
    %v2393 = vmul.f32 %v2372, %v2385
    %v2394 = vmul.f32 %v2378, %v2386
    %v2395 = vadd.f32 %v2387, %v2391
    %v2396 = vadd.f32 %v2388, %v2392
    %v2397 = vadd.f32 %v2389, %v2393
    %v2398 = vadd.f32 %v2390, %v2394
    %v2399 = vtanh.pop %v2395
    %v2400 = vtanh.pop %v2396
    %v2401 = vtanh.pop %v2397
    %v2402 = vtanh.pop %v2398
    %v2403 = vmul.f32 %v2364, %v2399
    %v2404 = vmul.f32 %v2370, %v2400
    %v2405 = vmul.f32 %v2376, %v2401
    %v2406 = vmul.f32 %v2382, %v2402
    %2407 = vmatprep.subr.mxu0 %v231
    %2408 = vmatpush1.msra.mxu0 %v230
    %2409 = vmatprep.subr.mxu0 %v235
    %2410 = vmatpush1.msra.mxu0 %v234
    %2411 = vmatprep.subr.mxu0 %v239
    %2412 = vmatpush1.msra.mxu0 %v238
    %2413 = vmatprep.subr.mxu0 %v243
    %2414 = vmatpush1.msra.mxu0 %v242
    %2415 = vmatprep.subr.mxu0 %v247
    %2416 = vmatpush1.msra.mxu0 %v246
    %2417 = vmatprep.subr.mxu0 %v251
    %2418 = vmatpush1.msra.mxu0 %v250
    %2419 = vmatprep.subr.mxu0 %v255
    %2420 = vmatpush1.msra.mxu0 %v254
    %2421 = vmatprep.subr.mxu0 %v259
    %2422 = vmatpush1.msra.mxu0 %v258
    %2423 = vmatprep.subr.mxu0 %v263
    %2424 = vmatpush1.msra.mxu0 %v262
    %2425 = vmatprep.subr.mxu0 %v267
    %2426 = vmatpush1.msra.mxu0 %v266
    %2427 = vmatprep.subr.mxu0 %v271
    %2428 = vmatpush1.msra.mxu0 %v270
    %2429 = vmatprep.subr.mxu0 %v275
    %2430 = vmatpush1.msra.mxu0 %v274
    %2431 = vmatprep.subr.mxu0 %v279
    %2432 = vmatpush1.msra.mxu0 %v278
    %2433 = vmatprep.subr.mxu0 %v283
    %2434 = vmatpush1.msra.mxu0 %v282
    %2435 = vmatprep.subr.mxu0 %v287
    %2436 = vmatpush1.msra.mxu0 %v286
    %2437 = vmatprep.subr.mxu0 %v291
    %2438 = vmatpush1.msra.mxu0 %v290
    %2439 = vmatprep.subr.mxu0 0.0
    %2440 = vmatpush1.msra.mxu0 0.0
    %2441 = vmatprep.subr.mxu0 0.0
    %2442 = vmatpush1.msra.mxu0 0.0
    %2443 = vmatprep.subr.mxu0 0.0
    %2444 = vmatpush1.msra.mxu0 0.0
    %2445 = vmatprep.subr.mxu0 0.0
    %2446 = vmatpush1.msra.mxu0 0.0
    %2447 = vmatprep.subr.mxu0 0.0
    %2448 = vmatpush1.msra.mxu0 0.0
    %2449 = vmatprep.subr.mxu0 0.0
    %2450 = vmatpush1.msra.mxu0 0.0
    %2451 = vmatprep.subr.mxu0 0.0
    %2452 = vmatpush1.msra.mxu0 0.0
    %2453 = vmatprep.subr.mxu0 0.0
    %2454 = vmatpush1.msra.mxu0 0.0
    %2455 = vmatprep.subr.mxu0 0.0
    %2456 = vmatpush1.msra.mxu0 0.0
    %2457 = vmatprep.subr.mxu0 0.0
    %2458 = vmatpush1.msra.mxu0 0.0
    %2459 = vmatprep.subr.mxu0 0.0
    %2460 = vmatpush1.msra.mxu0 0.0
    %2461 = vmatprep.subr.mxu0 0.0
    %2462 = vmatpush1.msra.mxu0 0.0
    %2463 = vmatprep.subr.mxu0 0.0
    %2464 = vmatpush1.msra.mxu0 0.0
    %2465 = vmatprep.subr.mxu0 0.0
    %2466 = vmatpush1.msra.mxu0 0.0
    %2467 = vmatprep.subr.mxu0 0.0
    %2468 = vmatpush1.msra.mxu0 0.0
    %2469 = vmatprep.subr.mxu0 0.0
    %2470 = vmatpush1.msra.mxu0 0.0
    %2471 = vmatprep.mubr.f32.mxu0 0.0
    %2472 = vmatmul.mubr.f32.gmra.mrb[0].mxu0 %v2403
    %v2473 = vpop.f32.mrb[0].mxu0
    %v2474 = vadd.f32 %v1989, %v2473
    %v2475 = vpop.f32.mrb[0].mxu0
    %v2476 = vadd.f32 %v1991, %v2475
    %2477 = vmatprep.mubr.f32.mxu0 0.0
    %2478 = vmatmul.mubr.f32.gmra.mrb[0].mxu0 %v2404
    %v2479 = vpop.f32.mrb[0].mxu0
    %v2480 = vadd.f32 %v1995, %v2479
    %v2481 = vpop.f32.mrb[0].mxu0
    %v2482 = vadd.f32 %v1997, %v2481
    %2483 = vmatprep.mubr.f32.mxu0 0.0
    %2484 = vmatmul.mubr.f32.gmra.mrb[0].mxu0 %v2405
    %v2485 = vpop.f32.mrb[0].mxu0
    %v2486 = vadd.f32 %v2001, %v2485
    %v2487 = vpop.f32.mrb[0].mxu0
    %v2488 = vadd.f32 %v2003, %v2487
    %2489 = vmatprep.mubr.f32.mxu0 0.0
    %2490 = vmatmul.mubr.f32.gmra.mrb[0].mxu0 %v2406
    %v2491 = vpop.f32.mrb[0].mxu0
    %v2492 = vadd.f32 %v2007, %v2491
    %v2493 = vpop.f32.mrb[0].mxu0
    %v2494 = vadd.f32 %v2009, %v2493
    %2495 = vdwg.mxu0
    %2496 = vmatprep.subr.mxu0 %v233
    %2497 = vmatpush1.msra.mxu0 %v232
    %2498 = vmatprep.subr.mxu0 %v237
    %2499 = vmatpush1.msra.mxu0 %v236
    %2500 = vmatprep.subr.mxu0 %v241
    %2501 = vmatpush1.msra.mxu0 %v240
    %2502 = vmatprep.subr.mxu0 %v245
    %2503 = vmatpush1.msra.mxu0 %v244
    %2504 = vmatprep.subr.mxu0 %v249
    %2505 = vmatpush1.msra.mxu0 %v248
    %2506 = vmatprep.subr.mxu0 %v253
    %2507 = vmatpush1.msra.mxu0 %v252
    %2508 = vmatprep.subr.mxu0 %v257
    %2509 = vmatpush1.msra.mxu0 %v256
    %2510 = vmatprep.subr.mxu0 %v261
    %2511 = vmatpush1.msra.mxu0 %v260
    %2512 = vmatprep.subr.mxu0 %v265
    %2513 = vmatpush1.msra.mxu0 %v264
    %2514 = vmatprep.subr.mxu0 %v269
    %2515 = vmatpush1.msra.mxu0 %v268
    %2516 = vmatprep.subr.mxu0 %v273
    %2517 = vmatpush1.msra.mxu0 %v272
    %2518 = vmatprep.subr.mxu0 %v277
    %2519 = vmatpush1.msra.mxu0 %v276
    %2520 = vmatprep.subr.mxu0 %v281
    %2521 = vmatpush1.msra.mxu0 %v280
    %2522 = vmatprep.subr.mxu0 %v285
    %2523 = vmatpush1.msra.mxu0 %v284
    %2524 = vmatprep.subr.mxu0 %v289
    %2525 = vmatpush1.msra.mxu0 %v288
    %2526 = vmatprep.subr.mxu0 %v293
    %2527 = vmatpush1.msra.mxu0 %v292
    %2528 = vmatprep.subr.mxu0 0.0
    %2529 = vmatpush1.msra.mxu0 0.0
    %2530 = vmatprep.subr.mxu0 0.0
    %2531 = vmatpush1.msra.mxu0 0.0
    %2532 = vmatprep.subr.mxu0 0.0
    %2533 = vmatpush1.msra.mxu0 0.0
    %2534 = vmatprep.subr.mxu0 0.0
    %2535 = vmatpush1.msra.mxu0 0.0
    %2536 = vmatprep.subr.mxu0 0.0
    %2537 = vmatpush1.msra.mxu0 0.0
    %2538 = vmatprep.subr.mxu0 0.0
    %2539 = vmatpush1.msra.mxu0 0.0
    %2540 = vmatprep.subr.mxu0 0.0
    %2541 = vmatpush1.msra.mxu0 0.0
    %2542 = vmatprep.subr.mxu0 0.0
    %2543 = vmatpush1.msra.mxu0 0.0
    %2544 = vmatprep.subr.mxu0 0.0
    %2545 = vmatpush1.msra.mxu0 0.0
    %2546 = vmatprep.subr.mxu0 0.0
    %2547 = vmatpush1.msra.mxu0 0.0
    %2548 = vmatprep.subr.mxu0 0.0
    %2549 = vmatpush1.msra.mxu0 0.0
    %2550 = vmatprep.subr.mxu0 0.0
    %2551 = vmatpush1.msra.mxu0 0.0
    %2552 = vmatprep.subr.mxu0 0.0
    %2553 = vmatpush1.msra.mxu0 0.0
    %2554 = vmatprep.subr.mxu0 0.0
    %2555 = vmatpush1.msra.mxu0 0.0
    %2556 = vmatprep.subr.mxu0 0.0
    %2557 = vmatpush1.msra.mxu0 0.0
    %2558 = vmatprep.subr.mxu0 0.0
    %2559 = vmatpush1.msra.mxu0 0.0
    %2560 = vmatprep.mubr.f32.mxu0 0.0
    %2561 = vmatmul.mubr.f32.gmra.mrb[0].mxu0 %v2403
    %v2562 = vpop.f32.mrb[0].mxu0
    %v2563 = vadd.f32 %v2078, %v2562
    %v2564 = vpop.f32.mrb[0].mxu0
    %v2565 = vadd.f32 %v2080, %v2564
    %2566 = vmatprep.mubr.f32.mxu0 0.0
    %2567 = vmatmul.mubr.f32.gmra.mrb[0].mxu0 %v2404
    %v2568 = vpop.f32.mrb[0].mxu0
    %v2569 = vadd.f32 %v2084, %v2568
    %v2570 = vpop.f32.mrb[0].mxu0
    %v2571 = vadd.f32 %v2086, %v2570
    %2572 = vmatprep.mubr.f32.mxu0 0.0
    %2573 = vmatmul.mubr.f32.gmra.mrb[0].mxu0 %v2405
    %v2574 = vpop.f32.mrb[0].mxu0
    %v2575 = vadd.f32 %v2090, %v2574
    %v2576 = vpop.f32.mrb[0].mxu0
    %v2577 = vadd.f32 %v2092, %v2576
    %2578 = vmatprep.mubr.f32.mxu0 0.0
    %2579 = vmatmul.mubr.f32.gmra.mrb[0].mxu0 %v2406
    %v2580 = vpop.f32.mrb[0].mxu0
    %v2581 = vadd.f32 %v2096, %v2580
    %v2582 = vpop.f32.mrb[0].mxu0
    %v2583 = vadd.f32 %v2098, %v2582
    %2584 = vdwg.mxu0
    %v2585 = vxor.u32 %v2474, 2147483648
    %v2586 = vxor.u32 %v2476, 2147483648
    %v2587 = vxor.u32 %v2563, 2147483648
    %v2588 = vxor.u32 %v2480, 2147483648
    %v2589 = vxor.u32 %v2482, 2147483648
    %v2590 = vxor.u32 %v2569, 2147483648
    %v2591 = vxor.u32 %v2486, 2147483648
    %v2592 = vxor.u32 %v2488, 2147483648
    %v2593 = vxor.u32 %v2575, 2147483648
    %v2594 = vxor.u32 %v2492, 2147483648
    %v2595 = vxor.u32 %v2494, 2147483648
    %v2596 = vxor.u32 %v2581, 2147483648
    %v2597 = vmul.f32 %v2585, 1.442695
    %v2598 = vpow.pop %v2597
    %v2599 = vmul.f32 %v2586, 1.442695
    %v2600 = vpow.pop %v2599
    %v2601 = vmul.f32 %v2587, 1.442695
    %v2602 = vpow.pop %v2601
    %v2603 = vmul.f32 %v2588, 1.442695
    %v2604 = vpow.pop %v2603
    %v2605 = vmul.f32 %v2589, 1.442695
    %v2606 = vpow.pop %v2605
    %v2607 = vmul.f32 %v2590, 1.442695
    %v2608 = vpow.pop %v2607
    %v2609 = vmul.f32 %v2591, 1.442695
    %v2610 = vpow.pop %v2609
    %v2611 = vmul.f32 %v2592, 1.442695
    %v2612 = vpow.pop %v2611
    %v2613 = vmul.f32 %v2593, 1.442695
    %v2614 = vpow.pop %v2613
    %v2615 = vmul.f32 %v2594, 1.442695
    %v2616 = vpow.pop %v2615
    %v2617 = vmul.f32 %v2595, 1.442695
    %v2618 = vpow.pop %v2617
    %v2619 = vmul.f32 %v2596, 1.442695
    %v2620 = vpow.pop %v2619
    %v2621 = vadd.f32 %v2598, 1.0
    %v2622 = vadd.f32 %v2600, 1.0
    %v2623 = vadd.f32 %v2602, 1.0
    %v2624 = vadd.f32 %v2604, 1.0
    %v2625 = vadd.f32 %v2606, 1.0
    %v2626 = vadd.f32 %v2608, 1.0
    %v2627 = vadd.f32 %v2610, 1.0
    %v2628 = vadd.f32 %v2612, 1.0
    %v2629 = vadd.f32 %v2614, 1.0
    %v2630 = vadd.f32 %v2616, 1.0
    %v2631 = vadd.f32 %v2618, 1.0
    %v2632 = vadd.f32 %v2620, 1.0
    %v2633 = vrcp.pop %v2621
    %v2634 = vmul.f32 1.0, %v2633
    %v2635 = vrcp.pop %v2622
    %v2636 = vmul.f32 1.0, %v2635
    %v2637 = vrcp.pop %v2623
    %v2638 = vmul.f32 1.0, %v2637
    %v2639 = vrcp.pop %v2624
    %v2640 = vmul.f32 1.0, %v2639
    %v2641 = vrcp.pop %v2625
    %v2642 = vmul.f32 1.0, %v2641
    %v2643 = vrcp.pop %v2626
    %v2644 = vmul.f32 1.0, %v2643
    %v2645 = vrcp.pop %v2627
    %v2646 = vmul.f32 1.0, %v2645
    %v2647 = vrcp.pop %v2628
    %v2648 = vmul.f32 1.0, %v2647
    %v2649 = vrcp.pop %v2629
    %v2650 = vmul.f32 1.0, %v2649
    %v2651 = vrcp.pop %v2630
    %v2652 = vmul.f32 1.0, %v2651
    %v2653 = vrcp.pop %v2631
    %v2654 = vmul.f32 1.0, %v2653
    %v2655 = vrcp.pop %v2632
    %v2656 = vmul.f32 1.0, %v2655
    %v2657 = vtanh.pop %v2565
    %v2658 = vtanh.pop %v2571
    %v2659 = vtanh.pop %v2577
    %v2660 = vtanh.pop %v2583
    %v2661 = vmul.f32 %v2636, %v1905
    %v2662 = vmul.f32 %v2642, %v1906
    %v2663 = vmul.f32 %v2648, %v1907
    %v2664 = vmul.f32 %v2654, %v1908
    %v2665 = vmul.f32 %v2634, %v2657
    %v2666 = vmul.f32 %v2640, %v2658
    %v2667 = vmul.f32 %v2646, %v2659
    %v2668 = vmul.f32 %v2652, %v2660
    %v2669 = vadd.f32 %v2661, %v2665
    %v2670 = vadd.f32 %v2662, %v2666
    %v2671 = vadd.f32 %v2663, %v2667
    %v2672 = vadd.f32 %v2664, %v2668
    %v2673 = vtanh.pop %v2669
    %v2674 = vtanh.pop %v2670
    %v2675 = vtanh.pop %v2671
    %v2676 = vtanh.pop %v2672
    %v2677 = vmul.f32 %v2638, %v2673
    %v2678 = vmul.f32 %v2644, %v2674
    %v2679 = vmul.f32 %v2650, %v2675
    %v2680 = vmul.f32 %v2656, %v2676
    %s2681 = scalar_lea.vmem [#allocation2], 64
    %2682 = vst [vmem:[%s2681] sm:$0xff] %v2677
    %2683 = vst [vmem:[%s2681 + $0x8] sm:$0xff] %v2678
    %2684 = vst [vmem:[%s2681 + $0x10] sm:$0xff] %v2679
    %2685 = vst [vmem:[%s2681 + $0x18] sm:$0xff] %v2680
    %2686 = vmatprep.subr.mxu0 %v295
    %2687 = vmatpush1.msra.mxu0 %v294
    %2688 = vmatprep.subr.mxu0 %v299
    %2689 = vmatpush1.msra.mxu0 %v298
    %2690 = vmatprep.subr.mxu0 %v303
    %2691 = vmatpush1.msra.mxu0 %v302
    %2692 = vmatprep.subr.mxu0 %v307
    %2693 = vmatpush1.msra.mxu0 %v306
    %2694 = vmatprep.subr.mxu0 %v311
    %2695 = vmatpush1.msra.mxu0 %v310
    %2696 = vmatprep.subr.mxu0 %v315
    %2697 = vmatpush1.msra.mxu0 %v314
    %2698 = vmatprep.subr.mxu0 %v319
    %2699 = vmatpush1.msra.mxu0 %v318
    %2700 = vmatprep.subr.mxu0 %v323
    %2701 = vmatpush1.msra.mxu0 %v322
    %2702 = vmatprep.subr.mxu0 %v327
    %2703 = vmatpush1.msra.mxu0 %v326
    %2704 = vmatprep.subr.mxu0 %v331
    %2705 = vmatpush1.msra.mxu0 %v330
    %2706 = vmatprep.subr.mxu0 %v335
    %2707 = vmatpush1.msra.mxu0 %v334
    %2708 = vmatprep.subr.mxu0 %v339
    %2709 = vmatpush1.msra.mxu0 %v338
    %2710 = vmatprep.subr.mxu0 %v343
    %2711 = vmatpush1.msra.mxu0 %v342
    %2712 = vmatprep.subr.mxu0 %v347
    %2713 = vmatpush1.msra.mxu0 %v346
    %2714 = vmatprep.subr.mxu0 %v351
    %2715 = vmatpush1.msra.mxu0 %v350
    %2716 = vmatprep.subr.mxu0 %v355
    %2717 = vmatpush1.msra.mxu0 %v354
    %2718 = vmatprep.subr.mxu0 0.0
    %2719 = vmatpush1.msra.mxu0 0.0
    %2720 = vmatprep.subr.mxu0 0.0
    %2721 = vmatpush1.msra.mxu0 0.0
    %2722 = vmatprep.subr.mxu0 0.0
    %2723 = vmatpush1.msra.mxu0 0.0
    %2724 = vmatprep.subr.mxu0 0.0
    %2725 = vmatpush1.msra.mxu0 0.0
    %2726 = vmatprep.subr.mxu0 0.0
    %2727 = vmatpush1.msra.mxu0 0.0
    %2728 = vmatprep.subr.mxu0 0.0
    %2729 = vmatpush1.msra.mxu0 0.0
    %2730 = vmatprep.subr.mxu0 0.0
    %2731 = vmatpush1.msra.mxu0 0.0
    %2732 = vmatprep.subr.mxu0 0.0
    %2733 = vmatpush1.msra.mxu0 0.0
    %2734 = vmatprep.subr.mxu0 0.0
    %2735 = vmatpush1.msra.mxu0 0.0
    %2736 = vmatprep.subr.mxu0 0.0
    %2737 = vmatpush1.msra.mxu0 0.0
    %2738 = vmatprep.subr.mxu0 0.0
    %2739 = vmatpush1.msra.mxu0 0.0
    %2740 = vmatprep.subr.mxu0 0.0
    %2741 = vmatpush1.msra.mxu0 0.0
    %2742 = vmatprep.subr.mxu0 0.0
    %2743 = vmatpush1.msra.mxu0 0.0
    %2744 = vmatprep.subr.mxu0 0.0
    %2745 = vmatpush1.msra.mxu0 0.0
    %2746 = vmatprep.subr.mxu0 0.0
    %2747 = vmatpush1.msra.mxu0 0.0
    %2748 = vmatprep.subr.mxu0 0.0
    %2749 = vmatpush1.msra.mxu0 0.0
    %2750 = vmatprep.mubr.f32.mxu0 0.0
    %2751 = vmatmul.mubr.f32.gmra.mrb[0].mxu0 %v2677
    %v2752 = vpop.f32.mrb[0].mxu0
    %v2753 = vadd.f32 %v363, %v2752
    %v2754 = vpop.f32.mrb[0].mxu0
    %v2755 = vadd.f32 %v367, %v2754
    %2756 = vmatprep.mubr.f32.mxu0 0.0
    %2757 = vmatmul.mubr.f32.gmra.mrb[0].mxu0 %v2678
    %v2758 = vpop.f32.mrb[0].mxu0
    %v2759 = vadd.f32 %v363, %v2758
    %v2760 = vpop.f32.mrb[0].mxu0
    %v2761 = vadd.f32 %v367, %v2760
    %2762 = vmatprep.mubr.f32.mxu0 0.0
    %2763 = vmatmul.mubr.f32.gmra.mrb[0].mxu0 %v2679
    %v2764 = vpop.f32.mrb[0].mxu0
    %v2765 = vadd.f32 %v363, %v2764
    %v2766 = vpop.f32.mrb[0].mxu0
    %v2767 = vadd.f32 %v367, %v2766
    %2768 = vmatprep.mubr.f32.mxu0 0.0
    %2769 = vmatmul.mubr.f32.gmra.mrb[0].mxu0 %v2680
    %v2770 = vpop.f32.mrb[0].mxu0
    %v2771 = vadd.f32 %v363, %v2770
    %v2772 = vpop.f32.mrb[0].mxu0
    %v2773 = vadd.f32 %v367, %v2772
    %2774 = vdwg.mxu0
    %2775 = vmatprep.subr.mxu0 %v297
    %2776 = vmatpush1.msra.mxu0 %v296
    %2777 = vmatprep.subr.mxu0 %v301
    %2778 = vmatpush1.msra.mxu0 %v300
    %2779 = vmatprep.subr.mxu0 %v305
    %2780 = vmatpush1.msra.mxu0 %v304
    %2781 = vmatprep.subr.mxu0 %v309
    %2782 = vmatpush1.msra.mxu0 %v308
    %2783 = vmatprep.subr.mxu0 %v313
    %2784 = vmatpush1.msra.mxu0 %v312
    %2785 = vmatprep.subr.mxu0 %v317
    %2786 = vmatpush1.msra.mxu0 %v316
    %2787 = vmatprep.subr.mxu0 %v321
    %2788 = vmatpush1.msra.mxu0 %v320
    %2789 = vmatprep.subr.mxu0 %v325
    %2790 = vmatpush1.msra.mxu0 %v324
    %2791 = vmatprep.subr.mxu0 %v329
    %2792 = vmatpush1.msra.mxu0 %v328
    %2793 = vmatprep.subr.mxu0 %v333
    %2794 = vmatpush1.msra.mxu0 %v332
    %2795 = vmatprep.subr.mxu0 %v337
    %2796 = vmatpush1.msra.mxu0 %v336
    %2797 = vmatprep.subr.mxu0 %v341
    %2798 = vmatpush1.msra.mxu0 %v340
    %2799 = vmatprep.subr.mxu0 %v345
    %2800 = vmatpush1.msra.mxu0 %v344
    %2801 = vmatprep.subr.mxu0 %v349
    %2802 = vmatpush1.msra.mxu0 %v348
    %2803 = vmatprep.subr.mxu0 %v353
    %2804 = vmatpush1.msra.mxu0 %v352
    %2805 = vmatprep.subr.mxu0 %v357
    %2806 = vmatpush1.msra.mxu0 %v356
    %2807 = vmatprep.subr.mxu0 0.0
    %2808 = vmatpush1.msra.mxu0 0.0
    %2809 = vmatprep.subr.mxu0 0.0
    %2810 = vmatpush1.msra.mxu0 0.0
    %2811 = vmatprep.subr.mxu0 0.0
    %2812 = vmatpush1.msra.mxu0 0.0
    %2813 = vmatprep.subr.mxu0 0.0
    %2814 = vmatpush1.msra.mxu0 0.0
    %2815 = vmatprep.subr.mxu0 0.0
    %2816 = vmatpush1.msra.mxu0 0.0
    %2817 = vmatprep.subr.mxu0 0.0
    %2818 = vmatpush1.msra.mxu0 0.0
    %2819 = vmatprep.subr.mxu0 0.0
    %2820 = vmatpush1.msra.mxu0 0.0
    %2821 = vmatprep.subr.mxu0 0.0
    %2822 = vmatpush1.msra.mxu0 0.0
    %2823 = vmatprep.subr.mxu0 0.0
    %2824 = vmatpush1.msra.mxu0 0.0
    %2825 = vmatprep.subr.mxu0 0.0
    %2826 = vmatpush1.msra.mxu0 0.0
    %2827 = vmatprep.subr.mxu0 0.0
    %2828 = vmatpush1.msra.mxu0 0.0
    %2829 = vmatprep.subr.mxu0 0.0
    %2830 = vmatpush1.msra.mxu0 0.0
    %2831 = vmatprep.subr.mxu0 0.0
    %2832 = vmatpush1.msra.mxu0 0.0
    %2833 = vmatprep.subr.mxu0 0.0
    %2834 = vmatpush1.msra.mxu0 0.0
    %2835 = vmatprep.subr.mxu0 0.0
    %2836 = vmatpush1.msra.mxu0 0.0
    %2837 = vmatprep.subr.mxu0 0.0
    %2838 = vmatpush1.msra.mxu0 0.0
    %2839 = vmatprep.mubr.f32.mxu0 0.0
    %2840 = vmatmul.mubr.f32.gmra.mrb[0].mxu0 %v2677
    %v2841 = vpop.f32.mrb[0].mxu0
    %v2842 = vadd.f32 %v371, %v2841
    %v2843 = vpop.f32.mrb[0].mxu0
    %v2844 = vadd.f32 %v375, %v2843
    %2845 = vmatprep.mubr.f32.mxu0 0.0
    %2846 = vmatmul.mubr.f32.gmra.mrb[0].mxu0 %v2678
    %v2847 = vpop.f32.mrb[0].mxu0
    %v2848 = vadd.f32 %v371, %v2847
    %v2849 = vpop.f32.mrb[0].mxu0
    %v2850 = vadd.f32 %v375, %v2849
    %2851 = vmatprep.mubr.f32.mxu0 0.0
    %2852 = vmatmul.mubr.f32.gmra.mrb[0].mxu0 %v2679
    %v2853 = vpop.f32.mrb[0].mxu0
    %v2854 = vadd.f32 %v371, %v2853
    %v2855 = vpop.f32.mrb[0].mxu0
    %v2856 = vadd.f32 %v375, %v2855
    %2857 = vmatprep.mubr.f32.mxu0 0.0
    %2858 = vmatmul.mubr.f32.gmra.mrb[0].mxu0 %v2680
    %v2859 = vpop.f32.mrb[0].mxu0
    %v2860 = vadd.f32 %v371, %v2859
    %v2861 = vpop.f32.mrb[0].mxu0
    %v2862 = vadd.f32 %v375, %v2861
    %2863 = vdwg.mxu0
    %s2864 = scalar_lea.vmem [#allocation3], 384
    %v2865 = vld [vmem:[%s2864] sm:$0xff]
    %v2866 = vld [vmem:[%s2864 + $0x8] sm:$0xff]
    %v2867 = vld [vmem:[%s2864 + $0x10] sm:$0xff]
    %v2868 = vld [vmem:[%s2864 + $0x18] sm:$0xff]
    %v2869 = vld [vmem:[%s2864 + $0x20] sm:$0xff]
    %v2870 = vld [vmem:[%s2864 + $0x28] sm:$0xff]
    %v2871 = vld [vmem:[%s2864 + $0x30] sm:$0xff]
    %v2872 = vld [vmem:[%s2864 + $0x38] sm:$0xff]
    %v2873 = vld [vmem:[%s2864 + $0x40] sm:$0xff]
    %v2874 = vld [vmem:[%s2864 + $0x48] sm:$0xff]
    %v2875 = vld [vmem:[%s2864 + $0x50] sm:$0xff]
    %v2876 = vld [vmem:[%s2864 + $0x58] sm:$0xff]
    %v2877 = vld [vmem:[%s2864 + $0x60] sm:$0xff]
    %v2878 = vld [vmem:[%s2864 + $0x68] sm:$0xff]
    %v2879 = vld [vmem:[%s2864 + $0x70] sm:$0xff]
    %v2880 = vld [vmem:[%s2864 + $0x78] sm:$0xff]
    %2881 = vmatprep.subr.mxu0 %v167
    %2882 = vmatpush1.msra.mxu0 %v166
    %2883 = vmatprep.subr.mxu0 %v171
    %2884 = vmatpush1.msra.mxu0 %v170
    %2885 = vmatprep.subr.mxu0 %v175
    %2886 = vmatpush1.msra.mxu0 %v174
    %2887 = vmatprep.subr.mxu0 %v179
    %2888 = vmatpush1.msra.mxu0 %v178
    %2889 = vmatprep.subr.mxu0 %v183
    %2890 = vmatpush1.msra.mxu0 %v182
    %2891 = vmatprep.subr.mxu0 %v187
    %2892 = vmatpush1.msra.mxu0 %v186
    %2893 = vmatprep.subr.mxu0 %v191
    %2894 = vmatpush1.msra.mxu0 %v190
    %2895 = vmatprep.subr.mxu0 %v195
    %2896 = vmatpush1.msra.mxu0 %v194
    %2897 = vmatprep.subr.mxu0 %v199
    %2898 = vmatpush1.msra.mxu0 %v198
    %2899 = vmatprep.subr.mxu0 %v203
    %2900 = vmatpush1.msra.mxu0 %v202
    %2901 = vmatprep.subr.mxu0 %v207
    %2902 = vmatpush1.msra.mxu0 %v206
    %2903 = vmatprep.subr.mxu0 %v211
    %2904 = vmatpush1.msra.mxu0 %v210
    %2905 = vmatprep.subr.mxu0 %v215
    %2906 = vmatpush1.msra.mxu0 %v214
    %2907 = vmatprep.subr.mxu0 %v219
    %2908 = vmatpush1.msra.mxu0 %v218
    %2909 = vmatprep.subr.mxu0 %v223
    %2910 = vmatpush1.msra.mxu0 %v222
    %2911 = vmatprep.subr.mxu0 %v227
    %2912 = vmatpush1.msra.mxu0 %v226
    %2913 = vmatprep.subr.mxu0 0.0
    %2914 = vmatpush1.msra.mxu0 0.0
    %2915 = vmatprep.subr.mxu0 0.0
    %2916 = vmatpush1.msra.mxu0 0.0
    %2917 = vmatprep.subr.mxu0 0.0
    %2918 = vmatpush1.msra.mxu0 0.0
    %2919 = vmatprep.subr.mxu0 0.0
    %2920 = vmatpush1.msra.mxu0 0.0
    %2921 = vmatprep.subr.mxu0 0.0
    %2922 = vmatpush1.msra.mxu0 0.0
    %2923 = vmatprep.subr.mxu0 0.0
    %2924 = vmatpush1.msra.mxu0 0.0
    %2925 = vmatprep.subr.mxu0 0.0
    %2926 = vmatpush1.msra.mxu0 0.0
    %2927 = vmatprep.subr.mxu0 0.0
    %2928 = vmatpush1.msra.mxu0 0.0
    %2929 = vmatprep.subr.mxu0 0.0
    %2930 = vmatpush1.msra.mxu0 0.0
    %2931 = vmatprep.subr.mxu0 0.0
    %2932 = vmatpush1.msra.mxu0 0.0
    %2933 = vmatprep.subr.mxu0 0.0
    %2934 = vmatpush1.msra.mxu0 0.0
    %2935 = vmatprep.subr.mxu0 0.0
    %2936 = vmatpush1.msra.mxu0 0.0
    %2937 = vmatprep.subr.mxu0 0.0
    %2938 = vmatpush1.msra.mxu0 0.0
    %2939 = vmatprep.subr.mxu0 0.0
    %2940 = vmatpush1.msra.mxu0 0.0
    %2941 = vmatprep.subr.mxu0 0.0
    %2942 = vmatpush1.msra.mxu0 0.0
    %2943 = vmatprep.subr.mxu0 0.0
    %2944 = vmatpush1.msra.mxu0 0.0
    %2945 = vmatprep.mubr.f32.mxu0 0.0
    %2946 = vmatmul.mubr.f32.gmra.mrb[0].mxu0 %v2403
    %v2947 = vpop.f32.mrb[0].mxu0
    %v2948 = vadd.f32 0.0, %v2947
    %v2949 = vpop.f32.mrb[0].mxu0
    %v2950 = vadd.f32 0.0, %v2949
    %2951 = vmatprep.mubr.f32.mxu0 0.0
    %2952 = vmatmul.mubr.f32.gmra.mrb[0].mxu0 %v2404
    %v2953 = vpop.f32.mrb[0].mxu0
    %v2954 = vadd.f32 0.0, %v2953
    %v2955 = vpop.f32.mrb[0].mxu0
    %v2956 = vadd.f32 0.0, %v2955
    %2957 = vmatprep.mubr.f32.mxu0 0.0
    %2958 = vmatmul.mubr.f32.gmra.mrb[0].mxu0 %v2405
    %v2959 = vpop.f32.mrb[0].mxu0
    %v2960 = vadd.f32 0.0, %v2959
    %v2961 = vpop.f32.mrb[0].mxu0
    %v2962 = vadd.f32 0.0, %v2961
    %2963 = vmatprep.mubr.f32.mxu0 0.0
    %2964 = vmatmul.mubr.f32.gmra.mrb[0].mxu0 %v2406
    %v2965 = vpop.f32.mrb[0].mxu0
    %v2966 = vadd.f32 0.0, %v2965
    %v2967 = vpop.f32.mrb[0].mxu0
    %v2968 = vadd.f32 0.0, %v2967
    %2969 = vdwg.mxu0
    %2970 = vmatprep.subr.mxu0 %v169
    %2971 = vmatpush1.msra.mxu0 %v168
    %2972 = vmatprep.subr.mxu0 %v173
    %2973 = vmatpush1.msra.mxu0 %v172
    %2974 = vmatprep.subr.mxu0 %v177
    %2975 = vmatpush1.msra.mxu0 %v176
    %2976 = vmatprep.subr.mxu0 %v181
    %2977 = vmatpush1.msra.mxu0 %v180
    %2978 = vmatprep.subr.mxu0 %v185
    %2979 = vmatpush1.msra.mxu0 %v184
    %2980 = vmatprep.subr.mxu0 %v189
    %2981 = vmatpush1.msra.mxu0 %v188
    %2982 = vmatprep.subr.mxu0 %v193
    %2983 = vmatpush1.msra.mxu0 %v192
    %2984 = vmatprep.subr.mxu0 %v197
    %2985 = vmatpush1.msra.mxu0 %v196
    %2986 = vmatprep.subr.mxu0 %v201
    %2987 = vmatpush1.msra.mxu0 %v200
    %2988 = vmatprep.subr.mxu0 %v205
    %2989 = vmatpush1.msra.mxu0 %v204
    %2990 = vmatprep.subr.mxu0 %v209
    %2991 = vmatpush1.msra.mxu0 %v208
    %2992 = vmatprep.subr.mxu0 %v213
    %2993 = vmatpush1.msra.mxu0 %v212
    %2994 = vmatprep.subr.mxu0 %v217
    %2995 = vmatpush1.msra.mxu0 %v216
    %2996 = vmatprep.subr.mxu0 %v221
    %2997 = vmatpush1.msra.mxu0 %v220
    %2998 = vmatprep.subr.mxu0 %v225
    %2999 = vmatpush1.msra.mxu0 %v224
    %3000 = vmatprep.subr.mxu0 %v229
    %3001 = vmatpush1.msra.mxu0 %v228
    %3002 = vmatprep.subr.mxu0 0.0
    %3003 = vmatpush1.msra.mxu0 0.0
    %3004 = vmatprep.subr.mxu0 0.0
    %3005 = vmatpush1.msra.mxu0 0.0
    %3006 = vmatprep.subr.mxu0 0.0
    %3007 = vmatpush1.msra.mxu0 0.0
    %3008 = vmatprep.subr.mxu0 0.0
    %3009 = vmatpush1.msra.mxu0 0.0
    %3010 = vmatprep.subr.mxu0 0.0
    %3011 = vmatpush1.msra.mxu0 0.0
    %3012 = vmatprep.subr.mxu0 0.0
    %3013 = vmatpush1.msra.mxu0 0.0
    %3014 = vmatprep.subr.mxu0 0.0
    %3015 = vmatpush1.msra.mxu0 0.0
    %3016 = vmatprep.subr.mxu0 0.0
    %3017 = vmatpush1.msra.mxu0 0.0
    %3018 = vmatprep.subr.mxu0 0.0
    %3019 = vmatpush1.msra.mxu0 0.0
    %3020 = vmatprep.subr.mxu0 0.0
    %3021 = vmatpush1.msra.mxu0 0.0
    %3022 = vmatprep.subr.mxu0 0.0
    %3023 = vmatpush1.msra.mxu0 0.0
    %3024 = vmatprep.subr.mxu0 0.0
    %3025 = vmatpush1.msra.mxu0 0.0
    %3026 = vmatprep.subr.mxu0 0.0
    %3027 = vmatpush1.msra.mxu0 0.0
    %3028 = vmatprep.subr.mxu0 0.0
    %3029 = vmatpush1.msra.mxu0 0.0
    %3030 = vmatprep.subr.mxu0 0.0
    %3031 = vmatpush1.msra.mxu0 0.0
    %3032 = vmatprep.subr.mxu0 0.0
    %3033 = vmatpush1.msra.mxu0 0.0
    %3034 = vmatprep.mubr.f32.mxu0 0.0
    %3035 = vmatmul.mubr.f32.gmra.mrb[0].mxu0 %v2403
    %v3036 = vpop.f32.mrb[0].mxu0
    %v3037 = vadd.f32 0.0, %v3036
    %v3038 = vpop.f32.mrb[0].mxu0
    %v3039 = vadd.f32 0.0, %v3038
    %3040 = vmatprep.mubr.f32.mxu0 0.0
    %3041 = vmatmul.mubr.f32.gmra.mrb[0].mxu0 %v2404
    %v3042 = vpop.f32.mrb[0].mxu0
    %v3043 = vadd.f32 0.0, %v3042
    %v3044 = vpop.f32.mrb[0].mxu0
    %v3045 = vadd.f32 0.0, %v3044
    %3046 = vmatprep.mubr.f32.mxu0 0.0
    %3047 = vmatmul.mubr.f32.gmra.mrb[0].mxu0 %v2405
    %v3048 = vpop.f32.mrb[0].mxu0
    %v3049 = vadd.f32 0.0, %v3048
    %v3050 = vpop.f32.mrb[0].mxu0
    %v3051 = vadd.f32 0.0, %v3050
    %3052 = vmatprep.mubr.f32.mxu0 0.0
    %3053 = vmatmul.mubr.f32.gmra.mrb[0].mxu0 %v2406
    %v3054 = vpop.f32.mrb[0].mxu0
    %v3055 = vadd.f32 0.0, %v3054
    %v3056 = vpop.f32.mrb[0].mxu0
    %v3057 = vadd.f32 0.0, %v3056
    %3058 = vdwg.mxu0
    %v3059 = vadd.f32 %v2865, %v2948
    %v3060 = vadd.f32 %v2866, %v2950
    %v3061 = vadd.f32 %v2867, %v3037
    %v3062 = vadd.f32 %v2868, %v3039
    %v3063 = vadd.f32 %v2869, %v2954
    %v3064 = vadd.f32 %v2870, %v2956
    %v3065 = vadd.f32 %v2871, %v3043
    %v3066 = vadd.f32 %v2872, %v3045
    %v3067 = vadd.f32 %v2873, %v2960
    %v3068 = vadd.f32 %v2874, %v2962
    %v3069 = vadd.f32 %v2875, %v3049
    %v3070 = vadd.f32 %v2876, %v3051
    %v3071 = vadd.f32 %v2877, %v2966
    %v3072 = vadd.f32 %v2878, %v2968
    %v3073 = vadd.f32 %v2879, %v3055
    %v3074 = vadd.f32 %v2880, %v3057
    %v3075 = vxor.u32 %v3059, 2147483648
    %v3076 = vxor.u32 %v3060, 2147483648
    %v3077 = vxor.u32 %v3061, 2147483648
    %v3078 = vxor.u32 %v3063, 2147483648
    %v3079 = vxor.u32 %v3064, 2147483648
    %v3080 = vxor.u32 %v3065, 2147483648
    %v3081 = vxor.u32 %v3067, 2147483648
    %v3082 = vxor.u32 %v3068, 2147483648
    %v3083 = vxor.u32 %v3069, 2147483648
    %v3084 = vxor.u32 %v3071, 2147483648
    %v3085 = vxor.u32 %v3072, 2147483648
    %v3086 = vxor.u32 %v3073, 2147483648
    %v3087 = vmul.f32 %v3075, 1.442695
    %v3088 = vpow.pop %v3087
    %v3089 = vmul.f32 %v3076, 1.442695
    %v3090 = vpow.pop %v3089
    %v3091 = vmul.f32 %v3077, 1.442695
    %v3092 = vpow.pop %v3091
    %v3093 = vmul.f32 %v3078, 1.442695
    %v3094 = vpow.pop %v3093
    %v3095 = vmul.f32 %v3079, 1.442695
    %v3096 = vpow.pop %v3095
    %v3097 = vmul.f32 %v3080, 1.442695
    %v3098 = vpow.pop %v3097
    %v3099 = vmul.f32 %v3081, 1.442695
    %v3100 = vpow.pop %v3099
    %v3101 = vmul.f32 %v3082, 1.442695
    %v3102 = vpow.pop %v3101
    %v3103 = vmul.f32 %v3083, 1.442695
    %v3104 = vpow.pop %v3103
    %v3105 = vmul.f32 %v3084, 1.442695
    %v3106 = vpow.pop %v3105
    %v3107 = vmul.f32 %v3085, 1.442695
    %v3108 = vpow.pop %v3107
    %v3109 = vmul.f32 %v3086, 1.442695
    %v3110 = vpow.pop %v3109
    %v3111 = vadd.f32 %v3088, 1.0
    %v3112 = vadd.f32 %v3090, 1.0
    %v3113 = vadd.f32 %v3092, 1.0
    %v3114 = vadd.f32 %v3094, 1.0
    %v3115 = vadd.f32 %v3096, 1.0
    %v3116 = vadd.f32 %v3098, 1.0
    %v3117 = vadd.f32 %v3100, 1.0
    %v3118 = vadd.f32 %v3102, 1.0
    %v3119 = vadd.f32 %v3104, 1.0
    %v3120 = vadd.f32 %v3106, 1.0
    %v3121 = vadd.f32 %v3108, 1.0
    %v3122 = vadd.f32 %v3110, 1.0
    %v3123 = vrcp.pop %v3111
    %v3124 = vmul.f32 1.0, %v3123
    %v3125 = vrcp.pop %v3112
    %v3126 = vmul.f32 1.0, %v3125
    %v3127 = vrcp.pop %v3113
    %v3128 = vmul.f32 1.0, %v3127
    %v3129 = vrcp.pop %v3114
    %v3130 = vmul.f32 1.0, %v3129
    %v3131 = vrcp.pop %v3115
    %v3132 = vmul.f32 1.0, %v3131
    %v3133 = vrcp.pop %v3116
    %v3134 = vmul.f32 1.0, %v3133
    %v3135 = vrcp.pop %v3117
    %v3136 = vmul.f32 1.0, %v3135
    %v3137 = vrcp.pop %v3118
    %v3138 = vmul.f32 1.0, %v3137
    %v3139 = vrcp.pop %v3119
    %v3140 = vmul.f32 1.0, %v3139
    %v3141 = vrcp.pop %v3120
    %v3142 = vmul.f32 1.0, %v3141
    %v3143 = vrcp.pop %v3121
    %v3144 = vmul.f32 1.0, %v3143
    %v3145 = vrcp.pop %v3122
    %v3146 = vmul.f32 1.0, %v3145
    %v3147 = vtanh.pop %v3062
    %v3148 = vtanh.pop %v3066
    %v3149 = vtanh.pop %v3070
    %v3150 = vtanh.pop %v3074
    %v3151 = vmul.f32 %v3126, %v2395
    %v3152 = vmul.f32 %v3132, %v2396
    %v3153 = vmul.f32 %v3138, %v2397
    %v3154 = vmul.f32 %v3144, %v2398
    %v3155 = vmul.f32 %v3124, %v3147
    %v3156 = vmul.f32 %v3130, %v3148
    %v3157 = vmul.f32 %v3136, %v3149
    %v3158 = vmul.f32 %v3142, %v3150
    %v3159 = vadd.f32 %v3151, %v3155
    %v3160 = vadd.f32 %v3152, %v3156
    %v3161 = vadd.f32 %v3153, %v3157
    %v3162 = vadd.f32 %v3154, %v3158
    %v3163 = vtanh.pop %v3159
    %v3164 = vtanh.pop %v3160
    %v3165 = vtanh.pop %v3161
    %v3166 = vtanh.pop %v3162
    %v3167 = vmul.f32 %v3128, %v3163
    %v3168 = vmul.f32 %v3134, %v3164
    %v3169 = vmul.f32 %v3140, %v3165
    %v3170 = vmul.f32 %v3146, %v3166
    %3171 = vmatprep.subr.mxu0 %v231
    %3172 = vmatpush1.msra.mxu0 %v230
    %3173 = vmatprep.subr.mxu0 %v235
    %3174 = vmatpush1.msra.mxu0 %v234
    %3175 = vmatprep.subr.mxu0 %v239
    %3176 = vmatpush1.msra.mxu0 %v238
    %3177 = vmatprep.subr.mxu0 %v243
    %3178 = vmatpush1.msra.mxu0 %v242
    %3179 = vmatprep.subr.mxu0 %v247
    %3180 = vmatpush1.msra.mxu0 %v246
    %3181 = vmatprep.subr.mxu0 %v251
    %3182 = vmatpush1.msra.mxu0 %v250
    %3183 = vmatprep.subr.mxu0 %v255
    %3184 = vmatpush1.msra.mxu0 %v254
    %3185 = vmatprep.subr.mxu0 %v259
    %3186 = vmatpush1.msra.mxu0 %v258
    %3187 = vmatprep.subr.mxu0 %v263
    %3188 = vmatpush1.msra.mxu0 %v262
    %3189 = vmatprep.subr.mxu0 %v267
    %3190 = vmatpush1.msra.mxu0 %v266
    %3191 = vmatprep.subr.mxu0 %v271
    %3192 = vmatpush1.msra.mxu0 %v270
    %3193 = vmatprep.subr.mxu0 %v275
    %3194 = vmatpush1.msra.mxu0 %v274
    %3195 = vmatprep.subr.mxu0 %v279
    %3196 = vmatpush1.msra.mxu0 %v278
    %3197 = vmatprep.subr.mxu0 %v283
    %3198 = vmatpush1.msra.mxu0 %v282
    %3199 = vmatprep.subr.mxu0 %v287
    %3200 = vmatpush1.msra.mxu0 %v286
    %3201 = vmatprep.subr.mxu0 %v291
    %3202 = vmatpush1.msra.mxu0 %v290
    %3203 = vmatprep.subr.mxu0 0.0
    %3204 = vmatpush1.msra.mxu0 0.0
    %3205 = vmatprep.subr.mxu0 0.0
    %3206 = vmatpush1.msra.mxu0 0.0
    %3207 = vmatprep.subr.mxu0 0.0
    %3208 = vmatpush1.msra.mxu0 0.0
    %3209 = vmatprep.subr.mxu0 0.0
    %3210 = vmatpush1.msra.mxu0 0.0
    %3211 = vmatprep.subr.mxu0 0.0
    %3212 = vmatpush1.msra.mxu0 0.0
    %3213 = vmatprep.subr.mxu0 0.0
    %3214 = vmatpush1.msra.mxu0 0.0
    %3215 = vmatprep.subr.mxu0 0.0
    %3216 = vmatpush1.msra.mxu0 0.0
    %3217 = vmatprep.subr.mxu0 0.0
    %3218 = vmatpush1.msra.mxu0 0.0
    %3219 = vmatprep.subr.mxu0 0.0
    %3220 = vmatpush1.msra.mxu0 0.0
    %3221 = vmatprep.subr.mxu0 0.0
    %3222 = vmatpush1.msra.mxu0 0.0
    %3223 = vmatprep.subr.mxu0 0.0
    %3224 = vmatpush1.msra.mxu0 0.0
    %3225 = vmatprep.subr.mxu0 0.0
    %3226 = vmatpush1.msra.mxu0 0.0
    %3227 = vmatprep.subr.mxu0 0.0
    %3228 = vmatpush1.msra.mxu0 0.0
    %3229 = vmatprep.subr.mxu0 0.0
    %3230 = vmatpush1.msra.mxu0 0.0
    %3231 = vmatprep.subr.mxu0 0.0
    %3232 = vmatpush1.msra.mxu0 0.0
    %3233 = vmatprep.subr.mxu0 0.0
    %3234 = vmatpush1.msra.mxu0 0.0
    %3235 = vmatprep.mubr.f32.mxu0 0.0
    %3236 = vmatmul.mubr.f32.gmra.mrb[0].mxu0 %v3167
    %v3237 = vpop.f32.mrb[0].mxu0
    %v3238 = vadd.f32 %v2753, %v3237
    %v3239 = vpop.f32.mrb[0].mxu0
    %v3240 = vadd.f32 %v2755, %v3239
    %3241 = vmatprep.mubr.f32.mxu0 0.0
    %3242 = vmatmul.mubr.f32.gmra.mrb[0].mxu0 %v3168
    %v3243 = vpop.f32.mrb[0].mxu0
    %v3244 = vadd.f32 %v2759, %v3243
    %v3245 = vpop.f32.mrb[0].mxu0
    %v3246 = vadd.f32 %v2761, %v3245
    %3247 = vmatprep.mubr.f32.mxu0 0.0
    %3248 = vmatmul.mubr.f32.gmra.mrb[0].mxu0 %v3169
    %v3249 = vpop.f32.mrb[0].mxu0
    %v3250 = vadd.f32 %v2765, %v3249
    %v3251 = vpop.f32.mrb[0].mxu0
    %v3252 = vadd.f32 %v2767, %v3251
    %3253 = vmatprep.mubr.f32.mxu0 0.0
    %3254 = vmatmul.mubr.f32.gmra.mrb[0].mxu0 %v3170
    %v3255 = vpop.f32.mrb[0].mxu0
    %v3256 = vadd.f32 %v2771, %v3255
    %v3257 = vpop.f32.mrb[0].mxu0
    %v3258 = vadd.f32 %v2773, %v3257
    %3259 = vdwg.mxu0
    %3260 = vmatprep.subr.mxu0 %v233
    %3261 = vmatpush1.msra.mxu0 %v232
    %3262 = vmatprep.subr.mxu0 %v237
    %3263 = vmatpush1.msra.mxu0 %v236
    %3264 = vmatprep.subr.mxu0 %v241
    %3265 = vmatpush1.msra.mxu0 %v240
    %3266 = vmatprep.subr.mxu0 %v245
    %3267 = vmatpush1.msra.mxu0 %v244
    %3268 = vmatprep.subr.mxu0 %v249
    %3269 = vmatpush1.msra.mxu0 %v248
    %3270 = vmatprep.subr.mxu0 %v253
    %3271 = vmatpush1.msra.mxu0 %v252
    %3272 = vmatprep.subr.mxu0 %v257
    %3273 = vmatpush1.msra.mxu0 %v256
    %3274 = vmatprep.subr.mxu0 %v261
    %3275 = vmatpush1.msra.mxu0 %v260
    %3276 = vmatprep.subr.mxu0 %v265
    %3277 = vmatpush1.msra.mxu0 %v264
    %3278 = vmatprep.subr.mxu0 %v269
    %3279 = vmatpush1.msra.mxu0 %v268
    %3280 = vmatprep.subr.mxu0 %v273
    %3281 = vmatpush1.msra.mxu0 %v272
    %3282 = vmatprep.subr.mxu0 %v277
    %3283 = vmatpush1.msra.mxu0 %v276
    %3284 = vmatprep.subr.mxu0 %v281
    %3285 = vmatpush1.msra.mxu0 %v280
    %3286 = vmatprep.subr.mxu0 %v285
    %3287 = vmatpush1.msra.mxu0 %v284
    %3288 = vmatprep.subr.mxu0 %v289
    %3289 = vmatpush1.msra.mxu0 %v288
    %3290 = vmatprep.subr.mxu0 %v293
    %3291 = vmatpush1.msra.mxu0 %v292
    %3292 = vmatprep.subr.mxu0 0.0
    %3293 = vmatpush1.msra.mxu0 0.0
    %3294 = vmatprep.subr.mxu0 0.0
    %3295 = vmatpush1.msra.mxu0 0.0
    %3296 = vmatprep.subr.mxu0 0.0
    %3297 = vmatpush1.msra.mxu0 0.0
    %3298 = vmatprep.subr.mxu0 0.0
    %3299 = vmatpush1.msra.mxu0 0.0
    %3300 = vmatprep.subr.mxu0 0.0
    %3301 = vmatpush1.msra.mxu0 0.0
    %3302 = vmatprep.subr.mxu0 0.0
    %3303 = vmatpush1.msra.mxu0 0.0
    %3304 = vmatprep.subr.mxu0 0.0
    %3305 = vmatpush1.msra.mxu0 0.0
    %3306 = vmatprep.subr.mxu0 0.0
    %3307 = vmatpush1.msra.mxu0 0.0
    %3308 = vmatprep.subr.mxu0 0.0
    %3309 = vmatpush1.msra.mxu0 0.0
    %3310 = vmatprep.subr.mxu0 0.0
    %3311 = vmatpush1.msra.mxu0 0.0
    %3312 = vmatprep.subr.mxu0 0.0
    %3313 = vmatpush1.msra.mxu0 0.0
    %3314 = vmatprep.subr.mxu0 0.0
    %3315 = vmatpush1.msra.mxu0 0.0
    %3316 = vmatprep.subr.mxu0 0.0
    %3317 = vmatpush1.msra.mxu0 0.0
    %3318 = vmatprep.subr.mxu0 0.0
    %3319 = vmatpush1.msra.mxu0 0.0
    %3320 = vmatprep.subr.mxu0 0.0
    %3321 = vmatpush1.msra.mxu0 0.0
    %3322 = vmatprep.subr.mxu0 0.0
    %3323 = vmatpush1.msra.mxu0 0.0
    %3324 = vmatprep.mubr.f32.mxu0 0.0
    %3325 = vmatmul.mubr.f32.gmra.mrb[0].mxu0 %v3167
    %v3326 = vpop.f32.mrb[0].mxu0
    %v3327 = vadd.f32 %v2842, %v3326
    %v3328 = vpop.f32.mrb[0].mxu0
    %v3329 = vadd.f32 %v2844, %v3328
    %3330 = vmatprep.mubr.f32.mxu0 0.0
    %3331 = vmatmul.mubr.f32.gmra.mrb[0].mxu0 %v3168
    %v3332 = vpop.f32.mrb[0].mxu0
    %v3333 = vadd.f32 %v2848, %v3332
    %v3334 = vpop.f32.mrb[0].mxu0
    %v3335 = vadd.f32 %v2850, %v3334
    %3336 = vmatprep.mubr.f32.mxu0 0.0
    %3337 = vmatmul.mubr.f32.gmra.mrb[0].mxu0 %v3169
    %v3338 = vpop.f32.mrb[0].mxu0
    %v3339 = vadd.f32 %v2854, %v3338
    %v3340 = vpop.f32.mrb[0].mxu0
    %v3341 = vadd.f32 %v2856, %v3340
    %3342 = vmatprep.mubr.f32.mxu0 0.0
    %3343 = vmatmul.mubr.f32.gmra.mrb[0].mxu0 %v3170
    %v3344 = vpop.f32.mrb[0].mxu0
    %v3345 = vadd.f32 %v2860, %v3344
    %v3346 = vpop.f32.mrb[0].mxu0
    %v3347 = vadd.f32 %v2862, %v3346
    %3348 = vdwg.mxu0
    %v3349 = vxor.u32 %v3238, 2147483648
    %v3350 = vxor.u32 %v3240, 2147483648
    %v3351 = vxor.u32 %v3327, 2147483648
    %v3352 = vxor.u32 %v3244, 2147483648
    %v3353 = vxor.u32 %v3246, 2147483648
    %v3354 = vxor.u32 %v3333, 2147483648
    %v3355 = vxor.u32 %v3250, 2147483648
    %v3356 = vxor.u32 %v3252, 2147483648
    %v3357 = vxor.u32 %v3339, 2147483648
    %v3358 = vxor.u32 %v3256, 2147483648
    %v3359 = vxor.u32 %v3258, 2147483648
    %v3360 = vxor.u32 %v3345, 2147483648
    %v3361 = vmul.f32 %v3349, 1.442695
    %v3362 = vpow.pop %v3361
    %v3363 = vmul.f32 %v3350, 1.442695
    %v3364 = vpow.pop %v3363
    %v3365 = vmul.f32 %v3351, 1.442695
    %v3366 = vpow.pop %v3365
    %v3367 = vmul.f32 %v3352, 1.442695
    %v3368 = vpow.pop %v3367
    %v3369 = vmul.f32 %v3353, 1.442695
    %v3370 = vpow.pop %v3369
    %v3371 = vmul.f32 %v3354, 1.442695
    %v3372 = vpow.pop %v3371
    %v3373 = vmul.f32 %v3355, 1.442695
    %v3374 = vpow.pop %v3373
    %v3375 = vmul.f32 %v3356, 1.442695
    %v3376 = vpow.pop %v3375
    %v3377 = vmul.f32 %v3357, 1.442695
    %v3378 = vpow.pop %v3377
    %v3379 = vmul.f32 %v3358, 1.442695
    %v3380 = vpow.pop %v3379
    %v3381 = vmul.f32 %v3359, 1.442695
    %v3382 = vpow.pop %v3381
    %v3383 = vmul.f32 %v3360, 1.442695
    %v3384 = vpow.pop %v3383
    %v3385 = vadd.f32 %v3362, 1.0
    %v3386 = vadd.f32 %v3364, 1.0
    %v3387 = vadd.f32 %v3366, 1.0
    %v3388 = vadd.f32 %v3368, 1.0
    %v3389 = vadd.f32 %v3370, 1.0
    %v3390 = vadd.f32 %v3372, 1.0
    %v3391 = vadd.f32 %v3374, 1.0
    %v3392 = vadd.f32 %v3376, 1.0
    %v3393 = vadd.f32 %v3378, 1.0
    %v3394 = vadd.f32 %v3380, 1.0
    %v3395 = vadd.f32 %v3382, 1.0
    %v3396 = vadd.f32 %v3384, 1.0
    %v3397 = vrcp.pop %v3385
    %v3398 = vmul.f32 1.0, %v3397
    %v3399 = vrcp.pop %v3386
    %v3400 = vmul.f32 1.0, %v3399
    %v3401 = vrcp.pop %v3387
    %v3402 = vmul.f32 1.0, %v3401
    %v3403 = vrcp.pop %v3388
    %v3404 = vmul.f32 1.0, %v3403
    %v3405 = vrcp.pop %v3389
    %v3406 = vmul.f32 1.0, %v3405
    %v3407 = vrcp.pop %v3390
    %v3408 = vmul.f32 1.0, %v3407
    %v3409 = vrcp.pop %v3391
    %v3410 = vmul.f32 1.0, %v3409
    %v3411 = vrcp.pop %v3392
    %v3412 = vmul.f32 1.0, %v3411
    %v3413 = vrcp.pop %v3393
    %v3414 = vmul.f32 1.0, %v3413
    %v3415 = vrcp.pop %v3394
    %v3416 = vmul.f32 1.0, %v3415
    %v3417 = vrcp.pop %v3395
    %v3418 = vmul.f32 1.0, %v3417
    %v3419 = vrcp.pop %v3396
    %v3420 = vmul.f32 1.0, %v3419
    %v3421 = vtanh.pop %v3329
    %v3422 = vtanh.pop %v3335
    %v3423 = vtanh.pop %v3341
    %v3424 = vtanh.pop %v3347
    %v3425 = vmul.f32 %v3400, %v2669
    %v3426 = vmul.f32 %v3406, %v2670
    %v3427 = vmul.f32 %v3412, %v2671
    %v3428 = vmul.f32 %v3418, %v2672
    %v3429 = vmul.f32 %v3398, %v3421
    %v3430 = vmul.f32 %v3404, %v3422
    %v3431 = vmul.f32 %v3410, %v3423
    %v3432 = vmul.f32 %v3416, %v3424
    %v3433 = vadd.f32 %v3425, %v3429
    %v3434 = vadd.f32 %v3426, %v3430
    %v3435 = vadd.f32 %v3427, %v3431
    %v3436 = vadd.f32 %v3428, %v3432
    %v3437 = vtanh.pop %v3433
    %v3438 = vtanh.pop %v3434
    %v3439 = vtanh.pop %v3435
    %v3440 = vtanh.pop %v3436
    %v3441 = vmul.f32 %v3402, %v3437
    %v3442 = vmul.f32 %v3408, %v3438
    %v3443 = vmul.f32 %v3414, %v3439
    %v3444 = vmul.f32 %v3420, %v3440
    %s3445 = scalar_lea.vmem [#allocation2], 96
    %3446 = vst [vmem:[%s3445] sm:$0xff] %v3441
    %3447 = vst [vmem:[%s3445 + $0x8] sm:$0xff] %v3442
    %3448 = vst [vmem:[%s3445 + $0x10] sm:$0xff] %v3443
    %3449 = vst [vmem:[%s3445 + $0x18] sm:$0xff] %v3444
    %3450 = vmatprep.subr.mxu0 %v295
    %3451 = vmatpush1.msra.mxu0 %v294
    %3452 = vmatprep.subr.mxu0 %v299
    %3453 = vmatpush1.msra.mxu0 %v298
    %3454 = vmatprep.subr.mxu0 %v303
    %3455 = vmatpush1.msra.mxu0 %v302
    %3456 = vmatprep.subr.mxu0 %v307
    %3457 = vmatpush1.msra.mxu0 %v306
    %3458 = vmatprep.subr.mxu0 %v311
    %3459 = vmatpush1.msra.mxu0 %v310
    %3460 = vmatprep.subr.mxu0 %v315
    %3461 = vmatpush1.msra.mxu0 %v314
    %3462 = vmatprep.subr.mxu0 %v319
    %3463 = vmatpush1.msra.mxu0 %v318
    %3464 = vmatprep.subr.mxu0 %v323
    %3465 = vmatpush1.msra.mxu0 %v322
    %3466 = vmatprep.subr.mxu0 %v327
    %3467 = vmatpush1.msra.mxu0 %v326
    %3468 = vmatprep.subr.mxu0 %v331
    %3469 = vmatpush1.msra.mxu0 %v330
    %3470 = vmatprep.subr.mxu0 %v335
    %3471 = vmatpush1.msra.mxu0 %v334
    %3472 = vmatprep.subr.mxu0 %v339
    %3473 = vmatpush1.msra.mxu0 %v338
    %3474 = vmatprep.subr.mxu0 %v343
    %3475 = vmatpush1.msra.mxu0 %v342
    %3476 = vmatprep.subr.mxu0 %v347
    %3477 = vmatpush1.msra.mxu0 %v346
    %3478 = vmatprep.subr.mxu0 %v351
    %3479 = vmatpush1.msra.mxu0 %v350
    %3480 = vmatprep.subr.mxu0 %v355
    %3481 = vmatpush1.msra.mxu0 %v354
    %3482 = vmatprep.subr.mxu0 0.0
    %3483 = vmatpush1.msra.mxu0 0.0
    %3484 = vmatprep.subr.mxu0 0.0
    %3485 = vmatpush1.msra.mxu0 0.0
    %3486 = vmatprep.subr.mxu0 0.0
    %3487 = vmatpush1.msra.mxu0 0.0
    %3488 = vmatprep.subr.mxu0 0.0
    %3489 = vmatpush1.msra.mxu0 0.0
    %3490 = vmatprep.subr.mxu0 0.0
    %3491 = vmatpush1.msra.mxu0 0.0
    %3492 = vmatprep.subr.mxu0 0.0
    %3493 = vmatpush1.msra.mxu0 0.0
    %3494 = vmatprep.subr.mxu0 0.0
    %3495 = vmatpush1.msra.mxu0 0.0
    %3496 = vmatprep.subr.mxu0 0.0
    %3497 = vmatpush1.msra.mxu0 0.0
    %3498 = vmatprep.subr.mxu0 0.0
    %3499 = vmatpush1.msra.mxu0 0.0
    %3500 = vmatprep.subr.mxu0 0.0
    %3501 = vmatpush1.msra.mxu0 0.0
    %3502 = vmatprep.subr.mxu0 0.0
    %3503 = vmatpush1.msra.mxu0 0.0
    %3504 = vmatprep.subr.mxu0 0.0
    %3505 = vmatpush1.msra.mxu0 0.0
    %3506 = vmatprep.subr.mxu0 0.0
    %3507 = vmatpush1.msra.mxu0 0.0
    %3508 = vmatprep.subr.mxu0 0.0
    %3509 = vmatpush1.msra.mxu0 0.0
    %3510 = vmatprep.subr.mxu0 0.0
    %3511 = vmatpush1.msra.mxu0 0.0
    %3512 = vmatprep.subr.mxu0 0.0
    %3513 = vmatpush1.msra.mxu0 0.0
    %3514 = vmatprep.mubr.f32.mxu0 0.0
    %3515 = vmatmul.mubr.f32.gmra.mrb[0].mxu0 %v3441
    %v3516 = vpop.f32.mrb[0].mxu0
    %v3517 = vadd.f32 %v363, %v3516
    %v3518 = vpop.f32.mrb[0].mxu0
    %v3519 = vadd.f32 %v367, %v3518
    %3520 = vmatprep.mubr.f32.mxu0 0.0
    %3521 = vmatmul.mubr.f32.gmra.mrb[0].mxu0 %v3442
    %v3522 = vpop.f32.mrb[0].mxu0
    %v3523 = vadd.f32 %v363, %v3522
    %v3524 = vpop.f32.mrb[0].mxu0
    %v3525 = vadd.f32 %v367, %v3524
    %3526 = vmatprep.mubr.f32.mxu0 0.0
    %3527 = vmatmul.mubr.f32.gmra.mrb[0].mxu0 %v3443
    %v3528 = vpop.f32.mrb[0].mxu0
    %v3529 = vadd.f32 %v363, %v3528
    %v3530 = vpop.f32.mrb[0].mxu0
    %v3531 = vadd.f32 %v367, %v3530
    %3532 = vmatprep.mubr.f32.mxu0 0.0
    %3533 = vmatmul.mubr.f32.gmra.mrb[0].mxu0 %v3444
    %v3534 = vpop.f32.mrb[0].mxu0
    %v3535 = vadd.f32 %v363, %v3534
    %v3536 = vpop.f32.mrb[0].mxu0
    %v3537 = vadd.f32 %v367, %v3536
    %3538 = vdwg.mxu0
    %3539 = vmatprep.subr.mxu0 %v297
    %3540 = vmatpush1.msra.mxu0 %v296
    %3541 = vmatprep.subr.mxu0 %v301
    %3542 = vmatpush1.msra.mxu0 %v300
    %3543 = vmatprep.subr.mxu0 %v305
    %3544 = vmatpush1.msra.mxu0 %v304
    %3545 = vmatprep.subr.mxu0 %v309
    %3546 = vmatpush1.msra.mxu0 %v308
    %3547 = vmatprep.subr.mxu0 %v313
    %3548 = vmatpush1.msra.mxu0 %v312
    %3549 = vmatprep.subr.mxu0 %v317
    %3550 = vmatpush1.msra.mxu0 %v316
    %3551 = vmatprep.subr.mxu0 %v321
    %3552 = vmatpush1.msra.mxu0 %v320
    %3553 = vmatprep.subr.mxu0 %v325
    %3554 = vmatpush1.msra.mxu0 %v324
    %3555 = vmatprep.subr.mxu0 %v329
    %3556 = vmatpush1.msra.mxu0 %v328
    %3557 = vmatprep.subr.mxu0 %v333
    %3558 = vmatpush1.msra.mxu0 %v332
    %3559 = vmatprep.subr.mxu0 %v337
    %3560 = vmatpush1.msra.mxu0 %v336
    %3561 = vmatprep.subr.mxu0 %v341
    %3562 = vmatpush1.msra.mxu0 %v340
    %3563 = vmatprep.subr.mxu0 %v345
    %3564 = vmatpush1.msra.mxu0 %v344
    %3565 = vmatprep.subr.mxu0 %v349
    %3566 = vmatpush1.msra.mxu0 %v348
    %3567 = vmatprep.subr.mxu0 %v353
    %3568 = vmatpush1.msra.mxu0 %v352
    %3569 = vmatprep.subr.mxu0 %v357
    %3570 = vmatpush1.msra.mxu0 %v356
    %3571 = vmatprep.subr.mxu0 0.0
    %3572 = vmatpush1.msra.mxu0 0.0
    %3573 = vmatprep.subr.mxu0 0.0
    %3574 = vmatpush1.msra.mxu0 0.0
    %3575 = vmatprep.subr.mxu0 0.0
    %3576 = vmatpush1.msra.mxu0 0.0
    %3577 = vmatprep.subr.mxu0 0.0
    %3578 = vmatpush1.msra.mxu0 0.0
    %3579 = vmatprep.subr.mxu0 0.0
    %3580 = vmatpush1.msra.mxu0 0.0
    %3581 = vmatprep.subr.mxu0 0.0
    %3582 = vmatpush1.msra.mxu0 0.0
    %3583 = vmatprep.subr.mxu0 0.0
    %3584 = vmatpush1.msra.mxu0 0.0
    %3585 = vmatprep.subr.mxu0 0.0
    %3586 = vmatpush1.msra.mxu0 0.0
    %3587 = vmatprep.subr.mxu0 0.0
    %3588 = vmatpush1.msra.mxu0 0.0
    %3589 = vmatprep.subr.mxu0 0.0
    %3590 = vmatpush1.msra.mxu0 0.0
    %3591 = vmatprep.subr.mxu0 0.0
    %3592 = vmatpush1.msra.mxu0 0.0
    %3593 = vmatprep.subr.mxu0 0.0
    %3594 = vmatpush1.msra.mxu0 0.0
    %3595 = vmatprep.subr.mxu0 0.0
    %3596 = vmatpush1.msra.mxu0 0.0
    %3597 = vmatprep.subr.mxu0 0.0
    %3598 = vmatpush1.msra.mxu0 0.0
    %3599 = vmatprep.subr.mxu0 0.0
    %3600 = vmatpush1.msra.mxu0 0.0
    %3601 = vmatprep.subr.mxu0 0.0
    %3602 = vmatpush1.msra.mxu0 0.0
    %3603 = vmatprep.mubr.f32.mxu0 0.0
    %3604 = vmatmul.mubr.f32.gmra.mrb[0].mxu0 %v3441
    %v3605 = vpop.f32.mrb[0].mxu0
    %v3606 = vadd.f32 %v371, %v3605
    %v3607 = vpop.f32.mrb[0].mxu0
    %v3608 = vadd.f32 %v375, %v3607
    %3609 = vmatprep.mubr.f32.mxu0 0.0
    %3610 = vmatmul.mubr.f32.gmra.mrb[0].mxu0 %v3442
    %v3611 = vpop.f32.mrb[0].mxu0
    %v3612 = vadd.f32 %v371, %v3611
    %v3613 = vpop.f32.mrb[0].mxu0
    %v3614 = vadd.f32 %v375, %v3613
    %3615 = vmatprep.mubr.f32.mxu0 0.0
    %3616 = vmatmul.mubr.f32.gmra.mrb[0].mxu0 %v3443
    %v3617 = vpop.f32.mrb[0].mxu0
    %v3618 = vadd.f32 %v371, %v3617
    %v3619 = vpop.f32.mrb[0].mxu0
    %v3620 = vadd.f32 %v375, %v3619
    %3621 = vmatprep.mubr.f32.mxu0 0.0
    %3622 = vmatmul.mubr.f32.gmra.mrb[0].mxu0 %v3444
    %v3623 = vpop.f32.mrb[0].mxu0
    %v3624 = vadd.f32 %v371, %v3623
    %v3625 = vpop.f32.mrb[0].mxu0
    %v3626 = vadd.f32 %v375, %v3625
    %3627 = vdwg.mxu0
    %s3628 = scalar_lea.vmem [#allocation3], 512
    %v3629 = vld [vmem:[%s3628] sm:$0xff]
    %v3630 = vld [vmem:[%s3628 + $0x8] sm:$0xff]
    %v3631 = vld [vmem:[%s3628 + $0x10] sm:$0xff]
    %v3632 = vld [vmem:[%s3628 + $0x18] sm:$0xff]
    %v3633 = vld [vmem:[%s3628 + $0x20] sm:$0xff]
    %v3634 = vld [vmem:[%s3628 + $0x28] sm:$0xff]
    %v3635 = vld [vmem:[%s3628 + $0x30] sm:$0xff]
    %v3636 = vld [vmem:[%s3628 + $0x38] sm:$0xff]
    %v3637 = vld [vmem:[%s3628 + $0x40] sm:$0xff]
    %v3638 = vld [vmem:[%s3628 + $0x48] sm:$0xff]
    %v3639 = vld [vmem:[%s3628 + $0x50] sm:$0xff]
    %v3640 = vld [vmem:[%s3628 + $0x58] sm:$0xff]
    %v3641 = vld [vmem:[%s3628 + $0x60] sm:$0xff]
    %v3642 = vld [vmem:[%s3628 + $0x68] sm:$0xff]
    %v3643 = vld [vmem:[%s3628 + $0x70] sm:$0xff]
    %v3644 = vld [vmem:[%s3628 + $0x78] sm:$0xff]
    %3645 = vmatprep.subr.mxu0 %v167
    %3646 = vmatpush1.msra.mxu0 %v166
    %3647 = vmatprep.subr.mxu0 %v171
    %3648 = vmatpush1.msra.mxu0 %v170
    %3649 = vmatprep.subr.mxu0 %v175
    %3650 = vmatpush1.msra.mxu0 %v174
    %3651 = vmatprep.subr.mxu0 %v179
    %3652 = vmatpush1.msra.mxu0 %v178
    %3653 = vmatprep.subr.mxu0 %v183
    %3654 = vmatpush1.msra.mxu0 %v182
    %3655 = vmatprep.subr.mxu0 %v187
    %3656 = vmatpush1.msra.mxu0 %v186
    %3657 = vmatprep.subr.mxu0 %v191
    %3658 = vmatpush1.msra.mxu0 %v190
    %3659 = vmatprep.subr.mxu0 %v195
    %3660 = vmatpush1.msra.mxu0 %v194
    %3661 = vmatprep.subr.mxu0 %v199
    %3662 = vmatpush1.msra.mxu0 %v198
    %3663 = vmatprep.subr.mxu0 %v203
    %3664 = vmatpush1.msra.mxu0 %v202
    %3665 = vmatprep.subr.mxu0 %v207
    %3666 = vmatpush1.msra.mxu0 %v206
    %3667 = vmatprep.subr.mxu0 %v211
    %3668 = vmatpush1.msra.mxu0 %v210
    %3669 = vmatprep.subr.mxu0 %v215
    %3670 = vmatpush1.msra.mxu0 %v214
    %3671 = vmatprep.subr.mxu0 %v219
    %3672 = vmatpush1.msra.mxu0 %v218
    %3673 = vmatprep.subr.mxu0 %v223
    %3674 = vmatpush1.msra.mxu0 %v222
    %3675 = vmatprep.subr.mxu0 %v227
    %3676 = vmatpush1.msra.mxu0 %v226
    %3677 = vmatprep.subr.mxu0 0.0
    %3678 = vmatpush1.msra.mxu0 0.0
    %3679 = vmatprep.subr.mxu0 0.0
    %3680 = vmatpush1.msra.mxu0 0.0
    %3681 = vmatprep.subr.mxu0 0.0
    %3682 = vmatpush1.msra.mxu0 0.0
    %3683 = vmatprep.subr.mxu0 0.0
    %3684 = vmatpush1.msra.mxu0 0.0
    %3685 = vmatprep.subr.mxu0 0.0
    %3686 = vmatpush1.msra.mxu0 0.0
    %3687 = vmatprep.subr.mxu0 0.0
    %3688 = vmatpush1.msra.mxu0 0.0
    %3689 = vmatprep.subr.mxu0 0.0
    %3690 = vmatpush1.msra.mxu0 0.0
    %3691 = vmatprep.subr.mxu0 0.0
    %3692 = vmatpush1.msra.mxu0 0.0
    %3693 = vmatprep.subr.mxu0 0.0
    %3694 = vmatpush1.msra.mxu0 0.0
    %3695 = vmatprep.subr.mxu0 0.0
    %3696 = vmatpush1.msra.mxu0 0.0
    %3697 = vmatprep.subr.mxu0 0.0
    %3698 = vmatpush1.msra.mxu0 0.0
    %3699 = vmatprep.subr.mxu0 0.0
    %3700 = vmatpush1.msra.mxu0 0.0
    %3701 = vmatprep.subr.mxu0 0.0
    %3702 = vmatpush1.msra.mxu0 0.0
    %3703 = vmatprep.subr.mxu0 0.0
    %3704 = vmatpush1.msra.mxu0 0.0
    %3705 = vmatprep.subr.mxu0 0.0
    %3706 = vmatpush1.msra.mxu0 0.0
    %3707 = vmatprep.subr.mxu0 0.0
    %3708 = vmatpush1.msra.mxu0 0.0
    %3709 = vmatprep.mubr.f32.mxu0 0.0
    %3710 = vmatmul.mubr.f32.gmra.mrb[0].mxu0 %v3167
    %v3711 = vpop.f32.mrb[0].mxu0
    %v3712 = vadd.f32 0.0, %v3711
    %v3713 = vpop.f32.mrb[0].mxu0
    %v3714 = vadd.f32 0.0, %v3713
    %3715 = vmatprep.mubr.f32.mxu0 0.0
    %3716 = vmatmul.mubr.f32.gmra.mrb[0].mxu0 %v3168
    %v3717 = vpop.f32.mrb[0].mxu0
    %v3718 = vadd.f32 0.0, %v3717
    %v3719 = vpop.f32.mrb[0].mxu0
    %v3720 = vadd.f32 0.0, %v3719
    %3721 = vmatprep.mubr.f32.mxu0 0.0
    %3722 = vmatmul.mubr.f32.gmra.mrb[0].mxu0 %v3169
    %v3723 = vpop.f32.mrb[0].mxu0
    %v3724 = vadd.f32 0.0, %v3723
    %v3725 = vpop.f32.mrb[0].mxu0
    %v3726 = vadd.f32 0.0, %v3725
    %3727 = vmatprep.mubr.f32.mxu0 0.0
    %3728 = vmatmul.mubr.f32.gmra.mrb[0].mxu0 %v3170
    %v3729 = vpop.f32.mrb[0].mxu0
    %v3730 = vadd.f32 0.0, %v3729
    %v3731 = vpop.f32.mrb[0].mxu0
    %v3732 = vadd.f32 0.0, %v3731
    %3733 = vdwg.mxu0
    %3734 = vmatprep.subr.mxu0 %v169
    %3735 = vmatpush1.msra.mxu0 %v168
    %3736 = vmatprep.subr.mxu0 %v173
    %3737 = vmatpush1.msra.mxu0 %v172
    %3738 = vmatprep.subr.mxu0 %v177
    %3739 = vmatpush1.msra.mxu0 %v176
    %3740 = vmatprep.subr.mxu0 %v181
    %3741 = vmatpush1.msra.mxu0 %v180
    %3742 = vmatprep.subr.mxu0 %v185
    %3743 = vmatpush1.msra.mxu0 %v184
    %3744 = vmatprep.subr.mxu0 %v189
    %3745 = vmatpush1.msra.mxu0 %v188
    %3746 = vmatprep.subr.mxu0 %v193
    %3747 = vmatpush1.msra.mxu0 %v192
    %3748 = vmatprep.subr.mxu0 %v197
    %3749 = vmatpush1.msra.mxu0 %v196
    %3750 = vmatprep.subr.mxu0 %v201
    %3751 = vmatpush1.msra.mxu0 %v200
    %3752 = vmatprep.subr.mxu0 %v205
    %3753 = vmatpush1.msra.mxu0 %v204
    %3754 = vmatprep.subr.mxu0 %v209
    %3755 = vmatpush1.msra.mxu0 %v208
    %3756 = vmatprep.subr.mxu0 %v213
    %3757 = vmatpush1.msra.mxu0 %v212
    %3758 = vmatprep.subr.mxu0 %v217
    %3759 = vmatpush1.msra.mxu0 %v216
    %3760 = vmatprep.subr.mxu0 %v221
    %3761 = vmatpush1.msra.mxu0 %v220
    %3762 = vmatprep.subr.mxu0 %v225
    %3763 = vmatpush1.msra.mxu0 %v224
    %3764 = vmatprep.subr.mxu0 %v229
    %3765 = vmatpush1.msra.mxu0 %v228
    %3766 = vmatprep.subr.mxu0 0.0
    %3767 = vmatpush1.msra.mxu0 0.0
    %3768 = vmatprep.subr.mxu0 0.0
    %3769 = vmatpush1.msra.mxu0 0.0
    %3770 = vmatprep.subr.mxu0 0.0
    %3771 = vmatpush1.msra.mxu0 0.0
    %3772 = vmatprep.subr.mxu0 0.0
    %3773 = vmatpush1.msra.mxu0 0.0
    %3774 = vmatprep.subr.mxu0 0.0
    %3775 = vmatpush1.msra.mxu0 0.0
    %3776 = vmatprep.subr.mxu0 0.0
    %3777 = vmatpush1.msra.mxu0 0.0
    %3778 = vmatprep.subr.mxu0 0.0
    %3779 = vmatpush1.msra.mxu0 0.0
    %3780 = vmatprep.subr.mxu0 0.0
    %3781 = vmatpush1.msra.mxu0 0.0
    %3782 = vmatprep.subr.mxu0 0.0
    %3783 = vmatpush1.msra.mxu0 0.0
    %3784 = vmatprep.subr.mxu0 0.0
    %3785 = vmatpush1.msra.mxu0 0.0
    %3786 = vmatprep.subr.mxu0 0.0
    %3787 = vmatpush1.msra.mxu0 0.0
    %3788 = vmatprep.subr.mxu0 0.0
    %3789 = vmatpush1.msra.mxu0 0.0
    %3790 = vmatprep.subr.mxu0 0.0
    %3791 = vmatpush1.msra.mxu0 0.0
    %3792 = vmatprep.subr.mxu0 0.0
    %3793 = vmatpush1.msra.mxu0 0.0
    %3794 = vmatprep.subr.mxu0 0.0
    %3795 = vmatpush1.msra.mxu0 0.0
    %3796 = vmatprep.subr.mxu0 0.0
    %3797 = vmatpush1.msra.mxu0 0.0
    %3798 = vmatprep.mubr.f32.mxu0 0.0
    %3799 = vmatmul.mubr.f32.gmra.mrb[0].mxu0 %v3167
    %v3800 = vpop.f32.mrb[0].mxu0
    %v3801 = vadd.f32 0.0, %v3800
    %v3802 = vpop.f32.mrb[0].mxu0
    %v3803 = vadd.f32 0.0, %v3802
    %3804 = vmatprep.mubr.f32.mxu0 0.0
    %3805 = vmatmul.mubr.f32.gmra.mrb[0].mxu0 %v3168
    %v3806 = vpop.f32.mrb[0].mxu0
    %v3807 = vadd.f32 0.0, %v3806
    %v3808 = vpop.f32.mrb[0].mxu0
    %v3809 = vadd.f32 0.0, %v3808
    %3810 = vmatprep.mubr.f32.mxu0 0.0
    %3811 = vmatmul.mubr.f32.gmra.mrb[0].mxu0 %v3169
    %v3812 = vpop.f32.mrb[0].mxu0
    %v3813 = vadd.f32 0.0, %v3812
    %v3814 = vpop.f32.mrb[0].mxu0
    %v3815 = vadd.f32 0.0, %v3814
    %3816 = vmatprep.mubr.f32.mxu0 0.0
    %3817 = vmatmul.mubr.f32.gmra.mrb[0].mxu0 %v3170
    %v3818 = vpop.f32.mrb[0].mxu0
    %v3819 = vadd.f32 0.0, %v3818
    %v3820 = vpop.f32.mrb[0].mxu0
    %v3821 = vadd.f32 0.0, %v3820
    %3822 = vdwg.mxu0
    %v3823 = vadd.f32 %v3629, %v3712
    %v3824 = vadd.f32 %v3630, %v3714
    %v3825 = vadd.f32 %v3631, %v3801
    %v3826 = vadd.f32 %v3632, %v3803
    %v3827 = vadd.f32 %v3633, %v3718
    %v3828 = vadd.f32 %v3634, %v3720
    %v3829 = vadd.f32 %v3635, %v3807
    %v3830 = vadd.f32 %v3636, %v3809
    %v3831 = vadd.f32 %v3637, %v3724
    %v3832 = vadd.f32 %v3638, %v3726
    %v3833 = vadd.f32 %v3639, %v3813
    %v3834 = vadd.f32 %v3640, %v3815
    %v3835 = vadd.f32 %v3641, %v3730
    %v3836 = vadd.f32 %v3642, %v3732
    %v3837 = vadd.f32 %v3643, %v3819
    %v3838 = vadd.f32 %v3644, %v3821
    %v3839 = vxor.u32 %v3823, 2147483648
    %v3840 = vxor.u32 %v3824, 2147483648
    %v3841 = vxor.u32 %v3825, 2147483648
    %v3842 = vxor.u32 %v3827, 2147483648
    %v3843 = vxor.u32 %v3828, 2147483648
    %v3844 = vxor.u32 %v3829, 2147483648
    %v3845 = vxor.u32 %v3831, 2147483648
    %v3846 = vxor.u32 %v3832, 2147483648
    %v3847 = vxor.u32 %v3833, 2147483648
    %v3848 = vxor.u32 %v3835, 2147483648
    %v3849 = vxor.u32 %v3836, 2147483648
    %v3850 = vxor.u32 %v3837, 2147483648
    %v3851 = vmul.f32 %v3839, 1.442695
    %v3852 = vpow.pop %v3851
    %v3853 = vmul.f32 %v3840, 1.442695
    %v3854 = vpow.pop %v3853
    %v3855 = vmul.f32 %v3841, 1.442695
    %v3856 = vpow.pop %v3855
    %v3857 = vmul.f32 %v3842, 1.442695
    %v3858 = vpow.pop %v3857
    %v3859 = vmul.f32 %v3843, 1.442695
    %v3860 = vpow.pop %v3859
    %v3861 = vmul.f32 %v3844, 1.442695
    %v3862 = vpow.pop %v3861
    %v3863 = vmul.f32 %v3845, 1.442695
    %v3864 = vpow.pop %v3863
    %v3865 = vmul.f32 %v3846, 1.442695
    %v3866 = vpow.pop %v3865
    %v3867 = vmul.f32 %v3847, 1.442695
    %v3868 = vpow.pop %v3867
    %v3869 = vmul.f32 %v3848, 1.442695
    %v3870 = vpow.pop %v3869
    %v3871 = vmul.f32 %v3849, 1.442695
    %v3872 = vpow.pop %v3871
    %v3873 = vmul.f32 %v3850, 1.442695
    %v3874 = vpow.pop %v3873
    %v3875 = vadd.f32 %v3852, 1.0
    %v3876 = vadd.f32 %v3854, 1.0
    %v3877 = vadd.f32 %v3856, 1.0
    %v3878 = vadd.f32 %v3858, 1.0
    %v3879 = vadd.f32 %v3860, 1.0
    %v3880 = vadd.f32 %v3862, 1.0
    %v3881 = vadd.f32 %v3864, 1.0
    %v3882 = vadd.f32 %v3866, 1.0
    %v3883 = vadd.f32 %v3868, 1.0
    %v3884 = vadd.f32 %v3870, 1.0
    %v3885 = vadd.f32 %v3872, 1.0
    %v3886 = vadd.f32 %v3874, 1.0
    %v3887 = vrcp.pop %v3875
    %v3888 = vmul.f32 1.0, %v3887
    %v3889 = vrcp.pop %v3876
    %v3890 = vmul.f32 1.0, %v3889
    %v3891 = vrcp.pop %v3877
    %v3892 = vmul.f32 1.0, %v3891
    %v3893 = vrcp.pop %v3878
    %v3894 = vmul.f32 1.0, %v3893
    %v3895 = vrcp.pop %v3879
    %v3896 = vmul.f32 1.0, %v3895
    %v3897 = vrcp.pop %v3880
    %v3898 = vmul.f32 1.0, %v3897
    %v3899 = vrcp.pop %v3881
    %v3900 = vmul.f32 1.0, %v3899
    %v3901 = vrcp.pop %v3882
    %v3902 = vmul.f32 1.0, %v3901
    %v3903 = vrcp.pop %v3883
    %v3904 = vmul.f32 1.0, %v3903
    %v3905 = vrcp.pop %v3884
    %v3906 = vmul.f32 1.0, %v3905
    %v3907 = vrcp.pop %v3885
    %v3908 = vmul.f32 1.0, %v3907
    %v3909 = vrcp.pop %v3886
    %v3910 = vmul.f32 1.0, %v3909
    %v3911 = vtanh.pop %v3826
    %v3912 = vtanh.pop %v3830
    %v3913 = vtanh.pop %v3834
    %v3914 = vtanh.pop %v3838
    %v3915 = vmul.f32 %v3890, %v3159
    %v3916 = vmul.f32 %v3896, %v3160
    %v3917 = vmul.f32 %v3902, %v3161
    %v3918 = vmul.f32 %v3908, %v3162
    %v3919 = vmul.f32 %v3888, %v3911
    %v3920 = vmul.f32 %v3894, %v3912
    %v3921 = vmul.f32 %v3900, %v3913
    %v3922 = vmul.f32 %v3906, %v3914
    %v3923 = vadd.f32 %v3915, %v3919
    %v3924 = vadd.f32 %v3916, %v3920
    %v3925 = vadd.f32 %v3917, %v3921
    %v3926 = vadd.f32 %v3918, %v3922
    %v3927 = vtanh.pop %v3923
    %v3928 = vtanh.pop %v3924
    %v3929 = vtanh.pop %v3925
    %v3930 = vtanh.pop %v3926
    %v3931 = vmul.f32 %v3892, %v3927
    %v3932 = vmul.f32 %v3898, %v3928
    %v3933 = vmul.f32 %v3904, %v3929
    %v3934 = vmul.f32 %v3910, %v3930
    %3935 = vmatprep.subr.mxu0 %v231
    %3936 = vmatpush1.msra.mxu0 %v230
    %3937 = vmatprep.subr.mxu0 %v235
    %3938 = vmatpush1.msra.mxu0 %v234
    %3939 = vmatprep.subr.mxu0 %v239
    %3940 = vmatpush1.msra.mxu0 %v238
    %3941 = vmatprep.subr.mxu0 %v243
    %3942 = vmatpush1.msra.mxu0 %v242
    %3943 = vmatprep.subr.mxu0 %v247
    %3944 = vmatpush1.msra.mxu0 %v246
    %3945 = vmatprep.subr.mxu0 %v251
    %3946 = vmatpush1.msra.mxu0 %v250
    %3947 = vmatprep.subr.mxu0 %v255
    %3948 = vmatpush1.msra.mxu0 %v254
    %3949 = vmatprep.subr.mxu0 %v259
    %3950 = vmatpush1.msra.mxu0 %v258
    %3951 = vmatprep.subr.mxu0 %v263
    %3952 = vmatpush1.msra.mxu0 %v262
    %3953 = vmatprep.subr.mxu0 %v267
    %3954 = vmatpush1.msra.mxu0 %v266
    %3955 = vmatprep.subr.mxu0 %v271
    %3956 = vmatpush1.msra.mxu0 %v270
    %3957 = vmatprep.subr.mxu0 %v275
    %3958 = vmatpush1.msra.mxu0 %v274
    %3959 = vmatprep.subr.mxu0 %v279
    %3960 = vmatpush1.msra.mxu0 %v278
    %3961 = vmatprep.subr.mxu0 %v283
    %3962 = vmatpush1.msra.mxu0 %v282
    %3963 = vmatprep.subr.mxu0 %v287
    %3964 = vmatpush1.msra.mxu0 %v286
    %3965 = vmatprep.subr.mxu0 %v291
    %3966 = vmatpush1.msra.mxu0 %v290
    %3967 = vmatprep.subr.mxu0 0.0
    %3968 = vmatpush1.msra.mxu0 0.0
    %3969 = vmatprep.subr.mxu0 0.0
    %3970 = vmatpush1.msra.mxu0 0.0
    %3971 = vmatprep.subr.mxu0 0.0
    %3972 = vmatpush1.msra.mxu0 0.0
    %3973 = vmatprep.subr.mxu0 0.0
    %3974 = vmatpush1.msra.mxu0 0.0
    %3975 = vmatprep.subr.mxu0 0.0
    %3976 = vmatpush1.msra.mxu0 0.0
    %3977 = vmatprep.subr.mxu0 0.0
    %3978 = vmatpush1.msra.mxu0 0.0
    %3979 = vmatprep.subr.mxu0 0.0
    %3980 = vmatpush1.msra.mxu0 0.0
    %3981 = vmatprep.subr.mxu0 0.0
    %3982 = vmatpush1.msra.mxu0 0.0
    %3983 = vmatprep.subr.mxu0 0.0
    %3984 = vmatpush1.msra.mxu0 0.0
    %3985 = vmatprep.subr.mxu0 0.0
    %3986 = vmatpush1.msra.mxu0 0.0
    %3987 = vmatprep.subr.mxu0 0.0
    %3988 = vmatpush1.msra.mxu0 0.0
    %3989 = vmatprep.subr.mxu0 0.0
    %3990 = vmatpush1.msra.mxu0 0.0
    %3991 = vmatprep.subr.mxu0 0.0
    %3992 = vmatpush1.msra.mxu0 0.0
    %3993 = vmatprep.subr.mxu0 0.0
    %3994 = vmatpush1.msra.mxu0 0.0
    %3995 = vmatprep.subr.mxu0 0.0
    %3996 = vmatpush1.msra.mxu0 0.0
    %3997 = vmatprep.subr.mxu0 0.0
    %3998 = vmatpush1.msra.mxu0 0.0
    %3999 = vmatprep.mubr.f32.mxu0 0.0
    %4000 = vmatmul.mubr.f32.gmra.mrb[0].mxu0 %v3931
    %v4001 = vpop.f32.mrb[0].mxu0
    %v4002 = vadd.f32 %v3517, %v4001
    %v4003 = vpop.f32.mrb[0].mxu0
    %v4004 = vadd.f32 %v3519, %v4003
    %4005 = vmatprep.mubr.f32.mxu0 0.0
    %4006 = vmatmul.mubr.f32.gmra.mrb[0].mxu0 %v3932
    %v4007 = vpop.f32.mrb[0].mxu0
    %v4008 = vadd.f32 %v3523, %v4007
    %v4009 = vpop.f32.mrb[0].mxu0
    %v4010 = vadd.f32 %v3525, %v4009
    %4011 = vmatprep.mubr.f32.mxu0 0.0
    %4012 = vmatmul.mubr.f32.gmra.mrb[0].mxu0 %v3933
    %v4013 = vpop.f32.mrb[0].mxu0
    %v4014 = vadd.f32 %v3529, %v4013
    %v4015 = vpop.f32.mrb[0].mxu0
    %v4016 = vadd.f32 %v3531, %v4015
    %4017 = vmatprep.mubr.f32.mxu0 0.0
    %4018 = vmatmul.mubr.f32.gmra.mrb[0].mxu0 %v3934
    %v4019 = vpop.f32.mrb[0].mxu0
    %v4020 = vadd.f32 %v3535, %v4019
    %v4021 = vpop.f32.mrb[0].mxu0
    %v4022 = vadd.f32 %v3537, %v4021
    %4023 = vdwg.mxu0
    %4024 = vmatprep.subr.mxu0 %v233
    %4025 = vmatpush1.msra.mxu0 %v232
    %4026 = vmatprep.subr.mxu0 %v237
    %4027 = vmatpush1.msra.mxu0 %v236
    %4028 = vmatprep.subr.mxu0 %v241
    %4029 = vmatpush1.msra.mxu0 %v240
    %4030 = vmatprep.subr.mxu0 %v245
    %4031 = vmatpush1.msra.mxu0 %v244
    %4032 = vmatprep.subr.mxu0 %v249
    %4033 = vmatpush1.msra.mxu0 %v248
    %4034 = vmatprep.subr.mxu0 %v253
    %4035 = vmatpush1.msra.mxu0 %v252
    %4036 = vmatprep.subr.mxu0 %v257
    %4037 = vmatpush1.msra.mxu0 %v256
    %4038 = vmatprep.subr.mxu0 %v261
    %4039 = vmatpush1.msra.mxu0 %v260
    %4040 = vmatprep.subr.mxu0 %v265
    %4041 = vmatpush1.msra.mxu0 %v264
    %4042 = vmatprep.subr.mxu0 %v269
    %4043 = vmatpush1.msra.mxu0 %v268
    %4044 = vmatprep.subr.mxu0 %v273
    %4045 = vmatpush1.msra.mxu0 %v272
    %4046 = vmatprep.subr.mxu0 %v277
    %4047 = vmatpush1.msra.mxu0 %v276
    %4048 = vmatprep.subr.mxu0 %v281
    %4049 = vmatpush1.msra.mxu0 %v280
    %4050 = vmatprep.subr.mxu0 %v285
    %4051 = vmatpush1.msra.mxu0 %v284
    %4052 = vmatprep.subr.mxu0 %v289
    %4053 = vmatpush1.msra.mxu0 %v288
    %4054 = vmatprep.subr.mxu0 %v293
    %4055 = vmatpush1.msra.mxu0 %v292
    %4056 = vmatprep.subr.mxu0 0.0
    %4057 = vmatpush1.msra.mxu0 0.0
    %4058 = vmatprep.subr.mxu0 0.0
    %4059 = vmatpush1.msra.mxu0 0.0
    %4060 = vmatprep.subr.mxu0 0.0
    %4061 = vmatpush1.msra.mxu0 0.0
    %4062 = vmatprep.subr.mxu0 0.0
    %4063 = vmatpush1.msra.mxu0 0.0
    %4064 = vmatprep.subr.mxu0 0.0
    %4065 = vmatpush1.msra.mxu0 0.0
    %4066 = vmatprep.subr.mxu0 0.0
    %4067 = vmatpush1.msra.mxu0 0.0
    %4068 = vmatprep.subr.mxu0 0.0
    %4069 = vmatpush1.msra.mxu0 0.0
    %4070 = vmatprep.subr.mxu0 0.0
    %4071 = vmatpush1.msra.mxu0 0.0
    %4072 = vmatprep.subr.mxu0 0.0
    %4073 = vmatpush1.msra.mxu0 0.0
    %4074 = vmatprep.subr.mxu0 0.0
    %4075 = vmatpush1.msra.mxu0 0.0
    %4076 = vmatprep.subr.mxu0 0.0
    %4077 = vmatpush1.msra.mxu0 0.0
    %4078 = vmatprep.subr.mxu0 0.0
    %4079 = vmatpush1.msra.mxu0 0.0
    %4080 = vmatprep.subr.mxu0 0.0
    %4081 = vmatpush1.msra.mxu0 0.0
    %4082 = vmatprep.subr.mxu0 0.0
    %4083 = vmatpush1.msra.mxu0 0.0
    %4084 = vmatprep.subr.mxu0 0.0
    %4085 = vmatpush1.msra.mxu0 0.0
    %4086 = vmatprep.subr.mxu0 0.0
    %4087 = vmatpush1.msra.mxu0 0.0
    %4088 = vmatprep.mubr.f32.mxu0 0.0
    %4089 = vmatmul.mubr.f32.gmra.mrb[0].mxu0 %v3931
    %v4090 = vpop.f32.mrb[0].mxu0
    %v4091 = vadd.f32 %v3606, %v4090
    %v4092 = vpop.f32.mrb[0].mxu0
    %v4093 = vadd.f32 %v3608, %v4092
    %4094 = vmatprep.mubr.f32.mxu0 0.0
    %4095 = vmatmul.mubr.f32.gmra.mrb[0].mxu0 %v3932
    %v4096 = vpop.f32.mrb[0].mxu0
    %v4097 = vadd.f32 %v3612, %v4096
    %v4098 = vpop.f32.mrb[0].mxu0
    %v4099 = vadd.f32 %v3614, %v4098
    %4100 = vmatprep.mubr.f32.mxu0 0.0
    %4101 = vmatmul.mubr.f32.gmra.mrb[0].mxu0 %v3933
    %v4102 = vpop.f32.mrb[0].mxu0
    %v4103 = vadd.f32 %v3618, %v4102
    %v4104 = vpop.f32.mrb[0].mxu0
    %v4105 = vadd.f32 %v3620, %v4104
    %4106 = vmatprep.mubr.f32.mxu0 0.0
    %4107 = vmatmul.mubr.f32.gmra.mrb[0].mxu0 %v3934
    %v4108 = vpop.f32.mrb[0].mxu0
    %v4109 = vadd.f32 %v3624, %v4108
    %v4110 = vpop.f32.mrb[0].mxu0
    %v4111 = vadd.f32 %v3626, %v4110
    %4112 = vdwg.mxu0
    %v4113 = vxor.u32 %v4002, 2147483648
    %v4114 = vxor.u32 %v4004, 2147483648
    %v4115 = vxor.u32 %v4091, 2147483648
    %v4116 = vxor.u32 %v4008, 2147483648
    %v4117 = vxor.u32 %v4010, 2147483648
    %v4118 = vxor.u32 %v4097, 2147483648
    %v4119 = vxor.u32 %v4014, 2147483648
    %v4120 = vxor.u32 %v4016, 2147483648
    %v4121 = vxor.u32 %v4103, 2147483648
    %v4122 = vxor.u32 %v4020, 2147483648
    %v4123 = vxor.u32 %v4022, 2147483648
    %v4124 = vxor.u32 %v4109, 2147483648
    %v4125 = vmul.f32 %v4113, 1.442695
    %v4126 = vpow.pop %v4125
    %v4127 = vmul.f32 %v4114, 1.442695
    %v4128 = vpow.pop %v4127
    %v4129 = vmul.f32 %v4115, 1.442695
    %v4130 = vpow.pop %v4129
    %v4131 = vmul.f32 %v4116, 1.442695
    %v4132 = vpow.pop %v4131
    %v4133 = vmul.f32 %v4117, 1.442695
    %v4134 = vpow.pop %v4133
    %v4135 = vmul.f32 %v4118, 1.442695
    %v4136 = vpow.pop %v4135
    %v4137 = vmul.f32 %v4119, 1.442695
    %v4138 = vpow.pop %v4137
    %v4139 = vmul.f32 %v4120, 1.442695
    %v4140 = vpow.pop %v4139
    %v4141 = vmul.f32 %v4121, 1.442695
    %v4142 = vpow.pop %v4141
    %v4143 = vmul.f32 %v4122, 1.442695
    %v4144 = vpow.pop %v4143
    %v4145 = vmul.f32 %v4123, 1.442695
    %v4146 = vpow.pop %v4145
    %v4147 = vmul.f32 %v4124, 1.442695
    %v4148 = vpow.pop %v4147
    %v4149 = vadd.f32 %v4126, 1.0
    %v4150 = vadd.f32 %v4128, 1.0
    %v4151 = vadd.f32 %v4130, 1.0
    %v4152 = vadd.f32 %v4132, 1.0
    %v4153 = vadd.f32 %v4134, 1.0
    %v4154 = vadd.f32 %v4136, 1.0
    %v4155 = vadd.f32 %v4138, 1.0
    %v4156 = vadd.f32 %v4140, 1.0
    %v4157 = vadd.f32 %v4142, 1.0
    %v4158 = vadd.f32 %v4144, 1.0
    %v4159 = vadd.f32 %v4146, 1.0
    %v4160 = vadd.f32 %v4148, 1.0
    %v4161 = vrcp.pop %v4149
    %v4162 = vmul.f32 1.0, %v4161
    %v4163 = vrcp.pop %v4150
    %v4164 = vmul.f32 1.0, %v4163
    %v4165 = vrcp.pop %v4151
    %v4166 = vmul.f32 1.0, %v4165
    %v4167 = vrcp.pop %v4152
    %v4168 = vmul.f32 1.0, %v4167
    %v4169 = vrcp.pop %v4153
    %v4170 = vmul.f32 1.0, %v4169
    %v4171 = vrcp.pop %v4154
    %v4172 = vmul.f32 1.0, %v4171
    %v4173 = vrcp.pop %v4155
    %v4174 = vmul.f32 1.0, %v4173
    %v4175 = vrcp.pop %v4156
    %v4176 = vmul.f32 1.0, %v4175
    %v4177 = vrcp.pop %v4157
    %v4178 = vmul.f32 1.0, %v4177
    %v4179 = vrcp.pop %v4158
    %v4180 = vmul.f32 1.0, %v4179
    %v4181 = vrcp.pop %v4159
    %v4182 = vmul.f32 1.0, %v4181
    %v4183 = vrcp.pop %v4160
    %v4184 = vmul.f32 1.0, %v4183
    %v4185 = vtanh.pop %v4093
    %v4186 = vtanh.pop %v4099
    %v4187 = vtanh.pop %v4105
    %v4188 = vtanh.pop %v4111
    %v4189 = vmul.f32 %v4164, %v3433
    %v4190 = vmul.f32 %v4170, %v3434
    %v4191 = vmul.f32 %v4176, %v3435
    %v4192 = vmul.f32 %v4182, %v3436
    %v4193 = vmul.f32 %v4162, %v4185
    %v4194 = vmul.f32 %v4168, %v4186
    %v4195 = vmul.f32 %v4174, %v4187
    %v4196 = vmul.f32 %v4180, %v4188
    %v4197 = vadd.f32 %v4189, %v4193
    %v4198 = vadd.f32 %v4190, %v4194
    %v4199 = vadd.f32 %v4191, %v4195
    %v4200 = vadd.f32 %v4192, %v4196
    %v4201 = vtanh.pop %v4197
    %v4202 = vtanh.pop %v4198
    %v4203 = vtanh.pop %v4199
    %v4204 = vtanh.pop %v4200
    %v4205 = vmul.f32 %v4166, %v4201
    %v4206 = vmul.f32 %v4172, %v4202
    %v4207 = vmul.f32 %v4178, %v4203
    %v4208 = vmul.f32 %v4184, %v4204
    %s4209 = scalar_lea.vmem [#allocation2], 128
    %4210 = vst [vmem:[%s4209] sm:$0xff] %v4205
    %4211 = vst [vmem:[%s4209 + $0x8] sm:$0xff] %v4206
    %4212 = vst [vmem:[%s4209 + $0x10] sm:$0xff] %v4207
    %4213 = vst [vmem:[%s4209 + $0x18] sm:$0xff] %v4208
    %4214 = vmatprep.subr.mxu0 %v295
    %4215 = vmatpush1.msra.mxu0 %v294
    %4216 = vmatprep.subr.mxu0 %v299
    %4217 = vmatpush1.msra.mxu0 %v298
    %4218 = vmatprep.subr.mxu0 %v303
    %4219 = vmatpush1.msra.mxu0 %v302
    %4220 = vmatprep.subr.mxu0 %v307
    %4221 = vmatpush1.msra.mxu0 %v306
    %4222 = vmatprep.subr.mxu0 %v311
    %4223 = vmatpush1.msra.mxu0 %v310
    %4224 = vmatprep.subr.mxu0 %v315
    %4225 = vmatpush1.msra.mxu0 %v314
    %4226 = vmatprep.subr.mxu0 %v319
    %4227 = vmatpush1.msra.mxu0 %v318
    %4228 = vmatprep.subr.mxu0 %v323
    %4229 = vmatpush1.msra.mxu0 %v322
    %4230 = vmatprep.subr.mxu0 %v327
    %4231 = vmatpush1.msra.mxu0 %v326
    %4232 = vmatprep.subr.mxu0 %v331
    %4233 = vmatpush1.msra.mxu0 %v330
    %4234 = vmatprep.subr.mxu0 %v335
    %4235 = vmatpush1.msra.mxu0 %v334
    %4236 = vmatprep.subr.mxu0 %v339
    %4237 = vmatpush1.msra.mxu0 %v338
    %4238 = vmatprep.subr.mxu0 %v343
    %4239 = vmatpush1.msra.mxu0 %v342
    %4240 = vmatprep.subr.mxu0 %v347
    %4241 = vmatpush1.msra.mxu0 %v346
    %4242 = vmatprep.subr.mxu0 %v351
    %4243 = vmatpush1.msra.mxu0 %v350
    %4244 = vmatprep.subr.mxu0 %v355
    %4245 = vmatpush1.msra.mxu0 %v354
    %4246 = vmatprep.subr.mxu0 0.0
    %4247 = vmatpush1.msra.mxu0 0.0
    %4248 = vmatprep.subr.mxu0 0.0
    %4249 = vmatpush1.msra.mxu0 0.0
    %4250 = vmatprep.subr.mxu0 0.0
    %4251 = vmatpush1.msra.mxu0 0.0
    %4252 = vmatprep.subr.mxu0 0.0
    %4253 = vmatpush1.msra.mxu0 0.0
    %4254 = vmatprep.subr.mxu0 0.0
    %4255 = vmatpush1.msra.mxu0 0.0
    %4256 = vmatprep.subr.mxu0 0.0
    %4257 = vmatpush1.msra.mxu0 0.0
    %4258 = vmatprep.subr.mxu0 0.0
    %4259 = vmatpush1.msra.mxu0 0.0
    %4260 = vmatprep.subr.mxu0 0.0
    %4261 = vmatpush1.msra.mxu0 0.0
    %4262 = vmatprep.subr.mxu0 0.0
    %4263 = vmatpush1.msra.mxu0 0.0
    %4264 = vmatprep.subr.mxu0 0.0
    %4265 = vmatpush1.msra.mxu0 0.0
    %4266 = vmatprep.subr.mxu0 0.0
    %4267 = vmatpush1.msra.mxu0 0.0
    %4268 = vmatprep.subr.mxu0 0.0
    %4269 = vmatpush1.msra.mxu0 0.0
    %4270 = vmatprep.subr.mxu0 0.0
    %4271 = vmatpush1.msra.mxu0 0.0
    %4272 = vmatprep.subr.mxu0 0.0
    %4273 = vmatpush1.msra.mxu0 0.0
    %4274 = vmatprep.subr.mxu0 0.0
    %4275 = vmatpush1.msra.mxu0 0.0
    %4276 = vmatprep.subr.mxu0 0.0
    %4277 = vmatpush1.msra.mxu0 0.0
    %4278 = vmatprep.mubr.f32.mxu0 0.0
    %4279 = vmatmul.mubr.f32.gmra.mrb[0].mxu0 %v4205
    %v4280 = vpop.f32.mrb[0].mxu0
    %v4281 = vadd.f32 %v363, %v4280
    %v4282 = vpop.f32.mrb[0].mxu0
    %v4283 = vadd.f32 %v367, %v4282
    %4284 = vmatprep.mubr.f32.mxu0 0.0
    %4285 = vmatmul.mubr.f32.gmra.mrb[0].mxu0 %v4206
    %v4286 = vpop.f32.mrb[0].mxu0
    %v4287 = vadd.f32 %v363, %v4286
    %v4288 = vpop.f32.mrb[0].mxu0
    %v4289 = vadd.f32 %v367, %v4288
    %4290 = vmatprep.mubr.f32.mxu0 0.0
    %4291 = vmatmul.mubr.f32.gmra.mrb[0].mxu0 %v4207
    %v4292 = vpop.f32.mrb[0].mxu0
    %v4293 = vadd.f32 %v363, %v4292
    %v4294 = vpop.f32.mrb[0].mxu0
    %v4295 = vadd.f32 %v367, %v4294
    %4296 = vmatprep.mubr.f32.mxu0 0.0
    %4297 = vmatmul.mubr.f32.gmra.mrb[0].mxu0 %v4208
    %v4298 = vpop.f32.mrb[0].mxu0
    %v4299 = vadd.f32 %v363, %v4298
    %v4300 = vpop.f32.mrb[0].mxu0
    %v4301 = vadd.f32 %v367, %v4300
    %4302 = vdwg.mxu0
    %4303 = vmatprep.subr.mxu0 %v297
    %4304 = vmatpush1.msra.mxu0 %v296
    %4305 = vmatprep.subr.mxu0 %v301
    %4306 = vmatpush1.msra.mxu0 %v300
    %4307 = vmatprep.subr.mxu0 %v305
    %4308 = vmatpush1.msra.mxu0 %v304
    %4309 = vmatprep.subr.mxu0 %v309
    %4310 = vmatpush1.msra.mxu0 %v308
    %4311 = vmatprep.subr.mxu0 %v313
    %4312 = vmatpush1.msra.mxu0 %v312
    %4313 = vmatprep.subr.mxu0 %v317
    %4314 = vmatpush1.msra.mxu0 %v316
    %4315 = vmatprep.subr.mxu0 %v321
    %4316 = vmatpush1.msra.mxu0 %v320
    %4317 = vmatprep.subr.mxu0 %v325
    %4318 = vmatpush1.msra.mxu0 %v324
    %4319 = vmatprep.subr.mxu0 %v329
    %4320 = vmatpush1.msra.mxu0 %v328
    %4321 = vmatprep.subr.mxu0 %v333
    %4322 = vmatpush1.msra.mxu0 %v332
    %4323 = vmatprep.subr.mxu0 %v337
    %4324 = vmatpush1.msra.mxu0 %v336
    %4325 = vmatprep.subr.mxu0 %v341
    %4326 = vmatpush1.msra.mxu0 %v340
    %4327 = vmatprep.subr.mxu0 %v345
    %4328 = vmatpush1.msra.mxu0 %v344
    %4329 = vmatprep.subr.mxu0 %v349
    %4330 = vmatpush1.msra.mxu0 %v348
    %4331 = vmatprep.subr.mxu0 %v353
    %4332 = vmatpush1.msra.mxu0 %v352
    %4333 = vmatprep.subr.mxu0 %v357
    %4334 = vmatpush1.msra.mxu0 %v356
    %4335 = vmatprep.subr.mxu0 0.0
    %4336 = vmatpush1.msra.mxu0 0.0
    %4337 = vmatprep.subr.mxu0 0.0
    %4338 = vmatpush1.msra.mxu0 0.0
    %4339 = vmatprep.subr.mxu0 0.0
    %4340 = vmatpush1.msra.mxu0 0.0
    %4341 = vmatprep.subr.mxu0 0.0
    %4342 = vmatpush1.msra.mxu0 0.0
    %4343 = vmatprep.subr.mxu0 0.0
    %4344 = vmatpush1.msra.mxu0 0.0
    %4345 = vmatprep.subr.mxu0 0.0
    %4346 = vmatpush1.msra.mxu0 0.0
    %4347 = vmatprep.subr.mxu0 0.0
    %4348 = vmatpush1.msra.mxu0 0.0
    %4349 = vmatprep.subr.mxu0 0.0
    %4350 = vmatpush1.msra.mxu0 0.0
    %4351 = vmatprep.subr.mxu0 0.0
    %4352 = vmatpush1.msra.mxu0 0.0
    %4353 = vmatprep.subr.mxu0 0.0
    %4354 = vmatpush1.msra.mxu0 0.0
    %4355 = vmatprep.subr.mxu0 0.0
    %4356 = vmatpush1.msra.mxu0 0.0
    %4357 = vmatprep.subr.mxu0 0.0
    %4358 = vmatpush1.msra.mxu0 0.0
    %4359 = vmatprep.subr.mxu0 0.0
    %4360 = vmatpush1.msra.mxu0 0.0
    %4361 = vmatprep.subr.mxu0 0.0
    %4362 = vmatpush1.msra.mxu0 0.0
    %4363 = vmatprep.subr.mxu0 0.0
    %4364 = vmatpush1.msra.mxu0 0.0
    %4365 = vmatprep.subr.mxu0 0.0
    %4366 = vmatpush1.msra.mxu0 0.0
    %4367 = vmatprep.mubr.f32.mxu0 0.0
    %4368 = vmatmul.mubr.f32.gmra.mrb[0].mxu0 %v4205
    %v4369 = vpop.f32.mrb[0].mxu0
    %v4370 = vadd.f32 %v371, %v4369
    %v4371 = vpop.f32.mrb[0].mxu0
    %v4372 = vadd.f32 %v375, %v4371
    %4373 = vmatprep.mubr.f32.mxu0 0.0
    %4374 = vmatmul.mubr.f32.gmra.mrb[0].mxu0 %v4206
    %v4375 = vpop.f32.mrb[0].mxu0
    %v4376 = vadd.f32 %v371, %v4375
    %v4377 = vpop.f32.mrb[0].mxu0
    %v4378 = vadd.f32 %v375, %v4377
    %4379 = vmatprep.mubr.f32.mxu0 0.0
    %4380 = vmatmul.mubr.f32.gmra.mrb[0].mxu0 %v4207
    %v4381 = vpop.f32.mrb[0].mxu0
    %v4382 = vadd.f32 %v371, %v4381
    %v4383 = vpop.f32.mrb[0].mxu0
    %v4384 = vadd.f32 %v375, %v4383
    %4385 = vmatprep.mubr.f32.mxu0 0.0
    %4386 = vmatmul.mubr.f32.gmra.mrb[0].mxu0 %v4208
    %v4387 = vpop.f32.mrb[0].mxu0
    %v4388 = vadd.f32 %v371, %v4387
    %v4389 = vpop.f32.mrb[0].mxu0
    %v4390 = vadd.f32 %v375, %v4389
    %4391 = vdwg.mxu0
    %s4392 = scalar_lea.vmem [#allocation3], 640
    %v4393 = vld [vmem:[%s4392] sm:$0xff]
    %v4394 = vld [vmem:[%s4392 + $0x8] sm:$0xff]
    %v4395 = vld [vmem:[%s4392 + $0x10] sm:$0xff]
    %v4396 = vld [vmem:[%s4392 + $0x18] sm:$0xff]
    %v4397 = vld [vmem:[%s4392 + $0x20] sm:$0xff]
    %v4398 = vld [vmem:[%s4392 + $0x28] sm:$0xff]
    %v4399 = vld [vmem:[%s4392 + $0x30] sm:$0xff]
    %v4400 = vld [vmem:[%s4392 + $0x38] sm:$0xff]
    %v4401 = vld [vmem:[%s4392 + $0x40] sm:$0xff]
    %v4402 = vld [vmem:[%s4392 + $0x48] sm:$0xff]
    %v4403 = vld [vmem:[%s4392 + $0x50] sm:$0xff]
    %v4404 = vld [vmem:[%s4392 + $0x58] sm:$0xff]
    %v4405 = vld [vmem:[%s4392 + $0x60] sm:$0xff]
    %v4406 = vld [vmem:[%s4392 + $0x68] sm:$0xff]
    %v4407 = vld [vmem:[%s4392 + $0x70] sm:$0xff]
    %v4408 = vld [vmem:[%s4392 + $0x78] sm:$0xff]
    %4409 = vmatprep.subr.mxu0 %v167
    %4410 = vmatpush1.msra.mxu0 %v166
    %4411 = vmatprep.subr.mxu0 %v171
    %4412 = vmatpush1.msra.mxu0 %v170
    %4413 = vmatprep.subr.mxu0 %v175
    %4414 = vmatpush1.msra.mxu0 %v174
    %4415 = vmatprep.subr.mxu0 %v179
    %4416 = vmatpush1.msra.mxu0 %v178
    %4417 = vmatprep.subr.mxu0 %v183
    %4418 = vmatpush1.msra.mxu0 %v182
    %4419 = vmatprep.subr.mxu0 %v187
    %4420 = vmatpush1.msra.mxu0 %v186
    %4421 = vmatprep.subr.mxu0 %v191
    %4422 = vmatpush1.msra.mxu0 %v190
    %4423 = vmatprep.subr.mxu0 %v195
    %4424 = vmatpush1.msra.mxu0 %v194
    %4425 = vmatprep.subr.mxu0 %v199
    %4426 = vmatpush1.msra.mxu0 %v198
    %4427 = vmatprep.subr.mxu0 %v203
    %4428 = vmatpush1.msra.mxu0 %v202
    %4429 = vmatprep.subr.mxu0 %v207
    %4430 = vmatpush1.msra.mxu0 %v206
    %4431 = vmatprep.subr.mxu0 %v211
    %4432 = vmatpush1.msra.mxu0 %v210
    %4433 = vmatprep.subr.mxu0 %v215
    %4434 = vmatpush1.msra.mxu0 %v214
    %4435 = vmatprep.subr.mxu0 %v219
    %4436 = vmatpush1.msra.mxu0 %v218
    %4437 = vmatprep.subr.mxu0 %v223
    %4438 = vmatpush1.msra.mxu0 %v222
    %4439 = vmatprep.subr.mxu0 %v227
    %4440 = vmatpush1.msra.mxu0 %v226
    %4441 = vmatprep.subr.mxu0 0.0
    %4442 = vmatpush1.msra.mxu0 0.0
    %4443 = vmatprep.subr.mxu0 0.0
    %4444 = vmatpush1.msra.mxu0 0.0
    %4445 = vmatprep.subr.mxu0 0.0
    %4446 = vmatpush1.msra.mxu0 0.0
    %4447 = vmatprep.subr.mxu0 0.0
    %4448 = vmatpush1.msra.mxu0 0.0
    %4449 = vmatprep.subr.mxu0 0.0
    %4450 = vmatpush1.msra.mxu0 0.0
    %4451 = vmatprep.subr.mxu0 0.0
    %4452 = vmatpush1.msra.mxu0 0.0
    %4453 = vmatprep.subr.mxu0 0.0
    %4454 = vmatpush1.msra.mxu0 0.0
    %4455 = vmatprep.subr.mxu0 0.0
    %4456 = vmatpush1.msra.mxu0 0.0
    %4457 = vmatprep.subr.mxu0 0.0
    %4458 = vmatpush1.msra.mxu0 0.0
    %4459 = vmatprep.subr.mxu0 0.0
    %4460 = vmatpush1.msra.mxu0 0.0
    %4461 = vmatprep.subr.mxu0 0.0
    %4462 = vmatpush1.msra.mxu0 0.0
    %4463 = vmatprep.subr.mxu0 0.0
    %4464 = vmatpush1.msra.mxu0 0.0
    %4465 = vmatprep.subr.mxu0 0.0
    %4466 = vmatpush1.msra.mxu0 0.0
    %4467 = vmatprep.subr.mxu0 0.0
    %4468 = vmatpush1.msra.mxu0 0.0
    %4469 = vmatprep.subr.mxu0 0.0
    %4470 = vmatpush1.msra.mxu0 0.0
    %4471 = vmatprep.subr.mxu0 0.0
    %4472 = vmatpush1.msra.mxu0 0.0
    %4473 = vmatprep.mubr.f32.mxu0 0.0
    %4474 = vmatmul.mubr.f32.gmra.mrb[0].mxu0 %v3931
    %v4475 = vpop.f32.mrb[0].mxu0
    %v4476 = vadd.f32 0.0, %v4475
    %v4477 = vpop.f32.mrb[0].mxu0
    %v4478 = vadd.f32 0.0, %v4477
    %4479 = vmatprep.mubr.f32.mxu0 0.0
    %4480 = vmatmul.mubr.f32.gmra.mrb[0].mxu0 %v3932
    %v4481 = vpop.f32.mrb[0].mxu0
    %v4482 = vadd.f32 0.0, %v4481
    %v4483 = vpop.f32.mrb[0].mxu0
    %v4484 = vadd.f32 0.0, %v4483
    %4485 = vmatprep.mubr.f32.mxu0 0.0
    %4486 = vmatmul.mubr.f32.gmra.mrb[0].mxu0 %v3933
    %v4487 = vpop.f32.mrb[0].mxu0
    %v4488 = vadd.f32 0.0, %v4487
    %v4489 = vpop.f32.mrb[0].mxu0
    %v4490 = vadd.f32 0.0, %v4489
    %4491 = vmatprep.mubr.f32.mxu0 0.0
    %4492 = vmatmul.mubr.f32.gmra.mrb[0].mxu0 %v3934
    %v4493 = vpop.f32.mrb[0].mxu0
    %v4494 = vadd.f32 0.0, %v4493
    %v4495 = vpop.f32.mrb[0].mxu0
    %v4496 = vadd.f32 0.0, %v4495
    %4497 = vdwg.mxu0
    %4498 = vmatprep.subr.mxu0 %v169
    %4499 = vmatpush1.msra.mxu0 %v168
    %4500 = vmatprep.subr.mxu0 %v173
    %4501 = vmatpush1.msra.mxu0 %v172
    %4502 = vmatprep.subr.mxu0 %v177
    %4503 = vmatpush1.msra.mxu0 %v176
    %4504 = vmatprep.subr.mxu0 %v181
    %4505 = vmatpush1.msra.mxu0 %v180
    %4506 = vmatprep.subr.mxu0 %v185
    %4507 = vmatpush1.msra.mxu0 %v184
    %4508 = vmatprep.subr.mxu0 %v189
    %4509 = vmatpush1.msra.mxu0 %v188
    %4510 = vmatprep.subr.mxu0 %v193
    %4511 = vmatpush1.msra.mxu0 %v192
    %4512 = vmatprep.subr.mxu0 %v197
    %4513 = vmatpush1.msra.mxu0 %v196
    %4514 = vmatprep.subr.mxu0 %v201
    %4515 = vmatpush1.msra.mxu0 %v200
    %4516 = vmatprep.subr.mxu0 %v205
    %4517 = vmatpush1.msra.mxu0 %v204
    %4518 = vmatprep.subr.mxu0 %v209
    %4519 = vmatpush1.msra.mxu0 %v208
    %4520 = vmatprep.subr.mxu0 %v213
    %4521 = vmatpush1.msra.mxu0 %v212
    %4522 = vmatprep.subr.mxu0 %v217
    %4523 = vmatpush1.msra.mxu0 %v216
    %4524 = vmatprep.subr.mxu0 %v221
    %4525 = vmatpush1.msra.mxu0 %v220
    %4526 = vmatprep.subr.mxu0 %v225
    %4527 = vmatpush1.msra.mxu0 %v224
    %4528 = vmatprep.subr.mxu0 %v229
    %4529 = vmatpush1.msra.mxu0 %v228
    %4530 = vmatprep.subr.mxu0 0.0
    %4531 = vmatpush1.msra.mxu0 0.0
    %4532 = vmatprep.subr.mxu0 0.0
    %4533 = vmatpush1.msra.mxu0 0.0
    %4534 = vmatprep.subr.mxu0 0.0
    %4535 = vmatpush1.msra.mxu0 0.0
    %4536 = vmatprep.subr.mxu0 0.0
    %4537 = vmatpush1.msra.mxu0 0.0
    %4538 = vmatprep.subr.mxu0 0.0
    %4539 = vmatpush1.msra.mxu0 0.0
    %4540 = vmatprep.subr.mxu0 0.0
    %4541 = vmatpush1.msra.mxu0 0.0
    %4542 = vmatprep.subr.mxu0 0.0
    %4543 = vmatpush1.msra.mxu0 0.0
    %4544 = vmatprep.subr.mxu0 0.0
    %4545 = vmatpush1.msra.mxu0 0.0
    %4546 = vmatprep.subr.mxu0 0.0
    %4547 = vmatpush1.msra.mxu0 0.0
    %4548 = vmatprep.subr.mxu0 0.0
    %4549 = vmatpush1.msra.mxu0 0.0
    %4550 = vmatprep.subr.mxu0 0.0
    %4551 = vmatpush1.msra.mxu0 0.0
    %4552 = vmatprep.subr.mxu0 0.0
    %4553 = vmatpush1.msra.mxu0 0.0
    %4554 = vmatprep.subr.mxu0 0.0
    %4555 = vmatpush1.msra.mxu0 0.0
    %4556 = vmatprep.subr.mxu0 0.0
    %4557 = vmatpush1.msra.mxu0 0.0
    %4558 = vmatprep.subr.mxu0 0.0
    %4559 = vmatpush1.msra.mxu0 0.0
    %4560 = vmatprep.subr.mxu0 0.0
    %4561 = vmatpush1.msra.mxu0 0.0
    %4562 = vmatprep.mubr.f32.mxu0 0.0
    %4563 = vmatmul.mubr.f32.gmra.mrb[0].mxu0 %v3931
    %v4564 = vpop.f32.mrb[0].mxu0
    %v4565 = vadd.f32 0.0, %v4564
    %v4566 = vpop.f32.mrb[0].mxu0
    %v4567 = vadd.f32 0.0, %v4566
    %4568 = vmatprep.mubr.f32.mxu0 0.0
    %4569 = vmatmul.mubr.f32.gmra.mrb[0].mxu0 %v3932
    %v4570 = vpop.f32.mrb[0].mxu0
    %v4571 = vadd.f32 0.0, %v4570
    %v4572 = vpop.f32.mrb[0].mxu0
    %v4573 = vadd.f32 0.0, %v4572
    %4574 = vmatprep.mubr.f32.mxu0 0.0
    %4575 = vmatmul.mubr.f32.gmra.mrb[0].mxu0 %v3933
    %v4576 = vpop.f32.mrb[0].mxu0
    %v4577 = vadd.f32 0.0, %v4576
    %v4578 = vpop.f32.mrb[0].mxu0
    %v4579 = vadd.f32 0.0, %v4578
    %4580 = vmatprep.mubr.f32.mxu0 0.0
    %4581 = vmatmul.mubr.f32.gmra.mrb[0].mxu0 %v3934
    %v4582 = vpop.f32.mrb[0].mxu0
    %v4583 = vadd.f32 0.0, %v4582
    %v4584 = vpop.f32.mrb[0].mxu0
    %v4585 = vadd.f32 0.0, %v4584
    %4586 = vdwg.mxu0
    %v4587 = vadd.f32 %v4393, %v4476
    %v4588 = vadd.f32 %v4394, %v4478
    %v4589 = vadd.f32 %v4395, %v4565
    %v4590 = vadd.f32 %v4396, %v4567
    %v4591 = vadd.f32 %v4397, %v4482
    %v4592 = vadd.f32 %v4398, %v4484
    %v4593 = vadd.f32 %v4399, %v4571
    %v4594 = vadd.f32 %v4400, %v4573
    %v4595 = vadd.f32 %v4401, %v4488
    %v4596 = vadd.f32 %v4402, %v4490
    %v4597 = vadd.f32 %v4403, %v4577
    %v4598 = vadd.f32 %v4404, %v4579
    %v4599 = vadd.f32 %v4405, %v4494
    %v4600 = vadd.f32 %v4406, %v4496
    %v4601 = vadd.f32 %v4407, %v4583
    %v4602 = vadd.f32 %v4408, %v4585
    %v4603 = vxor.u32 %v4587, 2147483648
    %v4604 = vxor.u32 %v4588, 2147483648
    %v4605 = vxor.u32 %v4589, 2147483648
    %v4606 = vxor.u32 %v4591, 2147483648
    %v4607 = vxor.u32 %v4592, 2147483648
    %v4608 = vxor.u32 %v4593, 2147483648
    %v4609 = vxor.u32 %v4595, 2147483648
    %v4610 = vxor.u32 %v4596, 2147483648
    %v4611 = vxor.u32 %v4597, 2147483648
    %v4612 = vxor.u32 %v4599, 2147483648
    %v4613 = vxor.u32 %v4600, 2147483648
    %v4614 = vxor.u32 %v4601, 2147483648
    %v4615 = vmul.f32 %v4603, 1.442695
    %v4616 = vpow.pop %v4615
    %v4617 = vmul.f32 %v4604, 1.442695
    %v4618 = vpow.pop %v4617
    %v4619 = vmul.f32 %v4605, 1.442695
    %v4620 = vpow.pop %v4619
    %v4621 = vmul.f32 %v4606, 1.442695
    %v4622 = vpow.pop %v4621
    %v4623 = vmul.f32 %v4607, 1.442695
    %v4624 = vpow.pop %v4623
    %v4625 = vmul.f32 %v4608, 1.442695
    %v4626 = vpow.pop %v4625
    %v4627 = vmul.f32 %v4609, 1.442695
    %v4628 = vpow.pop %v4627
    %v4629 = vmul.f32 %v4610, 1.442695
    %v4630 = vpow.pop %v4629
    %v4631 = vmul.f32 %v4611, 1.442695
    %v4632 = vpow.pop %v4631
    %v4633 = vmul.f32 %v4612, 1.442695
    %v4634 = vpow.pop %v4633
    %v4635 = vmul.f32 %v4613, 1.442695
    %v4636 = vpow.pop %v4635
    %v4637 = vmul.f32 %v4614, 1.442695
    %v4638 = vpow.pop %v4637
    %v4639 = vadd.f32 %v4616, 1.0
    %v4640 = vadd.f32 %v4618, 1.0
    %v4641 = vadd.f32 %v4620, 1.0
    %v4642 = vadd.f32 %v4622, 1.0
    %v4643 = vadd.f32 %v4624, 1.0
    %v4644 = vadd.f32 %v4626, 1.0
    %v4645 = vadd.f32 %v4628, 1.0
    %v4646 = vadd.f32 %v4630, 1.0
    %v4647 = vadd.f32 %v4632, 1.0
    %v4648 = vadd.f32 %v4634, 1.0
    %v4649 = vadd.f32 %v4636, 1.0
    %v4650 = vadd.f32 %v4638, 1.0
    %v4651 = vrcp.pop %v4639
    %v4652 = vmul.f32 1.0, %v4651
    %v4653 = vrcp.pop %v4640
    %v4654 = vmul.f32 1.0, %v4653
    %v4655 = vrcp.pop %v4641
    %v4656 = vmul.f32 1.0, %v4655
    %v4657 = vrcp.pop %v4642
    %v4658 = vmul.f32 1.0, %v4657
    %v4659 = vrcp.pop %v4643
    %v4660 = vmul.f32 1.0, %v4659
    %v4661 = vrcp.pop %v4644
    %v4662 = vmul.f32 1.0, %v4661
    %v4663 = vrcp.pop %v4645
    %v4664 = vmul.f32 1.0, %v4663
    %v4665 = vrcp.pop %v4646
    %v4666 = vmul.f32 1.0, %v4665
    %v4667 = vrcp.pop %v4647
    %v4668 = vmul.f32 1.0, %v4667
    %v4669 = vrcp.pop %v4648
    %v4670 = vmul.f32 1.0, %v4669
    %v4671 = vrcp.pop %v4649
    %v4672 = vmul.f32 1.0, %v4671
    %v4673 = vrcp.pop %v4650
    %v4674 = vmul.f32 1.0, %v4673
    %v4675 = vtanh.pop %v4590
    %v4676 = vtanh.pop %v4594
    %v4677 = vtanh.pop %v4598
    %v4678 = vtanh.pop %v4602
    %v4679 = vmul.f32 %v4654, %v3923
    %v4680 = vmul.f32 %v4660, %v3924
    %v4681 = vmul.f32 %v4666, %v3925
    %v4682 = vmul.f32 %v4672, %v3926
    %v4683 = vmul.f32 %v4652, %v4675
    %v4684 = vmul.f32 %v4658, %v4676
    %v4685 = vmul.f32 %v4664, %v4677
    %v4686 = vmul.f32 %v4670, %v4678
    %v4687 = vadd.f32 %v4679, %v4683
    %v4688 = vadd.f32 %v4680, %v4684
    %v4689 = vadd.f32 %v4681, %v4685
    %v4690 = vadd.f32 %v4682, %v4686
    %v4691 = vtanh.pop %v4687
    %v4692 = vtanh.pop %v4688
    %v4693 = vtanh.pop %v4689
    %v4694 = vtanh.pop %v4690
    %v4695 = vmul.f32 %v4656, %v4691
    %v4696 = vmul.f32 %v4662, %v4692
    %v4697 = vmul.f32 %v4668, %v4693
    %v4698 = vmul.f32 %v4674, %v4694
    %4699 = vmatprep.subr.mxu0 %v231
    %4700 = vmatpush1.msra.mxu0 %v230
    %4701 = vmatprep.subr.mxu0 %v235
    %4702 = vmatpush1.msra.mxu0 %v234
    %4703 = vmatprep.subr.mxu0 %v239
    %4704 = vmatpush1.msra.mxu0 %v238
    %4705 = vmatprep.subr.mxu0 %v243
    %4706 = vmatpush1.msra.mxu0 %v242
    %4707 = vmatprep.subr.mxu0 %v247
    %4708 = vmatpush1.msra.mxu0 %v246
    %4709 = vmatprep.subr.mxu0 %v251
    %4710 = vmatpush1.msra.mxu0 %v250
    %4711 = vmatprep.subr.mxu0 %v255
    %4712 = vmatpush1.msra.mxu0 %v254
    %4713 = vmatprep.subr.mxu0 %v259
    %4714 = vmatpush1.msra.mxu0 %v258
    %4715 = vmatprep.subr.mxu0 %v263
    %4716 = vmatpush1.msra.mxu0 %v262
    %4717 = vmatprep.subr.mxu0 %v267
    %4718 = vmatpush1.msra.mxu0 %v266
    %4719 = vmatprep.subr.mxu0 %v271
    %4720 = vmatpush1.msra.mxu0 %v270
    %4721 = vmatprep.subr.mxu0 %v275
    %4722 = vmatpush1.msra.mxu0 %v274
    %4723 = vmatprep.subr.mxu0 %v279
    %4724 = vmatpush1.msra.mxu0 %v278
    %4725 = vmatprep.subr.mxu0 %v283
    %4726 = vmatpush1.msra.mxu0 %v282
    %4727 = vmatprep.subr.mxu0 %v287
    %4728 = vmatpush1.msra.mxu0 %v286
    %4729 = vmatprep.subr.mxu0 %v291
    %4730 = vmatpush1.msra.mxu0 %v290
    %4731 = vmatprep.subr.mxu0 0.0
    %4732 = vmatpush1.msra.mxu0 0.0
    %4733 = vmatprep.subr.mxu0 0.0
    %4734 = vmatpush1.msra.mxu0 0.0
    %4735 = vmatprep.subr.mxu0 0.0
    %4736 = vmatpush1.msra.mxu0 0.0
    %4737 = vmatprep.subr.mxu0 0.0
    %4738 = vmatpush1.msra.mxu0 0.0
    %4739 = vmatprep.subr.mxu0 0.0
    %4740 = vmatpush1.msra.mxu0 0.0
    %4741 = vmatprep.subr.mxu0 0.0
    %4742 = vmatpush1.msra.mxu0 0.0
    %4743 = vmatprep.subr.mxu0 0.0
    %4744 = vmatpush1.msra.mxu0 0.0
    %4745 = vmatprep.subr.mxu0 0.0
    %4746 = vmatpush1.msra.mxu0 0.0
    %4747 = vmatprep.subr.mxu0 0.0
    %4748 = vmatpush1.msra.mxu0 0.0
    %4749 = vmatprep.subr.mxu0 0.0
    %4750 = vmatpush1.msra.mxu0 0.0
    %4751 = vmatprep.subr.mxu0 0.0
    %4752 = vmatpush1.msra.mxu0 0.0
    %4753 = vmatprep.subr.mxu0 0.0
    %4754 = vmatpush1.msra.mxu0 0.0
    %4755 = vmatprep.subr.mxu0 0.0
    %4756 = vmatpush1.msra.mxu0 0.0
    %4757 = vmatprep.subr.mxu0 0.0
    %4758 = vmatpush1.msra.mxu0 0.0
    %4759 = vmatprep.subr.mxu0 0.0
    %4760 = vmatpush1.msra.mxu0 0.0
    %4761 = vmatprep.subr.mxu0 0.0
    %4762 = vmatpush1.msra.mxu0 0.0
    %4763 = vmatprep.mubr.f32.mxu0 0.0
    %4764 = vmatmul.mubr.f32.gmra.mrb[0].mxu0 %v4695
    %v4765 = vpop.f32.mrb[0].mxu0
    %v4766 = vadd.f32 %v4281, %v4765
    %v4767 = vpop.f32.mrb[0].mxu0
    %v4768 = vadd.f32 %v4283, %v4767
    %4769 = vmatprep.mubr.f32.mxu0 0.0
    %4770 = vmatmul.mubr.f32.gmra.mrb[0].mxu0 %v4696
    %v4771 = vpop.f32.mrb[0].mxu0
    %v4772 = vadd.f32 %v4287, %v4771
    %v4773 = vpop.f32.mrb[0].mxu0
    %v4774 = vadd.f32 %v4289, %v4773
    %4775 = vmatprep.mubr.f32.mxu0 0.0
    %4776 = vmatmul.mubr.f32.gmra.mrb[0].mxu0 %v4697
    %v4777 = vpop.f32.mrb[0].mxu0
    %v4778 = vadd.f32 %v4293, %v4777
    %v4779 = vpop.f32.mrb[0].mxu0
    %v4780 = vadd.f32 %v4295, %v4779
    %4781 = vmatprep.mubr.f32.mxu0 0.0
    %4782 = vmatmul.mubr.f32.gmra.mrb[0].mxu0 %v4698
    %v4783 = vpop.f32.mrb[0].mxu0
    %v4784 = vadd.f32 %v4299, %v4783
    %v4785 = vpop.f32.mrb[0].mxu0
    %v4786 = vadd.f32 %v4301, %v4785
    %4787 = vdwg.mxu0
    %4788 = vmatprep.subr.mxu0 %v233
    %4789 = vmatpush1.msra.mxu0 %v232
    %4790 = vmatprep.subr.mxu0 %v237
    %4791 = vmatpush1.msra.mxu0 %v236
    %4792 = vmatprep.subr.mxu0 %v241
    %4793 = vmatpush1.msra.mxu0 %v240
    %4794 = vmatprep.subr.mxu0 %v245
    %4795 = vmatpush1.msra.mxu0 %v244
    %4796 = vmatprep.subr.mxu0 %v249
    %4797 = vmatpush1.msra.mxu0 %v248
    %4798 = vmatprep.subr.mxu0 %v253
    %4799 = vmatpush1.msra.mxu0 %v252
    %4800 = vmatprep.subr.mxu0 %v257
    %4801 = vmatpush1.msra.mxu0 %v256
    %4802 = vmatprep.subr.mxu0 %v261
    %4803 = vmatpush1.msra.mxu0 %v260
    %4804 = vmatprep.subr.mxu0 %v265
    %4805 = vmatpush1.msra.mxu0 %v264
    %4806 = vmatprep.subr.mxu0 %v269
    %4807 = vmatpush1.msra.mxu0 %v268
    %4808 = vmatprep.subr.mxu0 %v273
    %4809 = vmatpush1.msra.mxu0 %v272
    %4810 = vmatprep.subr.mxu0 %v277
    %4811 = vmatpush1.msra.mxu0 %v276
    %4812 = vmatprep.subr.mxu0 %v281
    %4813 = vmatpush1.msra.mxu0 %v280
    %4814 = vmatprep.subr.mxu0 %v285
    %4815 = vmatpush1.msra.mxu0 %v284
    %4816 = vmatprep.subr.mxu0 %v289
    %4817 = vmatpush1.msra.mxu0 %v288
    %4818 = vmatprep.subr.mxu0 %v293
    %4819 = vmatpush1.msra.mxu0 %v292
    %4820 = vmatprep.subr.mxu0 0.0
    %4821 = vmatpush1.msra.mxu0 0.0
    %4822 = vmatprep.subr.mxu0 0.0
    %4823 = vmatpush1.msra.mxu0 0.0
    %4824 = vmatprep.subr.mxu0 0.0
    %4825 = vmatpush1.msra.mxu0 0.0
    %4826 = vmatprep.subr.mxu0 0.0
    %4827 = vmatpush1.msra.mxu0 0.0
    %4828 = vmatprep.subr.mxu0 0.0
    %4829 = vmatpush1.msra.mxu0 0.0
    %4830 = vmatprep.subr.mxu0 0.0
    %4831 = vmatpush1.msra.mxu0 0.0
    %4832 = vmatprep.subr.mxu0 0.0
    %4833 = vmatpush1.msra.mxu0 0.0
    %4834 = vmatprep.subr.mxu0 0.0
    %4835 = vmatpush1.msra.mxu0 0.0
    %4836 = vmatprep.subr.mxu0 0.0
    %4837 = vmatpush1.msra.mxu0 0.0
    %4838 = vmatprep.subr.mxu0 0.0
    %4839 = vmatpush1.msra.mxu0 0.0
    %4840 = vmatprep.subr.mxu0 0.0
    %4841 = vmatpush1.msra.mxu0 0.0
    %4842 = vmatprep.subr.mxu0 0.0
    %4843 = vmatpush1.msra.mxu0 0.0
    %4844 = vmatprep.subr.mxu0 0.0
    %4845 = vmatpush1.msra.mxu0 0.0
    %4846 = vmatprep.subr.mxu0 0.0
    %4847 = vmatpush1.msra.mxu0 0.0
    %4848 = vmatprep.subr.mxu0 0.0
    %4849 = vmatpush1.msra.mxu0 0.0
    %4850 = vmatprep.subr.mxu0 0.0
    %4851 = vmatpush1.msra.mxu0 0.0
    %4852 = vmatprep.mubr.f32.mxu0 0.0
    %4853 = vmatmul.mubr.f32.gmra.mrb[0].mxu0 %v4695
    %v4854 = vpop.f32.mrb[0].mxu0
    %v4855 = vadd.f32 %v4370, %v4854
    %v4856 = vpop.f32.mrb[0].mxu0
    %v4857 = vadd.f32 %v4372, %v4856
    %4858 = vmatprep.mubr.f32.mxu0 0.0
    %4859 = vmatmul.mubr.f32.gmra.mrb[0].mxu0 %v4696
    %v4860 = vpop.f32.mrb[0].mxu0
    %v4861 = vadd.f32 %v4376, %v4860
    %v4862 = vpop.f32.mrb[0].mxu0
    %v4863 = vadd.f32 %v4378, %v4862
    %4864 = vmatprep.mubr.f32.mxu0 0.0
    %4865 = vmatmul.mubr.f32.gmra.mrb[0].mxu0 %v4697
    %v4866 = vpop.f32.mrb[0].mxu0
    %v4867 = vadd.f32 %v4382, %v4866
    %v4868 = vpop.f32.mrb[0].mxu0
    %v4869 = vadd.f32 %v4384, %v4868
    %4870 = vmatprep.mubr.f32.mxu0 0.0
    %4871 = vmatmul.mubr.f32.gmra.mrb[0].mxu0 %v4698
    %v4872 = vpop.f32.mrb[0].mxu0
    %v4873 = vadd.f32 %v4388, %v4872
    %v4874 = vpop.f32.mrb[0].mxu0
    %v4875 = vadd.f32 %v4390, %v4874
    %4876 = vdwg.mxu0
    %v4877 = vxor.u32 %v4766, 2147483648
    %v4878 = vxor.u32 %v4768, 2147483648
    %v4879 = vxor.u32 %v4855, 2147483648
    %v4880 = vxor.u32 %v4772, 2147483648
    %v4881 = vxor.u32 %v4774, 2147483648
    %v4882 = vxor.u32 %v4861, 2147483648
    %v4883 = vxor.u32 %v4778, 2147483648
    %v4884 = vxor.u32 %v4780, 2147483648
    %v4885 = vxor.u32 %v4867, 2147483648
    %v4886 = vxor.u32 %v4784, 2147483648
    %v4887 = vxor.u32 %v4786, 2147483648
    %v4888 = vxor.u32 %v4873, 2147483648
    %v4889 = vmul.f32 %v4877, 1.442695
    %v4890 = vpow.pop %v4889
    %v4891 = vmul.f32 %v4878, 1.442695
    %v4892 = vpow.pop %v4891
    %v4893 = vmul.f32 %v4879, 1.442695
    %v4894 = vpow.pop %v4893
    %v4895 = vmul.f32 %v4880, 1.442695
    %v4896 = vpow.pop %v4895
    %v4897 = vmul.f32 %v4881, 1.442695
    %v4898 = vpow.pop %v4897
    %v4899 = vmul.f32 %v4882, 1.442695
    %v4900 = vpow.pop %v4899
    %v4901 = vmul.f32 %v4883, 1.442695
    %v4902 = vpow.pop %v4901
    %v4903 = vmul.f32 %v4884, 1.442695
    %v4904 = vpow.pop %v4903
    %v4905 = vmul.f32 %v4885, 1.442695
    %v4906 = vpow.pop %v4905
    %v4907 = vmul.f32 %v4886, 1.442695
    %v4908 = vpow.pop %v4907
    %v4909 = vmul.f32 %v4887, 1.442695
    %v4910 = vpow.pop %v4909
    %v4911 = vmul.f32 %v4888, 1.442695
    %v4912 = vpow.pop %v4911
    %v4913 = vadd.f32 %v4890, 1.0
    %v4914 = vadd.f32 %v4892, 1.0
    %v4915 = vadd.f32 %v4894, 1.0
    %v4916 = vadd.f32 %v4896, 1.0
    %v4917 = vadd.f32 %v4898, 1.0
    %v4918 = vadd.f32 %v4900, 1.0
    %v4919 = vadd.f32 %v4902, 1.0
    %v4920 = vadd.f32 %v4904, 1.0
    %v4921 = vadd.f32 %v4906, 1.0
    %v4922 = vadd.f32 %v4908, 1.0
    %v4923 = vadd.f32 %v4910, 1.0
    %v4924 = vadd.f32 %v4912, 1.0
    %v4925 = vrcp.pop %v4913
    %v4926 = vmul.f32 1.0, %v4925
    %v4927 = vrcp.pop %v4914
    %v4928 = vmul.f32 1.0, %v4927
    %v4929 = vrcp.pop %v4915
    %v4930 = vmul.f32 1.0, %v4929
    %v4931 = vrcp.pop %v4916
    %v4932 = vmul.f32 1.0, %v4931
    %v4933 = vrcp.pop %v4917
    %v4934 = vmul.f32 1.0, %v4933
    %v4935 = vrcp.pop %v4918
    %v4936 = vmul.f32 1.0, %v4935
    %v4937 = vrcp.pop %v4919
    %v4938 = vmul.f32 1.0, %v4937
    %v4939 = vrcp.pop %v4920
    %v4940 = vmul.f32 1.0, %v4939
    %v4941 = vrcp.pop %v4921
    %v4942 = vmul.f32 1.0, %v4941
    %v4943 = vrcp.pop %v4922
    %v4944 = vmul.f32 1.0, %v4943
    %v4945 = vrcp.pop %v4923
    %v4946 = vmul.f32 1.0, %v4945
    %v4947 = vrcp.pop %v4924
    %v4948 = vmul.f32 1.0, %v4947
    %v4949 = vtanh.pop %v4857
    %v4950 = vtanh.pop %v4863
    %v4951 = vtanh.pop %v4869
    %v4952 = vtanh.pop %v4875
    %v4953 = vmul.f32 %v4928, %v4197
    %v4954 = vmul.f32 %v4934, %v4198
    %v4955 = vmul.f32 %v4940, %v4199
    %v4956 = vmul.f32 %v4946, %v4200
    %v4957 = vmul.f32 %v4926, %v4949
    %v4958 = vmul.f32 %v4932, %v4950
    %v4959 = vmul.f32 %v4938, %v4951
    %v4960 = vmul.f32 %v4944, %v4952
    %v4961 = vadd.f32 %v4953, %v4957
    %v4962 = vadd.f32 %v4954, %v4958
    %v4963 = vadd.f32 %v4955, %v4959
    %v4964 = vadd.f32 %v4956, %v4960
    %v4965 = vtanh.pop %v4961
    %v4966 = vtanh.pop %v4962
    %v4967 = vtanh.pop %v4963
    %v4968 = vtanh.pop %v4964
    %v4969 = vmul.f32 %v4930, %v4965
    %v4970 = vmul.f32 %v4936, %v4966
    %v4971 = vmul.f32 %v4942, %v4967
    %v4972 = vmul.f32 %v4948, %v4968
    %s4973 = scalar_lea.vmem [#allocation2], 160
    %4974 = vst [vmem:[%s4973] sm:$0xff] %v4969
    %4975 = vst [vmem:[%s4973 + $0x8] sm:$0xff] %v4970
    %4976 = vst [vmem:[%s4973 + $0x10] sm:$0xff] %v4971
    %4977 = vst [vmem:[%s4973 + $0x18] sm:$0xff] %v4972
    %4978 = vmatprep.subr.mxu0 %v295
    %4979 = vmatpush1.msra.mxu0 %v294
    %4980 = vmatprep.subr.mxu0 %v299
    %4981 = vmatpush1.msra.mxu0 %v298
    %4982 = vmatprep.subr.mxu0 %v303
    %4983 = vmatpush1.msra.mxu0 %v302
    %4984 = vmatprep.subr.mxu0 %v307
    %4985 = vmatpush1.msra.mxu0 %v306
    %4986 = vmatprep.subr.mxu0 %v311
    %4987 = vmatpush1.msra.mxu0 %v310
    %4988 = vmatprep.subr.mxu0 %v315
    %4989 = vmatpush1.msra.mxu0 %v314
    %4990 = vmatprep.subr.mxu0 %v319
    %4991 = vmatpush1.msra.mxu0 %v318
    %4992 = vmatprep.subr.mxu0 %v323
    %4993 = vmatpush1.msra.mxu0 %v322
    %4994 = vmatprep.subr.mxu0 %v327
    %4995 = vmatpush1.msra.mxu0 %v326
    %4996 = vmatprep.subr.mxu0 %v331
    %4997 = vmatpush1.msra.mxu0 %v330
    %4998 = vmatprep.subr.mxu0 %v335
    %4999 = vmatpush1.msra.mxu0 %v334
    %5000 = vmatprep.subr.mxu0 %v339
    %5001 = vmatpush1.msra.mxu0 %v338
    %5002 = vmatprep.subr.mxu0 %v343
    %5003 = vmatpush1.msra.mxu0 %v342
    %5004 = vmatprep.subr.mxu0 %v347
    %5005 = vmatpush1.msra.mxu0 %v346
    %5006 = vmatprep.subr.mxu0 %v351
    %5007 = vmatpush1.msra.mxu0 %v350
    %5008 = vmatprep.subr.mxu0 %v355
    %5009 = vmatpush1.msra.mxu0 %v354
    %5010 = vmatprep.subr.mxu0 0.0
    %5011 = vmatpush1.msra.mxu0 0.0
    %5012 = vmatprep.subr.mxu0 0.0
    %5013 = vmatpush1.msra.mxu0 0.0
    %5014 = vmatprep.subr.mxu0 0.0
    %5015 = vmatpush1.msra.mxu0 0.0
    %5016 = vmatprep.subr.mxu0 0.0
    %5017 = vmatpush1.msra.mxu0 0.0
    %5018 = vmatprep.subr.mxu0 0.0
    %5019 = vmatpush1.msra.mxu0 0.0
    %5020 = vmatprep.subr.mxu0 0.0
    %5021 = vmatpush1.msra.mxu0 0.0
    %5022 = vmatprep.subr.mxu0 0.0
    %5023 = vmatpush1.msra.mxu0 0.0
    %5024 = vmatprep.subr.mxu0 0.0
    %5025 = vmatpush1.msra.mxu0 0.0
    %5026 = vmatprep.subr.mxu0 0.0
    %5027 = vmatpush1.msra.mxu0 0.0
    %5028 = vmatprep.subr.mxu0 0.0
    %5029 = vmatpush1.msra.mxu0 0.0
    %5030 = vmatprep.subr.mxu0 0.0
    %5031 = vmatpush1.msra.mxu0 0.0
    %5032 = vmatprep.subr.mxu0 0.0
    %5033 = vmatpush1.msra.mxu0 0.0
    %5034 = vmatprep.subr.mxu0 0.0
    %5035 = vmatpush1.msra.mxu0 0.0
    %5036 = vmatprep.subr.mxu0 0.0
    %5037 = vmatpush1.msra.mxu0 0.0
    %5038 = vmatprep.subr.mxu0 0.0
    %5039 = vmatpush1.msra.mxu0 0.0
    %5040 = vmatprep.subr.mxu0 0.0
    %5041 = vmatpush1.msra.mxu0 0.0
    %5042 = vmatprep.mubr.f32.mxu0 0.0
    %5043 = vmatmul.mubr.f32.gmra.mrb[0].mxu0 %v4969
    %v5044 = vpop.f32.mrb[0].mxu0
    %v5045 = vadd.f32 %v363, %v5044
    %v5046 = vpop.f32.mrb[0].mxu0
    %v5047 = vadd.f32 %v367, %v5046
    %5048 = vmatprep.mubr.f32.mxu0 0.0
    %5049 = vmatmul.mubr.f32.gmra.mrb[0].mxu0 %v4970
    %v5050 = vpop.f32.mrb[0].mxu0
    %v5051 = vadd.f32 %v363, %v5050
    %v5052 = vpop.f32.mrb[0].mxu0
    %v5053 = vadd.f32 %v367, %v5052
    %5054 = vmatprep.mubr.f32.mxu0 0.0
    %5055 = vmatmul.mubr.f32.gmra.mrb[0].mxu0 %v4971
    %v5056 = vpop.f32.mrb[0].mxu0
    %v5057 = vadd.f32 %v363, %v5056
    %v5058 = vpop.f32.mrb[0].mxu0
    %v5059 = vadd.f32 %v367, %v5058
    %5060 = vmatprep.mubr.f32.mxu0 0.0
    %5061 = vmatmul.mubr.f32.gmra.mrb[0].mxu0 %v4972
    %v5062 = vpop.f32.mrb[0].mxu0
    %v5063 = vadd.f32 %v363, %v5062
    %v5064 = vpop.f32.mrb[0].mxu0
    %v5065 = vadd.f32 %v367, %v5064
    %5066 = vdwg.mxu0
    %5067 = vmatprep.subr.mxu0 %v297
    %5068 = vmatpush1.msra.mxu0 %v296
    %5069 = vmatprep.subr.mxu0 %v301
    %5070 = vmatpush1.msra.mxu0 %v300
    %5071 = vmatprep.subr.mxu0 %v305
    %5072 = vmatpush1.msra.mxu0 %v304
    %5073 = vmatprep.subr.mxu0 %v309
    %5074 = vmatpush1.msra.mxu0 %v308
    %5075 = vmatprep.subr.mxu0 %v313
    %5076 = vmatpush1.msra.mxu0 %v312
    %5077 = vmatprep.subr.mxu0 %v317
    %5078 = vmatpush1.msra.mxu0 %v316
    %5079 = vmatprep.subr.mxu0 %v321
    %5080 = vmatpush1.msra.mxu0 %v320
    %5081 = vmatprep.subr.mxu0 %v325
    %5082 = vmatpush1.msra.mxu0 %v324
    %5083 = vmatprep.subr.mxu0 %v329
    %5084 = vmatpush1.msra.mxu0 %v328
    %5085 = vmatprep.subr.mxu0 %v333
    %5086 = vmatpush1.msra.mxu0 %v332
    %5087 = vmatprep.subr.mxu0 %v337
    %5088 = vmatpush1.msra.mxu0 %v336
    %5089 = vmatprep.subr.mxu0 %v341
    %5090 = vmatpush1.msra.mxu0 %v340
    %5091 = vmatprep.subr.mxu0 %v345
    %5092 = vmatpush1.msra.mxu0 %v344
    %5093 = vmatprep.subr.mxu0 %v349
    %5094 = vmatpush1.msra.mxu0 %v348
    %5095 = vmatprep.subr.mxu0 %v353
    %5096 = vmatpush1.msra.mxu0 %v352
    %5097 = vmatprep.subr.mxu0 %v357
    %5098 = vmatpush1.msra.mxu0 %v356
    %5099 = vmatprep.subr.mxu0 0.0
    %5100 = vmatpush1.msra.mxu0 0.0
    %5101 = vmatprep.subr.mxu0 0.0
    %5102 = vmatpush1.msra.mxu0 0.0
    %5103 = vmatprep.subr.mxu0 0.0
    %5104 = vmatpush1.msra.mxu0 0.0
    %5105 = vmatprep.subr.mxu0 0.0
    %5106 = vmatpush1.msra.mxu0 0.0
    %5107 = vmatprep.subr.mxu0 0.0
    %5108 = vmatpush1.msra.mxu0 0.0
    %5109 = vmatprep.subr.mxu0 0.0
    %5110 = vmatpush1.msra.mxu0 0.0
    %5111 = vmatprep.subr.mxu0 0.0
    %5112 = vmatpush1.msra.mxu0 0.0
    %5113 = vmatprep.subr.mxu0 0.0
    %5114 = vmatpush1.msra.mxu0 0.0
    %5115 = vmatprep.subr.mxu0 0.0
    %5116 = vmatpush1.msra.mxu0 0.0
    %5117 = vmatprep.subr.mxu0 0.0
    %5118 = vmatpush1.msra.mxu0 0.0
    %5119 = vmatprep.subr.mxu0 0.0
    %5120 = vmatpush1.msra.mxu0 0.0
    %5121 = vmatprep.subr.mxu0 0.0
    %5122 = vmatpush1.msra.mxu0 0.0
    %5123 = vmatprep.subr.mxu0 0.0
    %5124 = vmatpush1.msra.mxu0 0.0
    %5125 = vmatprep.subr.mxu0 0.0
    %5126 = vmatpush1.msra.mxu0 0.0
    %5127 = vmatprep.subr.mxu0 0.0
    %5128 = vmatpush1.msra.mxu0 0.0
    %5129 = vmatprep.subr.mxu0 0.0
    %5130 = vmatpush1.msra.mxu0 0.0
    %5131 = vmatprep.mubr.f32.mxu0 0.0
    %5132 = vmatmul.mubr.f32.gmra.mrb[0].mxu0 %v4969
    %v5133 = vpop.f32.mrb[0].mxu0
    %v5134 = vadd.f32 %v371, %v5133
    %v5135 = vpop.f32.mrb[0].mxu0
    %v5136 = vadd.f32 %v375, %v5135
    %5137 = vmatprep.mubr.f32.mxu0 0.0
    %5138 = vmatmul.mubr.f32.gmra.mrb[0].mxu0 %v4970
    %v5139 = vpop.f32.mrb[0].mxu0
    %v5140 = vadd.f32 %v371, %v5139
    %v5141 = vpop.f32.mrb[0].mxu0
    %v5142 = vadd.f32 %v375, %v5141
    %5143 = vmatprep.mubr.f32.mxu0 0.0
    %5144 = vmatmul.mubr.f32.gmra.mrb[0].mxu0 %v4971
    %v5145 = vpop.f32.mrb[0].mxu0
    %v5146 = vadd.f32 %v371, %v5145
    %v5147 = vpop.f32.mrb[0].mxu0
    %v5148 = vadd.f32 %v375, %v5147
    %5149 = vmatprep.mubr.f32.mxu0 0.0
    %5150 = vmatmul.mubr.f32.gmra.mrb[0].mxu0 %v4972
    %v5151 = vpop.f32.mrb[0].mxu0
    %v5152 = vadd.f32 %v371, %v5151
    %v5153 = vpop.f32.mrb[0].mxu0
    %v5154 = vadd.f32 %v375, %v5153
    %5155 = vdwg.mxu0
    %s5156 = scalar_lea.vmem [#allocation3], 768
    %v5157 = vld [vmem:[%s5156] sm:$0xff]
    %v5158 = vld [vmem:[%s5156 + $0x8] sm:$0xff]
    %v5159 = vld [vmem:[%s5156 + $0x10] sm:$0xff]
    %v5160 = vld [vmem:[%s5156 + $0x18] sm:$0xff]
    %v5161 = vld [vmem:[%s5156 + $0x20] sm:$0xff]
    %v5162 = vld [vmem:[%s5156 + $0x28] sm:$0xff]
    %v5163 = vld [vmem:[%s5156 + $0x30] sm:$0xff]
    %v5164 = vld [vmem:[%s5156 + $0x38] sm:$0xff]
    %v5165 = vld [vmem:[%s5156 + $0x40] sm:$0xff]
    %v5166 = vld [vmem:[%s5156 + $0x48] sm:$0xff]
    %v5167 = vld [vmem:[%s5156 + $0x50] sm:$0xff]
    %v5168 = vld [vmem:[%s5156 + $0x58] sm:$0xff]
    %v5169 = vld [vmem:[%s5156 + $0x60] sm:$0xff]
    %v5170 = vld [vmem:[%s5156 + $0x68] sm:$0xff]
    %v5171 = vld [vmem:[%s5156 + $0x70] sm:$0xff]
    %v5172 = vld [vmem:[%s5156 + $0x78] sm:$0xff]
    %5173 = vmatprep.subr.mxu0 %v167
    %5174 = vmatpush1.msra.mxu0 %v166
    %5175 = vmatprep.subr.mxu0 %v171
    %5176 = vmatpush1.msra.mxu0 %v170
    %5177 = vmatprep.subr.mxu0 %v175
    %5178 = vmatpush1.msra.mxu0 %v174
    %5179 = vmatprep.subr.mxu0 %v179
    %5180 = vmatpush1.msra.mxu0 %v178
    %5181 = vmatprep.subr.mxu0 %v183
    %5182 = vmatpush1.msra.mxu0 %v182
    %5183 = vmatprep.subr.mxu0 %v187
    %5184 = vmatpush1.msra.mxu0 %v186
    %5185 = vmatprep.subr.mxu0 %v191
    %5186 = vmatpush1.msra.mxu0 %v190
    %5187 = vmatprep.subr.mxu0 %v195
    %5188 = vmatpush1.msra.mxu0 %v194
    %5189 = vmatprep.subr.mxu0 %v199
    %5190 = vmatpush1.msra.mxu0 %v198
    %5191 = vmatprep.subr.mxu0 %v203
    %5192 = vmatpush1.msra.mxu0 %v202
    %5193 = vmatprep.subr.mxu0 %v207
    %5194 = vmatpush1.msra.mxu0 %v206
    %5195 = vmatprep.subr.mxu0 %v211
    %5196 = vmatpush1.msra.mxu0 %v210
    %5197 = vmatprep.subr.mxu0 %v215
    %5198 = vmatpush1.msra.mxu0 %v214
    %5199 = vmatprep.subr.mxu0 %v219
    %5200 = vmatpush1.msra.mxu0 %v218
    %5201 = vmatprep.subr.mxu0 %v223
    %5202 = vmatpush1.msra.mxu0 %v222
    %5203 = vmatprep.subr.mxu0 %v227
    %5204 = vmatpush1.msra.mxu0 %v226
    %5205 = vmatprep.subr.mxu0 0.0
    %5206 = vmatpush1.msra.mxu0 0.0
    %5207 = vmatprep.subr.mxu0 0.0
    %5208 = vmatpush1.msra.mxu0 0.0
    %5209 = vmatprep.subr.mxu0 0.0
    %5210 = vmatpush1.msra.mxu0 0.0
    %5211 = vmatprep.subr.mxu0 0.0
    %5212 = vmatpush1.msra.mxu0 0.0
    %5213 = vmatprep.subr.mxu0 0.0
    %5214 = vmatpush1.msra.mxu0 0.0
    %5215 = vmatprep.subr.mxu0 0.0
    %5216 = vmatpush1.msra.mxu0 0.0
    %5217 = vmatprep.subr.mxu0 0.0
    %5218 = vmatpush1.msra.mxu0 0.0
    %5219 = vmatprep.subr.mxu0 0.0
    %5220 = vmatpush1.msra.mxu0 0.0
    %5221 = vmatprep.subr.mxu0 0.0
    %5222 = vmatpush1.msra.mxu0 0.0
    %5223 = vmatprep.subr.mxu0 0.0
    %5224 = vmatpush1.msra.mxu0 0.0
    %5225 = vmatprep.subr.mxu0 0.0
    %5226 = vmatpush1.msra.mxu0 0.0
    %5227 = vmatprep.subr.mxu0 0.0
    %5228 = vmatpush1.msra.mxu0 0.0
    %5229 = vmatprep.subr.mxu0 0.0
    %5230 = vmatpush1.msra.mxu0 0.0
    %5231 = vmatprep.subr.mxu0 0.0
    %5232 = vmatpush1.msra.mxu0 0.0
    %5233 = vmatprep.subr.mxu0 0.0
    %5234 = vmatpush1.msra.mxu0 0.0
    %5235 = vmatprep.subr.mxu0 0.0
    %5236 = vmatpush1.msra.mxu0 0.0
    %5237 = vmatprep.mubr.f32.mxu0 0.0
    %5238 = vmatmul.mubr.f32.gmra.mrb[0].mxu0 %v4695
    %v5239 = vpop.f32.mrb[0].mxu0
    %v5240 = vadd.f32 0.0, %v5239
    %v5241 = vpop.f32.mrb[0].mxu0
    %v5242 = vadd.f32 0.0, %v5241
    %5243 = vmatprep.mubr.f32.mxu0 0.0
    %5244 = vmatmul.mubr.f32.gmra.mrb[0].mxu0 %v4696
    %v5245 = vpop.f32.mrb[0].mxu0
    %v5246 = vadd.f32 0.0, %v5245
    %v5247 = vpop.f32.mrb[0].mxu0
    %v5248 = vadd.f32 0.0, %v5247
    %5249 = vmatprep.mubr.f32.mxu0 0.0
    %5250 = vmatmul.mubr.f32.gmra.mrb[0].mxu0 %v4697
    %v5251 = vpop.f32.mrb[0].mxu0
    %v5252 = vadd.f32 0.0, %v5251
    %v5253 = vpop.f32.mrb[0].mxu0
    %v5254 = vadd.f32 0.0, %v5253
    %5255 = vmatprep.mubr.f32.mxu0 0.0
    %5256 = vmatmul.mubr.f32.gmra.mrb[0].mxu0 %v4698
    %v5257 = vpop.f32.mrb[0].mxu0
    %v5258 = vadd.f32 0.0, %v5257
    %v5259 = vpop.f32.mrb[0].mxu0
    %v5260 = vadd.f32 0.0, %v5259
    %5261 = vdwg.mxu0
    %5262 = vmatprep.subr.mxu0 %v169
    %5263 = vmatpush1.msra.mxu0 %v168
    %5264 = vmatprep.subr.mxu0 %v173
    %5265 = vmatpush1.msra.mxu0 %v172
    %5266 = vmatprep.subr.mxu0 %v177
    %5267 = vmatpush1.msra.mxu0 %v176
    %5268 = vmatprep.subr.mxu0 %v181
    %5269 = vmatpush1.msra.mxu0 %v180
    %5270 = vmatprep.subr.mxu0 %v185
    %5271 = vmatpush1.msra.mxu0 %v184
    %5272 = vmatprep.subr.mxu0 %v189
    %5273 = vmatpush1.msra.mxu0 %v188
    %5274 = vmatprep.subr.mxu0 %v193
    %5275 = vmatpush1.msra.mxu0 %v192
    %5276 = vmatprep.subr.mxu0 %v197
    %5277 = vmatpush1.msra.mxu0 %v196
    %5278 = vmatprep.subr.mxu0 %v201
    %5279 = vmatpush1.msra.mxu0 %v200
    %5280 = vmatprep.subr.mxu0 %v205
    %5281 = vmatpush1.msra.mxu0 %v204
    %5282 = vmatprep.subr.mxu0 %v209
    %5283 = vmatpush1.msra.mxu0 %v208
    %5284 = vmatprep.subr.mxu0 %v213
    %5285 = vmatpush1.msra.mxu0 %v212
    %5286 = vmatprep.subr.mxu0 %v217
    %5287 = vmatpush1.msra.mxu0 %v216
    %5288 = vmatprep.subr.mxu0 %v221
    %5289 = vmatpush1.msra.mxu0 %v220
    %5290 = vmatprep.subr.mxu0 %v225
    %5291 = vmatpush1.msra.mxu0 %v224
    %5292 = vmatprep.subr.mxu0 %v229
    %5293 = vmatpush1.msra.mxu0 %v228
    %5294 = vmatprep.subr.mxu0 0.0
    %5295 = vmatpush1.msra.mxu0 0.0
    %5296 = vmatprep.subr.mxu0 0.0
    %5297 = vmatpush1.msra.mxu0 0.0
    %5298 = vmatprep.subr.mxu0 0.0
    %5299 = vmatpush1.msra.mxu0 0.0
    %5300 = vmatprep.subr.mxu0 0.0
    %5301 = vmatpush1.msra.mxu0 0.0
    %5302 = vmatprep.subr.mxu0 0.0
    %5303 = vmatpush1.msra.mxu0 0.0
    %5304 = vmatprep.subr.mxu0 0.0
    %5305 = vmatpush1.msra.mxu0 0.0
    %5306 = vmatprep.subr.mxu0 0.0
    %5307 = vmatpush1.msra.mxu0 0.0
    %5308 = vmatprep.subr.mxu0 0.0
    %5309 = vmatpush1.msra.mxu0 0.0
    %5310 = vmatprep.subr.mxu0 0.0
    %5311 = vmatpush1.msra.mxu0 0.0
    %5312 = vmatprep.subr.mxu0 0.0
    %5313 = vmatpush1.msra.mxu0 0.0
    %5314 = vmatprep.subr.mxu0 0.0
    %5315 = vmatpush1.msra.mxu0 0.0
    %5316 = vmatprep.subr.mxu0 0.0
    %5317 = vmatpush1.msra.mxu0 0.0
    %5318 = vmatprep.subr.mxu0 0.0
    %5319 = vmatpush1.msra.mxu0 0.0
    %5320 = vmatprep.subr.mxu0 0.0
    %5321 = vmatpush1.msra.mxu0 0.0
    %5322 = vmatprep.subr.mxu0 0.0
    %5323 = vmatpush1.msra.mxu0 0.0
    %5324 = vmatprep.subr.mxu0 0.0
    %5325 = vmatpush1.msra.mxu0 0.0
    %5326 = vmatprep.mubr.f32.mxu0 0.0
    %5327 = vmatmul.mubr.f32.gmra.mrb[0].mxu0 %v4695
    %v5328 = vpop.f32.mrb[0].mxu0
    %v5329 = vadd.f32 0.0, %v5328
    %v5330 = vpop.f32.mrb[0].mxu0
    %v5331 = vadd.f32 0.0, %v5330
    %5332 = vmatprep.mubr.f32.mxu0 0.0
    %5333 = vmatmul.mubr.f32.gmra.mrb[0].mxu0 %v4696
    %v5334 = vpop.f32.mrb[0].mxu0
    %v5335 = vadd.f32 0.0, %v5334
    %v5336 = vpop.f32.mrb[0].mxu0
    %v5337 = vadd.f32 0.0, %v5336
    %5338 = vmatprep.mubr.f32.mxu0 0.0
    %5339 = vmatmul.mubr.f32.gmra.mrb[0].mxu0 %v4697
    %v5340 = vpop.f32.mrb[0].mxu0
    %v5341 = vadd.f32 0.0, %v5340
    %v5342 = vpop.f32.mrb[0].mxu0
    %v5343 = vadd.f32 0.0, %v5342
    %5344 = vmatprep.mubr.f32.mxu0 0.0
    %5345 = vmatmul.mubr.f32.gmra.mrb[0].mxu0 %v4698
    %v5346 = vpop.f32.mrb[0].mxu0
    %v5347 = vadd.f32 0.0, %v5346
    %v5348 = vpop.f32.mrb[0].mxu0
    %v5349 = vadd.f32 0.0, %v5348
    %5350 = vdwg.mxu0
    %v5351 = vadd.f32 %v5157, %v5240
    %v5352 = vadd.f32 %v5158, %v5242
    %v5353 = vadd.f32 %v5159, %v5329
    %v5354 = vadd.f32 %v5160, %v5331
    %v5355 = vadd.f32 %v5161, %v5246
    %v5356 = vadd.f32 %v5162, %v5248
    %v5357 = vadd.f32 %v5163, %v5335
    %v5358 = vadd.f32 %v5164, %v5337
    %v5359 = vadd.f32 %v5165, %v5252
    %v5360 = vadd.f32 %v5166, %v5254
    %v5361 = vadd.f32 %v5167, %v5341
    %v5362 = vadd.f32 %v5168, %v5343
    %v5363 = vadd.f32 %v5169, %v5258
    %v5364 = vadd.f32 %v5170, %v5260
    %v5365 = vadd.f32 %v5171, %v5347
    %v5366 = vadd.f32 %v5172, %v5349
    %v5367 = vxor.u32 %v5351, 2147483648
    %v5368 = vxor.u32 %v5352, 2147483648
    %v5369 = vxor.u32 %v5353, 2147483648
    %v5370 = vxor.u32 %v5355, 2147483648
    %v5371 = vxor.u32 %v5356, 2147483648
    %v5372 = vxor.u32 %v5357, 2147483648
    %v5373 = vxor.u32 %v5359, 2147483648
    %v5374 = vxor.u32 %v5360, 2147483648
    %v5375 = vxor.u32 %v5361, 2147483648
    %v5376 = vxor.u32 %v5363, 2147483648
    %v5377 = vxor.u32 %v5364, 2147483648
    %v5378 = vxor.u32 %v5365, 2147483648
    %v5379 = vmul.f32 %v5367, 1.442695
    %v5380 = vpow.pop %v5379
    %v5381 = vmul.f32 %v5368, 1.442695
    %v5382 = vpow.pop %v5381
    %v5383 = vmul.f32 %v5369, 1.442695
    %v5384 = vpow.pop %v5383
    %v5385 = vmul.f32 %v5370, 1.442695
    %v5386 = vpow.pop %v5385
    %v5387 = vmul.f32 %v5371, 1.442695
    %v5388 = vpow.pop %v5387
    %v5389 = vmul.f32 %v5372, 1.442695
    %v5390 = vpow.pop %v5389
    %v5391 = vmul.f32 %v5373, 1.442695
    %v5392 = vpow.pop %v5391
    %v5393 = vmul.f32 %v5374, 1.442695
    %v5394 = vpow.pop %v5393
    %v5395 = vmul.f32 %v5375, 1.442695
    %v5396 = vpow.pop %v5395
    %v5397 = vmul.f32 %v5376, 1.442695
    %v5398 = vpow.pop %v5397
    %v5399 = vmul.f32 %v5377, 1.442695
    %v5400 = vpow.pop %v5399
    %v5401 = vmul.f32 %v5378, 1.442695
    %v5402 = vpow.pop %v5401
    %v5403 = vadd.f32 %v5380, 1.0
    %v5404 = vadd.f32 %v5382, 1.0
    %v5405 = vadd.f32 %v5384, 1.0
    %v5406 = vadd.f32 %v5386, 1.0
    %v5407 = vadd.f32 %v5388, 1.0
    %v5408 = vadd.f32 %v5390, 1.0
    %v5409 = vadd.f32 %v5392, 1.0
    %v5410 = vadd.f32 %v5394, 1.0
    %v5411 = vadd.f32 %v5396, 1.0
    %v5412 = vadd.f32 %v5398, 1.0
    %v5413 = vadd.f32 %v5400, 1.0
    %v5414 = vadd.f32 %v5402, 1.0
    %v5415 = vrcp.pop %v5403
    %v5416 = vmul.f32 1.0, %v5415
    %v5417 = vrcp.pop %v5404
    %v5418 = vmul.f32 1.0, %v5417
    %v5419 = vrcp.pop %v5405
    %v5420 = vmul.f32 1.0, %v5419
    %v5421 = vrcp.pop %v5406
    %v5422 = vmul.f32 1.0, %v5421
    %v5423 = vrcp.pop %v5407
    %v5424 = vmul.f32 1.0, %v5423
    %v5425 = vrcp.pop %v5408
    %v5426 = vmul.f32 1.0, %v5425
    %v5427 = vrcp.pop %v5409
    %v5428 = vmul.f32 1.0, %v5427
    %v5429 = vrcp.pop %v5410
    %v5430 = vmul.f32 1.0, %v5429
    %v5431 = vrcp.pop %v5411
    %v5432 = vmul.f32 1.0, %v5431
    %v5433 = vrcp.pop %v5412
    %v5434 = vmul.f32 1.0, %v5433
    %v5435 = vrcp.pop %v5413
    %v5436 = vmul.f32 1.0, %v5435
    %v5437 = vrcp.pop %v5414
    %v5438 = vmul.f32 1.0, %v5437
    %v5439 = vtanh.pop %v5354
    %v5440 = vtanh.pop %v5358
    %v5441 = vtanh.pop %v5362
    %v5442 = vtanh.pop %v5366
    %v5443 = vmul.f32 %v5418, %v4687
    %v5444 = vmul.f32 %v5424, %v4688
    %v5445 = vmul.f32 %v5430, %v4689
    %v5446 = vmul.f32 %v5436, %v4690
    %v5447 = vmul.f32 %v5416, %v5439
    %v5448 = vmul.f32 %v5422, %v5440
    %v5449 = vmul.f32 %v5428, %v5441
    %v5450 = vmul.f32 %v5434, %v5442
    %v5451 = vadd.f32 %v5443, %v5447
    %v5452 = vadd.f32 %v5444, %v5448
    %v5453 = vadd.f32 %v5445, %v5449
    %v5454 = vadd.f32 %v5446, %v5450
    %v5455 = vtanh.pop %v5451
    %v5456 = vtanh.pop %v5452
    %v5457 = vtanh.pop %v5453
    %v5458 = vtanh.pop %v5454
    %v5459 = vmul.f32 %v5420, %v5455
    %v5460 = vmul.f32 %v5426, %v5456
    %v5461 = vmul.f32 %v5432, %v5457
    %v5462 = vmul.f32 %v5438, %v5458
    %5463 = vmatprep.subr.mxu0 %v231
    %5464 = vmatpush1.msra.mxu0 %v230
    %5465 = vmatprep.subr.mxu0 %v235
    %5466 = vmatpush1.msra.mxu0 %v234
    %5467 = vmatprep.subr.mxu0 %v239
    %5468 = vmatpush1.msra.mxu0 %v238
    %5469 = vmatprep.subr.mxu0 %v243
    %5470 = vmatpush1.msra.mxu0 %v242
    %5471 = vmatprep.subr.mxu0 %v247
    %5472 = vmatpush1.msra.mxu0 %v246
    %5473 = vmatprep.subr.mxu0 %v251
    %5474 = vmatpush1.msra.mxu0 %v250
    %5475 = vmatprep.subr.mxu0 %v255
    %5476 = vmatpush1.msra.mxu0 %v254
    %5477 = vmatprep.subr.mxu0 %v259
    %5478 = vmatpush1.msra.mxu0 %v258
    %5479 = vmatprep.subr.mxu0 %v263
    %5480 = vmatpush1.msra.mxu0 %v262
    %5481 = vmatprep.subr.mxu0 %v267
    %5482 = vmatpush1.msra.mxu0 %v266
    %5483 = vmatprep.subr.mxu0 %v271
    %5484 = vmatpush1.msra.mxu0 %v270
    %5485 = vmatprep.subr.mxu0 %v275
    %5486 = vmatpush1.msra.mxu0 %v274
    %5487 = vmatprep.subr.mxu0 %v279
    %5488 = vmatpush1.msra.mxu0 %v278
    %5489 = vmatprep.subr.mxu0 %v283
    %5490 = vmatpush1.msra.mxu0 %v282
    %5491 = vmatprep.subr.mxu0 %v287
    %5492 = vmatpush1.msra.mxu0 %v286
    %5493 = vmatprep.subr.mxu0 %v291
    %5494 = vmatpush1.msra.mxu0 %v290
    %5495 = vmatprep.subr.mxu0 0.0
    %5496 = vmatpush1.msra.mxu0 0.0
    %5497 = vmatprep.subr.mxu0 0.0
    %5498 = vmatpush1.msra.mxu0 0.0
    %5499 = vmatprep.subr.mxu0 0.0
    %5500 = vmatpush1.msra.mxu0 0.0
    %5501 = vmatprep.subr.mxu0 0.0
    %5502 = vmatpush1.msra.mxu0 0.0
    %5503 = vmatprep.subr.mxu0 0.0
    %5504 = vmatpush1.msra.mxu0 0.0
    %5505 = vmatprep.subr.mxu0 0.0
    %5506 = vmatpush1.msra.mxu0 0.0
    %5507 = vmatprep.subr.mxu0 0.0
    %5508 = vmatpush1.msra.mxu0 0.0
    %5509 = vmatprep.subr.mxu0 0.0
    %5510 = vmatpush1.msra.mxu0 0.0
    %5511 = vmatprep.subr.mxu0 0.0
    %5512 = vmatpush1.msra.mxu0 0.0
    %5513 = vmatprep.subr.mxu0 0.0
    %5514 = vmatpush1.msra.mxu0 0.0
    %5515 = vmatprep.subr.mxu0 0.0
    %5516 = vmatpush1.msra.mxu0 0.0
    %5517 = vmatprep.subr.mxu0 0.0
    %5518 = vmatpush1.msra.mxu0 0.0
    %5519 = vmatprep.subr.mxu0 0.0
    %5520 = vmatpush1.msra.mxu0 0.0
    %5521 = vmatprep.subr.mxu0 0.0
    %5522 = vmatpush1.msra.mxu0 0.0
    %5523 = vmatprep.subr.mxu0 0.0
    %5524 = vmatpush1.msra.mxu0 0.0
    %5525 = vmatprep.subr.mxu0 0.0
    %5526 = vmatpush1.msra.mxu0 0.0
    %5527 = vmatprep.mubr.f32.mxu0 0.0
    %5528 = vmatmul.mubr.f32.gmra.mrb[0].mxu0 %v5459
    %v5529 = vpop.f32.mrb[0].mxu0
    %v5530 = vadd.f32 %v5045, %v5529
    %v5531 = vpop.f32.mrb[0].mxu0
    %v5532 = vadd.f32 %v5047, %v5531
    %5533 = vmatprep.mubr.f32.mxu0 0.0
    %5534 = vmatmul.mubr.f32.gmra.mrb[0].mxu0 %v5460
    %v5535 = vpop.f32.mrb[0].mxu0
    %v5536 = vadd.f32 %v5051, %v5535
    %v5537 = vpop.f32.mrb[0].mxu0
    %v5538 = vadd.f32 %v5053, %v5537
    %5539 = vmatprep.mubr.f32.mxu0 0.0
    %5540 = vmatmul.mubr.f32.gmra.mrb[0].mxu0 %v5461
    %v5541 = vpop.f32.mrb[0].mxu0
    %v5542 = vadd.f32 %v5057, %v5541
    %v5543 = vpop.f32.mrb[0].mxu0
    %v5544 = vadd.f32 %v5059, %v5543
    %5545 = vmatprep.mubr.f32.mxu0 0.0
    %5546 = vmatmul.mubr.f32.gmra.mrb[0].mxu0 %v5462
    %v5547 = vpop.f32.mrb[0].mxu0
    %v5548 = vadd.f32 %v5063, %v5547
    %v5549 = vpop.f32.mrb[0].mxu0
    %v5550 = vadd.f32 %v5065, %v5549
    %5551 = vdwg.mxu0
    %5552 = vmatprep.subr.mxu0 %v233
    %5553 = vmatpush1.msra.mxu0 %v232
    %5554 = vmatprep.subr.mxu0 %v237
    %5555 = vmatpush1.msra.mxu0 %v236
    %5556 = vmatprep.subr.mxu0 %v241
    %5557 = vmatpush1.msra.mxu0 %v240
    %5558 = vmatprep.subr.mxu0 %v245
    %5559 = vmatpush1.msra.mxu0 %v244
    %5560 = vmatprep.subr.mxu0 %v249
    %5561 = vmatpush1.msra.mxu0 %v248
    %5562 = vmatprep.subr.mxu0 %v253
    %5563 = vmatpush1.msra.mxu0 %v252
    %5564 = vmatprep.subr.mxu0 %v257
    %5565 = vmatpush1.msra.mxu0 %v256
    %5566 = vmatprep.subr.mxu0 %v261
    %5567 = vmatpush1.msra.mxu0 %v260
    %5568 = vmatprep.subr.mxu0 %v265
    %5569 = vmatpush1.msra.mxu0 %v264
    %5570 = vmatprep.subr.mxu0 %v269
    %5571 = vmatpush1.msra.mxu0 %v268
    %5572 = vmatprep.subr.mxu0 %v273
    %5573 = vmatpush1.msra.mxu0 %v272
    %5574 = vmatprep.subr.mxu0 %v277
    %5575 = vmatpush1.msra.mxu0 %v276
    %5576 = vmatprep.subr.mxu0 %v281
    %5577 = vmatpush1.msra.mxu0 %v280
    %5578 = vmatprep.subr.mxu0 %v285
    %5579 = vmatpush1.msra.mxu0 %v284
    %5580 = vmatprep.subr.mxu0 %v289
    %5581 = vmatpush1.msra.mxu0 %v288
    %5582 = vmatprep.subr.mxu0 %v293
    %5583 = vmatpush1.msra.mxu0 %v292
    %5584 = vmatprep.subr.mxu0 0.0
    %5585 = vmatpush1.msra.mxu0 0.0
    %5586 = vmatprep.subr.mxu0 0.0
    %5587 = vmatpush1.msra.mxu0 0.0
    %5588 = vmatprep.subr.mxu0 0.0
    %5589 = vmatpush1.msra.mxu0 0.0
    %5590 = vmatprep.subr.mxu0 0.0
    %5591 = vmatpush1.msra.mxu0 0.0
    %5592 = vmatprep.subr.mxu0 0.0
    %5593 = vmatpush1.msra.mxu0 0.0
    %5594 = vmatprep.subr.mxu0 0.0
    %5595 = vmatpush1.msra.mxu0 0.0
    %5596 = vmatprep.subr.mxu0 0.0
    %5597 = vmatpush1.msra.mxu0 0.0
    %5598 = vmatprep.subr.mxu0 0.0
    %5599 = vmatpush1.msra.mxu0 0.0
    %5600 = vmatprep.subr.mxu0 0.0
    %5601 = vmatpush1.msra.mxu0 0.0
    %5602 = vmatprep.subr.mxu0 0.0
    %5603 = vmatpush1.msra.mxu0 0.0
    %5604 = vmatprep.subr.mxu0 0.0
    %5605 = vmatpush1.msra.mxu0 0.0
    %5606 = vmatprep.subr.mxu0 0.0
    %5607 = vmatpush1.msra.mxu0 0.0
    %5608 = vmatprep.subr.mxu0 0.0
    %5609 = vmatpush1.msra.mxu0 0.0
    %5610 = vmatprep.subr.mxu0 0.0
    %5611 = vmatpush1.msra.mxu0 0.0
    %5612 = vmatprep.subr.mxu0 0.0
    %5613 = vmatpush1.msra.mxu0 0.0
    %5614 = vmatprep.subr.mxu0 0.0
    %5615 = vmatpush1.msra.mxu0 0.0
    %5616 = vmatprep.mubr.f32.mxu0 0.0
    %5617 = vmatmul.mubr.f32.gmra.mrb[0].mxu0 %v5459
    %v5618 = vpop.f32.mrb[0].mxu0
    %v5619 = vadd.f32 %v5134, %v5618
    %v5620 = vpop.f32.mrb[0].mxu0
    %v5621 = vadd.f32 %v5136, %v5620
    %5622 = vmatprep.mubr.f32.mxu0 0.0
    %5623 = vmatmul.mubr.f32.gmra.mrb[0].mxu0 %v5460
    %v5624 = vpop.f32.mrb[0].mxu0
    %v5625 = vadd.f32 %v5140, %v5624
    %v5626 = vpop.f32.mrb[0].mxu0
    %v5627 = vadd.f32 %v5142, %v5626
    %5628 = vmatprep.mubr.f32.mxu0 0.0
    %5629 = vmatmul.mubr.f32.gmra.mrb[0].mxu0 %v5461
    %v5630 = vpop.f32.mrb[0].mxu0
    %v5631 = vadd.f32 %v5146, %v5630
    %v5632 = vpop.f32.mrb[0].mxu0
    %v5633 = vadd.f32 %v5148, %v5632
    %5634 = vmatprep.mubr.f32.mxu0 0.0
    %5635 = vmatmul.mubr.f32.gmra.mrb[0].mxu0 %v5462
    %v5636 = vpop.f32.mrb[0].mxu0
    %v5637 = vadd.f32 %v5152, %v5636
    %v5638 = vpop.f32.mrb[0].mxu0
    %v5639 = vadd.f32 %v5154, %v5638
    %5640 = vdwg.mxu0
    %v5641 = vxor.u32 %v5530, 2147483648
    %v5642 = vxor.u32 %v5532, 2147483648
    %v5643 = vxor.u32 %v5619, 2147483648
    %v5644 = vxor.u32 %v5536, 2147483648
    %v5645 = vxor.u32 %v5538, 2147483648
    %v5646 = vxor.u32 %v5625, 2147483648
    %v5647 = vxor.u32 %v5542, 2147483648
    %v5648 = vxor.u32 %v5544, 2147483648
    %v5649 = vxor.u32 %v5631, 2147483648
    %v5650 = vxor.u32 %v5548, 2147483648
    %v5651 = vxor.u32 %v5550, 2147483648
    %v5652 = vxor.u32 %v5637, 2147483648
    %v5653 = vmul.f32 %v5641, 1.442695
    %v5654 = vpow.pop %v5653
    %v5655 = vmul.f32 %v5642, 1.442695
    %v5656 = vpow.pop %v5655
    %v5657 = vmul.f32 %v5643, 1.442695
    %v5658 = vpow.pop %v5657
    %v5659 = vmul.f32 %v5644, 1.442695
    %v5660 = vpow.pop %v5659
    %v5661 = vmul.f32 %v5645, 1.442695
    %v5662 = vpow.pop %v5661
    %v5663 = vmul.f32 %v5646, 1.442695
    %v5664 = vpow.pop %v5663
    %v5665 = vmul.f32 %v5647, 1.442695
    %v5666 = vpow.pop %v5665
    %v5667 = vmul.f32 %v5648, 1.442695
    %v5668 = vpow.pop %v5667
    %v5669 = vmul.f32 %v5649, 1.442695
    %v5670 = vpow.pop %v5669
    %v5671 = vmul.f32 %v5650, 1.442695
    %v5672 = vpow.pop %v5671
    %v5673 = vmul.f32 %v5651, 1.442695
    %v5674 = vpow.pop %v5673
    %v5675 = vmul.f32 %v5652, 1.442695
    %v5676 = vpow.pop %v5675
    %v5677 = vadd.f32 %v5654, 1.0
    %v5678 = vadd.f32 %v5656, 1.0
    %v5679 = vadd.f32 %v5658, 1.0
    %v5680 = vadd.f32 %v5660, 1.0
    %v5681 = vadd.f32 %v5662, 1.0
    %v5682 = vadd.f32 %v5664, 1.0
    %v5683 = vadd.f32 %v5666, 1.0
    %v5684 = vadd.f32 %v5668, 1.0
    %v5685 = vadd.f32 %v5670, 1.0
    %v5686 = vadd.f32 %v5672, 1.0
    %v5687 = vadd.f32 %v5674, 1.0
    %v5688 = vadd.f32 %v5676, 1.0
    %v5689 = vrcp.pop %v5677
    %v5690 = vmul.f32 1.0, %v5689
    %v5691 = vrcp.pop %v5678
    %v5692 = vmul.f32 1.0, %v5691
    %v5693 = vrcp.pop %v5679
    %v5694 = vmul.f32 1.0, %v5693
    %v5695 = vrcp.pop %v5680
    %v5696 = vmul.f32 1.0, %v5695
    %v5697 = vrcp.pop %v5681
    %v5698 = vmul.f32 1.0, %v5697
    %v5699 = vrcp.pop %v5682
    %v5700 = vmul.f32 1.0, %v5699
    %v5701 = vrcp.pop %v5683
    %v5702 = vmul.f32 1.0, %v5701
    %v5703 = vrcp.pop %v5684
    %v5704 = vmul.f32 1.0, %v5703
    %v5705 = vrcp.pop %v5685
    %v5706 = vmul.f32 1.0, %v5705
    %v5707 = vrcp.pop %v5686
    %v5708 = vmul.f32 1.0, %v5707
    %v5709 = vrcp.pop %v5687
    %v5710 = vmul.f32 1.0, %v5709
    %v5711 = vrcp.pop %v5688
    %v5712 = vmul.f32 1.0, %v5711
    %v5713 = vtanh.pop %v5621
    %v5714 = vtanh.pop %v5627
    %v5715 = vtanh.pop %v5633
    %v5716 = vtanh.pop %v5639
    %v5717 = vmul.f32 %v5692, %v4961
    %v5718 = vmul.f32 %v5698, %v4962
    %v5719 = vmul.f32 %v5704, %v4963
    %v5720 = vmul.f32 %v5710, %v4964
    %v5721 = vmul.f32 %v5690, %v5713
    %v5722 = vmul.f32 %v5696, %v5714
    %v5723 = vmul.f32 %v5702, %v5715
    %v5724 = vmul.f32 %v5708, %v5716
    %v5725 = vadd.f32 %v5717, %v5721
    %v5726 = vadd.f32 %v5718, %v5722
    %v5727 = vadd.f32 %v5719, %v5723
    %v5728 = vadd.f32 %v5720, %v5724
    %v5729 = vtanh.pop %v5725
    %v5730 = vtanh.pop %v5726
    %v5731 = vtanh.pop %v5727
    %v5732 = vtanh.pop %v5728
    %v5733 = vmul.f32 %v5694, %v5729
    %v5734 = vmul.f32 %v5700, %v5730
    %v5735 = vmul.f32 %v5706, %v5731
    %v5736 = vmul.f32 %v5712, %v5732
    %s5737 = scalar_lea.vmem [#allocation2], 192
    %5738 = vst [vmem:[%s5737] sm:$0xff] %v5733
    %5739 = vst [vmem:[%s5737 + $0x8] sm:$0xff] %v5734
    %5740 = vst [vmem:[%s5737 + $0x10] sm:$0xff] %v5735
    %5741 = vst [vmem:[%s5737 + $0x18] sm:$0xff] %v5736
    %5742 = vmatprep.subr.mxu0 %v295
    %5743 = vmatpush1.msra.mxu0 %v294
    %5744 = vmatprep.subr.mxu0 %v299
    %5745 = vmatpush1.msra.mxu0 %v298
    %5746 = vmatprep.subr.mxu0 %v303
    %5747 = vmatpush1.msra.mxu0 %v302
    %5748 = vmatprep.subr.mxu0 %v307
    %5749 = vmatpush1.msra.mxu0 %v306
    %5750 = vmatprep.subr.mxu0 %v311
    %5751 = vmatpush1.msra.mxu0 %v310
    %5752 = vmatprep.subr.mxu0 %v315
    %5753 = vmatpush1.msra.mxu0 %v314
    %5754 = vmatprep.subr.mxu0 %v319
    %5755 = vmatpush1.msra.mxu0 %v318
    %5756 = vmatprep.subr.mxu0 %v323
    %5757 = vmatpush1.msra.mxu0 %v322
    %5758 = vmatprep.subr.mxu0 %v327
    %5759 = vmatpush1.msra.mxu0 %v326
    %5760 = vmatprep.subr.mxu0 %v331
    %5761 = vmatpush1.msra.mxu0 %v330
    %5762 = vmatprep.subr.mxu0 %v335
    %5763 = vmatpush1.msra.mxu0 %v334
    %5764 = vmatprep.subr.mxu0 %v339
    %5765 = vmatpush1.msra.mxu0 %v338
    %5766 = vmatprep.subr.mxu0 %v343
    %5767 = vmatpush1.msra.mxu0 %v342
    %5768 = vmatprep.subr.mxu0 %v347
    %5769 = vmatpush1.msra.mxu0 %v346
    %5770 = vmatprep.subr.mxu0 %v351
    %5771 = vmatpush1.msra.mxu0 %v350
    %5772 = vmatprep.subr.mxu0 %v355
    %5773 = vmatpush1.msra.mxu0 %v354
    %5774 = vmatprep.subr.mxu0 0.0
    %5775 = vmatpush1.msra.mxu0 0.0
    %5776 = vmatprep.subr.mxu0 0.0
    %5777 = vmatpush1.msra.mxu0 0.0
    %5778 = vmatprep.subr.mxu0 0.0
    %5779 = vmatpush1.msra.mxu0 0.0
    %5780 = vmatprep.subr.mxu0 0.0
    %5781 = vmatpush1.msra.mxu0 0.0
    %5782 = vmatprep.subr.mxu0 0.0
    %5783 = vmatpush1.msra.mxu0 0.0
    %5784 = vmatprep.subr.mxu0 0.0
    %5785 = vmatpush1.msra.mxu0 0.0
    %5786 = vmatprep.subr.mxu0 0.0
    %5787 = vmatpush1.msra.mxu0 0.0
    %5788 = vmatprep.subr.mxu0 0.0
    %5789 = vmatpush1.msra.mxu0 0.0
    %5790 = vmatprep.subr.mxu0 0.0
    %5791 = vmatpush1.msra.mxu0 0.0
    %5792 = vmatprep.subr.mxu0 0.0
    %5793 = vmatpush1.msra.mxu0 0.0
    %5794 = vmatprep.subr.mxu0 0.0
    %5795 = vmatpush1.msra.mxu0 0.0
    %5796 = vmatprep.subr.mxu0 0.0
    %5797 = vmatpush1.msra.mxu0 0.0
    %5798 = vmatprep.subr.mxu0 0.0
    %5799 = vmatpush1.msra.mxu0 0.0
    %5800 = vmatprep.subr.mxu0 0.0
    %5801 = vmatpush1.msra.mxu0 0.0
    %5802 = vmatprep.subr.mxu0 0.0
    %5803 = vmatpush1.msra.mxu0 0.0
    %5804 = vmatprep.subr.mxu0 0.0
    %5805 = vmatpush1.msra.mxu0 0.0
    %5806 = vmatprep.mubr.f32.mxu0 0.0
    %5807 = vmatmul.mubr.f32.gmra.mrb[0].mxu0 %v5733
    %v5808 = vpop.f32.mrb[0].mxu0
    %v5809 = vadd.f32 %v363, %v5808
    %v5810 = vpop.f32.mrb[0].mxu0
    %v5811 = vadd.f32 %v367, %v5810
    %5812 = vmatprep.mubr.f32.mxu0 0.0
    %5813 = vmatmul.mubr.f32.gmra.mrb[0].mxu0 %v5734
    %v5814 = vpop.f32.mrb[0].mxu0
    %v5815 = vadd.f32 %v363, %v5814
    %v5816 = vpop.f32.mrb[0].mxu0
    %v5817 = vadd.f32 %v367, %v5816
    %5818 = vmatprep.mubr.f32.mxu0 0.0
    %5819 = vmatmul.mubr.f32.gmra.mrb[0].mxu0 %v5735
    %v5820 = vpop.f32.mrb[0].mxu0
    %v5821 = vadd.f32 %v363, %v5820
    %v5822 = vpop.f32.mrb[0].mxu0
    %v5823 = vadd.f32 %v367, %v5822
    %5824 = vmatprep.mubr.f32.mxu0 0.0
    %5825 = vmatmul.mubr.f32.gmra.mrb[0].mxu0 %v5736
    %v5826 = vpop.f32.mrb[0].mxu0
    %v5827 = vadd.f32 %v363, %v5826
    %v5828 = vpop.f32.mrb[0].mxu0
    %v5829 = vadd.f32 %v367, %v5828
    %5830 = vdwg.mxu0
    %5831 = vmatprep.subr.mxu0 %v297
    %5832 = vmatpush1.msra.mxu0 %v296
    %5833 = vmatprep.subr.mxu0 %v301
    %5834 = vmatpush1.msra.mxu0 %v300
    %5835 = vmatprep.subr.mxu0 %v305
    %5836 = vmatpush1.msra.mxu0 %v304
    %5837 = vmatprep.subr.mxu0 %v309
    %5838 = vmatpush1.msra.mxu0 %v308
    %5839 = vmatprep.subr.mxu0 %v313
    %5840 = vmatpush1.msra.mxu0 %v312
    %5841 = vmatprep.subr.mxu0 %v317
    %5842 = vmatpush1.msra.mxu0 %v316
    %5843 = vmatprep.subr.mxu0 %v321
    %5844 = vmatpush1.msra.mxu0 %v320
    %5845 = vmatprep.subr.mxu0 %v325
    %5846 = vmatpush1.msra.mxu0 %v324
    %5847 = vmatprep.subr.mxu0 %v329
    %5848 = vmatpush1.msra.mxu0 %v328
    %5849 = vmatprep.subr.mxu0 %v333
    %5850 = vmatpush1.msra.mxu0 %v332
    %5851 = vmatprep.subr.mxu0 %v337
    %5852 = vmatpush1.msra.mxu0 %v336
    %5853 = vmatprep.subr.mxu0 %v341
    %5854 = vmatpush1.msra.mxu0 %v340
    %5855 = vmatprep.subr.mxu0 %v345
    %5856 = vmatpush1.msra.mxu0 %v344
    %5857 = vmatprep.subr.mxu0 %v349
    %5858 = vmatpush1.msra.mxu0 %v348
    %5859 = vmatprep.subr.mxu0 %v353
    %5860 = vmatpush1.msra.mxu0 %v352
    %5861 = vmatprep.subr.mxu0 %v357
    %5862 = vmatpush1.msra.mxu0 %v356
    %5863 = vmatprep.subr.mxu0 0.0
    %5864 = vmatpush1.msra.mxu0 0.0
    %5865 = vmatprep.subr.mxu0 0.0
    %5866 = vmatpush1.msra.mxu0 0.0
    %5867 = vmatprep.subr.mxu0 0.0
    %5868 = vmatpush1.msra.mxu0 0.0
    %5869 = vmatprep.subr.mxu0 0.0
    %5870 = vmatpush1.msra.mxu0 0.0
    %5871 = vmatprep.subr.mxu0 0.0
    %5872 = vmatpush1.msra.mxu0 0.0
    %5873 = vmatprep.subr.mxu0 0.0
    %5874 = vmatpush1.msra.mxu0 0.0
    %5875 = vmatprep.subr.mxu0 0.0
    %5876 = vmatpush1.msra.mxu0 0.0
    %5877 = vmatprep.subr.mxu0 0.0
    %5878 = vmatpush1.msra.mxu0 0.0
    %5879 = vmatprep.subr.mxu0 0.0
    %5880 = vmatpush1.msra.mxu0 0.0
    %5881 = vmatprep.subr.mxu0 0.0
    %5882 = vmatpush1.msra.mxu0 0.0
    %5883 = vmatprep.subr.mxu0 0.0
    %5884 = vmatpush1.msra.mxu0 0.0
    %5885 = vmatprep.subr.mxu0 0.0
    %5886 = vmatpush1.msra.mxu0 0.0
    %5887 = vmatprep.subr.mxu0 0.0
    %5888 = vmatpush1.msra.mxu0 0.0
    %5889 = vmatprep.subr.mxu0 0.0
    %5890 = vmatpush1.msra.mxu0 0.0
    %5891 = vmatprep.subr.mxu0 0.0
    %5892 = vmatpush1.msra.mxu0 0.0
    %5893 = vmatprep.subr.mxu0 0.0
    %5894 = vmatpush1.msra.mxu0 0.0
    %5895 = vmatprep.mubr.f32.mxu0 0.0
    %5896 = vmatmul.mubr.f32.gmra.mrb[0].mxu0 %v5733
    %v5897 = vpop.f32.mrb[0].mxu0
    %v5898 = vadd.f32 %v371, %v5897
    %v5899 = vpop.f32.mrb[0].mxu0
    %v5900 = vadd.f32 %v375, %v5899
    %5901 = vmatprep.mubr.f32.mxu0 0.0
    %5902 = vmatmul.mubr.f32.gmra.mrb[0].mxu0 %v5734
    %v5903 = vpop.f32.mrb[0].mxu0
    %v5904 = vadd.f32 %v371, %v5903
    %v5905 = vpop.f32.mrb[0].mxu0
    %v5906 = vadd.f32 %v375, %v5905
    %5907 = vmatprep.mubr.f32.mxu0 0.0
    %5908 = vmatmul.mubr.f32.gmra.mrb[0].mxu0 %v5735
    %v5909 = vpop.f32.mrb[0].mxu0
    %v5910 = vadd.f32 %v371, %v5909
    %v5911 = vpop.f32.mrb[0].mxu0
    %v5912 = vadd.f32 %v375, %v5911
    %5913 = vmatprep.mubr.f32.mxu0 0.0
    %5914 = vmatmul.mubr.f32.gmra.mrb[0].mxu0 %v5736
    %v5915 = vpop.f32.mrb[0].mxu0
    %v5916 = vadd.f32 %v371, %v5915
    %v5917 = vpop.f32.mrb[0].mxu0
    %v5918 = vadd.f32 %v375, %v5917
    %5919 = vdwg.mxu0
    %s5920 = scalar_lea.vmem [#allocation3], 896
    %v5921 = vld [vmem:[%s5920] sm:$0xff]
    %v5922 = vld [vmem:[%s5920 + $0x8] sm:$0xff]
    %v5923 = vld [vmem:[%s5920 + $0x10] sm:$0xff]
    %v5924 = vld [vmem:[%s5920 + $0x18] sm:$0xff]
    %v5925 = vld [vmem:[%s5920 + $0x20] sm:$0xff]
    %v5926 = vld [vmem:[%s5920 + $0x28] sm:$0xff]
    %v5927 = vld [vmem:[%s5920 + $0x30] sm:$0xff]
    %v5928 = vld [vmem:[%s5920 + $0x38] sm:$0xff]
    %v5929 = vld [vmem:[%s5920 + $0x40] sm:$0xff]
    %v5930 = vld [vmem:[%s5920 + $0x48] sm:$0xff]
    %v5931 = vld [vmem:[%s5920 + $0x50] sm:$0xff]
    %v5932 = vld [vmem:[%s5920 + $0x58] sm:$0xff]
    %v5933 = vld [vmem:[%s5920 + $0x60] sm:$0xff]
    %v5934 = vld [vmem:[%s5920 + $0x68] sm:$0xff]
    %v5935 = vld [vmem:[%s5920 + $0x70] sm:$0xff]
    %v5936 = vld [vmem:[%s5920 + $0x78] sm:$0xff]
    %5937 = vmatprep.subr.mxu0 %v167
    %5938 = vmatpush1.msra.mxu0 %v166
    %5939 = vmatprep.subr.mxu0 %v171
    %5940 = vmatpush1.msra.mxu0 %v170
    %5941 = vmatprep.subr.mxu0 %v175
    %5942 = vmatpush1.msra.mxu0 %v174
    %5943 = vmatprep.subr.mxu0 %v179
    %5944 = vmatpush1.msra.mxu0 %v178
    %5945 = vmatprep.subr.mxu0 %v183
    %5946 = vmatpush1.msra.mxu0 %v182
    %5947 = vmatprep.subr.mxu0 %v187
    %5948 = vmatpush1.msra.mxu0 %v186
    %5949 = vmatprep.subr.mxu0 %v191
    %5950 = vmatpush1.msra.mxu0 %v190
    %5951 = vmatprep.subr.mxu0 %v195
    %5952 = vmatpush1.msra.mxu0 %v194
    %5953 = vmatprep.subr.mxu0 %v199
    %5954 = vmatpush1.msra.mxu0 %v198
    %5955 = vmatprep.subr.mxu0 %v203
    %5956 = vmatpush1.msra.mxu0 %v202
    %5957 = vmatprep.subr.mxu0 %v207
    %5958 = vmatpush1.msra.mxu0 %v206
    %5959 = vmatprep.subr.mxu0 %v211
    %5960 = vmatpush1.msra.mxu0 %v210
    %5961 = vmatprep.subr.mxu0 %v215
    %5962 = vmatpush1.msra.mxu0 %v214
    %5963 = vmatprep.subr.mxu0 %v219
    %5964 = vmatpush1.msra.mxu0 %v218
    %5965 = vmatprep.subr.mxu0 %v223
    %5966 = vmatpush1.msra.mxu0 %v222
    %5967 = vmatprep.subr.mxu0 %v227
    %5968 = vmatpush1.msra.mxu0 %v226
    %5969 = vmatprep.subr.mxu0 0.0
    %5970 = vmatpush1.msra.mxu0 0.0
    %5971 = vmatprep.subr.mxu0 0.0
    %5972 = vmatpush1.msra.mxu0 0.0
    %5973 = vmatprep.subr.mxu0 0.0
    %5974 = vmatpush1.msra.mxu0 0.0
    %5975 = vmatprep.subr.mxu0 0.0
    %5976 = vmatpush1.msra.mxu0 0.0
    %5977 = vmatprep.subr.mxu0 0.0
    %5978 = vmatpush1.msra.mxu0 0.0
    %5979 = vmatprep.subr.mxu0 0.0
    %5980 = vmatpush1.msra.mxu0 0.0
    %5981 = vmatprep.subr.mxu0 0.0
    %5982 = vmatpush1.msra.mxu0 0.0
    %5983 = vmatprep.subr.mxu0 0.0
    %5984 = vmatpush1.msra.mxu0 0.0
    %5985 = vmatprep.subr.mxu0 0.0
    %5986 = vmatpush1.msra.mxu0 0.0
    %5987 = vmatprep.subr.mxu0 0.0
    %5988 = vmatpush1.msra.mxu0 0.0
    %5989 = vmatprep.subr.mxu0 0.0
    %5990 = vmatpush1.msra.mxu0 0.0
    %5991 = vmatprep.subr.mxu0 0.0
    %5992 = vmatpush1.msra.mxu0 0.0
    %5993 = vmatprep.subr.mxu0 0.0
    %5994 = vmatpush1.msra.mxu0 0.0
    %5995 = vmatprep.subr.mxu0 0.0
    %5996 = vmatpush1.msra.mxu0 0.0
    %5997 = vmatprep.subr.mxu0 0.0
    %5998 = vmatpush1.msra.mxu0 0.0
    %5999 = vmatprep.subr.mxu0 0.0
    %6000 = vmatpush1.msra.mxu0 0.0
    %6001 = vmatprep.mubr.f32.mxu0 0.0
    %6002 = vmatmul.mubr.f32.gmra.mrb[0].mxu0 %v5459
    %v6003 = vpop.f32.mrb[0].mxu0
    %v6004 = vadd.f32 0.0, %v6003
    %v6005 = vpop.f32.mrb[0].mxu0
    %v6006 = vadd.f32 0.0, %v6005
    %6007 = vmatprep.mubr.f32.mxu0 0.0
    %6008 = vmatmul.mubr.f32.gmra.mrb[0].mxu0 %v5460
    %v6009 = vpop.f32.mrb[0].mxu0
    %v6010 = vadd.f32 0.0, %v6009
    %v6011 = vpop.f32.mrb[0].mxu0
    %v6012 = vadd.f32 0.0, %v6011
    %6013 = vmatprep.mubr.f32.mxu0 0.0
    %6014 = vmatmul.mubr.f32.gmra.mrb[0].mxu0 %v5461
    %v6015 = vpop.f32.mrb[0].mxu0
    %v6016 = vadd.f32 0.0, %v6015
    %v6017 = vpop.f32.mrb[0].mxu0
    %v6018 = vadd.f32 0.0, %v6017
    %6019 = vmatprep.mubr.f32.mxu0 0.0
    %6020 = vmatmul.mubr.f32.gmra.mrb[0].mxu0 %v5462
    %v6021 = vpop.f32.mrb[0].mxu0
    %v6022 = vadd.f32 0.0, %v6021
    %v6023 = vpop.f32.mrb[0].mxu0
    %v6024 = vadd.f32 0.0, %v6023
    %6025 = vdwg.mxu0
    %6026 = vmatprep.subr.mxu0 %v169
    %6027 = vmatpush1.msra.mxu0 %v168
    %6028 = vmatprep.subr.mxu0 %v173
    %6029 = vmatpush1.msra.mxu0 %v172
    %6030 = vmatprep.subr.mxu0 %v177
    %6031 = vmatpush1.msra.mxu0 %v176
    %6032 = vmatprep.subr.mxu0 %v181
    %6033 = vmatpush1.msra.mxu0 %v180
    %6034 = vmatprep.subr.mxu0 %v185
    %6035 = vmatpush1.msra.mxu0 %v184
    %6036 = vmatprep.subr.mxu0 %v189
    %6037 = vmatpush1.msra.mxu0 %v188
    %6038 = vmatprep.subr.mxu0 %v193
    %6039 = vmatpush1.msra.mxu0 %v192
    %6040 = vmatprep.subr.mxu0 %v197
    %6041 = vmatpush1.msra.mxu0 %v196
    %6042 = vmatprep.subr.mxu0 %v201
    %6043 = vmatpush1.msra.mxu0 %v200
    %6044 = vmatprep.subr.mxu0 %v205
    %6045 = vmatpush1.msra.mxu0 %v204
    %6046 = vmatprep.subr.mxu0 %v209
    %6047 = vmatpush1.msra.mxu0 %v208
    %6048 = vmatprep.subr.mxu0 %v213
    %6049 = vmatpush1.msra.mxu0 %v212
    %6050 = vmatprep.subr.mxu0 %v217
    %6051 = vmatpush1.msra.mxu0 %v216
    %6052 = vmatprep.subr.mxu0 %v221
    %6053 = vmatpush1.msra.mxu0 %v220
    %6054 = vmatprep.subr.mxu0 %v225
    %6055 = vmatpush1.msra.mxu0 %v224
    %6056 = vmatprep.subr.mxu0 %v229
    %6057 = vmatpush1.msra.mxu0 %v228
    %6058 = vmatprep.subr.mxu0 0.0
    %6059 = vmatpush1.msra.mxu0 0.0
    %6060 = vmatprep.subr.mxu0 0.0
    %6061 = vmatpush1.msra.mxu0 0.0
    %6062 = vmatprep.subr.mxu0 0.0
    %6063 = vmatpush1.msra.mxu0 0.0
    %6064 = vmatprep.subr.mxu0 0.0
    %6065 = vmatpush1.msra.mxu0 0.0
    %6066 = vmatprep.subr.mxu0 0.0
    %6067 = vmatpush1.msra.mxu0 0.0
    %6068 = vmatprep.subr.mxu0 0.0
    %6069 = vmatpush1.msra.mxu0 0.0
    %6070 = vmatprep.subr.mxu0 0.0
    %6071 = vmatpush1.msra.mxu0 0.0
    %6072 = vmatprep.subr.mxu0 0.0
    %6073 = vmatpush1.msra.mxu0 0.0
    %6074 = vmatprep.subr.mxu0 0.0
    %6075 = vmatpush1.msra.mxu0 0.0
    %6076 = vmatprep.subr.mxu0 0.0
    %6077 = vmatpush1.msra.mxu0 0.0
    %6078 = vmatprep.subr.mxu0 0.0
    %6079 = vmatpush1.msra.mxu0 0.0
    %6080 = vmatprep.subr.mxu0 0.0
    %6081 = vmatpush1.msra.mxu0 0.0
    %6082 = vmatprep.subr.mxu0 0.0
    %6083 = vmatpush1.msra.mxu0 0.0
    %6084 = vmatprep.subr.mxu0 0.0
    %6085 = vmatpush1.msra.mxu0 0.0
    %6086 = vmatprep.subr.mxu0 0.0
    %6087 = vmatpush1.msra.mxu0 0.0
    %6088 = vmatprep.subr.mxu0 0.0
    %6089 = vmatpush1.msra.mxu0 0.0
    %6090 = vmatprep.mubr.f32.mxu0 0.0
    %6091 = vmatmul.mubr.f32.gmra.mrb[0].mxu0 %v5459
    %v6092 = vpop.f32.mrb[0].mxu0
    %v6093 = vadd.f32 0.0, %v6092
    %v6094 = vpop.f32.mrb[0].mxu0
    %v6095 = vadd.f32 0.0, %v6094
    %6096 = vmatprep.mubr.f32.mxu0 0.0
    %6097 = vmatmul.mubr.f32.gmra.mrb[0].mxu0 %v5460
    %v6098 = vpop.f32.mrb[0].mxu0
    %v6099 = vadd.f32 0.0, %v6098
    %v6100 = vpop.f32.mrb[0].mxu0
    %v6101 = vadd.f32 0.0, %v6100
    %6102 = vmatprep.mubr.f32.mxu0 0.0
    %6103 = vmatmul.mubr.f32.gmra.mrb[0].mxu0 %v5461
    %v6104 = vpop.f32.mrb[0].mxu0
    %v6105 = vadd.f32 0.0, %v6104
    %v6106 = vpop.f32.mrb[0].mxu0
    %v6107 = vadd.f32 0.0, %v6106
    %6108 = vmatprep.mubr.f32.mxu0 0.0
    %6109 = vmatmul.mubr.f32.gmra.mrb[0].mxu0 %v5462
    %v6110 = vpop.f32.mrb[0].mxu0
    %v6111 = vadd.f32 0.0, %v6110
    %v6112 = vpop.f32.mrb[0].mxu0
    %v6113 = vadd.f32 0.0, %v6112
    %6114 = vdwg.mxu0
    %v6115 = vadd.f32 %v5921, %v6004
    %v6116 = vadd.f32 %v5922, %v6006
    %v6117 = vadd.f32 %v5923, %v6093
    %v6118 = vadd.f32 %v5924, %v6095
    %v6119 = vadd.f32 %v5925, %v6010
    %v6120 = vadd.f32 %v5926, %v6012
    %v6121 = vadd.f32 %v5927, %v6099
    %v6122 = vadd.f32 %v5928, %v6101
    %v6123 = vadd.f32 %v5929, %v6016
    %v6124 = vadd.f32 %v5930, %v6018
    %v6125 = vadd.f32 %v5931, %v6105
    %v6126 = vadd.f32 %v5932, %v6107
    %v6127 = vadd.f32 %v5933, %v6022
    %v6128 = vadd.f32 %v5934, %v6024
    %v6129 = vadd.f32 %v5935, %v6111
    %v6130 = vadd.f32 %v5936, %v6113
    %v6131 = vxor.u32 %v6115, 2147483648
    %v6132 = vxor.u32 %v6116, 2147483648
    %v6133 = vxor.u32 %v6117, 2147483648
    %v6134 = vxor.u32 %v6119, 2147483648
    %v6135 = vxor.u32 %v6120, 2147483648
    %v6136 = vxor.u32 %v6121, 2147483648
    %v6137 = vxor.u32 %v6123, 2147483648
    %v6138 = vxor.u32 %v6124, 2147483648
    %v6139 = vxor.u32 %v6125, 2147483648
    %v6140 = vxor.u32 %v6127, 2147483648
    %v6141 = vxor.u32 %v6128, 2147483648
    %v6142 = vxor.u32 %v6129, 2147483648
    %v6143 = vmul.f32 %v6131, 1.442695
    %v6144 = vpow.pop %v6143
    %v6145 = vmul.f32 %v6132, 1.442695
    %v6146 = vpow.pop %v6145
    %v6147 = vmul.f32 %v6133, 1.442695
    %v6148 = vpow.pop %v6147
    %v6149 = vmul.f32 %v6134, 1.442695
    %v6150 = vpow.pop %v6149
    %v6151 = vmul.f32 %v6135, 1.442695
    %v6152 = vpow.pop %v6151
    %v6153 = vmul.f32 %v6136, 1.442695
    %v6154 = vpow.pop %v6153
    %v6155 = vmul.f32 %v6137, 1.442695
    %v6156 = vpow.pop %v6155
    %v6157 = vmul.f32 %v6138, 1.442695
    %v6158 = vpow.pop %v6157
    %v6159 = vmul.f32 %v6139, 1.442695
    %v6160 = vpow.pop %v6159
    %v6161 = vmul.f32 %v6140, 1.442695
    %v6162 = vpow.pop %v6161
    %v6163 = vmul.f32 %v6141, 1.442695
    %v6164 = vpow.pop %v6163
    %v6165 = vmul.f32 %v6142, 1.442695
    %v6166 = vpow.pop %v6165
    %v6167 = vadd.f32 %v6144, 1.0
    %v6168 = vadd.f32 %v6146, 1.0
    %v6169 = vadd.f32 %v6148, 1.0
    %v6170 = vadd.f32 %v6150, 1.0
    %v6171 = vadd.f32 %v6152, 1.0
    %v6172 = vadd.f32 %v6154, 1.0
    %v6173 = vadd.f32 %v6156, 1.0
    %v6174 = vadd.f32 %v6158, 1.0
    %v6175 = vadd.f32 %v6160, 1.0
    %v6176 = vadd.f32 %v6162, 1.0
    %v6177 = vadd.f32 %v6164, 1.0
    %v6178 = vadd.f32 %v6166, 1.0
    %v6179 = vrcp.pop %v6167
    %v6180 = vmul.f32 1.0, %v6179
    %v6181 = vrcp.pop %v6168
    %v6182 = vmul.f32 1.0, %v6181
    %v6183 = vrcp.pop %v6169
    %v6184 = vmul.f32 1.0, %v6183
    %v6185 = vrcp.pop %v6170
    %v6186 = vmul.f32 1.0, %v6185
    %v6187 = vrcp.pop %v6171
    %v6188 = vmul.f32 1.0, %v6187
    %v6189 = vrcp.pop %v6172
    %v6190 = vmul.f32 1.0, %v6189
    %v6191 = vrcp.pop %v6173
    %v6192 = vmul.f32 1.0, %v6191
    %v6193 = vrcp.pop %v6174
    %v6194 = vmul.f32 1.0, %v6193
    %v6195 = vrcp.pop %v6175
    %v6196 = vmul.f32 1.0, %v6195
    %v6197 = vrcp.pop %v6176
    %v6198 = vmul.f32 1.0, %v6197
    %v6199 = vrcp.pop %v6177
    %v6200 = vmul.f32 1.0, %v6199
    %v6201 = vrcp.pop %v6178
    %v6202 = vmul.f32 1.0, %v6201
    %v6203 = vtanh.pop %v6118
    %v6204 = vtanh.pop %v6122
    %v6205 = vtanh.pop %v6126
    %v6206 = vtanh.pop %v6130
    %v6207 = vmul.f32 %v6182, %v5451
    %v6208 = vmul.f32 %v6188, %v5452
    %v6209 = vmul.f32 %v6194, %v5453
    %v6210 = vmul.f32 %v6200, %v5454
    %v6211 = vmul.f32 %v6180, %v6203
    %v6212 = vmul.f32 %v6186, %v6204
    %v6213 = vmul.f32 %v6192, %v6205
    %v6214 = vmul.f32 %v6198, %v6206
    %v6215 = vadd.f32 %v6207, %v6211
    %v6216 = vadd.f32 %v6208, %v6212
    %v6217 = vadd.f32 %v6209, %v6213
    %v6218 = vadd.f32 %v6210, %v6214
    %v6219 = vtanh.pop %v6215
    %v6220 = vtanh.pop %v6216
    %v6221 = vtanh.pop %v6217
    %v6222 = vtanh.pop %v6218
    %v6223 = vmul.f32 %v6184, %v6219
    %v6224 = vmul.f32 %v6190, %v6220
    %v6225 = vmul.f32 %v6196, %v6221
    %v6226 = vmul.f32 %v6202, %v6222
    %6227 = vmatprep.subr.mxu0 %v231
    %6228 = vmatpush1.msra.mxu0 %v230
    %6229 = vmatprep.subr.mxu0 %v235
    %6230 = vmatpush1.msra.mxu0 %v234
    %6231 = vmatprep.subr.mxu0 %v239
    %6232 = vmatpush1.msra.mxu0 %v238
    %6233 = vmatprep.subr.mxu0 %v243
    %6234 = vmatpush1.msra.mxu0 %v242
    %6235 = vmatprep.subr.mxu0 %v247
    %6236 = vmatpush1.msra.mxu0 %v246
    %6237 = vmatprep.subr.mxu0 %v251
    %6238 = vmatpush1.msra.mxu0 %v250
    %6239 = vmatprep.subr.mxu0 %v255
    %6240 = vmatpush1.msra.mxu0 %v254
    %6241 = vmatprep.subr.mxu0 %v259
    %6242 = vmatpush1.msra.mxu0 %v258
    %6243 = vmatprep.subr.mxu0 %v263
    %6244 = vmatpush1.msra.mxu0 %v262
    %6245 = vmatprep.subr.mxu0 %v267
    %6246 = vmatpush1.msra.mxu0 %v266
    %6247 = vmatprep.subr.mxu0 %v271
    %6248 = vmatpush1.msra.mxu0 %v270
    %6249 = vmatprep.subr.mxu0 %v275
    %6250 = vmatpush1.msra.mxu0 %v274
    %6251 = vmatprep.subr.mxu0 %v279
    %6252 = vmatpush1.msra.mxu0 %v278
    %6253 = vmatprep.subr.mxu0 %v283
    %6254 = vmatpush1.msra.mxu0 %v282
    %6255 = vmatprep.subr.mxu0 %v287
    %6256 = vmatpush1.msra.mxu0 %v286
    %6257 = vmatprep.subr.mxu0 %v291
    %6258 = vmatpush1.msra.mxu0 %v290
    %6259 = vmatprep.subr.mxu0 0.0
    %6260 = vmatpush1.msra.mxu0 0.0
    %6261 = vmatprep.subr.mxu0 0.0
    %6262 = vmatpush1.msra.mxu0 0.0
    %6263 = vmatprep.subr.mxu0 0.0
    %6264 = vmatpush1.msra.mxu0 0.0
    %6265 = vmatprep.subr.mxu0 0.0
    %6266 = vmatpush1.msra.mxu0 0.0
    %6267 = vmatprep.subr.mxu0 0.0
    %6268 = vmatpush1.msra.mxu0 0.0
    %6269 = vmatprep.subr.mxu0 0.0
    %6270 = vmatpush1.msra.mxu0 0.0
    %6271 = vmatprep.subr.mxu0 0.0
    %6272 = vmatpush1.msra.mxu0 0.0
    %6273 = vmatprep.subr.mxu0 0.0
    %6274 = vmatpush1.msra.mxu0 0.0
    %6275 = vmatprep.subr.mxu0 0.0
    %6276 = vmatpush1.msra.mxu0 0.0
    %6277 = vmatprep.subr.mxu0 0.0
    %6278 = vmatpush1.msra.mxu0 0.0
    %6279 = vmatprep.subr.mxu0 0.0
    %6280 = vmatpush1.msra.mxu0 0.0
    %6281 = vmatprep.subr.mxu0 0.0
    %6282 = vmatpush1.msra.mxu0 0.0
    %6283 = vmatprep.subr.mxu0 0.0
    %6284 = vmatpush1.msra.mxu0 0.0
    %6285 = vmatprep.subr.mxu0 0.0
    %6286 = vmatpush1.msra.mxu0 0.0
    %6287 = vmatprep.subr.mxu0 0.0
    %6288 = vmatpush1.msra.mxu0 0.0
    %6289 = vmatprep.subr.mxu0 0.0
    %6290 = vmatpush1.msra.mxu0 0.0
    %6291 = vmatprep.mubr.f32.mxu0 0.0
    %6292 = vmatmul.mubr.f32.gmra.mrb[0].mxu0 %v6223
    %v6293 = vpop.f32.mrb[0].mxu0
    %v6294 = vadd.f32 %v5809, %v6293
    %v6295 = vpop.f32.mrb[0].mxu0
    %v6296 = vadd.f32 %v5811, %v6295
    %6297 = vmatprep.mubr.f32.mxu0 0.0
    %6298 = vmatmul.mubr.f32.gmra.mrb[0].mxu0 %v6224
    %v6299 = vpop.f32.mrb[0].mxu0
    %v6300 = vadd.f32 %v5815, %v6299
    %v6301 = vpop.f32.mrb[0].mxu0
    %v6302 = vadd.f32 %v5817, %v6301
    %6303 = vmatprep.mubr.f32.mxu0 0.0
    %6304 = vmatmul.mubr.f32.gmra.mrb[0].mxu0 %v6225
    %v6305 = vpop.f32.mrb[0].mxu0
    %v6306 = vadd.f32 %v5821, %v6305
    %v6307 = vpop.f32.mrb[0].mxu0
    %v6308 = vadd.f32 %v5823, %v6307
    %6309 = vmatprep.mubr.f32.mxu0 0.0
    %6310 = vmatmul.mubr.f32.gmra.mrb[0].mxu0 %v6226
    %v6311 = vpop.f32.mrb[0].mxu0
    %v6312 = vadd.f32 %v5827, %v6311
    %v6313 = vpop.f32.mrb[0].mxu0
    %v6314 = vadd.f32 %v5829, %v6313
    %6315 = vdwg.mxu0
    %6316 = vmatprep.subr.mxu0 %v233
    %6317 = vmatpush1.msra.mxu0 %v232
    %6318 = vmatprep.subr.mxu0 %v237
    %6319 = vmatpush1.msra.mxu0 %v236
    %6320 = vmatprep.subr.mxu0 %v241
    %6321 = vmatpush1.msra.mxu0 %v240
    %6322 = vmatprep.subr.mxu0 %v245
    %6323 = vmatpush1.msra.mxu0 %v244
    %6324 = vmatprep.subr.mxu0 %v249
    %6325 = vmatpush1.msra.mxu0 %v248
    %6326 = vmatprep.subr.mxu0 %v253
    %6327 = vmatpush1.msra.mxu0 %v252
    %6328 = vmatprep.subr.mxu0 %v257
    %6329 = vmatpush1.msra.mxu0 %v256
    %6330 = vmatprep.subr.mxu0 %v261
    %6331 = vmatpush1.msra.mxu0 %v260
    %6332 = vmatprep.subr.mxu0 %v265
    %6333 = vmatpush1.msra.mxu0 %v264
    %6334 = vmatprep.subr.mxu0 %v269
    %6335 = vmatpush1.msra.mxu0 %v268
    %6336 = vmatprep.subr.mxu0 %v273
    %6337 = vmatpush1.msra.mxu0 %v272
    %6338 = vmatprep.subr.mxu0 %v277
    %6339 = vmatpush1.msra.mxu0 %v276
    %6340 = vmatprep.subr.mxu0 %v281
    %6341 = vmatpush1.msra.mxu0 %v280
    %6342 = vmatprep.subr.mxu0 %v285
    %6343 = vmatpush1.msra.mxu0 %v284
    %6344 = vmatprep.subr.mxu0 %v289
    %6345 = vmatpush1.msra.mxu0 %v288
    %6346 = vmatprep.subr.mxu0 %v293
    %6347 = vmatpush1.msra.mxu0 %v292
    %6348 = vmatprep.subr.mxu0 0.0
    %6349 = vmatpush1.msra.mxu0 0.0
    %6350 = vmatprep.subr.mxu0 0.0
    %6351 = vmatpush1.msra.mxu0 0.0
    %6352 = vmatprep.subr.mxu0 0.0
    %6353 = vmatpush1.msra.mxu0 0.0
    %6354 = vmatprep.subr.mxu0 0.0
    %6355 = vmatpush1.msra.mxu0 0.0
    %6356 = vmatprep.subr.mxu0 0.0
    %6357 = vmatpush1.msra.mxu0 0.0
    %6358 = vmatprep.subr.mxu0 0.0
    %6359 = vmatpush1.msra.mxu0 0.0
    %6360 = vmatprep.subr.mxu0 0.0
    %6361 = vmatpush1.msra.mxu0 0.0
    %6362 = vmatprep.subr.mxu0 0.0
    %6363 = vmatpush1.msra.mxu0 0.0
    %6364 = vmatprep.subr.mxu0 0.0
    %6365 = vmatpush1.msra.mxu0 0.0
    %6366 = vmatprep.subr.mxu0 0.0
    %6367 = vmatpush1.msra.mxu0 0.0
    %6368 = vmatprep.subr.mxu0 0.0
    %6369 = vmatpush1.msra.mxu0 0.0
    %6370 = vmatprep.subr.mxu0 0.0
    %6371 = vmatpush1.msra.mxu0 0.0
    %6372 = vmatprep.subr.mxu0 0.0
    %6373 = vmatpush1.msra.mxu0 0.0
    %6374 = vmatprep.subr.mxu0 0.0
    %6375 = vmatpush1.msra.mxu0 0.0
    %6376 = vmatprep.subr.mxu0 0.0
    %6377 = vmatpush1.msra.mxu0 0.0
    %6378 = vmatprep.subr.mxu0 0.0
    %6379 = vmatpush1.msra.mxu0 0.0
    %6380 = vmatprep.mubr.f32.mxu0 0.0
    %6381 = vmatmul.mubr.f32.gmra.mrb[0].mxu0 %v6223
    %v6382 = vpop.f32.mrb[0].mxu0
    %v6383 = vadd.f32 %v5898, %v6382
    %v6384 = vpop.f32.mrb[0].mxu0
    %v6385 = vadd.f32 %v5900, %v6384
    %6386 = vmatprep.mubr.f32.mxu0 0.0
    %6387 = vmatmul.mubr.f32.gmra.mrb[0].mxu0 %v6224
    %v6388 = vpop.f32.mrb[0].mxu0
    %v6389 = vadd.f32 %v5904, %v6388
    %v6390 = vpop.f32.mrb[0].mxu0
    %v6391 = vadd.f32 %v5906, %v6390
    %6392 = vmatprep.mubr.f32.mxu0 0.0
    %6393 = vmatmul.mubr.f32.gmra.mrb[0].mxu0 %v6225
    %v6394 = vpop.f32.mrb[0].mxu0
    %v6395 = vadd.f32 %v5910, %v6394
    %v6396 = vpop.f32.mrb[0].mxu0
    %v6397 = vadd.f32 %v5912, %v6396
    %6398 = vmatprep.mubr.f32.mxu0 0.0
    %6399 = vmatmul.mubr.f32.gmra.mrb[0].mxu0 %v6226
    %v6400 = vpop.f32.mrb[0].mxu0
    %v6401 = vadd.f32 %v5916, %v6400
    %v6402 = vpop.f32.mrb[0].mxu0
    %v6403 = vadd.f32 %v5918, %v6402
    %6404 = vdwg.mxu0
    %v6405 = vxor.u32 %v6294, 2147483648
    %v6406 = vxor.u32 %v6296, 2147483648
    %v6407 = vxor.u32 %v6383, 2147483648
    %v6408 = vxor.u32 %v6300, 2147483648
    %v6409 = vxor.u32 %v6302, 2147483648
    %v6410 = vxor.u32 %v6389, 2147483648
    %v6411 = vxor.u32 %v6306, 2147483648
    %v6412 = vxor.u32 %v6308, 2147483648
    %v6413 = vxor.u32 %v6395, 2147483648
    %v6414 = vxor.u32 %v6312, 2147483648
    %v6415 = vxor.u32 %v6314, 2147483648
    %v6416 = vxor.u32 %v6401, 2147483648
    %v6417 = vmul.f32 %v6405, 1.442695
    %v6418 = vpow.pop %v6417
    %v6419 = vmul.f32 %v6406, 1.442695
    %v6420 = vpow.pop %v6419
    %v6421 = vmul.f32 %v6407, 1.442695
    %v6422 = vpow.pop %v6421
    %v6423 = vmul.f32 %v6408, 1.442695
    %v6424 = vpow.pop %v6423
    %v6425 = vmul.f32 %v6409, 1.442695
    %v6426 = vpow.pop %v6425
    %v6427 = vmul.f32 %v6410, 1.442695
    %v6428 = vpow.pop %v6427
    %v6429 = vmul.f32 %v6411, 1.442695
    %v6430 = vpow.pop %v6429
    %v6431 = vmul.f32 %v6412, 1.442695
    %v6432 = vpow.pop %v6431
    %v6433 = vmul.f32 %v6413, 1.442695
    %v6434 = vpow.pop %v6433
    %v6435 = vmul.f32 %v6414, 1.442695
    %v6436 = vpow.pop %v6435
    %v6437 = vmul.f32 %v6415, 1.442695
    %v6438 = vpow.pop %v6437
    %v6439 = vmul.f32 %v6416, 1.442695
    %v6440 = vpow.pop %v6439
    %v6441 = vadd.f32 %v6418, 1.0
    %v6442 = vadd.f32 %v6420, 1.0
    %v6443 = vadd.f32 %v6422, 1.0
    %v6444 = vadd.f32 %v6424, 1.0
    %v6445 = vadd.f32 %v6426, 1.0
    %v6446 = vadd.f32 %v6428, 1.0
    %v6447 = vadd.f32 %v6430, 1.0
    %v6448 = vadd.f32 %v6432, 1.0
    %v6449 = vadd.f32 %v6434, 1.0
    %v6450 = vadd.f32 %v6436, 1.0
    %v6451 = vadd.f32 %v6438, 1.0
    %v6452 = vadd.f32 %v6440, 1.0
    %v6453 = vrcp.pop %v6441
    %v6454 = vmul.f32 1.0, %v6453
    %v6455 = vrcp.pop %v6442
    %v6456 = vmul.f32 1.0, %v6455
    %v6457 = vrcp.pop %v6443
    %v6458 = vmul.f32 1.0, %v6457
    %v6459 = vrcp.pop %v6444
    %v6460 = vmul.f32 1.0, %v6459
    %v6461 = vrcp.pop %v6445
    %v6462 = vmul.f32 1.0, %v6461
    %v6463 = vrcp.pop %v6446
    %v6464 = vmul.f32 1.0, %v6463
    %v6465 = vrcp.pop %v6447
    %v6466 = vmul.f32 1.0, %v6465
    %v6467 = vrcp.pop %v6448
    %v6468 = vmul.f32 1.0, %v6467
    %v6469 = vrcp.pop %v6449
    %v6470 = vmul.f32 1.0, %v6469
    %v6471 = vrcp.pop %v6450
    %v6472 = vmul.f32 1.0, %v6471
    %v6473 = vrcp.pop %v6451
    %v6474 = vmul.f32 1.0, %v6473
    %v6475 = vrcp.pop %v6452
    %v6476 = vmul.f32 1.0, %v6475
    %v6477 = vtanh.pop %v6385
    %v6478 = vtanh.pop %v6391
    %v6479 = vtanh.pop %v6397
    %v6480 = vtanh.pop %v6403
    %v6481 = vmul.f32 %v6456, %v5725
    %v6482 = vmul.f32 %v6462, %v5726
    %v6483 = vmul.f32 %v6468, %v5727
    %v6484 = vmul.f32 %v6474, %v5728
    %v6485 = vmul.f32 %v6454, %v6477
    %v6486 = vmul.f32 %v6460, %v6478
    %v6487 = vmul.f32 %v6466, %v6479
    %v6488 = vmul.f32 %v6472, %v6480
    %v6489 = vadd.f32 %v6481, %v6485
    %v6490 = vadd.f32 %v6482, %v6486
    %v6491 = vadd.f32 %v6483, %v6487
    %v6492 = vadd.f32 %v6484, %v6488
    %v6493 = vtanh.pop %v6489
    %v6494 = vtanh.pop %v6490
    %v6495 = vtanh.pop %v6491
    %v6496 = vtanh.pop %v6492
    %v6497 = vmul.f32 %v6458, %v6493
    %v6498 = vmul.f32 %v6464, %v6494
    %v6499 = vmul.f32 %v6470, %v6495
    %v6500 = vmul.f32 %v6476, %v6496
    %s6501 = scalar_lea.vmem [#allocation2], 224
    %6502 = vst [vmem:[%s6501] sm:$0xff] %v6497
    %6503 = vst [vmem:[%s6501 + $0x8] sm:$0xff] %v6498
    %6504 = vst [vmem:[%s6501 + $0x10] sm:$0xff] %v6499
    %6505 = vst [vmem:[%s6501 + $0x18] sm:$0xff] %v6500
    %6506 = vst [vmem:[#allocation19] sm:$0xff] %v6223
    %6507 = vst [vmem:[#allocation19 + $0x8] sm:$0xff] %v6224
    %6508 = vst [vmem:[#allocation19 + $0x10] sm:$0xff] %v6225
    %6509 = vst [vmem:[#allocation19 + $0x18] sm:$0xff] %v6226
    %6510 = vst [vmem:[#allocation21] sm:$0xff] %v6215
    %6511 = vst [vmem:[#allocation21 + $0x8] sm:$0xff] %v6216
    %6512 = vst [vmem:[#allocation21 + $0x10] sm:$0xff] %v6217
    %6513 = vst [vmem:[#allocation21 + $0x18] sm:$0xff] %v6218
    %6514 = vst [vmem:[#allocation22] sm:$0xff] %v6497
    %6515 = vst [vmem:[#allocation22 + $0x8] sm:$0xff] %v6498
    %6516 = vst [vmem:[#allocation22 + $0x10] sm:$0xff] %v6499
    %6517 = vst [vmem:[#allocation22 + $0x18] sm:$0xff] %v6500
    %6518 = vst [vmem:[#allocation24] sm:$0xff] %v6489
    %6519 = vst [vmem:[#allocation24 + $0x8] sm:$0xff] %v6490
    %6520 = vst [vmem:[#allocation24 + $0x10] sm:$0xff] %v6491
    %6521 = vst [vmem:[#allocation24 + $0x18] sm:$0xff] %v6492
    %v6522 = vld [vmem:[#allocation2] sm:$0xff]
    %v6523 = vld [vmem:[#allocation2 + $0x8] sm:$0xff]
    %v6524 = vld [vmem:[#allocation2 + $0x10] sm:$0xff]
    %v6525 = vld [vmem:[#allocation2 + $0x18] sm:$0xff]
    %v6526 = vld [vmem:[#allocation2 + $0x20] sm:$0xff]
    %v6527 = vld [vmem:[#allocation2 + $0x28] sm:$0xff]
    %v6528 = vld [vmem:[#allocation2 + $0x30] sm:$0xff]
    %v6529 = vld [vmem:[#allocation2 + $0x38] sm:$0xff]
    %v6530 = vld [vmem:[#allocation2 + $0x40] sm:$0xff]
    %v6531 = vld [vmem:[#allocation2 + $0x48] sm:$0xff]
    %v6532 = vld [vmem:[#allocation2 + $0x50] sm:$0xff]
    %v6533 = vld [vmem:[#allocation2 + $0x58] sm:$0xff]
    %v6534 = vld [vmem:[#allocation2 + $0x60] sm:$0xff]
    %v6535 = vld [vmem:[#allocation2 + $0x68] sm:$0xff]
    %v6536 = vld [vmem:[#allocation2 + $0x70] sm:$0xff]
    %v6537 = vld [vmem:[#allocation2 + $0x78] sm:$0xff]
    %v6538 = vld [vmem:[#allocation2 + $0x80] sm:$0xff]
    %v6539 = vld [vmem:[#allocation2 + $0x88] sm:$0xff]
    %v6540 = vld [vmem:[#allocation2 + $0x90] sm:$0xff]
    %v6541 = vld [vmem:[#allocation2 + $0x98] sm:$0xff]
    %v6542 = vld [vmem:[#allocation2 + $0xa0] sm:$0xff]
    %v6543 = vld [vmem:[#allocation2 + $0xa8] sm:$0xff]
    %v6544 = vld [vmem:[#allocation2 + $0xb0] sm:$0xff]
    %v6545 = vld [vmem:[#allocation2 + $0xb8] sm:$0xff]
    %v6546 = vld [vmem:[#allocation2 + $0xc0] sm:$0xff]
    %v6547 = vld [vmem:[#allocation2 + $0xc8] sm:$0xff]
    %v6548 = vld [vmem:[#allocation2 + $0xd0] sm:$0xff]
    %v6549 = vld [vmem:[#allocation2 + $0xd8] sm:$0xff]
    %v6550 = vld [vmem:[#allocation2 + $0xe0] sm:$0xff]
    %v6551 = vld [vmem:[#allocation2 + $0xe8] sm:$0xff]
    %v6552 = vld [vmem:[#allocation2 + $0xf0] sm:$0xff]
    %v6553 = vld [vmem:[#allocation2 + $0xf8] sm:$0xff]
    %v6554 = vld [vmem:[#allocation12] sm:$0xff]
    %v6555 = vld [vmem:[#allocation12 + $0x8] sm:$0xff]
    %v6556 = vld [vmem:[#allocation12 + $0x10] sm:$0xff]
    %v6557 = vld [vmem:[#allocation12 + $0x18] sm:$0xff]
    %v6558 = vld [vmem:[#allocation12 + $0x20] sm:$0xff]
    %v6559 = vld [vmem:[#allocation12 + $0x28] sm:$0xff]
    %v6560 = vld [vmem:[#allocation12 + $0x30] sm:$0xff]
    %v6561 = vld [vmem:[#allocation12 + $0x38] sm:$0xff]
    %v6562 = vld [vmem:[#allocation12 + $0x40] sm:$0xff]
    %v6563 = vld [vmem:[#allocation12 + $0x48] sm:$0xff]
    %v6564 = vld [vmem:[#allocation12 + $0x50] sm:$0xff]
    %v6565 = vld [vmem:[#allocation12 + $0x58] sm:$0xff]
    %v6566 = vld [vmem:[#allocation12 + $0x60] sm:$0xff]
    %v6567 = vld [vmem:[#allocation12 + $0x68] sm:$0xff]
    %v6568 = vld [vmem:[#allocation12 + $0x70] sm:$0xff]
    %v6569 = vld [vmem:[#allocation12 + $0x78] sm:$0xff]
    %v6570 = vld [vmem:[%s6] sm:$0x1]
    %v6572 = vlaneseq
    %v6573 = vshrl.u32 %v6572, 7
    %v6574 = vsub.s32 0, %v6573
    %v6575 = vrot.slane %v6570, %v6574
    %6577 = vmatprep.subr.mxu0 0.0
    %6578 = vmatpush1.msra.mxu0 %v6554
    %6579 = vmatprep.subr.mxu0 0.0
    %6580 = vmatpush1.msra.mxu0 %v6555
    %6581 = vmatprep.subr.mxu0 0.0
    %6582 = vmatpush1.msra.mxu0 %v6556
    %6583 = vmatprep.subr.mxu0 0.0
    %6584 = vmatpush1.msra.mxu0 %v6557
    %6585 = vmatprep.subr.mxu0 0.0
    %6586 = vmatpush1.msra.mxu0 %v6558
    %6587 = vmatprep.subr.mxu0 0.0
    %6588 = vmatpush1.msra.mxu0 %v6559
    %6589 = vmatprep.subr.mxu0 0.0
    %6590 = vmatpush1.msra.mxu0 %v6560
    %6591 = vmatprep.subr.mxu0 0.0
    %6592 = vmatpush1.msra.mxu0 %v6561
    %6593 = vmatprep.subr.mxu0 0.0
    %6594 = vmatpush1.msra.mxu0 %v6562
    %6595 = vmatprep.subr.mxu0 0.0
    %6596 = vmatpush1.msra.mxu0 %v6563
    %6597 = vmatprep.subr.mxu0 0.0
    %6598 = vmatpush1.msra.mxu0 %v6564
    %6599 = vmatprep.subr.mxu0 0.0
    %6600 = vmatpush1.msra.mxu0 %v6565
    %6601 = vmatprep.subr.mxu0 0.0
    %6602 = vmatpush1.msra.mxu0 %v6566
    %6603 = vmatprep.subr.mxu0 0.0
    %6604 = vmatpush1.msra.mxu0 %v6567
    %6605 = vmatprep.subr.mxu0 0.0
    %6606 = vmatpush1.msra.mxu0 %v6568
    %6607 = vmatprep.subr.mxu0 0.0
    %6608 = vmatpush1.msra.mxu0 %v6569
    %6609 = vmatprep.subr.mxu0 0.0
    %6610 = vmatpush1.msra.mxu0 0.0
    %6611 = vmatprep.subr.mxu0 0.0
    %6612 = vmatpush1.msra.mxu0 0.0
    %6613 = vmatprep.subr.mxu0 0.0
    %6614 = vmatpush1.msra.mxu0 0.0
    %6615 = vmatprep.subr.mxu0 0.0
    %6616 = vmatpush1.msra.mxu0 0.0
    %6617 = vmatprep.subr.mxu0 0.0
    %6618 = vmatpush1.msra.mxu0 0.0
    %6619 = vmatprep.subr.mxu0 0.0
    %6620 = vmatpush1.msra.mxu0 0.0
    %6621 = vmatprep.subr.mxu0 0.0
    %6622 = vmatpush1.msra.mxu0 0.0
    %6623 = vmatprep.subr.mxu0 0.0
    %6624 = vmatpush1.msra.mxu0 0.0
    %6625 = vmatprep.subr.mxu0 0.0
    %6626 = vmatpush1.msra.mxu0 0.0
    %6627 = vmatprep.subr.mxu0 0.0
    %6628 = vmatpush1.msra.mxu0 0.0
    %6629 = vmatprep.subr.mxu0 0.0
    %6630 = vmatpush1.msra.mxu0 0.0
    %6631 = vmatprep.subr.mxu0 0.0
    %6632 = vmatpush1.msra.mxu0 0.0
    %6633 = vmatprep.subr.mxu0 0.0
    %6634 = vmatpush1.msra.mxu0 0.0
    %6635 = vmatprep.subr.mxu0 0.0
    %6636 = vmatpush1.msra.mxu0 0.0
    %6637 = vmatprep.subr.mxu0 0.0
    %6638 = vmatpush1.msra.mxu0 0.0
    %6639 = vmatprep.subr.mxu0 0.0
    %6640 = vmatpush1.msra.mxu0 0.0
    %6641 = vmatprep.mubr.f32.mxu0 0.0
    %6642 = vmatmul.mubr.f32.gmra.mrb[0].mxu0 %v6522
    %v6643 = vpop.f32.mrb[0].mxu0
    %v6644 = vadd.f32 %v6575, %v6643
    %v6645 = vpop.f32.mrb[0].mxu0
    %6646 = vmatprep.mubr.f32.mxu0 0.0
    %6647 = vmatmul.mubr.f32.gmra.mrb[0].mxu0 %v6523
    %v6648 = vpop.f32.mrb[0].mxu0
    %v6649 = vadd.f32 %v6575, %v6648
    %v6650 = vpop.f32.mrb[0].mxu0
    %6651 = vmatprep.mubr.f32.mxu0 0.0
    %6652 = vmatmul.mubr.f32.gmra.mrb[0].mxu0 %v6524
    %v6653 = vpop.f32.mrb[0].mxu0
    %v6654 = vadd.f32 %v6575, %v6653
    %v6655 = vpop.f32.mrb[0].mxu0
    %6656 = vmatprep.mubr.f32.mxu0 0.0
    %6657 = vmatmul.mubr.f32.gmra.mrb[0].mxu0 %v6525
    %v6658 = vpop.f32.mrb[0].mxu0
    %v6659 = vadd.f32 %v6575, %v6658
    %v6660 = vpop.f32.mrb[0].mxu0
    %6661 = vmatprep.mubr.f32.mxu0 0.0
    %6662 = vmatmul.mubr.f32.gmra.mrb[0].mxu0 %v6526
    %v6663 = vpop.f32.mrb[0].mxu0
    %v6664 = vadd.f32 %v6575, %v6663
    %v6665 = vpop.f32.mrb[0].mxu0
    %6666 = vmatprep.mubr.f32.mxu0 0.0
    %6667 = vmatmul.mubr.f32.gmra.mrb[0].mxu0 %v6527
    %v6668 = vpop.f32.mrb[0].mxu0
    %v6669 = vadd.f32 %v6575, %v6668
    %v6670 = vpop.f32.mrb[0].mxu0
    %6671 = vmatprep.mubr.f32.mxu0 0.0
    %6672 = vmatmul.mubr.f32.gmra.mrb[0].mxu0 %v6528
    %v6673 = vpop.f32.mrb[0].mxu0
    %v6674 = vadd.f32 %v6575, %v6673
    %v6675 = vpop.f32.mrb[0].mxu0
    %6676 = vmatprep.mubr.f32.mxu0 0.0
    %6677 = vmatmul.mubr.f32.gmra.mrb[0].mxu0 %v6529
    %v6678 = vpop.f32.mrb[0].mxu0
    %v6679 = vadd.f32 %v6575, %v6678
    %v6680 = vpop.f32.mrb[0].mxu0
    %6681 = vmatprep.mubr.f32.mxu0 0.0
    %6682 = vmatmul.mubr.f32.gmra.mrb[0].mxu0 %v6530
    %v6683 = vpop.f32.mrb[0].mxu0
    %v6684 = vadd.f32 %v6575, %v6683
    %v6685 = vpop.f32.mrb[0].mxu0
    %6686 = vmatprep.mubr.f32.mxu0 0.0
    %6687 = vmatmul.mubr.f32.gmra.mrb[0].mxu0 %v6531
    %v6688 = vpop.f32.mrb[0].mxu0
    %v6689 = vadd.f32 %v6575, %v6688
    %v6690 = vpop.f32.mrb[0].mxu0
    %6691 = vmatprep.mubr.f32.mxu0 0.0
    %6692 = vmatmul.mubr.f32.gmra.mrb[0].mxu0 %v6532
    %v6693 = vpop.f32.mrb[0].mxu0
    %v6694 = vadd.f32 %v6575, %v6693
    %v6695 = vpop.f32.mrb[0].mxu0
    %6696 = vmatprep.mubr.f32.mxu0 0.0
    %6697 = vmatmul.mubr.f32.gmra.mrb[0].mxu0 %v6533
    %v6698 = vpop.f32.mrb[0].mxu0
    %v6699 = vadd.f32 %v6575, %v6698
    %v6700 = vpop.f32.mrb[0].mxu0
    %6701 = vmatprep.mubr.f32.mxu0 0.0
    %6702 = vmatmul.mubr.f32.gmra.mrb[0].mxu0 %v6534
    %v6703 = vpop.f32.mrb[0].mxu0
    %v6704 = vadd.f32 %v6575, %v6703
    %v6705 = vpop.f32.mrb[0].mxu0
    %6706 = vmatprep.mubr.f32.mxu0 0.0
    %6707 = vmatmul.mubr.f32.gmra.mrb[0].mxu0 %v6535
    %v6708 = vpop.f32.mrb[0].mxu0
    %v6709 = vadd.f32 %v6575, %v6708
    %v6710 = vpop.f32.mrb[0].mxu0
    %6711 = vmatprep.mubr.f32.mxu0 0.0
    %6712 = vmatmul.mubr.f32.gmra.mrb[0].mxu0 %v6536
    %v6713 = vpop.f32.mrb[0].mxu0
    %v6714 = vadd.f32 %v6575, %v6713
    %v6715 = vpop.f32.mrb[0].mxu0
    %6716 = vmatprep.mubr.f32.mxu0 0.0
    %6717 = vmatmul.mubr.f32.gmra.mrb[0].mxu0 %v6537
    %v6718 = vpop.f32.mrb[0].mxu0
    %v6719 = vadd.f32 %v6575, %v6718
    %v6720 = vpop.f32.mrb[0].mxu0
    %6721 = vmatprep.mubr.f32.mxu0 0.0
    %6722 = vmatmul.mubr.f32.gmra.mrb[0].mxu0 %v6538
    %v6723 = vpop.f32.mrb[0].mxu0
    %v6724 = vadd.f32 %v6575, %v6723
    %v6725 = vpop.f32.mrb[0].mxu0
    %6726 = vmatprep.mubr.f32.mxu0 0.0
    %6727 = vmatmul.mubr.f32.gmra.mrb[0].mxu0 %v6539
    %v6728 = vpop.f32.mrb[0].mxu0
    %v6729 = vadd.f32 %v6575, %v6728
    %v6730 = vpop.f32.mrb[0].mxu0
    %6731 = vmatprep.mubr.f32.mxu0 0.0
    %6732 = vmatmul.mubr.f32.gmra.mrb[0].mxu0 %v6540
    %v6733 = vpop.f32.mrb[0].mxu0
    %v6734 = vadd.f32 %v6575, %v6733
    %v6735 = vpop.f32.mrb[0].mxu0
    %6736 = vmatprep.mubr.f32.mxu0 0.0
    %6737 = vmatmul.mubr.f32.gmra.mrb[0].mxu0 %v6541
    %v6738 = vpop.f32.mrb[0].mxu0
    %v6739 = vadd.f32 %v6575, %v6738
    %v6740 = vpop.f32.mrb[0].mxu0
    %6741 = vmatprep.mubr.f32.mxu0 0.0
    %6742 = vmatmul.mubr.f32.gmra.mrb[0].mxu0 %v6542
    %v6743 = vpop.f32.mrb[0].mxu0
    %v6744 = vadd.f32 %v6575, %v6743
    %v6745 = vpop.f32.mrb[0].mxu0
    %6746 = vmatprep.mubr.f32.mxu0 0.0
    %6747 = vmatmul.mubr.f32.gmra.mrb[0].mxu0 %v6543
    %v6748 = vpop.f32.mrb[0].mxu0
    %v6749 = vadd.f32 %v6575, %v6748
    %v6750 = vpop.f32.mrb[0].mxu0
    %6751 = vmatprep.mubr.f32.mxu0 0.0
    %6752 = vmatmul.mubr.f32.gmra.mrb[0].mxu0 %v6544
    %v6753 = vpop.f32.mrb[0].mxu0
    %v6754 = vadd.f32 %v6575, %v6753
    %v6755 = vpop.f32.mrb[0].mxu0
    %6756 = vmatprep.mubr.f32.mxu0 0.0
    %6757 = vmatmul.mubr.f32.gmra.mrb[0].mxu0 %v6545
    %v6758 = vpop.f32.mrb[0].mxu0
    %v6759 = vadd.f32 %v6575, %v6758
    %v6760 = vpop.f32.mrb[0].mxu0
    %6761 = vmatprep.mubr.f32.mxu0 0.0
    %6762 = vmatmul.mubr.f32.gmra.mrb[0].mxu0 %v6546
    %v6763 = vpop.f32.mrb[0].mxu0
    %v6764 = vadd.f32 %v6575, %v6763
    %v6765 = vpop.f32.mrb[0].mxu0
    %6766 = vmatprep.mubr.f32.mxu0 0.0
    %6767 = vmatmul.mubr.f32.gmra.mrb[0].mxu0 %v6547
    %v6768 = vpop.f32.mrb[0].mxu0
    %v6769 = vadd.f32 %v6575, %v6768
    %v6770 = vpop.f32.mrb[0].mxu0
    %6771 = vmatprep.mubr.f32.mxu0 0.0
    %6772 = vmatmul.mubr.f32.gmra.mrb[0].mxu0 %v6548
    %v6773 = vpop.f32.mrb[0].mxu0
    %v6774 = vadd.f32 %v6575, %v6773
    %v6775 = vpop.f32.mrb[0].mxu0
    %6776 = vmatprep.mubr.f32.mxu0 0.0
    %6777 = vmatmul.mubr.f32.gmra.mrb[0].mxu0 %v6549
    %v6778 = vpop.f32.mrb[0].mxu0
    %v6779 = vadd.f32 %v6575, %v6778
    %v6780 = vpop.f32.mrb[0].mxu0
    %6781 = vmatprep.mubr.f32.mxu0 0.0
    %6782 = vmatmul.mubr.f32.gmra.mrb[0].mxu0 %v6550
    %v6783 = vpop.f32.mrb[0].mxu0
    %v6784 = vadd.f32 %v6575, %v6783
    %v6785 = vpop.f32.mrb[0].mxu0
    %6786 = vmatprep.mubr.f32.mxu0 0.0
    %6787 = vmatmul.mubr.f32.gmra.mrb[0].mxu0 %v6551
    %v6788 = vpop.f32.mrb[0].mxu0
    %v6789 = vadd.f32 %v6575, %v6788
    %v6790 = vpop.f32.mrb[0].mxu0
    %6791 = vmatprep.mubr.f32.mxu0 0.0
    %6792 = vmatmul.mubr.f32.gmra.mrb[0].mxu0 %v6552
    %v6793 = vpop.f32.mrb[0].mxu0
    %v6794 = vadd.f32 %v6575, %v6793
    %v6795 = vpop.f32.mrb[0].mxu0
    %6796 = vmatprep.mubr.f32.mxu0 0.0
    %6797 = vmatmul.mubr.f32.gmra.mrb[0].mxu0 %v6553
    %v6798 = vpop.f32.mrb[0].mxu0
    %v6799 = vadd.f32 %v6575, %v6798
    %v6800 = vpop.f32.mrb[0].mxu0
    %6801 = vdwg.mxu0
    %6802 = vst [vmem:[#allocation18] sm:$0xff] %v6644
    %6803 = vst [vmem:[#allocation18 + $0x8] sm:$0xff] %v6649
    %6804 = vst [vmem:[#allocation18 + $0x10] sm:$0xff] %v6654
    %6805 = vst [vmem:[#allocation18 + $0x18] sm:$0xff] %v6659
    %6806 = vst [vmem:[#allocation18 + $0x20] sm:$0xff] %v6664
    %6807 = vst [vmem:[#allocation18 + $0x28] sm:$0xff] %v6669
    %6808 = vst [vmem:[#allocation18 + $0x30] sm:$0xff] %v6674
    %6809 = vst [vmem:[#allocation18 + $0x38] sm:$0xff] %v6679
    %6810 = vst [vmem:[#allocation18 + $0x40] sm:$0xff] %v6684
    %6811 = vst [vmem:[#allocation18 + $0x48] sm:$0xff] %v6689
    %6812 = vst [vmem:[#allocation18 + $0x50] sm:$0xff] %v6694
    %6813 = vst [vmem:[#allocation18 + $0x58] sm:$0xff] %v6699
    %6814 = vst [vmem:[#allocation18 + $0x60] sm:$0xff] %v6704
    %6815 = vst [vmem:[#allocation18 + $0x68] sm:$0xff] %v6709
    %6816 = vst [vmem:[#allocation18 + $0x70] sm:$0xff] %v6714
    %6817 = vst [vmem:[#allocation18 + $0x78] sm:$0xff] %v6719
    %6818 = vst [vmem:[#allocation18 + $0x80] sm:$0xff] %v6724
    %6819 = vst [vmem:[#allocation18 + $0x88] sm:$0xff] %v6729
    %6820 = vst [vmem:[#allocation18 + $0x90] sm:$0xff] %v6734
    %6821 = vst [vmem:[#allocation18 + $0x98] sm:$0xff] %v6739
    %6822 = vst [vmem:[#allocation18 + $0xa0] sm:$0xff] %v6744
    %6823 = vst [vmem:[#allocation18 + $0xa8] sm:$0xff] %v6749
    %6824 = vst [vmem:[#allocation18 + $0xb0] sm:$0xff] %v6754
    %6825 = vst [vmem:[#allocation18 + $0xb8] sm:$0xff] %v6759
    %6826 = vst [vmem:[#allocation18 + $0xc0] sm:$0xff] %v6764
    %6827 = vst [vmem:[#allocation18 + $0xc8] sm:$0xff] %v6769
    %6828 = vst [vmem:[#allocation18 + $0xd0] sm:$0xff] %v6774
    %6829 = vst [vmem:[#allocation18 + $0xd8] sm:$0xff] %v6779
    %6830 = vst [vmem:[#allocation18 + $0xe0] sm:$0xff] %v6784
    %6831 = vst [vmem:[#allocation18 + $0xe8] sm:$0xff] %v6789
    %6832 = vst [vmem:[#allocation18 + $0xf0] sm:$0xff] %v6794
    %6833 = vst [vmem:[#allocation18 + $0xf8] sm:$0xff] %v6799
    // Predicated region
    $region82: #{tpu_custom_call.1} parent=1 // pred_check
      _
    $region83: #{tpu_custom_call.1} parent=1 // pred_check_branch
      %6835 = sbr.rel (0) target = $region85
    $region84: #{tpu_custom_call.1} parent=1 // pred_region
      %s6837 = ssub.s32 4096, 4096
      %6838 = vsyncadd [#allocation5], %s6837
      %s6839 = sshll.u32 [#allocation18], 4
      %s6840 = int_to_ptr.vmem [resolvable:$true] %s6839
      %6845 = dma.vmem_to_hbm [thread:$0]  %s6840, 4096, %s11, [#allocation5], 128, 128, 8
    $region85: #{tpu_custom_call.1} parent=1 // pred_fallthru
      _
    // Predicated region
    $region86: #{tpu_custom_call.1} parent=1 // pred_check
      _
    $region87: #{tpu_custom_call.1} parent=1 // pred_check_branch
      %6847 = sbr.rel (0) target = $region89
    $region88: #{tpu_custom_call.1} parent=1 // pred_region
      %s6849 = ssub.s32 512, 512
      %6850 = vsyncadd [#allocation20], %s6849
      %s6851 = sshll.u32 [#allocation19], 4
      %s6852 = int_to_ptr.vmem [resolvable:$true] %s6851
      %6857 = dma.vmem_to_hbm [thread:$0]  %s6852, 512, %s12, [#allocation20], 128, 128, 8
    $region89: #{tpu_custom_call.1} parent=1 // pred_fallthru
      _
    // Predicated region
    $region90: #{tpu_custom_call.1} parent=1 // pred_check
      _
    $region91: #{tpu_custom_call.1} parent=1 // pred_check_branch
      %6859 = sbr.rel (0) target = $region93
    $region92: #{tpu_custom_call.1} parent=1 // pred_region
      %s6861 = ssub.s32 512, 512
      %6862 = vsyncadd [#allocation20], %s6861
      %s6863 = sshll.u32 [#allocation21], 4
      %s6864 = int_to_ptr.vmem [resolvable:$true] %s6863
      %6869 = dma.vmem_to_hbm [thread:$0]  %s6864, 512, %s13, [#allocation20], 128, 128, 8
    $region93: #{tpu_custom_call.1} parent=1 // pred_fallthru
      _
    // Predicated region
    $region94: #{tpu_custom_call.1} parent=1 // pred_check
      _
    $region95: #{tpu_custom_call.1} parent=1 // pred_check_branch
      %6871 = sbr.rel (0) target = $region97
    $region96: #{tpu_custom_call.1} parent=1 // pred_region
      %s6873 = ssub.s32 512, 512
      %6874 = vsyncadd [#allocation23], %s6873
      %s6875 = sshll.u32 [#allocation22], 4
      %s6876 = int_to_ptr.vmem [resolvable:$true] %s6875
      %6881 = dma.vmem_to_hbm [thread:$0]  %s6876, 512, %s14, [#allocation23], 128, 128, 8
    $region97: #{tpu_custom_call.1} parent=1 // pred_fallthru
      _
    // Predicated region
    $region98: #{tpu_custom_call.1} parent=1 // pred_check
      _
    $region99: #{tpu_custom_call.1} parent=1 // pred_check_branch
      %6883 = sbr.rel (0) target = $region101
    $region100: #{tpu_custom_call.1} parent=1 // pred_region
      %s6885 = ssub.s32 512, 512
      %6886 = vsyncadd [#allocation23], %s6885
      %s6887 = sshll.u32 [#allocation24], 4
      %s6888 = int_to_ptr.vmem [resolvable:$true] %s6887
      %6893 = dma.vmem_to_hbm [thread:$0]  %s6888, 512, %s15, [#allocation23], 128, 128, 8
    $region101: #{tpu_custom_call.1} parent=1 // pred_fallthru
      _
    // Predicated region
    $region102: #{tpu_custom_call.1} parent=1 // pred_check
      _
    $region103: #{tpu_custom_call.1} parent=1 // pred_check_branch
      %6895 = sbr.rel (0) target = $region105
    $region104: #{tpu_custom_call.1} parent=1 // pred_region
      %6896 = dma.done [#allocation5], 4096
    $region105: #{tpu_custom_call.1} parent=1 // pred_fallthru
      _
    // Predicated region
    $region106: #{tpu_custom_call.1} parent=1 // pred_check
      _
    $region107: #{tpu_custom_call.1} parent=1 // pred_check_branch
      %6898 = sbr.rel (0) target = $region109
    $region108: #{tpu_custom_call.1} parent=1 // pred_region
      %6899 = dma.done [#allocation20], 512
    $region109: #{tpu_custom_call.1} parent=1 // pred_fallthru
      _
    // Predicated region
    $region110: #{tpu_custom_call.1} parent=1 // pred_check
      _
    $region111: #{tpu_custom_call.1} parent=1 // pred_check_branch
      %6901 = sbr.rel (0) target = $region113
    $region112: #{tpu_custom_call.1} parent=1 // pred_region
      %6902 = dma.done [#allocation20], 512
    $region113: #{tpu_custom_call.1} parent=1 // pred_fallthru
      _
    // Predicated region
    $region114: #{tpu_custom_call.1} parent=1 // pred_check
      _
    $region115: #{tpu_custom_call.1} parent=1 // pred_check_branch
      %6904 = sbr.rel (0) target = $region117
    $region116: #{tpu_custom_call.1} parent=1 // pred_region
      %6905 = dma.done [#allocation23], 512
    $region117: #{tpu_custom_call.1} parent=1 // pred_fallthru
      _
    // Predicated region
    $region118: #{tpu_custom_call.1} parent=1 // pred_check
      _
    $region119: #{tpu_custom_call.1} parent=1 // pred_check_branch
      %6907 = sbr.rel (0) target = $region121
    $region120: #{tpu_custom_call.1} parent=1 // pred_region
      %6908 = dma.done [#allocation23], 512
    $region121: #{tpu_custom_call.1} parent=1 // pred_fallthru
      _
    %6909 = vsyncpa [#allocation4], 1
    %6910 = vsyncpa [#allocation7], 1
    %6911 = vsyncpa [#allocation10], 1
    %6912 = vsyncpa [#allocation13], 1
    %6913 = vsyncpa [#allocation16], 1
    %6914 = vsyncpa [#allocation5], 1
    %6915 = vsyncpa [#allocation20], 1
    %6916 = vsyncpa [#allocation23], 1

</llo_original>
